<compile_context>
chip_gen: v7x
topology: tpu7x:2x2x1
jax: 0.10.0
libtpu: 0.0.40
codegen_flags: <defaults>
</compile_context>

<pallas_src>
import functools

import jax
import jax.numpy as jnp
from jax.experimental import pallas as pl
from jax.experimental.pallas import tpu as pltpu  # noqa: F401  (TPU backend)

OC_PAD = 128                 # lane-dense channel padding for both conv layers
MXU_DTYPE = jnp.bfloat16     # MXU operand dtype (f32 accumulation everywhere)
BN_EPS = 1e-5


def _round_up(x, m):
    return (x + m - 1) // m * m


# ----------------------------- Pallas kernels ------------------------------

def _conv_bn_relu_pool_kernel(p_ref, w_ref, g_ref, b_ref, o_ref, *,
                              n_valid, gp, eps):
    """Fused conv (matmul over pre-extracted patches) + BatchNorm (batch stats)
    + ReLU + 2x2/2 max-pool.

    Row layout of p_ref / the matmul result (see _conv_patches_pool_ordered):
      rows [q*gp, (q+1)*gp), q = 0..3  -> corner q of every 2x2 pool window
      rows [4*gp, Mp)                  -> conv rows not covered by a window
                                          (odd tail) + zero padding rows.
    Zero padding rows contribute exactly 0 to the BN sums (no conv bias), so
    dividing by the true element count `n_valid` gives exact batch statistics.
    """
    acc = jnp.dot(p_ref[...], w_ref[...],
                  preferred_element_type=jnp.float32)            # (Mp, 128) f32
    inv_n = 1.0 / float(n_valid)
    mean = jnp.sum(acc, axis=0, keepdims=True) * inv_n
    ex2 = jnp.sum(acc * acc, axis=0, keepdims=True) * inv_n
    var = jnp.maximum(ex2 - mean * mean, 0.0)
    scale = jax.lax.rsqrt(var + eps) * g_ref[...]
    shift = b_ref[...] - mean * scale
    y = jnp.maximum(acc * scale + shift, 0.0)                    # BN + ReLU
    # 2x2 max-pool: the 4 corners of each window sit in 4 aligned row blocks.
    pooled = jnp.maximum(jnp.maximum(y[0:gp], y[gp:2 * gp]),
                         jnp.maximum(y[2 * gp:3 * gp], y[3 * gp:4 * gp]))
    o_ref[...] = pooled


def _mlp_head_kernel(x_ref, w1_ref, b1_ref, w2_ref, b2_ref, w3_ref, b3_ref,
                     o_ref):
    """Fused Linear(1250,1024)+ReLU -> Linear(1024,128)+ReLU -> Linear(128,10).
    Intermediates stay in VMEM/vregs; MXU operands bf16, f32 accumulation."""
    h = jnp.dot(x_ref[...].astype(MXU_DTYPE), w1_ref[...],
                preferred_element_type=jnp.float32) + b1_ref[...]
    h = jnp.maximum(h, 0.0)
    h = jnp.dot(h.astype(MXU_DTYPE), w2_ref[...],
                preferred_element_type=jnp.float32) + b2_ref[...]
    h = jnp.maximum(h, 0.0)
    o_ref[...] = jnp.dot(h.astype(MXU_DTYPE), w3_ref[...],
                         preferred_element_type=jnp.float32) + b3_ref[...]


# --------------------------- pallas_call wrappers ---------------------------

def conv_bn_relu_pool(patches, w_mat, gamma, beta, *, n_valid, gp):
    """patches: (Mp, K) bf16, w_mat: (K, OC_PAD) bf16, gamma/beta: (1, OC_PAD) f32.
    Returns pooled activations (gp, OC_PAD) f32 (first N*PH*PW rows valid)."""
    mp, k = patches.shape
    _, oc = w_mat.shape
    # TODO(synk): for large batch, add an M-grid over rows ('parallel') with a
    # running-sum/sumsq BN reduction instead of this single VMEM block.
    return pl.pallas_call(
        functools.partial(_conv_bn_relu_pool_kernel,
                          n_valid=n_valid, gp=gp, eps=BN_EPS),
        out_shape=jax.ShapeDtypeStruct((gp, oc), jnp.float32),
        in_specs=[
            pl.BlockSpec((mp, k), lambda: (0, 0)),
            pl.BlockSpec((k, oc), lambda: (0, 0)),
            pl.BlockSpec((1, oc), lambda: (0, 0)),
            pl.BlockSpec((1, oc), lambda: (0, 0)),
        ],
        out_specs=pl.BlockSpec((gp, oc), lambda: (0, 0)),
    )(patches, w_mat, gamma, beta)


def mlp_head(x, w1, b1, w2, b2, w3, b3):
    n = x.shape[0]
    # TODO(synk): if run in a loop, prefetch w1 (the dominant DMA) behind the
    # conv layers with a cross-call DMA future.
    return pl.pallas_call(
        _mlp_head_kernel,
        out_shape=jax.ShapeDtypeStruct((n, w3.shape[1]), jnp.float32),
        in_specs=[
            pl.BlockSpec(x.shape, lambda: (0, 0)),
            pl.BlockSpec(w1.shape, lambda: (0, 0)),
            pl.BlockSpec(b1.shape, lambda: (0, 0)),
            pl.BlockSpec(w2.shape, lambda: (0, 0)),
            pl.BlockSpec(b2.shape, lambda: (0, 0)),
            pl.BlockSpec(w3.shape, lambda: (0, 0)),
            pl.BlockSpec(b3.shape, lambda: (0, 0)),
        ],
        out_specs=pl.BlockSpec((n, w3.shape[1]), lambda: (0, 0)),
    )(x, w1, b1, w2, b2, w3, b3)


# ------------------------------ JAX glue ops --------------------------------

def _conv_patches_pool_ordered(x, kh, kw):
    """im2col for a valid 3x3 conv with rows emitted in 'pool corner' order so
    the fused kernel can max-pool with 4 static slices.

    x: (N, H, W, C) f32.  Returns (patches (Mp, kh*kw*C) bf16, n_valid, gp):
    rows [q*gp, q*gp + N*PH*PW) hold pool-window corner q (windows ordered
    row-major over (n, i2, j2)), followed by conv rows not covered by any
    window (odd tail) and zero padding.  K order is (ki, kj, c), matching the
    conv weights reshaped as (KH, KW, IC, OC)."""
    N, H, W, C = x.shape
    OH, OW = H - kh + 1, W - kw + 1
    PH, PW = OH // 2, OW // 2
    K = kh * kw * C
    # natural-order patch tensor (one fused XLA slice/stack, tens-of-KB here)
    p = jnp.stack([x[:, i:i + OH, j:j + OW, :]
                   for i in range(kh) for j in range(kw)], axis=3)
    p = p.reshape(N, OH, OW, K)
    g = N * PH * PW
    gp = _round_up(g, 8)                      # sublane-aligned block stride
    rows = []
    for di in range(2):
        for dj in range(2):
            blk = p[:, di::2, dj::2, :][:, :PH, :PW, :].reshape(g, K)
            rows.append(jnp.pad(blk, ((0, gp - g), (0, 0))))
    if OH > 2 * PH:                           # bottom row not pooled (odd OH)
        rows.append(p[:, 2 * PH:, :, :].reshape(-1, K))
    if OW > 2 * PW:                           # right col not pooled (odd OW)
        rows.append(p[:, :2 * PH, 2 * PW:, :].reshape(-1, K))
    pat = jnp.concatenate(rows, axis=0)
    mp = _round_up(pat.shape[0], 8)
    pat = jnp.pad(pat, ((0, mp - pat.shape[0]), (0, 0)))
    return pat.astype(MXU_DTYPE), N * OH * OW, gp


def _conv_block(x, w_mat, gamma, beta):
    """Conv2d(k=3, valid) + BatchNorm2d(train stats) + ReLU + MaxPool2d(2,2)."""
    N, H, W, _ = x.shape
    ph, pw = (H - 2) // 2, (W - 2) // 2
    pat, n_valid, gp = _conv_patches_pool_ordered(x, 3, 3)
    y = conv_bn_relu_pool(pat, w_mat, gamma, beta, n_valid=n_valid, gp=gp)
    return y[:N * ph * pw].reshape(N, ph, pw, OC_PAD)


# ------------------------------ Parameters ----------------------------------

def init_params(key):
    """PyTorch-layout parameters (like a state_dict)."""
    ks = jax.random.split(key, 8)

    def rnd(k, shape, fan_in):
        return jax.random.normal(k, shape, jnp.float32) / jnp.sqrt(fan_in)

    return {
        # layer1: Conv2d(1, 25, 3) + BatchNorm2d(25)
        "w1": rnd(ks[0], (25, 1, 3, 3), 9), "b1": jnp.zeros((25,), jnp.float32),
        "g1": jnp.ones((25,), jnp.float32), "be1": jnp.zeros((25,), jnp.float32),
        # layer3: Conv2d(25, 50, 3) + BatchNorm2d(50)
        "w2": rnd(ks[1], (50, 25, 3, 3), 225), "b2": jnp.zeros((50,), jnp.float32),
        "g2": jnp.ones((50,), jnp.float32), "be2": jnp.zeros((50,), jnp.float32),
        # fc: Linear(1250,1024), Linear(1024,128), Linear(128,10)  ((out, in))
        "fw1": rnd(ks[2], (1024, 1250), 1250), "fb1": jnp.zeros((1024,), jnp.float32),
        "fw2": rnd(ks[3], (128, 1024), 1024), "fb2": jnp.zeros((128,), jnp.float32),
        "fw3": rnd(ks[4], (10, 128), 128), "fb3": jnp.zeros((10,), jnp.float32),
    }


def prepare_params(raw):
    """One-time (outside jit) reorganisation into kernel-friendly layouts:
      * conv weights -> (KH*KW*ICpad, OC_PAD) bf16 matmul matrices; conv biases
        are dropped (exactly cancelled by BatchNorm's mean subtraction).
      * BN gamma/beta zero-padded to 128 lanes (padded channels stay 0).
      * fc weights pre-transposed to (in, out) bf16; fc1 additionally permuted
        to the NHWC-flatten order the conv path produces (absorbs the NCHW
        flatten transpose); fc3 output zero-padded to 128 lanes.
    """
    bf = MXU_DTYPE
    w1 = jnp.transpose(raw["w1"], (2, 3, 1, 0))                      # (3,3,1,25)
    w1 = jnp.pad(w1, ((0, 0), (0, 0), (0, 0), (0, OC_PAD - 25)))
    w1 = w1.reshape(3 * 3 * 1, OC_PAD).astype(bf)
    w2 = jnp.transpose(raw["w2"], (2, 3, 1, 0))                      # (3,3,25,50)
    w2 = jnp.pad(w2, ((0, 0), (0, 0), (0, OC_PAD - 25), (0, OC_PAD - 50)))
    w2 = w2.reshape(3 * 3 * OC_PAD, OC_PAD).astype(bf)
    # fc1: torch column index c*25 + h*5 + w  ->  our row index (h*5 + w)*50 + c
    fw1 = jnp.transpose(raw["fw1"].reshape(1024, 50, 5, 5), (2, 3, 1, 0))
    fw1 = fw1.reshape(50 * 5 * 5, 1024).astype(bf)
    fw2 = raw["fw2"].T.astype(bf)                                    # (1024,128)
    fw3 = jnp.pad(raw["fw3"].T, ((0, 0), (0, 128 - 10))).astype(bf)  # (128,128)
    return {
        "w1m": w1,
        "g1": jnp.pad(raw["g1"], (0, OC_PAD - 25)).reshape(1, OC_PAD),
        "be1": jnp.pad(raw["be1"], (0, OC_PAD - 25)).reshape(1, OC_PAD),
        "w2m": w2,
        "g2": jnp.pad(raw["g2"], (0, OC_PAD - 50)).reshape(1, OC_PAD),
        "be2": jnp.pad(raw["be2"], (0, OC_PAD - 50)).reshape(1, OC_PAD),
        "fw1": fw1, "fb1": raw["fb1"].reshape(1, 1024),
        "fw2": fw2, "fb2": raw["fb2"].reshape(1, 128),
        "fw3": fw3, "fb3": jnp.pad(raw["fb3"], (0, 128 - 10)).reshape(1, 128),
    }


# -------------------------------- Forward -----------------------------------

def cnn_forward(p, x_nchw):
    # x_nchw: (N, 1, 28, 28)  (28x28 required by the 50*5*5 fc input)
    N = x_nchw.shape[0]
    x = jnp.transpose(x_nchw, (0, 2, 3, 1))                          # (N,28,28,1)

    x = _conv_block(x, p["w1m"], p["g1"], p["be1"])                  # (N,13,13,128)
    x = _conv_block(x, p["w2m"], p["g2"], p["be2"])                  # (N, 5, 5,128)

    # NHWC flatten (fc1 was pre-permuted to this order -> no NCHW transpose)
    x = x[:, :, :, :50].reshape(N, 50 * 5 * 5)                       # (N, 1250)

    logits = mlp_head(x, p["fw1"], p["fb1"], p["fw2"], p["fb2"],
                      p["fw3"], p["fb3"])                            # (N, 128)
    return logits[:, :10]


# --------------------------------- Main -------------------------------------

if __name__ == "__main__":
    key = jax.random.PRNGKey(0)
    kp, kx = jax.random.split(key)
    params = prepare_params(init_params(kp))   # weight reorg once, outside jit

    x = jax.random.normal(kx, (2, 1, 28, 28), jnp.float32)

    out = jax.jit(cnn_forward)(params, x)
    out = jax.block_until_ready(out)
    assert out.shape == (2, 10) and out.dtype == jnp.float32
    print("KERNEL_OK")
</pallas_src>

<mosaic_0001>
module attributes {stable_mosaic.version = 11 : i64} {
  func.func @_conv_bn_relu_pool_kernel(%arg0: memref<1376x9xbf16, #tpu.memory_space<vmem>>, %arg1: memref<9x128xbf16, #tpu.memory_space<vmem>>, %arg2: memref<1x128xf32, #tpu.memory_space<vmem>>, %arg3: memref<1x128xf32, #tpu.memory_space<vmem>>, %arg4: memref<344x128xf32, #tpu.memory_space<vmem>>) attributes {dimension_semantics = [], scalar_prefetch = 0 : i64, scratch_operands = 0 : i64, tpu.core_type = #tpu.core_type<tc>} {
    %c0 = arith.constant 0 : index
    %c0_0 = arith.constant 0 : index
    %0 = vector.load %arg0[%c0, %c0_0] : memref<1376x9xbf16, #tpu.memory_space<vmem>>, vector<1376x9xbf16>
    %c0_1 = arith.constant 0 : index
    %c0_2 = arith.constant 0 : index
    %1 = vector.load %arg1[%c0_1, %c0_2] : memref<9x128xbf16, #tpu.memory_space<vmem>>, vector<9x128xbf16>
    %cst = arith.constant dense<0.000000e+00> : vector<1376x128xf32>
    %2 = tpu.matmul %0, %1, %cst {dimension_numbers = #tpu.dot_dimension_numbers<[1], [0], [0], [1], [0, 0, 1, 1], [], []>} : vector<1376x9xbf16>, vector<9x128xbf16>, vector<1376x128xf32> -> vector<1376x128xf32>
    %cst_3 = arith.constant dense<0.000000e+00> : vector<128xf32>
    %3 = vector.multi_reduction <add>, %2, %cst_3 [0] : vector<1376x128xf32> to vector<128xf32>
    %4 = vector.shape_cast %3 : vector<128xf32> to vector<1x128xf32>
    %cst_4 = arith.constant 7.396450e-04 : f32
    %5 = vector.broadcast %cst_4 : f32 to vector<1x128xf32>
    %6 = arith.mulf %4, %5 : vector<1x128xf32>
    %7 = arith.mulf %2, %2 : vector<1376x128xf32>
    %cst_5 = arith.constant dense<0.000000e+00> : vector<128xf32>
    %8 = vector.multi_reduction <add>, %7, %cst_5 [0] : vector<1376x128xf32> to vector<128xf32>
    %9 = vector.shape_cast %8 : vector<128xf32> to vector<1x128xf32>
    %cst_6 = arith.constant 7.396450e-04 : f32
    %10 = vector.broadcast %cst_6 : f32 to vector<1x128xf32>
    %11 = arith.mulf %9, %10 : vector<1x128xf32>
    %12 = arith.mulf %6, %6 : vector<1x128xf32>
    %13 = arith.subf %11, %12 : vector<1x128xf32>
    %cst_7 = arith.constant 0.000000e+00 : f32
    %14 = vector.broadcast %cst_7 : f32 to vector<1x128xf32>
    %15 = arith.maximumf %13, %14 : vector<1x128xf32>
    %cst_8 = arith.constant 9.99999974E-6 : f32
    %16 = vector.broadcast %cst_8 : f32 to vector<1x128xf32>
    %17 = arith.addf %15, %16 : vector<1x128xf32>
    %18 = math.rsqrt %17 : vector<1x128xf32>
    %c0_9 = arith.constant 0 : index
    %c0_10 = arith.constant 0 : index
    %19 = vector.load %arg2[%c0_9, %c0_10] : memref<1x128xf32, #tpu.memory_space<vmem>>, vector<1x128xf32>
    %20 = arith.mulf %18, %19 : vector<1x128xf32>
    %c0_11 = arith.constant 0 : index
    %c0_12 = arith.constant 0 : index
    %21 = vector.load %arg3[%c0_11, %c0_12] : memref<1x128xf32, #tpu.memory_space<vmem>>, vector<1x128xf32>
    %22 = arith.mulf %6, %20 : vector<1x128xf32>
    %23 = arith.subf %21, %22 : vector<1x128xf32>
    %24 = vector.broadcast %20 : vector<1x128xf32> to vector<1376x128xf32>
    %25 = arith.mulf %2, %24 : vector<1376x128xf32>
    %26 = vector.broadcast %23 : vector<1x128xf32> to vector<1376x128xf32>
    %27 = arith.addf %25, %26 : vector<1376x128xf32>
    %cst_13 = arith.constant 0.000000e+00 : f32
    %28 = vector.broadcast %cst_13 : f32 to vector<1376x128xf32>
    %29 = arith.maximumf %27, %28 : vector<1376x128xf32>
    %30 = vector.extract_strided_slice %29 {offsets = [0, 0], sizes = [344, 128], strides = [1, 1]} : vector<1376x128xf32> to vector<344x128xf32>
    %31 = vector.extract_strided_slice %29 {offsets = [344, 0], sizes = [344, 128], strides = [1, 1]} : vector<1376x128xf32> to vector<344x128xf32>
    %32 = arith.maximumf %30, %31 : vector<344x128xf32>
    %33 = vector.extract_strided_slice %29 {offsets = [688, 0], sizes = [344, 128], strides = [1, 1]} : vector<1376x128xf32> to vector<344x128xf32>
    %34 = vector.extract_strided_slice %29 {offsets = [1032, 0], sizes = [344, 128], strides = [1, 1]} : vector<1376x128xf32> to vector<344x128xf32>
    %35 = arith.maximumf %33, %34 : vector<344x128xf32>
    %36 = arith.maximumf %32, %35 : vector<344x128xf32>
    %c0_14 = arith.constant 0 : index
    %c0_15 = arith.constant 0 : index
    %37 = vector.load %arg4[%c0_14, %c0_15] : memref<344x128xf32, #tpu.memory_space<vmem>>, vector<344x128xf32>
    tpu.vector_store %arg4[%c0_14, %c0_15], %36 {strides = array<i32>} : memref<344x128xf32, #tpu.memory_space<vmem>>, vector<344x128xf32>,
    return
  }
}

module attributes {stable_mosaic.version = 11 : i64} {
  func.func @_conv_bn_relu_pool_kernel(%arg0: memref<272x1152xbf16, #tpu.memory_space<vmem>>, %arg1: memref<1152x128xbf16, #tpu.memory_space<vmem>>, %arg2: memref<1x128xf32, #tpu.memory_space<vmem>>, %arg3: memref<1x128xf32, #tpu.memory_space<vmem>>, %arg4: memref<56x128xf32, #tpu.memory_space<vmem>>) attributes {dimension_semantics = [], scalar_prefetch = 0 : i64, scratch_operands = 0 : i64, tpu.core_type = #tpu.core_type<tc>} {
    %c0 = arith.constant 0 : index
    %c0_0 = arith.constant 0 : index
    %0 = vector.load %arg0[%c0, %c0_0] : memref<272x1152xbf16, #tpu.memory_space<vmem>>, vector<272x1152xbf16>
    %c0_1 = arith.constant 0 : index
    %c0_2 = arith.constant 0 : index
    %1 = vector.load %arg1[%c0_1, %c0_2] : memref<1152x128xbf16, #tpu.memory_space<vmem>>, vector<1152x128xbf16>
    %cst = arith.constant dense<0.000000e+00> : vector<272x128xf32>
    %2 = tpu.matmul %0, %1, %cst {dimension_numbers = #tpu.dot_dimension_numbers<[1], [0], [0], [1], [0, 0, 1, 1], [], []>} : vector<272x1152xbf16>, vector<1152x128xbf16>, vector<272x128xf32> -> vector<272x128xf32>
    %cst_3 = arith.constant dense<0.000000e+00> : vector<128xf32>
    %3 = vector.multi_reduction <add>, %2, %cst_3 [0] : vector<272x128xf32> to vector<128xf32>
    %4 = vector.shape_cast %3 : vector<128xf32> to vector<1x128xf32>
    %cst_4 = arith.constant 0.00413223123 : f32
    %5 = vector.broadcast %cst_4 : f32 to vector<1x128xf32>
    %6 = arith.mulf %4, %5 : vector<1x128xf32>
    %7 = arith.mulf %2, %2 : vector<272x128xf32>
    %cst_5 = arith.constant dense<0.000000e+00> : vector<128xf32>
    %8 = vector.multi_reduction <add>, %7, %cst_5 [0] : vector<272x128xf32> to vector<128xf32>
    %9 = vector.shape_cast %8 : vector<128xf32> to vector<1x128xf32>
    %cst_6 = arith.constant 0.00413223123 : f32
    %10 = vector.broadcast %cst_6 : f32 to vector<1x128xf32>
    %11 = arith.mulf %9, %10 : vector<1x128xf32>
    %12 = arith.mulf %6, %6 : vector<1x128xf32>
    %13 = arith.subf %11, %12 : vector<1x128xf32>
    %cst_7 = arith.constant 0.000000e+00 : f32
    %14 = vector.broadcast %cst_7 : f32 to vector<1x128xf32>
    %15 = arith.maximumf %13, %14 : vector<1x128xf32>
    %cst_8 = arith.constant 9.99999974E-6 : f32
    %16 = vector.broadcast %cst_8 : f32 to vector<1x128xf32>
    %17 = arith.addf %15, %16 : vector<1x128xf32>
    %18 = math.rsqrt %17 : vector<1x128xf32>
    %c0_9 = arith.constant 0 : index
    %c0_10 = arith.constant 0 : index
    %19 = vector.load %arg2[%c0_9, %c0_10] : memref<1x128xf32, #tpu.memory_space<vmem>>, vector<1x128xf32>
    %20 = arith.mulf %18, %19 : vector<1x128xf32>
    %c0_11 = arith.constant 0 : index
    %c0_12 = arith.constant 0 : index
    %21 = vector.load %arg3[%c0_11, %c0_12] : memref<1x128xf32, #tpu.memory_space<vmem>>, vector<1x128xf32>
    %22 = arith.mulf %6, %20 : vector<1x128xf32>
    %23 = arith.subf %21, %22 : vector<1x128xf32>
    %24 = vector.broadcast %20 : vector<1x128xf32> to vector<272x128xf32>
    %25 = arith.mulf %2, %24 : vector<272x128xf32>
    %26 = vector.broadcast %23 : vector<1x128xf32> to vector<272x128xf32>
    %27 = arith.addf %25, %26 : vector<272x128xf32>
    %cst_13 = arith.constant 0.000000e+00 : f32
    %28 = vector.broadcast %cst_13 : f32 to vector<272x128xf32>
    %29 = arith.maximumf %27, %28 : vector<272x128xf32>
    %30 = vector.extract_strided_slice %29 {offsets = [0, 0], sizes = [56, 128], strides = [1, 1]} : vector<272x128xf32> to vector<56x128xf32>
    %31 = vector.extract_strided_slice %29 {offsets = [56, 0], sizes = [56, 128], strides = [1, 1]} : vector<272x128xf32> to vector<56x128xf32>
    %32 = arith.maximumf %30, %31 : vector<56x128xf32>
    %33 = vector.extract_strided_slice %29 {offsets = [112, 0], sizes = [56, 128], strides = [1, 1]} : vector<272x128xf32> to vector<56x128xf32>
    %34 = vector.extract_strided_slice %29 {offsets = [168, 0], sizes = [56, 128], strides = [1, 1]} : vector<272x128xf32> to vector<56x128xf32>
    %35 = arith.maximumf %33, %34 : vector<56x128xf32>
    %36 = arith.maximumf %32, %35 : vector<56x128xf32>
    %c0_14 = arith.constant 0 : index
    %c0_15 = arith.constant 0 : index
    %37 = vector.load %arg4[%c0_14, %c0_15] : memref<56x128xf32, #tpu.memory_space<vmem>>, vector<56x128xf32>
    tpu.vector_store %arg4[%c0_14, %c0_15], %36 {strides = array<i32>} : memref<56x128xf32, #tpu.memory_space<vmem>>, vector<56x128xf32>,
    return
  }
}

module attributes {stable_mosaic.version = 11 : i64} {
  func.func @_mlp_head_kernel(%arg0: memref<2x1250xf32, #tpu.memory_space<vmem>>, %arg1: memref<1250x1024xbf16, #tpu.memory_space<vmem>>, %arg2: memref<1x1024xf32, #tpu.memory_space<vmem>>, %arg3: memref<1024x128xbf16, #tpu.memory_space<vmem>>, %arg4: memref<1x128xf32, #tpu.memory_space<vmem>>, %arg5: memref<128x128xbf16, #tpu.memory_space<vmem>>, %arg6: memref<1x128xf32, #tpu.memory_space<vmem>>, %arg7: memref<2x128xf32, #tpu.memory_space<vmem>>) attributes {dimension_semantics = [], scalar_prefetch = 0 : i64, scratch_operands = 0 : i64, tpu.core_type = #tpu.core_type<tc>} {
    %c0 = arith.constant 0 : index
    %c0_0 = arith.constant 0 : index
    %0 = vector.load %arg0[%c0, %c0_0] : memref<2x1250xf32, #tpu.memory_space<vmem>>, vector<2x1250xf32>
    %1 = arith.truncf %0 : vector<2x1250xf32> to vector<2x1250xbf16>
    %c0_1 = arith.constant 0 : index
    %c0_2 = arith.constant 0 : index
    %2 = vector.load %arg1[%c0_1, %c0_2] : memref<1250x1024xbf16, #tpu.memory_space<vmem>>, vector<1250x1024xbf16>
    %cst = arith.constant dense<0.000000e+00> : vector<2x1024xf32>
    %3 = tpu.matmul %1, %2, %cst {dimension_numbers = #tpu.dot_dimension_numbers<[1], [0], [0], [1], [0, 0, 1, 1], [], []>} : vector<2x1250xbf16>, vector<1250x1024xbf16>, vector<2x1024xf32> -> vector<2x1024xf32>
    %c0_3 = arith.constant 0 : index
    %c0_4 = arith.constant 0 : index
    %4 = vector.load %arg2[%c0_3, %c0_4] : memref<1x1024xf32, #tpu.memory_space<vmem>>, vector<1x1024xf32>
    %5 = vector.broadcast %4 : vector<1x1024xf32> to vector<2x1024xf32>
    %6 = arith.addf %3, %5 : vector<2x1024xf32>
    %cst_5 = arith.constant 0.000000e+00 : f32
    %7 = vector.broadcast %cst_5 : f32 to vector<2x1024xf32>
    %8 = arith.maximumf %6, %7 : vector<2x1024xf32>
    %9 = arith.truncf %8 : vector<2x1024xf32> to vector<2x1024xbf16>
    %c0_6 = arith.constant 0 : index
    %c0_7 = arith.constant 0 : index
    %10 = vector.load %arg3[%c0_6, %c0_7] : memref<1024x128xbf16, #tpu.memory_space<vmem>>, vector<1024x128xbf16>
    %cst_8 = arith.constant dense<0.000000e+00> : vector<2x128xf32>
    %11 = tpu.matmul %9, %10, %cst_8 {dimension_numbers = #tpu.dot_dimension_numbers<[1], [0], [0], [1], [0, 0, 1, 1], [], []>} : vector<2x1024xbf16>, vector<1024x128xbf16>, vector<2x128xf32> -> vector<2x128xf32>
    %c0_9 = arith.constant 0 : index
    %c0_10 = arith.constant 0 : index
    %12 = vector.load %arg4[%c0_9, %c0_10] : memref<1x128xf32, #tpu.memory_space<vmem>>, vector<1x128xf32>
    %13 = vector.broadcast %12 : vector<1x128xf32> to vector<2x128xf32>
    %14 = arith.addf %11, %13 : vector<2x128xf32>
    %cst_11 = arith.constant 0.000000e+00 : f32
    %15 = vector.broadcast %cst_11 : f32 to vector<2x128xf32>
    %16 = arith.maximumf %14, %15 : vector<2x128xf32>
    %17 = arith.truncf %16 : vector<2x128xf32> to vector<2x128xbf16>
    %c0_12 = arith.constant 0 : index
    %c0_13 = arith.constant 0 : index
    %18 = vector.load %arg5[%c0_12, %c0_13] : memref<128x128xbf16, #tpu.memory_space<vmem>>, vector<128x128xbf16>
    %cst_14 = arith.constant dense<0.000000e+00> : vector<2x128xf32>
    %19 = tpu.matmul %17, %18, %cst_14 {dimension_numbers = #tpu.dot_dimension_numbers<[1], [0], [0], [1], [0, 0, 1, 1], [], []>} : vector<2x128xbf16>, vector<128x128xbf16>, vector<2x128xf32> -> vector<2x128xf32>
    %c0_15 = arith.constant 0 : index
    %c0_16 = arith.constant 0 : index
    %20 = vector.load %arg6[%c0_15, %c0_16] : memref<1x128xf32, #tpu.memory_space<vmem>>, vector<1x128xf32>
    %21 = vector.broadcast %20 : vector<1x128xf32> to vector<2x128xf32>
    %22 = arith.addf %19, %21 : vector<2x128xf32>
    %c0_17 = arith.constant 0 : index
    %c0_18 = arith.constant 0 : index
    %23 = vector.load %arg7[%c0_17, %c0_18] : memref<2x128xf32, #tpu.memory_space<vmem>>, vector<2x128xf32>
    tpu.vector_store %arg7[%c0_17, %c0_18], %22 {strides = array<i32>} : memref<2x128xf32, #tpu.memory_space<vmem>>, vector<2x128xf32>,
    return
  }
}

</mosaic_0001>

<llo_original>
// kernel: cnn_forward.3
$region0: #{cnn_forward.3}
  #allocation0 [shape = 'u32[]', space=smem, size = 0x4, offset = 0x4, fixed_abs, tag = 'smem constant byte address 0x4 - core index']
  #allocation1 [shape = 'u32[144,128]{1,0:T(1,128)}', space=vmem, size = 0x12000, scoped, tag = 'internal scratch']
  %s0 = inlined_call_operand.vmem [shape: bf16[1376,9], index: 0, kind: input, shape index: {}]
  %s1 = inlined_call_operand.vmem [shape: bf16[9,128], index: 1, kind: input, shape index: {}]
  %s2 = inlined_call_operand.vmem [shape: f32[1,128], index: 2, kind: input, shape index: {}]
  %s3 = inlined_call_operand.vmem [shape: f32[1,128], index: 3, kind: input, shape index: {}]
  %s4 = inlined_call_operand.vmem [shape: f32[344,128], index: 4, kind: output, shape index: {}]
  %s5 = sld [smem:[#allocation0]]
  $region26: #{cnn_forward.3} parent=0
    _
  %s7 = ssub.s32 1, %s5
  %s8 = scalar_select 0, %s7, %s5
  // Predicated region
  $region2: #{cnn_forward.3} parent=0 // pred_check
    _
  $region3: #{cnn_forward.3} parent=0 // pred_check_branch
    %10 = sbr.rel (0) target = $region5
  $region4: #{cnn_forward.3} parent=0 // pred_region
    _
  $region5: #{cnn_forward.3} parent=0 // pred_fallthru
    _
  // Predicated region
  $region6: #{cnn_forward.3} parent=0 // pred_check
    _
  $region7: #{cnn_forward.3} parent=0 // pred_check_branch
    %12 = sbr.rel (0) target = $region9
  $region8: #{cnn_forward.3} parent=0 // pred_region
    _
  $region9: #{cnn_forward.3} parent=0 // pred_fallthru
    _
  // Predicated region
  $region10: #{cnn_forward.3} parent=0 // pred_check
    _
  $region11: #{cnn_forward.3} parent=0 // pred_check_branch
    %14 = sbr.rel (0) target = $region13
  $region12: #{cnn_forward.3} parent=0 // pred_region
    _
  $region13: #{cnn_forward.3} parent=0 // pred_fallthru
    _
  // Predicated region
  $region14: #{cnn_forward.3} parent=0 // pred_check
    _
  $region15: #{cnn_forward.3} parent=0 // pred_check_branch
    %16 = sbr.rel (0) target = $region17
  $region16: #{cnn_forward.3} parent=0 // pred_region
    _
  $region17: #{cnn_forward.3} parent=0 // pred_fallthru
    _
  %v18 = vld [vmem:[%s0] sm:$0xf]
  %v19 = vld [vmem:[%s0 + $0x4] sm:$0xf]
  %v20 = vld [vmem:[%s0 + $0x8] sm:$0xf]
  %v21 = vld [vmem:[%s0 + $0xc] sm:$0xf]
  %v22 = vld [vmem:[%s0 + $0x10] sm:$0xf]
  %v23 = vld [vmem:[%s0 + $0x14] sm:$0xf]
  %v24 = vld [vmem:[%s0 + $0x18] sm:$0xf]
  %v25 = vld [vmem:[%s0 + $0x1c] sm:$0xf]
  %v26 = vld [vmem:[%s0 + $0x20] sm:$0xf]
  %v27 = vld [vmem:[%s0 + $0x24] sm:$0xf]
  %v28 = vld [vmem:[%s0 + $0x28] sm:$0xf]
  %v29 = vld [vmem:[%s0 + $0x2c] sm:$0xf]
  %v30 = vld [vmem:[%s0 + $0x30] sm:$0xf]
  %v31 = vld [vmem:[%s0 + $0x34] sm:$0xf]
  %v32 = vld [vmem:[%s0 + $0x38] sm:$0xf]
  %v33 = vld [vmem:[%s0 + $0x3c] sm:$0xf]
  %v34 = vld [vmem:[%s0 + $0x40] sm:$0xf]
  %v35 = vld [vmem:[%s0 + $0x44] sm:$0xf]
  %v36 = vld [vmem:[%s0 + $0x48] sm:$0xf]
  %v37 = vld [vmem:[%s0 + $0x4c] sm:$0xf]
  %v38 = vld [vmem:[%s0 + $0x50] sm:$0xf]
  %v39 = vld [vmem:[%s0 + $0x54] sm:$0xf]
  %v40 = vld [vmem:[%s0 + $0x58] sm:$0xf]
  %v41 = vld [vmem:[%s0 + $0x5c] sm:$0xf]
  %v42 = vld [vmem:[%s0 + $0x60] sm:$0xf]
  %v43 = vld [vmem:[%s0 + $0x64] sm:$0xf]
  %v44 = vld [vmem:[%s0 + $0x68] sm:$0xf]
  %v45 = vld [vmem:[%s0 + $0x6c] sm:$0xf]
  %v46 = vld [vmem:[%s0 + $0x70] sm:$0xf]
  %v47 = vld [vmem:[%s0 + $0x74] sm:$0xf]
  %v48 = vld [vmem:[%s0 + $0x78] sm:$0xf]
  %v49 = vld [vmem:[%s0 + $0x7c] sm:$0xf]
  %v50 = vld [vmem:[%s0 + $0x80] sm:$0xf]
  %v51 = vld [vmem:[%s0 + $0x84] sm:$0xf]
  %v52 = vld [vmem:[%s0 + $0x88] sm:$0xf]
  %v53 = vld [vmem:[%s0 + $0x8c] sm:$0xf]
  %v54 = vld [vmem:[%s0 + $0x90] sm:$0xf]
  %v55 = vld [vmem:[%s0 + $0x94] sm:$0xf]
  %v56 = vld [vmem:[%s0 + $0x98] sm:$0xf]
  %v57 = vld [vmem:[%s0 + $0x9c] sm:$0xf]
  %v58 = vld [vmem:[%s0 + $0xa0] sm:$0xf]
  %v59 = vld [vmem:[%s0 + $0xa4] sm:$0xf]
  %v60 = vld [vmem:[%s0 + $0xa8] sm:$0xf]
  %v61 = vld [vmem:[%s0 + $0xac] sm:$0xf]
  %v62 = vld [vmem:[%s0 + $0xb0] sm:$0xf]
  %v63 = vld [vmem:[%s0 + $0xb4] sm:$0xf]
  %v64 = vld [vmem:[%s0 + $0xb8] sm:$0xf]
  %v65 = vld [vmem:[%s0 + $0xbc] sm:$0xf]
  %v66 = vld [vmem:[%s0 + $0xc0] sm:$0xf]
  %v67 = vld [vmem:[%s0 + $0xc4] sm:$0xf]
  %v68 = vld [vmem:[%s0 + $0xc8] sm:$0xf]
  %v69 = vld [vmem:[%s0 + $0xcc] sm:$0xf]
  %v70 = vld [vmem:[%s0 + $0xd0] sm:$0xf]
  %v71 = vld [vmem:[%s0 + $0xd4] sm:$0xf]
  %v72 = vld [vmem:[%s0 + $0xd8] sm:$0xf]
  %v73 = vld [vmem:[%s0 + $0xdc] sm:$0xf]
  %v74 = vld [vmem:[%s0 + $0xe0] sm:$0xf]
  %v75 = vld [vmem:[%s0 + $0xe4] sm:$0xf]
  %v76 = vld [vmem:[%s0 + $0xe8] sm:$0xf]
  %v77 = vld [vmem:[%s0 + $0xec] sm:$0xf]
  %v78 = vld [vmem:[%s0 + $0xf0] sm:$0xf]
  %v79 = vld [vmem:[%s0 + $0xf4] sm:$0xf]
  %v80 = vld [vmem:[%s0 + $0xf8] sm:$0xf]
  %v81 = vld [vmem:[%s0 + $0xfc] sm:$0xf]
  %v82 = vld [vmem:[%s0 + $0x100] sm:$0xf]
  %v83 = vld [vmem:[%s0 + $0x104] sm:$0xf]
  %v84 = vld [vmem:[%s0 + $0x108] sm:$0xf]
  %v85 = vld [vmem:[%s0 + $0x10c] sm:$0xf]
  %v86 = vld [vmem:[%s0 + $0x110] sm:$0xf]
  %v87 = vld [vmem:[%s0 + $0x114] sm:$0xf]
  %v88 = vld [vmem:[%s0 + $0x118] sm:$0xf]
  %v89 = vld [vmem:[%s0 + $0x11c] sm:$0xf]
  %v90 = vld [vmem:[%s0 + $0x120] sm:$0xf]
  %v91 = vld [vmem:[%s0 + $0x124] sm:$0xf]
  %v92 = vld [vmem:[%s0 + $0x128] sm:$0xf]
  %v93 = vld [vmem:[%s0 + $0x12c] sm:$0xf]
  %v94 = vld [vmem:[%s0 + $0x130] sm:$0xf]
  %v95 = vld [vmem:[%s0 + $0x134] sm:$0xf]
  %v96 = vld [vmem:[%s0 + $0x138] sm:$0xf]
  %v97 = vld [vmem:[%s0 + $0x13c] sm:$0xf]
  %v98 = vld [vmem:[%s0 + $0x140] sm:$0xf]
  %v99 = vld [vmem:[%s0 + $0x144] sm:$0xf]
  %v100 = vld [vmem:[%s0 + $0x148] sm:$0xf]
  %v101 = vld [vmem:[%s0 + $0x14c] sm:$0xf]
  %v102 = vld [vmem:[%s0 + $0x150] sm:$0xf]
  %v103 = vld [vmem:[%s0 + $0x154] sm:$0xf]
  %v104 = vld [vmem:[%s0 + $0x158] sm:$0xf]
  %v105 = vld [vmem:[%s0 + $0x15c] sm:$0xf]
  %v106 = vld [vmem:[%s0 + $0x160] sm:$0xf]
  %v107 = vld [vmem:[%s0 + $0x164] sm:$0xf]
  %v108 = vld [vmem:[%s0 + $0x168] sm:$0xf]
  %v109 = vld [vmem:[%s0 + $0x16c] sm:$0xf]
  %v110 = vld [vmem:[%s0 + $0x170] sm:$0xf]
  %v111 = vld [vmem:[%s0 + $0x174] sm:$0xf]
  %v112 = vld [vmem:[%s0 + $0x178] sm:$0xf]
  %v113 = vld [vmem:[%s0 + $0x17c] sm:$0xf]
  %v114 = vld [vmem:[%s0 + $0x180] sm:$0xf]
  %v115 = vld [vmem:[%s0 + $0x184] sm:$0xf]
  %v116 = vld [vmem:[%s0 + $0x188] sm:$0xf]
  %v117 = vld [vmem:[%s0 + $0x18c] sm:$0xf]
  %v118 = vld [vmem:[%s0 + $0x190] sm:$0xf]
  %v119 = vld [vmem:[%s0 + $0x194] sm:$0xf]
  %v120 = vld [vmem:[%s0 + $0x198] sm:$0xf]
  %v121 = vld [vmem:[%s0 + $0x19c] sm:$0xf]
  %v122 = vld [vmem:[%s0 + $0x1a0] sm:$0xf]
  %v123 = vld [vmem:[%s0 + $0x1a4] sm:$0xf]
  %v124 = vld [vmem:[%s0 + $0x1a8] sm:$0xf]
  %v125 = vld [vmem:[%s0 + $0x1ac] sm:$0xf]
  %v126 = vld [vmem:[%s0 + $0x1b0] sm:$0xf]
  %v127 = vld [vmem:[%s0 + $0x1b4] sm:$0xf]
  %v128 = vld [vmem:[%s0 + $0x1b8] sm:$0xf]
  %v129 = vld [vmem:[%s0 + $0x1bc] sm:$0xf]
  %v130 = vld [vmem:[%s0 + $0x1c0] sm:$0xf]
  %v131 = vld [vmem:[%s0 + $0x1c4] sm:$0xf]
  %v132 = vld [vmem:[%s0 + $0x1c8] sm:$0xf]
  %v133 = vld [vmem:[%s0 + $0x1cc] sm:$0xf]
  %v134 = vld [vmem:[%s0 + $0x1d0] sm:$0xf]
  %v135 = vld [vmem:[%s0 + $0x1d4] sm:$0xf]
  %v136 = vld [vmem:[%s0 + $0x1d8] sm:$0xf]
  %v137 = vld [vmem:[%s0 + $0x1dc] sm:$0xf]
  %v138 = vld [vmem:[%s0 + $0x1e0] sm:$0xf]
  %v139 = vld [vmem:[%s0 + $0x1e4] sm:$0xf]
  %v140 = vld [vmem:[%s0 + $0x1e8] sm:$0xf]
  %v141 = vld [vmem:[%s0 + $0x1ec] sm:$0xf]
  %v142 = vld [vmem:[%s0 + $0x1f0] sm:$0xf]
  %v143 = vld [vmem:[%s0 + $0x1f4] sm:$0xf]
  %v144 = vld [vmem:[%s0 + $0x1f8] sm:$0xf]
  %v145 = vld [vmem:[%s0 + $0x1fc] sm:$0xf]
  %v146 = vld [vmem:[%s0 + $0x200] sm:$0xf]
  %v147 = vld [vmem:[%s0 + $0x204] sm:$0xf]
  %v148 = vld [vmem:[%s0 + $0x208] sm:$0xf]
  %v149 = vld [vmem:[%s0 + $0x20c] sm:$0xf]
  %v150 = vld [vmem:[%s0 + $0x210] sm:$0xf]
  %v151 = vld [vmem:[%s0 + $0x214] sm:$0xf]
  %v152 = vld [vmem:[%s0 + $0x218] sm:$0xf]
  %v153 = vld [vmem:[%s0 + $0x21c] sm:$0xf]
  %v154 = vld [vmem:[%s0 + $0x220] sm:$0xf]
  %v155 = vld [vmem:[%s0 + $0x224] sm:$0xf]
  %v156 = vld [vmem:[%s0 + $0x228] sm:$0xf]
  %v157 = vld [vmem:[%s0 + $0x22c] sm:$0xf]
  %v158 = vld [vmem:[%s0 + $0x230] sm:$0xf]
  %v159 = vld [vmem:[%s0 + $0x234] sm:$0xf]
  %v160 = vld [vmem:[%s0 + $0x238] sm:$0xf]
  %v161 = vld [vmem:[%s0 + $0x23c] sm:$0xf]
  %v162 = vld [vmem:[%s0 + $0x240] sm:$0xf]
  %v163 = vld [vmem:[%s0 + $0x244] sm:$0xf]
  %v164 = vld [vmem:[%s0 + $0x248] sm:$0xf]
  %v165 = vld [vmem:[%s0 + $0x24c] sm:$0xf]
  %v166 = vld [vmem:[%s0 + $0x250] sm:$0xf]
  %v167 = vld [vmem:[%s0 + $0x254] sm:$0xf]
  %v168 = vld [vmem:[%s0 + $0x258] sm:$0xf]
  %v169 = vld [vmem:[%s0 + $0x25c] sm:$0xf]
  %v170 = vld [vmem:[%s0 + $0x260] sm:$0xf]
  %v171 = vld [vmem:[%s0 + $0x264] sm:$0xf]
  %v172 = vld [vmem:[%s0 + $0x268] sm:$0xf]
  %v173 = vld [vmem:[%s0 + $0x26c] sm:$0xf]
  %v174 = vld [vmem:[%s0 + $0x270] sm:$0xf]
  %v175 = vld [vmem:[%s0 + $0x274] sm:$0xf]
  %v176 = vld [vmem:[%s0 + $0x278] sm:$0xf]
  %v177 = vld [vmem:[%s0 + $0x27c] sm:$0xf]
  %v178 = vld [vmem:[%s0 + $0x280] sm:$0xf]
  %v179 = vld [vmem:[%s0 + $0x284] sm:$0xf]
  %v180 = vld [vmem:[%s0 + $0x288] sm:$0xf]
  %v181 = vld [vmem:[%s0 + $0x28c] sm:$0xf]
  %v182 = vld [vmem:[%s0 + $0x290] sm:$0xf]
  %v183 = vld [vmem:[%s0 + $0x294] sm:$0xf]
  %v184 = vld [vmem:[%s0 + $0x298] sm:$0xf]
  %v185 = vld [vmem:[%s0 + $0x29c] sm:$0xf]
  %v186 = vld [vmem:[%s0 + $0x2a0] sm:$0xf]
  %v187 = vld [vmem:[%s0 + $0x2a4] sm:$0xf]
  %v188 = vld [vmem:[%s0 + $0x2a8] sm:$0xf]
  %v189 = vld [vmem:[%s0 + $0x2ac] sm:$0xf]
  %v190 = vld [vmem:[%s1] sm:$0xf]
  %v191 = vld [vmem:[%s1 + $0x4] sm:$0x1]
  %v364 = vunpack.c.l.b16 %v18
  %v365 = vunpack.c.l.b16 %v19
  %v366 = vunpack.c.l.b16 %v20
  %v367 = vunpack.c.l.b16 %v21
  %v368 = vunpack.c.l.b16 %v22
  %v369 = vunpack.c.l.b16 %v23
  %v370 = vunpack.c.l.b16 %v24
  %v371 = vunpack.c.l.b16 %v25
  %v372 = vunpack.c.l.b16 %v26
  %v373 = vunpack.c.l.b16 %v27
  %v374 = vunpack.c.l.b16 %v28
  %v375 = vunpack.c.l.b16 %v29
  %v376 = vunpack.c.l.b16 %v30
  %v377 = vunpack.c.l.b16 %v31
  %v378 = vunpack.c.l.b16 %v32
  %v379 = vunpack.c.l.b16 %v33
  %v380 = vunpack.c.l.b16 %v34
  %v381 = vunpack.c.l.b16 %v35
  %v382 = vunpack.c.l.b16 %v36
  %v383 = vunpack.c.l.b16 %v37
  %v384 = vunpack.c.l.b16 %v38
  %v385 = vunpack.c.l.b16 %v39
  %v386 = vunpack.c.l.b16 %v40
  %v387 = vunpack.c.l.b16 %v41
  %v388 = vunpack.c.l.b16 %v42
  %v389 = vunpack.c.l.b16 %v43
  %v390 = vunpack.c.l.b16 %v44
  %v391 = vunpack.c.l.b16 %v45
  %v392 = vunpack.c.l.b16 %v46
  %v393 = vunpack.c.l.b16 %v47
  %v394 = vunpack.c.l.b16 %v48
  %v395 = vunpack.c.l.b16 %v49
  %v396 = vunpack.c.l.b16 %v50
  %v397 = vunpack.c.l.b16 %v51
  %v398 = vunpack.c.l.b16 %v52
  %v399 = vunpack.c.l.b16 %v53
  %v400 = vunpack.c.l.b16 %v54
  %v401 = vunpack.c.l.b16 %v55
  %v402 = vunpack.c.l.b16 %v56
  %v403 = vunpack.c.l.b16 %v57
  %v404 = vunpack.c.l.b16 %v58
  %v405 = vunpack.c.l.b16 %v59
  %v406 = vunpack.c.l.b16 %v60
  %v407 = vunpack.c.l.b16 %v61
  %v408 = vunpack.c.l.b16 %v62
  %v409 = vunpack.c.l.b16 %v63
  %v410 = vunpack.c.l.b16 %v64
  %v411 = vunpack.c.l.b16 %v65
  %v412 = vunpack.c.l.b16 %v66
  %v413 = vunpack.c.l.b16 %v67
  %v414 = vunpack.c.l.b16 %v68
  %v415 = vunpack.c.l.b16 %v69
  %v416 = vunpack.c.l.b16 %v70
  %v417 = vunpack.c.l.b16 %v71
  %v418 = vunpack.c.l.b16 %v72
  %v419 = vunpack.c.l.b16 %v73
  %v420 = vunpack.c.l.b16 %v74
  %v421 = vunpack.c.l.b16 %v75
  %v422 = vunpack.c.l.b16 %v76
  %v423 = vunpack.c.l.b16 %v77
  %v424 = vunpack.c.l.b16 %v78
  %v425 = vunpack.c.l.b16 %v79
  %v426 = vunpack.c.l.b16 %v80
  %v427 = vunpack.c.l.b16 %v81
  %v428 = vunpack.c.l.b16 %v82
  %v429 = vunpack.c.l.b16 %v83
  %v430 = vunpack.c.l.b16 %v84
  %v431 = vunpack.c.l.b16 %v85
  %v432 = vunpack.c.l.b16 %v86
  %v433 = vunpack.c.l.b16 %v87
  %v434 = vunpack.c.l.b16 %v88
  %v435 = vunpack.c.l.b16 %v89
  %v436 = vunpack.c.l.b16 %v90
  %v437 = vunpack.c.l.b16 %v91
  %v438 = vunpack.c.l.b16 %v92
  %v439 = vunpack.c.l.b16 %v93
  %v440 = vunpack.c.l.b16 %v94
  %v441 = vunpack.c.l.b16 %v95
  %v442 = vunpack.c.l.b16 %v96
  %v443 = vunpack.c.l.b16 %v97
  %v444 = vunpack.c.l.b16 %v98
  %v445 = vunpack.c.l.b16 %v99
  %v446 = vunpack.c.l.b16 %v100
  %v447 = vunpack.c.l.b16 %v101
  %v448 = vunpack.c.l.b16 %v102
  %v449 = vunpack.c.l.b16 %v103
  %v450 = vunpack.c.l.b16 %v104
  %v451 = vunpack.c.l.b16 %v105
  %v452 = vunpack.c.l.b16 %v106
  %v453 = vunpack.c.l.b16 %v107
  %v454 = vunpack.c.l.b16 %v108
  %v455 = vunpack.c.l.b16 %v109
  %v456 = vunpack.c.l.b16 %v110
  %v457 = vunpack.c.l.b16 %v111
  %v458 = vunpack.c.l.b16 %v112
  %v459 = vunpack.c.l.b16 %v113
  %v460 = vunpack.c.l.b16 %v114
  %v461 = vunpack.c.l.b16 %v115
  %v462 = vunpack.c.l.b16 %v116
  %v463 = vunpack.c.l.b16 %v117
  %v464 = vunpack.c.l.b16 %v118
  %v465 = vunpack.c.l.b16 %v119
  %v466 = vunpack.c.l.b16 %v120
  %v467 = vunpack.c.l.b16 %v121
  %v468 = vunpack.c.l.b16 %v122
  %v469 = vunpack.c.l.b16 %v123
  %v470 = vunpack.c.l.b16 %v124
  %v471 = vunpack.c.l.b16 %v125
  %v472 = vunpack.c.l.b16 %v126
  %v473 = vunpack.c.l.b16 %v127
  %v474 = vunpack.c.l.b16 %v128
  %v475 = vunpack.c.l.b16 %v129
  %v476 = vunpack.c.l.b16 %v130
  %v477 = vunpack.c.l.b16 %v131
  %v478 = vunpack.c.l.b16 %v132
  %v479 = vunpack.c.l.b16 %v133
  %v480 = vunpack.c.l.b16 %v134
  %v481 = vunpack.c.l.b16 %v135
  %v482 = vunpack.c.l.b16 %v136
  %v483 = vunpack.c.l.b16 %v137
  %v484 = vunpack.c.l.b16 %v138
  %v485 = vunpack.c.l.b16 %v139
  %v486 = vunpack.c.l.b16 %v140
  %v487 = vunpack.c.l.b16 %v141
  %v488 = vunpack.c.l.b16 %v142
  %v489 = vunpack.c.l.b16 %v143
  %v490 = vunpack.c.l.b16 %v144
  %v491 = vunpack.c.l.b16 %v145
  %v492 = vunpack.c.l.b16 %v146
  %v493 = vunpack.c.l.b16 %v147
  %v494 = vunpack.c.l.b16 %v148
  %v495 = vunpack.c.l.b16 %v149
  %v496 = vunpack.c.l.b16 %v150
  %v497 = vunpack.c.l.b16 %v151
  %v498 = vunpack.c.l.b16 %v152
  %v499 = vunpack.c.l.b16 %v153
  %v500 = vunpack.c.l.b16 %v154
  %v501 = vunpack.c.l.b16 %v155
  %v502 = vunpack.c.l.b16 %v156
  %v503 = vunpack.c.l.b16 %v157
  %v504 = vunpack.c.l.b16 %v158
  %v505 = vunpack.c.l.b16 %v159
  %v506 = vunpack.c.l.b16 %v160
  %v507 = vunpack.c.l.b16 %v161
  %v508 = vunpack.c.l.b16 %v162
  %v509 = vunpack.c.l.b16 %v163
  %v510 = vunpack.c.l.b16 %v164
  %v511 = vunpack.c.l.b16 %v165
  %v512 = vunpack.c.l.b16 %v166
  %v513 = vunpack.c.l.b16 %v167
  %v514 = vunpack.c.l.b16 %v168
  %v515 = vunpack.c.l.b16 %v169
  %v516 = vunpack.c.l.b16 %v170
  %v517 = vunpack.c.l.b16 %v171
  %v518 = vunpack.c.l.b16 %v172
  %v519 = vunpack.c.l.b16 %v173
  %v520 = vunpack.c.l.b16 %v174
  %v521 = vunpack.c.l.b16 %v175
  %v522 = vunpack.c.l.b16 %v176
  %v523 = vunpack.c.l.b16 %v177
  %v524 = vunpack.c.l.b16 %v178
  %v525 = vunpack.c.l.b16 %v179
  %v526 = vunpack.c.l.b16 %v180
  %v527 = vunpack.c.l.b16 %v181
  %v528 = vunpack.c.l.b16 %v182
  %v529 = vunpack.c.l.b16 %v183
  %v530 = vunpack.c.l.b16 %v184
  %v531 = vunpack.c.l.b16 %v185
  %v532 = vunpack.c.l.b16 %v186
  %v533 = vunpack.c.l.b16 %v187
  %v534 = vunpack.c.l.b16 %v188
  %v535 = vunpack.c.l.b16 %v189
  %v536 = vpack.c.b16 %v365, %v364
  %v537 = vpack.c.b16 %v367, %v366
  %v538 = vpack.c.b16 %v369, %v368
  %v539 = vpack.c.b16 %v371, %v370
  %v540 = vpack.c.b16 %v373, %v372
  %v541 = vpack.c.b16 %v375, %v374
  %v542 = vpack.c.b16 %v377, %v376
  %v543 = vpack.c.b16 %v379, %v378
  %v544 = vpack.c.b16 %v381, %v380
  %v545 = vpack.c.b16 %v383, %v382
  %v546 = vpack.c.b16 %v385, %v384
  %v547 = vpack.c.b16 %v387, %v386
  %v548 = vpack.c.b16 %v389, %v388
  %v549 = vpack.c.b16 %v391, %v390
  %v550 = vpack.c.b16 %v393, %v392
  %v551 = vpack.c.b16 %v395, %v394
  %v552 = vpack.c.b16 %v397, %v396
  %v553 = vpack.c.b16 %v399, %v398
  %v554 = vpack.c.b16 %v401, %v400
  %v555 = vpack.c.b16 %v403, %v402
  %v556 = vpack.c.b16 %v405, %v404
  %v557 = vpack.c.b16 %v407, %v406
  %v558 = vpack.c.b16 %v409, %v408
  %v559 = vpack.c.b16 %v411, %v410
  %v560 = vpack.c.b16 %v413, %v412
  %v561 = vpack.c.b16 %v415, %v414
  %v562 = vpack.c.b16 %v417, %v416
  %v563 = vpack.c.b16 %v419, %v418
  %v564 = vpack.c.b16 %v421, %v420
  %v565 = vpack.c.b16 %v423, %v422
  %v566 = vpack.c.b16 %v425, %v424
  %v567 = vpack.c.b16 %v427, %v426
  %v568 = vpack.c.b16 %v429, %v428
  %v569 = vpack.c.b16 %v431, %v430
  %v570 = vpack.c.b16 %v433, %v432
  %v571 = vpack.c.b16 %v435, %v434
  %v572 = vpack.c.b16 %v437, %v436
  %v573 = vpack.c.b16 %v439, %v438
  %v574 = vpack.c.b16 %v441, %v440
  %v575 = vpack.c.b16 %v443, %v442
  %v576 = vpack.c.b16 %v445, %v444
  %v577 = vpack.c.b16 %v447, %v446
  %v578 = vpack.c.b16 %v449, %v448
  %v579 = vpack.c.b16 %v451, %v450
  %v580 = vpack.c.b16 %v453, %v452
  %v581 = vpack.c.b16 %v455, %v454
  %v582 = vpack.c.b16 %v457, %v456
  %v583 = vpack.c.b16 %v459, %v458
  %v584 = vpack.c.b16 %v461, %v460
  %v585 = vpack.c.b16 %v463, %v462
  %v586 = vpack.c.b16 %v465, %v464
  %v587 = vpack.c.b16 %v467, %v466
  %v588 = vpack.c.b16 %v469, %v468
  %v589 = vpack.c.b16 %v471, %v470
  %v590 = vpack.c.b16 %v473, %v472
  %v591 = vpack.c.b16 %v475, %v474
  %v592 = vpack.c.b16 %v477, %v476
  %v593 = vpack.c.b16 %v479, %v478
  %v594 = vpack.c.b16 %v481, %v480
  %v595 = vpack.c.b16 %v483, %v482
  %v596 = vpack.c.b16 %v485, %v484
  %v597 = vpack.c.b16 %v487, %v486
  %v598 = vpack.c.b16 %v489, %v488
  %v599 = vpack.c.b16 %v491, %v490
  %v600 = vpack.c.b16 %v493, %v492
  %v601 = vpack.c.b16 %v495, %v494
  %v602 = vpack.c.b16 %v497, %v496
  %v603 = vpack.c.b16 %v499, %v498
  %v604 = vpack.c.b16 %v501, %v500
  %v605 = vpack.c.b16 %v503, %v502
  %v606 = vpack.c.b16 %v505, %v504
  %v607 = vpack.c.b16 %v507, %v506
  %v608 = vpack.c.b16 %v509, %v508
  %v609 = vpack.c.b16 %v511, %v510
  %v610 = vpack.c.b16 %v513, %v512
  %v611 = vpack.c.b16 %v515, %v514
  %v612 = vpack.c.b16 %v517, %v516
  %v613 = vpack.c.b16 %v519, %v518
  %v614 = vpack.c.b16 %v521, %v520
  %v615 = vpack.c.b16 %v523, %v522
  %v616 = vpack.c.b16 %v525, %v524
  %v617 = vpack.c.b16 %v527, %v526
  %v618 = vpack.c.b16 %v529, %v528
  %v619 = vpack.c.b16 %v531, %v530
  %v620 = vpack.c.b16 %v533, %v532
  %v621 = vpack.c.b16 %v535, %v534
  %v624 = vunpack.c.l.b16 %v190
  %v625 = vunpack.c.l.b16 %v191
  %v626 = vpack.c.b16 %v625, %v624
  %vm627 = vcmask 72704
  %v629 = vsel %vm627, %v536, 0
  %v632 = vsel %vm627, %v537, 0
  %v635 = vsel %vm627, %v538, 0
  %v638 = vsel %vm627, %v539, 0
  %v641 = vsel %vm627, %v540, 0
  %v644 = vsel %vm627, %v541, 0
  %v647 = vsel %vm627, %v542, 0
  %v650 = vsel %vm627, %v543, 0
  %v653 = vsel %vm627, %v544, 0
  %v656 = vsel %vm627, %v545, 0
  %v659 = vsel %vm627, %v546, 0
  %v662 = vsel %vm627, %v547, 0
  %v665 = vsel %vm627, %v548, 0
  %v668 = vsel %vm627, %v549, 0
  %v671 = vsel %vm627, %v550, 0
  %v674 = vsel %vm627, %v551, 0
  %v677 = vsel %vm627, %v552, 0
  %v680 = vsel %vm627, %v553, 0
  %v683 = vsel %vm627, %v554, 0
  %v686 = vsel %vm627, %v555, 0
  %v689 = vsel %vm627, %v556, 0
  %v692 = vsel %vm627, %v557, 0
  %v695 = vsel %vm627, %v558, 0
  %v698 = vsel %vm627, %v559, 0
  %v701 = vsel %vm627, %v560, 0
  %v704 = vsel %vm627, %v561, 0
  %v707 = vsel %vm627, %v562, 0
  %v710 = vsel %vm627, %v563, 0
  %v713 = vsel %vm627, %v564, 0
  %v716 = vsel %vm627, %v565, 0
  %v719 = vsel %vm627, %v566, 0
  %v722 = vsel %vm627, %v567, 0
  %v725 = vsel %vm627, %v568, 0
  %v728 = vsel %vm627, %v569, 0
  %v731 = vsel %vm627, %v570, 0
  %v734 = vsel %vm627, %v571, 0
  %v737 = vsel %vm627, %v572, 0
  %v740 = vsel %vm627, %v573, 0
  %v743 = vsel %vm627, %v574, 0
  %v746 = vsel %vm627, %v575, 0
  %v749 = vsel %vm627, %v576, 0
  %v752 = vsel %vm627, %v577, 0
  %v755 = vsel %vm627, %v578, 0
  %v758 = vsel %vm627, %v579, 0
  %v761 = vsel %vm627, %v580, 0
  %v764 = vsel %vm627, %v581, 0
  %v767 = vsel %vm627, %v582, 0
  %v770 = vsel %vm627, %v583, 0
  %v773 = vsel %vm627, %v584, 0
  %v776 = vsel %vm627, %v585, 0
  %v779 = vsel %vm627, %v586, 0
  %v782 = vsel %vm627, %v587, 0
  %v785 = vsel %vm627, %v588, 0
  %v788 = vsel %vm627, %v589, 0
  %v791 = vsel %vm627, %v590, 0
  %v794 = vsel %vm627, %v591, 0
  %v797 = vsel %vm627, %v592, 0
  %v800 = vsel %vm627, %v593, 0
  %v803 = vsel %vm627, %v594, 0
  %v806 = vsel %vm627, %v595, 0
  %v809 = vsel %vm627, %v596, 0
  %v812 = vsel %vm627, %v597, 0
  %v815 = vsel %vm627, %v598, 0
  %v818 = vsel %vm627, %v599, 0
  %v821 = vsel %vm627, %v600, 0
  %v824 = vsel %vm627, %v601, 0
  %v827 = vsel %vm627, %v602, 0
  %v830 = vsel %vm627, %v603, 0
  %v833 = vsel %vm627, %v604, 0
  %v836 = vsel %vm627, %v605, 0
  %v839 = vsel %vm627, %v606, 0
  %v842 = vsel %vm627, %v607, 0
  %v845 = vsel %vm627, %v608, 0
  %v848 = vsel %vm627, %v609, 0
  %v851 = vsel %vm627, %v610, 0
  %v854 = vsel %vm627, %v611, 0
  %v857 = vsel %vm627, %v612, 0
  %v860 = vsel %vm627, %v613, 0
  %v863 = vsel %vm627, %v614, 0
  %v866 = vsel %vm627, %v615, 0
  %v869 = vsel %vm627, %v616, 0
  %v872 = vsel %vm627, %v617, 0
  %v875 = vsel %vm627, %v618, 0
  %v878 = vsel %vm627, %v619, 0
  %v881 = vsel %vm627, %v620, 0
  %v884 = vsel %vm627, %v621, 0
  %vm886 = vcmask 1043456
  %vm887 = vcmask 1044480
  %v888 = vsel %vm886, 4294967295, 65535
  %v889 = vsel %vm887, %v888, 0
  %v891 = vand.u32 %v626, %v889
  %893 = vmatprep.subr.bf16.mxu0 0
  %894 = vmatpush1.bf16.msra.mxu0 %v891
  %895 = vmatprep.subr.bf16.mxu0 0
  %896 = vmatpush1.bf16.msra.mxu0 0
  %897 = vmatprep.subr.bf16.mxu0 0
  %898 = vmatpush1.bf16.msra.mxu0 0
  %899 = vmatprep.subr.bf16.mxu0 0
  %900 = vmatpush1.bf16.msra.mxu0 0
  %901 = vmatprep.subr.bf16.mxu0 0
  %902 = vmatpush1.bf16.msra.mxu0 0
  %903 = vmatprep.subr.bf16.mxu0 0
  %904 = vmatpush1.bf16.msra.mxu0 0
  %905 = vmatprep.subr.bf16.mxu0 0
  %906 = vmatpush1.bf16.msra.mxu0 0
  %907 = vmatprep.subr.bf16.mxu0 0
  %908 = vmatpush1.bf16.msra.mxu0 0
  %909 = vmatprep.subr.bf16.mxu0 0
  %910 = vmatpush1.bf16.msra.mxu0 0
  %911 = vmatprep.subr.bf16.mxu0 0
  %912 = vmatpush1.bf16.msra.mxu0 0
  %913 = vmatprep.subr.bf16.mxu0 0
  %914 = vmatpush1.bf16.msra.mxu0 0
  %915 = vmatprep.subr.bf16.mxu0 0
  %916 = vmatpush1.bf16.msra.mxu0 0
  %917 = vmatprep.subr.bf16.mxu0 0
  %918 = vmatpush1.bf16.msra.mxu0 0
  %919 = vmatprep.subr.bf16.mxu0 0
  %920 = vmatpush1.bf16.msra.mxu0 0
  %921 = vmatprep.subr.bf16.mxu0 0
  %922 = vmatpush1.bf16.msra.mxu0 0
  %923 = vmatprep.subr.bf16.mxu0 0
  %924 = vmatpush1.bf16.msra.mxu0 0
  %925 = vmatprep.mubr.bf16.mxu0 0
  %926 = vmatmul.mubr.bf16.gmra.mrb[0].mxu0 %v629
  %v927 = vpop.f32.mrb[0].mxu0
  %v928 = vadd.f32 0.0, %v927
  %v929 = vpop.f32.mrb[0].mxu0
  %v930 = vpop.f32.mrb[0].mxu0
  %v931 = vadd.f32 0.0, %v930
  %v932 = vpop.f32.mrb[0].mxu0
  %933 = vmatprep.mubr.bf16.mxu0 0
  %934 = vmatmul.mubr.bf16.gmra.mrb[0].mxu0 %v632
  %v935 = vpop.f32.mrb[0].mxu0
  %v936 = vadd.f32 0.0, %v935
  %v937 = vpop.f32.mrb[0].mxu0
  %v938 = vpop.f32.mrb[0].mxu0
  %v939 = vadd.f32 0.0, %v938
  %v940 = vpop.f32.mrb[0].mxu0
  %941 = vmatprep.mubr.bf16.mxu0 0
  %942 = vmatmul.mubr.bf16.gmra.mrb[0].mxu0 %v635
  %v943 = vpop.f32.mrb[0].mxu0
  %v944 = vadd.f32 0.0, %v943
  %v945 = vpop.f32.mrb[0].mxu0
  %v946 = vpop.f32.mrb[0].mxu0
  %v947 = vadd.f32 0.0, %v946
  %v948 = vpop.f32.mrb[0].mxu0
  %949 = vmatprep.mubr.bf16.mxu0 0
  %950 = vmatmul.mubr.bf16.gmra.mrb[0].mxu0 %v638
  %v951 = vpop.f32.mrb[0].mxu0
  %v952 = vadd.f32 0.0, %v951
  %v953 = vpop.f32.mrb[0].mxu0
  %v954 = vpop.f32.mrb[0].mxu0
  %v955 = vadd.f32 0.0, %v954
  %v956 = vpop.f32.mrb[0].mxu0
  %957 = vmatprep.mubr.bf16.mxu0 0
  %958 = vmatmul.mubr.bf16.gmra.mrb[0].mxu0 %v641
  %v959 = vpop.f32.mrb[0].mxu0
  %v960 = vadd.f32 0.0, %v959
  %v961 = vpop.f32.mrb[0].mxu0
  %v962 = vpop.f32.mrb[0].mxu0
  %v963 = vadd.f32 0.0, %v962
  %v964 = vpop.f32.mrb[0].mxu0
  %965 = vmatprep.mubr.bf16.mxu0 0
  %966 = vmatmul.mubr.bf16.gmra.mrb[0].mxu0 %v644
  %v967 = vpop.f32.mrb[0].mxu0
  %v968 = vadd.f32 0.0, %v967
  %v969 = vpop.f32.mrb[0].mxu0
  %v970 = vpop.f32.mrb[0].mxu0
  %v971 = vadd.f32 0.0, %v970
  %v972 = vpop.f32.mrb[0].mxu0
  %973 = vmatprep.mubr.bf16.mxu0 0
  %974 = vmatmul.mubr.bf16.gmra.mrb[0].mxu0 %v647
  %v975 = vpop.f32.mrb[0].mxu0
  %v976 = vadd.f32 0.0, %v975
  %v977 = vpop.f32.mrb[0].mxu0
  %v978 = vpop.f32.mrb[0].mxu0
  %v979 = vadd.f32 0.0, %v978
  %v980 = vpop.f32.mrb[0].mxu0
  %981 = vmatprep.mubr.bf16.mxu0 0
  %982 = vmatmul.mubr.bf16.gmra.mrb[0].mxu0 %v650
  %v983 = vpop.f32.mrb[0].mxu0
  %v984 = vadd.f32 0.0, %v983
  %v985 = vpop.f32.mrb[0].mxu0
  %v986 = vpop.f32.mrb[0].mxu0
  %v987 = vadd.f32 0.0, %v986
  %v988 = vpop.f32.mrb[0].mxu0
  %989 = vmatprep.mubr.bf16.mxu0 0
  %990 = vmatmul.mubr.bf16.gmra.mrb[0].mxu0 %v653
  %v991 = vpop.f32.mrb[0].mxu0
  %v992 = vadd.f32 0.0, %v991
  %v993 = vpop.f32.mrb[0].mxu0
  %v994 = vpop.f32.mrb[0].mxu0
  %v995 = vadd.f32 0.0, %v994
  %v996 = vpop.f32.mrb[0].mxu0
  %997 = vmatprep.mubr.bf16.mxu0 0
  %998 = vmatmul.mubr.bf16.gmra.mrb[0].mxu0 %v656
  %v999 = vpop.f32.mrb[0].mxu0
  %v1000 = vadd.f32 0.0, %v999
  %v1001 = vpop.f32.mrb[0].mxu0
  %v1002 = vpop.f32.mrb[0].mxu0
  %v1003 = vadd.f32 0.0, %v1002
  %v1004 = vpop.f32.mrb[0].mxu0
  %1005 = vmatprep.mubr.bf16.mxu0 0
  %1006 = vmatmul.mubr.bf16.gmra.mrb[0].mxu0 %v659
  %v1007 = vpop.f32.mrb[0].mxu0
  %v1008 = vadd.f32 0.0, %v1007
  %v1009 = vpop.f32.mrb[0].mxu0
  %v1010 = vpop.f32.mrb[0].mxu0
  %v1011 = vadd.f32 0.0, %v1010
  %v1012 = vpop.f32.mrb[0].mxu0
  %1013 = vmatprep.mubr.bf16.mxu0 0
  %1014 = vmatmul.mubr.bf16.gmra.mrb[0].mxu0 %v662
  %v1015 = vpop.f32.mrb[0].mxu0
  %v1016 = vadd.f32 0.0, %v1015
  %v1017 = vpop.f32.mrb[0].mxu0
  %v1018 = vpop.f32.mrb[0].mxu0
  %v1019 = vadd.f32 0.0, %v1018
  %v1020 = vpop.f32.mrb[0].mxu0
  %1021 = vmatprep.mubr.bf16.mxu0 0
  %1022 = vmatmul.mubr.bf16.gmra.mrb[0].mxu0 %v665
  %v1023 = vpop.f32.mrb[0].mxu0
  %v1024 = vadd.f32 0.0, %v1023
  %v1025 = vpop.f32.mrb[0].mxu0
  %v1026 = vpop.f32.mrb[0].mxu0
  %v1027 = vadd.f32 0.0, %v1026
  %v1028 = vpop.f32.mrb[0].mxu0
  %1029 = vmatprep.mubr.bf16.mxu0 0
  %1030 = vmatmul.mubr.bf16.gmra.mrb[0].mxu0 %v668
  %v1031 = vpop.f32.mrb[0].mxu0
  %v1032 = vadd.f32 0.0, %v1031
  %v1033 = vpop.f32.mrb[0].mxu0
  %v1034 = vpop.f32.mrb[0].mxu0
  %v1035 = vadd.f32 0.0, %v1034
  %v1036 = vpop.f32.mrb[0].mxu0
  %1037 = vmatprep.mubr.bf16.mxu0 0
  %1038 = vmatmul.mubr.bf16.gmra.mrb[0].mxu0 %v671
  %v1039 = vpop.f32.mrb[0].mxu0
  %v1040 = vadd.f32 0.0, %v1039
  %v1041 = vpop.f32.mrb[0].mxu0
  %v1042 = vpop.f32.mrb[0].mxu0
  %v1043 = vadd.f32 0.0, %v1042
  %v1044 = vpop.f32.mrb[0].mxu0
  %1045 = vmatprep.mubr.bf16.mxu0 0
  %1046 = vmatmul.mubr.bf16.gmra.mrb[0].mxu0 %v674
  %v1047 = vpop.f32.mrb[0].mxu0
  %v1048 = vadd.f32 0.0, %v1047
  %v1049 = vpop.f32.mrb[0].mxu0
  %v1050 = vpop.f32.mrb[0].mxu0
  %v1051 = vadd.f32 0.0, %v1050
  %v1052 = vpop.f32.mrb[0].mxu0
  %1053 = vmatprep.mubr.bf16.mxu0 0
  %1054 = vmatmul.mubr.bf16.gmra.mrb[0].mxu0 %v677
  %v1055 = vpop.f32.mrb[0].mxu0
  %v1056 = vadd.f32 0.0, %v1055
  %v1057 = vpop.f32.mrb[0].mxu0
  %v1058 = vpop.f32.mrb[0].mxu0
  %v1059 = vadd.f32 0.0, %v1058
  %v1060 = vpop.f32.mrb[0].mxu0
  %1061 = vmatprep.mubr.bf16.mxu0 0
  %1062 = vmatmul.mubr.bf16.gmra.mrb[0].mxu0 %v680
  %v1063 = vpop.f32.mrb[0].mxu0
  %v1064 = vadd.f32 0.0, %v1063
  %v1065 = vpop.f32.mrb[0].mxu0
  %v1066 = vpop.f32.mrb[0].mxu0
  %v1067 = vadd.f32 0.0, %v1066
  %v1068 = vpop.f32.mrb[0].mxu0
  %1069 = vmatprep.mubr.bf16.mxu0 0
  %1070 = vmatmul.mubr.bf16.gmra.mrb[0].mxu0 %v683
  %v1071 = vpop.f32.mrb[0].mxu0
  %v1072 = vadd.f32 0.0, %v1071
  %v1073 = vpop.f32.mrb[0].mxu0
  %v1074 = vpop.f32.mrb[0].mxu0
  %v1075 = vadd.f32 0.0, %v1074
  %v1076 = vpop.f32.mrb[0].mxu0
  %1077 = vmatprep.mubr.bf16.mxu0 0
  %1078 = vmatmul.mubr.bf16.gmra.mrb[0].mxu0 %v686
  %v1079 = vpop.f32.mrb[0].mxu0
  %v1080 = vadd.f32 0.0, %v1079
  %v1081 = vpop.f32.mrb[0].mxu0
  %v1082 = vpop.f32.mrb[0].mxu0
  %v1083 = vadd.f32 0.0, %v1082
  %v1084 = vpop.f32.mrb[0].mxu0
  %1085 = vmatprep.mubr.bf16.mxu0 0
  %1086 = vmatmul.mubr.bf16.gmra.mrb[0].mxu0 %v689
  %v1087 = vpop.f32.mrb[0].mxu0
  %v1088 = vadd.f32 0.0, %v1087
  %v1089 = vpop.f32.mrb[0].mxu0
  %v1090 = vpop.f32.mrb[0].mxu0
  %v1091 = vadd.f32 0.0, %v1090
  %v1092 = vpop.f32.mrb[0].mxu0
  %1093 = vmatprep.mubr.bf16.mxu0 0
  %1094 = vmatmul.mubr.bf16.gmra.mrb[0].mxu0 %v692
  %v1095 = vpop.f32.mrb[0].mxu0
  %v1096 = vadd.f32 0.0, %v1095
  %v1097 = vpop.f32.mrb[0].mxu0
  %v1098 = vpop.f32.mrb[0].mxu0
  %v1099 = vadd.f32 0.0, %v1098
  %v1100 = vpop.f32.mrb[0].mxu0
  %1101 = vmatprep.mubr.bf16.mxu0 0
  %1102 = vmatmul.mubr.bf16.gmra.mrb[0].mxu0 %v695
  %v1103 = vpop.f32.mrb[0].mxu0
  %v1104 = vadd.f32 0.0, %v1103
  %v1105 = vpop.f32.mrb[0].mxu0
  %v1106 = vpop.f32.mrb[0].mxu0
  %v1107 = vadd.f32 0.0, %v1106
  %v1108 = vpop.f32.mrb[0].mxu0
  %1109 = vmatprep.mubr.bf16.mxu0 0
  %1110 = vmatmul.mubr.bf16.gmra.mrb[0].mxu0 %v698
  %v1111 = vpop.f32.mrb[0].mxu0
  %v1112 = vadd.f32 0.0, %v1111
  %v1113 = vpop.f32.mrb[0].mxu0
  %v1114 = vpop.f32.mrb[0].mxu0
  %v1115 = vadd.f32 0.0, %v1114
  %v1116 = vpop.f32.mrb[0].mxu0
  %1117 = vmatprep.mubr.bf16.mxu0 0
  %1118 = vmatmul.mubr.bf16.gmra.mrb[0].mxu0 %v701
  %v1119 = vpop.f32.mrb[0].mxu0
  %v1120 = vadd.f32 0.0, %v1119
  %v1121 = vpop.f32.mrb[0].mxu0
  %v1122 = vpop.f32.mrb[0].mxu0
  %v1123 = vadd.f32 0.0, %v1122
  %v1124 = vpop.f32.mrb[0].mxu0
  %1125 = vmatprep.mubr.bf16.mxu0 0
  %1126 = vmatmul.mubr.bf16.gmra.mrb[0].mxu0 %v704
  %v1127 = vpop.f32.mrb[0].mxu0
  %v1128 = vadd.f32 0.0, %v1127
  %v1129 = vpop.f32.mrb[0].mxu0
  %v1130 = vpop.f32.mrb[0].mxu0
  %v1131 = vadd.f32 0.0, %v1130
  %v1132 = vpop.f32.mrb[0].mxu0
  %1133 = vmatprep.mubr.bf16.mxu0 0
  %1134 = vmatmul.mubr.bf16.gmra.mrb[0].mxu0 %v707
  %v1135 = vpop.f32.mrb[0].mxu0
  %v1136 = vadd.f32 0.0, %v1135
  %v1137 = vpop.f32.mrb[0].mxu0
  %v1138 = vpop.f32.mrb[0].mxu0
  %v1139 = vadd.f32 0.0, %v1138
  %v1140 = vpop.f32.mrb[0].mxu0
  %1141 = vmatprep.mubr.bf16.mxu0 0
  %1142 = vmatmul.mubr.bf16.gmra.mrb[0].mxu0 %v710
  %v1143 = vpop.f32.mrb[0].mxu0
  %v1144 = vadd.f32 0.0, %v1143
  %v1145 = vpop.f32.mrb[0].mxu0
  %v1146 = vpop.f32.mrb[0].mxu0
  %v1147 = vadd.f32 0.0, %v1146
  %v1148 = vpop.f32.mrb[0].mxu0
  %1149 = vmatprep.mubr.bf16.mxu0 0
  %1150 = vmatmul.mubr.bf16.gmra.mrb[0].mxu0 %v713
  %v1151 = vpop.f32.mrb[0].mxu0
  %v1152 = vadd.f32 0.0, %v1151
  %v1153 = vpop.f32.mrb[0].mxu0
  %v1154 = vpop.f32.mrb[0].mxu0
  %v1155 = vadd.f32 0.0, %v1154
  %v1156 = vpop.f32.mrb[0].mxu0
  %1157 = vmatprep.mubr.bf16.mxu0 0
  %1158 = vmatmul.mubr.bf16.gmra.mrb[0].mxu0 %v716
  %v1159 = vpop.f32.mrb[0].mxu0
  %v1160 = vadd.f32 0.0, %v1159
  %v1161 = vpop.f32.mrb[0].mxu0
  %v1162 = vpop.f32.mrb[0].mxu0
  %v1163 = vadd.f32 0.0, %v1162
  %v1164 = vpop.f32.mrb[0].mxu0
  %1165 = vmatprep.mubr.bf16.mxu0 0
  %1166 = vmatmul.mubr.bf16.gmra.mrb[0].mxu0 %v719
  %v1167 = vpop.f32.mrb[0].mxu0
  %v1168 = vadd.f32 0.0, %v1167
  %v1169 = vpop.f32.mrb[0].mxu0
  %v1170 = vpop.f32.mrb[0].mxu0
  %v1171 = vadd.f32 0.0, %v1170
  %v1172 = vpop.f32.mrb[0].mxu0
  %1173 = vmatprep.mubr.bf16.mxu0 0
  %1174 = vmatmul.mubr.bf16.gmra.mrb[0].mxu0 %v722
  %v1175 = vpop.f32.mrb[0].mxu0
  %v1176 = vadd.f32 0.0, %v1175
  %v1177 = vpop.f32.mrb[0].mxu0
  %v1178 = vpop.f32.mrb[0].mxu0
  %v1179 = vadd.f32 0.0, %v1178
  %v1180 = vpop.f32.mrb[0].mxu0
  %1181 = vmatprep.mubr.bf16.mxu0 0
  %1182 = vmatmul.mubr.bf16.gmra.mrb[0].mxu0 %v725
  %v1183 = vpop.f32.mrb[0].mxu0
  %v1184 = vadd.f32 0.0, %v1183
  %v1185 = vpop.f32.mrb[0].mxu0
  %v1186 = vpop.f32.mrb[0].mxu0
  %v1187 = vadd.f32 0.0, %v1186
  %v1188 = vpop.f32.mrb[0].mxu0
  %1189 = vmatprep.mubr.bf16.mxu0 0
  %1190 = vmatmul.mubr.bf16.gmra.mrb[0].mxu0 %v728
  %v1191 = vpop.f32.mrb[0].mxu0
  %v1192 = vadd.f32 0.0, %v1191
  %v1193 = vpop.f32.mrb[0].mxu0
  %v1194 = vpop.f32.mrb[0].mxu0
  %v1195 = vadd.f32 0.0, %v1194
  %v1196 = vpop.f32.mrb[0].mxu0
  %1197 = vmatprep.mubr.bf16.mxu0 0
  %1198 = vmatmul.mubr.bf16.gmra.mrb[0].mxu0 %v731
  %v1199 = vpop.f32.mrb[0].mxu0
  %v1200 = vadd.f32 0.0, %v1199
  %v1201 = vpop.f32.mrb[0].mxu0
  %v1202 = vpop.f32.mrb[0].mxu0
  %v1203 = vadd.f32 0.0, %v1202
  %v1204 = vpop.f32.mrb[0].mxu0
  %1205 = vmatprep.mubr.bf16.mxu0 0
  %1206 = vmatmul.mubr.bf16.gmra.mrb[0].mxu0 %v734
  %v1207 = vpop.f32.mrb[0].mxu0
  %v1208 = vadd.f32 0.0, %v1207
  %v1209 = vpop.f32.mrb[0].mxu0
  %v1210 = vpop.f32.mrb[0].mxu0
  %v1211 = vadd.f32 0.0, %v1210
  %v1212 = vpop.f32.mrb[0].mxu0
  %1213 = vmatprep.mubr.bf16.mxu0 0
  %1214 = vmatmul.mubr.bf16.gmra.mrb[0].mxu0 %v737
  %v1215 = vpop.f32.mrb[0].mxu0
  %v1216 = vadd.f32 0.0, %v1215
  %v1217 = vpop.f32.mrb[0].mxu0
  %v1218 = vpop.f32.mrb[0].mxu0
  %v1219 = vadd.f32 0.0, %v1218
  %v1220 = vpop.f32.mrb[0].mxu0
  %1221 = vmatprep.mubr.bf16.mxu0 0
  %1222 = vmatmul.mubr.bf16.gmra.mrb[0].mxu0 %v740
  %v1223 = vpop.f32.mrb[0].mxu0
  %v1224 = vadd.f32 0.0, %v1223
  %v1225 = vpop.f32.mrb[0].mxu0
  %v1226 = vpop.f32.mrb[0].mxu0
  %v1227 = vadd.f32 0.0, %v1226
  %v1228 = vpop.f32.mrb[0].mxu0
  %1229 = vmatprep.mubr.bf16.mxu0 0
  %1230 = vmatmul.mubr.bf16.gmra.mrb[0].mxu0 %v743
  %v1231 = vpop.f32.mrb[0].mxu0
  %v1232 = vadd.f32 0.0, %v1231
  %v1233 = vpop.f32.mrb[0].mxu0
  %v1234 = vpop.f32.mrb[0].mxu0
  %v1235 = vadd.f32 0.0, %v1234
  %v1236 = vpop.f32.mrb[0].mxu0
  %1237 = vmatprep.mubr.bf16.mxu0 0
  %1238 = vmatmul.mubr.bf16.gmra.mrb[0].mxu0 %v746
  %v1239 = vpop.f32.mrb[0].mxu0
  %v1240 = vadd.f32 0.0, %v1239
  %v1241 = vpop.f32.mrb[0].mxu0
  %v1242 = vpop.f32.mrb[0].mxu0
  %v1243 = vadd.f32 0.0, %v1242
  %v1244 = vpop.f32.mrb[0].mxu0
  %1245 = vmatprep.mubr.bf16.mxu0 0
  %1246 = vmatmul.mubr.bf16.gmra.mrb[0].mxu0 %v749
  %v1247 = vpop.f32.mrb[0].mxu0
  %v1248 = vadd.f32 0.0, %v1247
  %v1249 = vpop.f32.mrb[0].mxu0
  %v1250 = vpop.f32.mrb[0].mxu0
  %v1251 = vadd.f32 0.0, %v1250
  %v1252 = vpop.f32.mrb[0].mxu0
  %1253 = vmatprep.mubr.bf16.mxu0 0
  %1254 = vmatmul.mubr.bf16.gmra.mrb[0].mxu0 %v752
  %v1255 = vpop.f32.mrb[0].mxu0
  %v1256 = vadd.f32 0.0, %v1255
  %v1257 = vpop.f32.mrb[0].mxu0
  %v1258 = vpop.f32.mrb[0].mxu0
  %v1259 = vadd.f32 0.0, %v1258
  %v1260 = vpop.f32.mrb[0].mxu0
  %1261 = vmatprep.mubr.bf16.mxu0 0
  %1262 = vmatmul.mubr.bf16.gmra.mrb[0].mxu0 %v755
  %v1263 = vpop.f32.mrb[0].mxu0
  %v1264 = vadd.f32 0.0, %v1263
  %v1265 = vpop.f32.mrb[0].mxu0
  %v1266 = vpop.f32.mrb[0].mxu0
  %v1267 = vadd.f32 0.0, %v1266
  %v1268 = vpop.f32.mrb[0].mxu0
  %1269 = vmatprep.mubr.bf16.mxu0 0
  %1270 = vmatmul.mubr.bf16.gmra.mrb[0].mxu0 %v758
  %v1271 = vpop.f32.mrb[0].mxu0
  %v1272 = vadd.f32 0.0, %v1271
  %v1273 = vpop.f32.mrb[0].mxu0
  %v1274 = vpop.f32.mrb[0].mxu0
  %v1275 = vadd.f32 0.0, %v1274
  %v1276 = vpop.f32.mrb[0].mxu0
  %1277 = vmatprep.mubr.bf16.mxu0 0
  %1278 = vmatmul.mubr.bf16.gmra.mrb[0].mxu0 %v761
  %v1279 = vpop.f32.mrb[0].mxu0
  %v1280 = vadd.f32 0.0, %v1279
  %v1281 = vpop.f32.mrb[0].mxu0
  %v1282 = vpop.f32.mrb[0].mxu0
  %v1283 = vadd.f32 0.0, %v1282
  %v1284 = vpop.f32.mrb[0].mxu0
  %1285 = vmatprep.mubr.bf16.mxu0 0
  %1286 = vmatmul.mubr.bf16.gmra.mrb[0].mxu0 %v764
  %v1287 = vpop.f32.mrb[0].mxu0
  %v1288 = vadd.f32 0.0, %v1287
  %v1289 = vpop.f32.mrb[0].mxu0
  %v1290 = vpop.f32.mrb[0].mxu0
  %v1291 = vadd.f32 0.0, %v1290
  %v1292 = vpop.f32.mrb[0].mxu0
  %1293 = vmatprep.mubr.bf16.mxu0 0
  %1294 = vmatmul.mubr.bf16.gmra.mrb[0].mxu0 %v767
  %v1295 = vpop.f32.mrb[0].mxu0
  %v1296 = vadd.f32 0.0, %v1295
  %v1297 = vpop.f32.mrb[0].mxu0
  %v1298 = vpop.f32.mrb[0].mxu0
  %v1299 = vadd.f32 0.0, %v1298
  %v1300 = vpop.f32.mrb[0].mxu0
  %1301 = vmatprep.mubr.bf16.mxu0 0
  %1302 = vmatmul.mubr.bf16.gmra.mrb[0].mxu0 %v770
  %v1303 = vpop.f32.mrb[0].mxu0
  %v1304 = vadd.f32 0.0, %v1303
  %v1305 = vpop.f32.mrb[0].mxu0
  %v1306 = vpop.f32.mrb[0].mxu0
  %v1307 = vadd.f32 0.0, %v1306
  %v1308 = vpop.f32.mrb[0].mxu0
  %1309 = vmatprep.mubr.bf16.mxu0 0
  %1310 = vmatmul.mubr.bf16.gmra.mrb[0].mxu0 %v773
  %v1311 = vpop.f32.mrb[0].mxu0
  %v1312 = vadd.f32 0.0, %v1311
  %v1313 = vpop.f32.mrb[0].mxu0
  %v1314 = vpop.f32.mrb[0].mxu0
  %v1315 = vadd.f32 0.0, %v1314
  %v1316 = vpop.f32.mrb[0].mxu0
  %1317 = vmatprep.mubr.bf16.mxu0 0
  %1318 = vmatmul.mubr.bf16.gmra.mrb[0].mxu0 %v776
  %v1319 = vpop.f32.mrb[0].mxu0
  %v1320 = vadd.f32 0.0, %v1319
  %v1321 = vpop.f32.mrb[0].mxu0
  %v1322 = vpop.f32.mrb[0].mxu0
  %v1323 = vadd.f32 0.0, %v1322
  %v1324 = vpop.f32.mrb[0].mxu0
  %1325 = vmatprep.mubr.bf16.mxu0 0
  %1326 = vmatmul.mubr.bf16.gmra.mrb[0].mxu0 %v779
  %v1327 = vpop.f32.mrb[0].mxu0
  %v1328 = vadd.f32 0.0, %v1327
  %v1329 = vpop.f32.mrb[0].mxu0
  %v1330 = vpop.f32.mrb[0].mxu0
  %v1331 = vadd.f32 0.0, %v1330
  %v1332 = vpop.f32.mrb[0].mxu0
  %1333 = vmatprep.mubr.bf16.mxu0 0
  %1334 = vmatmul.mubr.bf16.gmra.mrb[0].mxu0 %v782
  %v1335 = vpop.f32.mrb[0].mxu0
  %v1336 = vadd.f32 0.0, %v1335
  %v1337 = vpop.f32.mrb[0].mxu0
  %v1338 = vpop.f32.mrb[0].mxu0
  %v1339 = vadd.f32 0.0, %v1338
  %v1340 = vpop.f32.mrb[0].mxu0
  %1341 = vmatprep.mubr.bf16.mxu0 0
  %1342 = vmatmul.mubr.bf16.gmra.mrb[0].mxu0 %v785
  %v1343 = vpop.f32.mrb[0].mxu0
  %v1344 = vadd.f32 0.0, %v1343
  %v1345 = vpop.f32.mrb[0].mxu0
  %v1346 = vpop.f32.mrb[0].mxu0
  %v1347 = vadd.f32 0.0, %v1346
  %v1348 = vpop.f32.mrb[0].mxu0
  %1349 = vmatprep.mubr.bf16.mxu0 0
  %1350 = vmatmul.mubr.bf16.gmra.mrb[0].mxu0 %v788
  %v1351 = vpop.f32.mrb[0].mxu0
  %v1352 = vadd.f32 0.0, %v1351
  %v1353 = vpop.f32.mrb[0].mxu0
  %v1354 = vpop.f32.mrb[0].mxu0
  %v1355 = vadd.f32 0.0, %v1354
  %v1356 = vpop.f32.mrb[0].mxu0
  %1357 = vmatprep.mubr.bf16.mxu0 0
  %1358 = vmatmul.mubr.bf16.gmra.mrb[0].mxu0 %v791
  %v1359 = vpop.f32.mrb[0].mxu0
  %v1360 = vadd.f32 0.0, %v1359
  %v1361 = vpop.f32.mrb[0].mxu0
  %v1362 = vpop.f32.mrb[0].mxu0
  %v1363 = vadd.f32 0.0, %v1362
  %v1364 = vpop.f32.mrb[0].mxu0
  %1365 = vmatprep.mubr.bf16.mxu0 0
  %1366 = vmatmul.mubr.bf16.gmra.mrb[0].mxu0 %v794
  %v1367 = vpop.f32.mrb[0].mxu0
  %v1368 = vadd.f32 0.0, %v1367
  %v1369 = vpop.f32.mrb[0].mxu0
  %v1370 = vpop.f32.mrb[0].mxu0
  %v1371 = vadd.f32 0.0, %v1370
  %v1372 = vpop.f32.mrb[0].mxu0
  %1373 = vmatprep.mubr.bf16.mxu0 0
  %1374 = vmatmul.mubr.bf16.gmra.mrb[0].mxu0 %v797
  %v1375 = vpop.f32.mrb[0].mxu0
  %v1376 = vadd.f32 0.0, %v1375
  %v1377 = vpop.f32.mrb[0].mxu0
  %v1378 = vpop.f32.mrb[0].mxu0
  %v1379 = vadd.f32 0.0, %v1378
  %v1380 = vpop.f32.mrb[0].mxu0
  %1381 = vmatprep.mubr.bf16.mxu0 0
  %1382 = vmatmul.mubr.bf16.gmra.mrb[0].mxu0 %v800
  %v1383 = vpop.f32.mrb[0].mxu0
  %v1384 = vadd.f32 0.0, %v1383
  %v1385 = vpop.f32.mrb[0].mxu0
  %v1386 = vpop.f32.mrb[0].mxu0
  %v1387 = vadd.f32 0.0, %v1386
  %v1388 = vpop.f32.mrb[0].mxu0
  %1389 = vmatprep.mubr.bf16.mxu0 0
  %1390 = vmatmul.mubr.bf16.gmra.mrb[0].mxu0 %v803
  %v1391 = vpop.f32.mrb[0].mxu0
  %v1392 = vadd.f32 0.0, %v1391
  %v1393 = vpop.f32.mrb[0].mxu0
  %v1394 = vpop.f32.mrb[0].mxu0
  %v1395 = vadd.f32 0.0, %v1394
  %v1396 = vpop.f32.mrb[0].mxu0
  %1397 = vmatprep.mubr.bf16.mxu0 0
  %1398 = vmatmul.mubr.bf16.gmra.mrb[0].mxu0 %v806
  %v1399 = vpop.f32.mrb[0].mxu0
  %v1400 = vadd.f32 0.0, %v1399
  %v1401 = vpop.f32.mrb[0].mxu0
  %v1402 = vpop.f32.mrb[0].mxu0
  %v1403 = vadd.f32 0.0, %v1402
  %v1404 = vpop.f32.mrb[0].mxu0
  %1405 = vmatprep.mubr.bf16.mxu0 0
  %1406 = vmatmul.mubr.bf16.gmra.mrb[0].mxu0 %v809
  %v1407 = vpop.f32.mrb[0].mxu0
  %v1408 = vadd.f32 0.0, %v1407
  %v1409 = vpop.f32.mrb[0].mxu0
  %v1410 = vpop.f32.mrb[0].mxu0
  %v1411 = vadd.f32 0.0, %v1410
  %v1412 = vpop.f32.mrb[0].mxu0
  %1413 = vmatprep.mubr.bf16.mxu0 0
  %1414 = vmatmul.mubr.bf16.gmra.mrb[0].mxu0 %v812
  %v1415 = vpop.f32.mrb[0].mxu0
  %v1416 = vadd.f32 0.0, %v1415
  %v1417 = vpop.f32.mrb[0].mxu0
  %v1418 = vpop.f32.mrb[0].mxu0
  %v1419 = vadd.f32 0.0, %v1418
  %v1420 = vpop.f32.mrb[0].mxu0
  %1421 = vmatprep.mubr.bf16.mxu0 0
  %1422 = vmatmul.mubr.bf16.gmra.mrb[0].mxu0 %v815
  %v1423 = vpop.f32.mrb[0].mxu0
  %v1424 = vadd.f32 0.0, %v1423
  %v1425 = vpop.f32.mrb[0].mxu0
  %v1426 = vpop.f32.mrb[0].mxu0
  %v1427 = vadd.f32 0.0, %v1426
  %v1428 = vpop.f32.mrb[0].mxu0
  %1429 = vmatprep.mubr.bf16.mxu0 0
  %1430 = vmatmul.mubr.bf16.gmra.mrb[0].mxu0 %v818
  %v1431 = vpop.f32.mrb[0].mxu0
  %v1432 = vadd.f32 0.0, %v1431
  %v1433 = vpop.f32.mrb[0].mxu0
  %v1434 = vpop.f32.mrb[0].mxu0
  %v1435 = vadd.f32 0.0, %v1434
  %v1436 = vpop.f32.mrb[0].mxu0
  %1437 = vmatprep.mubr.bf16.mxu0 0
  %1438 = vmatmul.mubr.bf16.gmra.mrb[0].mxu0 %v821
  %v1439 = vpop.f32.mrb[0].mxu0
  %v1440 = vadd.f32 0.0, %v1439
  %v1441 = vpop.f32.mrb[0].mxu0
  %v1442 = vpop.f32.mrb[0].mxu0
  %v1443 = vadd.f32 0.0, %v1442
  %v1444 = vpop.f32.mrb[0].mxu0
  %1445 = vmatprep.mubr.bf16.mxu0 0
  %1446 = vmatmul.mubr.bf16.gmra.mrb[0].mxu0 %v824
  %v1447 = vpop.f32.mrb[0].mxu0
  %v1448 = vadd.f32 0.0, %v1447
  %v1449 = vpop.f32.mrb[0].mxu0
  %v1450 = vpop.f32.mrb[0].mxu0
  %v1451 = vadd.f32 0.0, %v1450
  %v1452 = vpop.f32.mrb[0].mxu0
  %1453 = vmatprep.mubr.bf16.mxu0 0
  %1454 = vmatmul.mubr.bf16.gmra.mrb[0].mxu0 %v827
  %v1455 = vpop.f32.mrb[0].mxu0
  %v1456 = vadd.f32 0.0, %v1455
  %v1457 = vpop.f32.mrb[0].mxu0
  %v1458 = vpop.f32.mrb[0].mxu0
  %v1459 = vadd.f32 0.0, %v1458
  %v1460 = vpop.f32.mrb[0].mxu0
  %1461 = vmatprep.mubr.bf16.mxu0 0
  %1462 = vmatmul.mubr.bf16.gmra.mrb[0].mxu0 %v830
  %v1463 = vpop.f32.mrb[0].mxu0
  %v1464 = vadd.f32 0.0, %v1463
  %v1465 = vpop.f32.mrb[0].mxu0
  %v1466 = vpop.f32.mrb[0].mxu0
  %v1467 = vadd.f32 0.0, %v1466
  %v1468 = vpop.f32.mrb[0].mxu0
  %1469 = vmatprep.mubr.bf16.mxu0 0
  %1470 = vmatmul.mubr.bf16.gmra.mrb[0].mxu0 %v833
  %v1471 = vpop.f32.mrb[0].mxu0
  %v1472 = vadd.f32 0.0, %v1471
  %v1473 = vpop.f32.mrb[0].mxu0
  %v1474 = vpop.f32.mrb[0].mxu0
  %v1475 = vadd.f32 0.0, %v1474
  %v1476 = vpop.f32.mrb[0].mxu0
  %1477 = vmatprep.mubr.bf16.mxu0 0
  %1478 = vmatmul.mubr.bf16.gmra.mrb[0].mxu0 %v836
  %v1479 = vpop.f32.mrb[0].mxu0
  %v1480 = vadd.f32 0.0, %v1479
  %v1481 = vpop.f32.mrb[0].mxu0
  %v1482 = vpop.f32.mrb[0].mxu0
  %v1483 = vadd.f32 0.0, %v1482
  %v1484 = vpop.f32.mrb[0].mxu0
  %1485 = vmatprep.mubr.bf16.mxu0 0
  %1486 = vmatmul.mubr.bf16.gmra.mrb[0].mxu0 %v839
  %v1487 = vpop.f32.mrb[0].mxu0
  %v1488 = vadd.f32 0.0, %v1487
  %v1489 = vpop.f32.mrb[0].mxu0
  %v1490 = vpop.f32.mrb[0].mxu0
  %v1491 = vadd.f32 0.0, %v1490
  %v1492 = vpop.f32.mrb[0].mxu0
  %1493 = vmatprep.mubr.bf16.mxu0 0
  %1494 = vmatmul.mubr.bf16.gmra.mrb[0].mxu0 %v842
  %v1495 = vpop.f32.mrb[0].mxu0
  %v1496 = vadd.f32 0.0, %v1495
  %v1497 = vpop.f32.mrb[0].mxu0
  %v1498 = vpop.f32.mrb[0].mxu0
  %v1499 = vadd.f32 0.0, %v1498
  %v1500 = vpop.f32.mrb[0].mxu0
  %1501 = vmatprep.mubr.bf16.mxu0 0
  %1502 = vmatmul.mubr.bf16.gmra.mrb[0].mxu0 %v845
  %v1503 = vpop.f32.mrb[0].mxu0
  %v1504 = vadd.f32 0.0, %v1503
  %v1505 = vpop.f32.mrb[0].mxu0
  %v1506 = vpop.f32.mrb[0].mxu0
  %v1507 = vadd.f32 0.0, %v1506
  %v1508 = vpop.f32.mrb[0].mxu0
  %1509 = vmatprep.mubr.bf16.mxu0 0
  %1510 = vmatmul.mubr.bf16.gmra.mrb[0].mxu0 %v848
  %v1511 = vpop.f32.mrb[0].mxu0
  %v1512 = vadd.f32 0.0, %v1511
  %v1513 = vpop.f32.mrb[0].mxu0
  %v1514 = vpop.f32.mrb[0].mxu0
  %v1515 = vadd.f32 0.0, %v1514
  %v1516 = vpop.f32.mrb[0].mxu0
  %1517 = vmatprep.mubr.bf16.mxu0 0
  %1518 = vmatmul.mubr.bf16.gmra.mrb[0].mxu0 %v851
  %v1519 = vpop.f32.mrb[0].mxu0
  %v1520 = vadd.f32 0.0, %v1519
  %v1521 = vpop.f32.mrb[0].mxu0
  %v1522 = vpop.f32.mrb[0].mxu0
  %v1523 = vadd.f32 0.0, %v1522
  %v1524 = vpop.f32.mrb[0].mxu0
  %1525 = vmatprep.mubr.bf16.mxu0 0
  %1526 = vmatmul.mubr.bf16.gmra.mrb[0].mxu0 %v854
  %v1527 = vpop.f32.mrb[0].mxu0
  %v1528 = vadd.f32 0.0, %v1527
  %v1529 = vpop.f32.mrb[0].mxu0
  %v1530 = vpop.f32.mrb[0].mxu0
  %v1531 = vadd.f32 0.0, %v1530
  %v1532 = vpop.f32.mrb[0].mxu0
  %1533 = vmatprep.mubr.bf16.mxu0 0
  %1534 = vmatmul.mubr.bf16.gmra.mrb[0].mxu0 %v857
  %v1535 = vpop.f32.mrb[0].mxu0
  %v1536 = vadd.f32 0.0, %v1535
  %v1537 = vpop.f32.mrb[0].mxu0
  %v1538 = vpop.f32.mrb[0].mxu0
  %v1539 = vadd.f32 0.0, %v1538
  %v1540 = vpop.f32.mrb[0].mxu0
  %1541 = vmatprep.mubr.bf16.mxu0 0
  %1542 = vmatmul.mubr.bf16.gmra.mrb[0].mxu0 %v860
  %v1543 = vpop.f32.mrb[0].mxu0
  %v1544 = vadd.f32 0.0, %v1543
  %v1545 = vpop.f32.mrb[0].mxu0
  %v1546 = vpop.f32.mrb[0].mxu0
  %v1547 = vadd.f32 0.0, %v1546
  %v1548 = vpop.f32.mrb[0].mxu0
  %1549 = vmatprep.mubr.bf16.mxu0 0
  %1550 = vmatmul.mubr.bf16.gmra.mrb[0].mxu0 %v863
  %v1551 = vpop.f32.mrb[0].mxu0
  %v1552 = vadd.f32 0.0, %v1551
  %v1553 = vpop.f32.mrb[0].mxu0
  %v1554 = vpop.f32.mrb[0].mxu0
  %v1555 = vadd.f32 0.0, %v1554
  %v1556 = vpop.f32.mrb[0].mxu0
  %1557 = vmatprep.mubr.bf16.mxu0 0
  %1558 = vmatmul.mubr.bf16.gmra.mrb[0].mxu0 %v866
  %v1559 = vpop.f32.mrb[0].mxu0
  %v1560 = vadd.f32 0.0, %v1559
  %v1561 = vpop.f32.mrb[0].mxu0
  %v1562 = vpop.f32.mrb[0].mxu0
  %v1563 = vadd.f32 0.0, %v1562
  %v1564 = vpop.f32.mrb[0].mxu0
  %1565 = vmatprep.mubr.bf16.mxu0 0
  %1566 = vmatmul.mubr.bf16.gmra.mrb[0].mxu0 %v869
  %v1567 = vpop.f32.mrb[0].mxu0
  %v1568 = vadd.f32 0.0, %v1567
  %v1569 = vpop.f32.mrb[0].mxu0
  %v1570 = vpop.f32.mrb[0].mxu0
  %v1571 = vadd.f32 0.0, %v1570
  %v1572 = vpop.f32.mrb[0].mxu0
  %1573 = vmatprep.mubr.bf16.mxu0 0
  %1574 = vmatmul.mubr.bf16.gmra.mrb[0].mxu0 %v872
  %v1575 = vpop.f32.mrb[0].mxu0
  %v1576 = vadd.f32 0.0, %v1575
  %v1577 = vpop.f32.mrb[0].mxu0
  %v1578 = vpop.f32.mrb[0].mxu0
  %v1579 = vadd.f32 0.0, %v1578
  %v1580 = vpop.f32.mrb[0].mxu0
  %1581 = vmatprep.mubr.bf16.mxu0 0
  %1582 = vmatmul.mubr.bf16.gmra.mrb[0].mxu0 %v875
  %v1583 = vpop.f32.mrb[0].mxu0
  %v1584 = vadd.f32 0.0, %v1583
  %v1585 = vpop.f32.mrb[0].mxu0
  %v1586 = vpop.f32.mrb[0].mxu0
  %v1587 = vadd.f32 0.0, %v1586
  %v1588 = vpop.f32.mrb[0].mxu0
  %1589 = vmatprep.mubr.bf16.mxu0 0
  %1590 = vmatmul.mubr.bf16.gmra.mrb[0].mxu0 %v878
  %v1591 = vpop.f32.mrb[0].mxu0
  %v1592 = vadd.f32 0.0, %v1591
  %v1593 = vpop.f32.mrb[0].mxu0
  %v1594 = vpop.f32.mrb[0].mxu0
  %v1595 = vadd.f32 0.0, %v1594
  %v1596 = vpop.f32.mrb[0].mxu0
  %1597 = vmatprep.mubr.bf16.mxu0 0
  %1598 = vmatmul.mubr.bf16.gmra.mrb[0].mxu0 %v881
  %v1599 = vpop.f32.mrb[0].mxu0
  %v1600 = vadd.f32 0.0, %v1599
  %v1601 = vpop.f32.mrb[0].mxu0
  %v1602 = vpop.f32.mrb[0].mxu0
  %v1603 = vadd.f32 0.0, %v1602
  %v1604 = vpop.f32.mrb[0].mxu0
  %1605 = vmatprep.mubr.bf16.mxu0 0
  %1606 = vmatmul.mubr.bf16.gmra.mrb[0].mxu0 %v884
  %v1607 = vpop.f32.mrb[0].mxu0
  %v1608 = vadd.f32 0.0, %v1607
  %v1609 = vpop.f32.mrb[0].mxu0
  %v1610 = vpop.f32.mrb[0].mxu0
  %v1611 = vadd.f32 0.0, %v1610
  %v1612 = vpop.f32.mrb[0].mxu0
  %1613 = vdwg.mxu0
  %v1614 = vadd.f32 %v928, %v931
  %v1615 = vadd.f32 %v1614, %v936
  %v1616 = vadd.f32 %v1615, %v939
  %v1617 = vadd.f32 %v1616, %v944
  %v1618 = vadd.f32 %v1617, %v947
  %v1619 = vadd.f32 %v1618, %v952
  %v1620 = vadd.f32 %v1619, %v955
  %v1621 = vadd.f32 %v1620, %v960
  %v1622 = vadd.f32 %v1621, %v963
  %v1623 = vadd.f32 %v1622, %v968
  %v1624 = vadd.f32 %v1623, %v971
  %v1625 = vadd.f32 %v1624, %v976
  %v1626 = vadd.f32 %v1625, %v979
  %v1627 = vadd.f32 %v1626, %v984
  %v1628 = vadd.f32 %v1627, %v987
  %v1629 = vadd.f32 %v1628, %v992
  %v1630 = vadd.f32 %v1629, %v995
  %v1631 = vadd.f32 %v1630, %v1000
  %v1632 = vadd.f32 %v1631, %v1003
  %v1633 = vadd.f32 %v1632, %v1008
  %v1634 = vadd.f32 %v1633, %v1011
  %v1635 = vadd.f32 %v1634, %v1016
  %v1636 = vadd.f32 %v1635, %v1019
  %v1637 = vadd.f32 %v1636, %v1024
  %v1638 = vadd.f32 %v1637, %v1027
  %v1639 = vadd.f32 %v1638, %v1032
  %v1640 = vadd.f32 %v1639, %v1035
  %v1641 = vadd.f32 %v1640, %v1040
  %v1642 = vadd.f32 %v1641, %v1043
  %v1643 = vadd.f32 %v1642, %v1048
  %v1644 = vadd.f32 %v1643, %v1051
  %v1645 = vadd.f32 %v1644, %v1056
  %v1646 = vadd.f32 %v1645, %v1059
  %v1647 = vadd.f32 %v1646, %v1064
  %v1648 = vadd.f32 %v1647, %v1067
  %v1649 = vadd.f32 %v1648, %v1072
  %v1650 = vadd.f32 %v1649, %v1075
  %v1651 = vadd.f32 %v1650, %v1080
  %v1652 = vadd.f32 %v1651, %v1083
  %v1653 = vadd.f32 %v1652, %v1088
  %v1654 = vadd.f32 %v1653, %v1091
  %v1655 = vadd.f32 %v1654, %v1096
  %v1656 = vadd.f32 %v1655, %v1099
  %v1657 = vadd.f32 %v1656, %v1104
  %v1658 = vadd.f32 %v1657, %v1107
  %v1659 = vadd.f32 %v1658, %v1112
  %v1660 = vadd.f32 %v1659, %v1115
  %v1661 = vadd.f32 %v1660, %v1120
  %v1662 = vadd.f32 %v1661, %v1123
  %v1663 = vadd.f32 %v1662, %v1128
  %v1664 = vadd.f32 %v1663, %v1131
  %v1665 = vadd.f32 %v1664, %v1136
  %v1666 = vadd.f32 %v1665, %v1139
  %v1667 = vadd.f32 %v1666, %v1144
  %v1668 = vadd.f32 %v1667, %v1147
  %v1669 = vadd.f32 %v1668, %v1152
  %v1670 = vadd.f32 %v1669, %v1155
  %v1671 = vadd.f32 %v1670, %v1160
  %v1672 = vadd.f32 %v1671, %v1163
  %v1673 = vadd.f32 %v1672, %v1168
  %v1674 = vadd.f32 %v1673, %v1171
  %v1675 = vadd.f32 %v1674, %v1176
  %v1676 = vadd.f32 %v1675, %v1179
  %v1677 = vadd.f32 %v1676, %v1184
  %v1678 = vadd.f32 %v1677, %v1187
  %v1679 = vadd.f32 %v1678, %v1192
  %v1680 = vadd.f32 %v1679, %v1195
  %v1681 = vadd.f32 %v1680, %v1200
  %v1682 = vadd.f32 %v1681, %v1203
  %v1683 = vadd.f32 %v1682, %v1208
  %v1684 = vadd.f32 %v1683, %v1211
  %v1685 = vadd.f32 %v1684, %v1216
  %v1686 = vadd.f32 %v1685, %v1219
  %v1687 = vadd.f32 %v1686, %v1224
  %v1688 = vadd.f32 %v1687, %v1227
  %v1689 = vadd.f32 %v1688, %v1232
  %v1690 = vadd.f32 %v1689, %v1235
  %v1691 = vadd.f32 %v1690, %v1240
  %v1692 = vadd.f32 %v1691, %v1243
  %v1693 = vadd.f32 %v1692, %v1248
  %v1694 = vadd.f32 %v1693, %v1251
  %v1695 = vadd.f32 %v1694, %v1256
  %v1696 = vadd.f32 %v1695, %v1259
  %v1697 = vadd.f32 %v1696, %v1264
  %v1698 = vadd.f32 %v1697, %v1267
  %v1699 = vadd.f32 %v1698, %v1272
  %v1700 = vadd.f32 %v1699, %v1275
  %v1701 = vadd.f32 %v1700, %v1280
  %v1702 = vadd.f32 %v1701, %v1283
  %v1703 = vadd.f32 %v1702, %v1288
  %v1704 = vadd.f32 %v1703, %v1291
  %v1705 = vadd.f32 %v1704, %v1296
  %v1706 = vadd.f32 %v1705, %v1299
  %v1707 = vadd.f32 %v1706, %v1304
  %v1708 = vadd.f32 %v1707, %v1307
  %v1709 = vadd.f32 %v1708, %v1312
  %v1710 = vadd.f32 %v1709, %v1315
  %v1711 = vadd.f32 %v1710, %v1320
  %v1712 = vadd.f32 %v1711, %v1323
  %v1713 = vadd.f32 %v1712, %v1328
  %v1714 = vadd.f32 %v1713, %v1331
  %v1715 = vadd.f32 %v1714, %v1336
  %v1716 = vadd.f32 %v1715, %v1339
  %v1717 = vadd.f32 %v1716, %v1344
  %v1718 = vadd.f32 %v1717, %v1347
  %v1719 = vadd.f32 %v1718, %v1352
  %v1720 = vadd.f32 %v1719, %v1355
  %v1721 = vadd.f32 %v1720, %v1360
  %v1722 = vadd.f32 %v1721, %v1363
  %v1723 = vadd.f32 %v1722, %v1368
  %v1724 = vadd.f32 %v1723, %v1371
  %v1725 = vadd.f32 %v1724, %v1376
  %v1726 = vadd.f32 %v1725, %v1379
  %v1727 = vadd.f32 %v1726, %v1384
  %v1728 = vadd.f32 %v1727, %v1387
  %v1729 = vadd.f32 %v1728, %v1392
  %v1730 = vadd.f32 %v1729, %v1395
  %v1731 = vadd.f32 %v1730, %v1400
  %v1732 = vadd.f32 %v1731, %v1403
  %v1733 = vadd.f32 %v1732, %v1408
  %v1734 = vadd.f32 %v1733, %v1411
  %v1735 = vadd.f32 %v1734, %v1416
  %v1736 = vadd.f32 %v1735, %v1419
  %v1737 = vadd.f32 %v1736, %v1424
  %v1738 = vadd.f32 %v1737, %v1427
  %v1739 = vadd.f32 %v1738, %v1432
  %v1740 = vadd.f32 %v1739, %v1435
  %v1741 = vadd.f32 %v1740, %v1440
  %v1742 = vadd.f32 %v1741, %v1443
  %v1743 = vadd.f32 %v1742, %v1448
  %v1744 = vadd.f32 %v1743, %v1451
  %v1745 = vadd.f32 %v1744, %v1456
  %v1746 = vadd.f32 %v1745, %v1459
  %v1747 = vadd.f32 %v1746, %v1464
  %v1748 = vadd.f32 %v1747, %v1467
  %v1749 = vadd.f32 %v1748, %v1472
  %v1750 = vadd.f32 %v1749, %v1475
  %v1751 = vadd.f32 %v1750, %v1480
  %v1752 = vadd.f32 %v1751, %v1483
  %v1753 = vadd.f32 %v1752, %v1488
  %v1754 = vadd.f32 %v1753, %v1491
  %v1755 = vadd.f32 %v1754, %v1496
  %v1756 = vadd.f32 %v1755, %v1499
  %v1757 = vadd.f32 %v1756, %v1504
  %v1758 = vadd.f32 %v1757, %v1507
  %v1759 = vadd.f32 %v1758, %v1512
  %v1760 = vadd.f32 %v1759, %v1515
  %v1761 = vadd.f32 %v1760, %v1520
  %v1762 = vadd.f32 %v1761, %v1523
  %v1763 = vadd.f32 %v1762, %v1528
  %v1764 = vadd.f32 %v1763, %v1531
  %v1765 = vadd.f32 %v1764, %v1536
  %v1766 = vadd.f32 %v1765, %v1539
  %v1767 = vadd.f32 %v1766, %v1544
  %v1768 = vadd.f32 %v1767, %v1547
  %v1769 = vadd.f32 %v1768, %v1552
  %v1770 = vadd.f32 %v1769, %v1555
  %v1771 = vadd.f32 %v1770, %v1560
  %v1772 = vadd.f32 %v1771, %v1563
  %v1773 = vadd.f32 %v1772, %v1568
  %v1774 = vadd.f32 %v1773, %v1571
  %v1775 = vadd.f32 %v1774, %v1576
  %v1776 = vadd.f32 %v1775, %v1579
  %v1777 = vadd.f32 %v1776, %v1584
  %v1778 = vadd.f32 %v1777, %v1587
  %v1779 = vadd.f32 %v1778, %v1592
  %v1780 = vadd.f32 %v1779, %v1595
  %v1781 = vadd.f32 %v1780, %v1600
  %v1782 = vadd.f32 %v1781, %v1603
  %v1783 = vadd.f32 %v1782, %v1608
  %v1784 = vadd.f32 %v1783, %v1611
  %v1785 = vrot.slane %v1784, 4
  %v1786 = vadd.f32 %v1784, %v1785
  %v1787 = vrot.slane %v1786, 2
  %v1788 = vadd.f32 %v1786, %v1787
  %v1789 = vrot.slane %v1788, 1
  %v1790 = vadd.f32 %v1788, %v1789
  %v1791 = vmul.f32 %v1790, 0.000739645
  %v1792 = vmul.f32 %v928, %v928
  %v1793 = vmul.f32 %v931, %v931
  %v1794 = vmul.f32 %v936, %v936
  %v1795 = vmul.f32 %v939, %v939
  %v1796 = vmul.f32 %v944, %v944
  %v1797 = vmul.f32 %v947, %v947
  %v1798 = vmul.f32 %v952, %v952
  %v1799 = vmul.f32 %v955, %v955
  %v1800 = vmul.f32 %v960, %v960
  %v1801 = vmul.f32 %v963, %v963
  %v1802 = vmul.f32 %v968, %v968
  %v1803 = vmul.f32 %v971, %v971
  %v1804 = vmul.f32 %v976, %v976
  %v1805 = vmul.f32 %v979, %v979
  %v1806 = vmul.f32 %v984, %v984
  %v1807 = vmul.f32 %v987, %v987
  %v1808 = vmul.f32 %v992, %v992
  %v1809 = vmul.f32 %v995, %v995
  %v1810 = vmul.f32 %v1000, %v1000
  %v1811 = vmul.f32 %v1003, %v1003
  %v1812 = vmul.f32 %v1008, %v1008
  %v1813 = vmul.f32 %v1011, %v1011
  %v1814 = vmul.f32 %v1016, %v1016
  %v1815 = vmul.f32 %v1019, %v1019
  %v1816 = vmul.f32 %v1024, %v1024
  %v1817 = vmul.f32 %v1027, %v1027
  %v1818 = vmul.f32 %v1032, %v1032
  %v1819 = vmul.f32 %v1035, %v1035
  %v1820 = vmul.f32 %v1040, %v1040
  %v1821 = vmul.f32 %v1043, %v1043
  %v1822 = vmul.f32 %v1048, %v1048
  %v1823 = vmul.f32 %v1051, %v1051
  %v1824 = vmul.f32 %v1056, %v1056
  %v1825 = vmul.f32 %v1059, %v1059
  %v1826 = vmul.f32 %v1064, %v1064
  %v1827 = vmul.f32 %v1067, %v1067
  %v1828 = vmul.f32 %v1072, %v1072
  %v1829 = vmul.f32 %v1075, %v1075
  %v1830 = vmul.f32 %v1080, %v1080
  %v1831 = vmul.f32 %v1083, %v1083
  %v1832 = vmul.f32 %v1088, %v1088
  %v1833 = vmul.f32 %v1091, %v1091
  %v1834 = vmul.f32 %v1096, %v1096
  %v1835 = vmul.f32 %v1099, %v1099
  %v1836 = vmul.f32 %v1104, %v1104
  %v1837 = vmul.f32 %v1107, %v1107
  %v1838 = vmul.f32 %v1112, %v1112
  %v1839 = vmul.f32 %v1115, %v1115
  %v1840 = vmul.f32 %v1120, %v1120
  %v1841 = vmul.f32 %v1123, %v1123
  %v1842 = vmul.f32 %v1128, %v1128
  %v1843 = vmul.f32 %v1131, %v1131
  %v1844 = vmul.f32 %v1136, %v1136
  %v1845 = vmul.f32 %v1139, %v1139
  %v1846 = vmul.f32 %v1144, %v1144
  %v1847 = vmul.f32 %v1147, %v1147
  %v1848 = vmul.f32 %v1152, %v1152
  %v1849 = vmul.f32 %v1155, %v1155
  %v1850 = vmul.f32 %v1160, %v1160
  %v1851 = vmul.f32 %v1163, %v1163
  %v1852 = vmul.f32 %v1168, %v1168
  %v1853 = vmul.f32 %v1171, %v1171
  %v1854 = vmul.f32 %v1176, %v1176
  %v1855 = vmul.f32 %v1179, %v1179
  %v1856 = vmul.f32 %v1184, %v1184
  %v1857 = vmul.f32 %v1187, %v1187
  %v1858 = vmul.f32 %v1192, %v1192
  %v1859 = vmul.f32 %v1195, %v1195
  %v1860 = vmul.f32 %v1200, %v1200
  %v1861 = vmul.f32 %v1203, %v1203
  %v1862 = vmul.f32 %v1208, %v1208
  %v1863 = vmul.f32 %v1211, %v1211
  %v1864 = vmul.f32 %v1216, %v1216
  %v1865 = vmul.f32 %v1219, %v1219
  %v1866 = vmul.f32 %v1224, %v1224
  %v1867 = vmul.f32 %v1227, %v1227
  %v1868 = vmul.f32 %v1232, %v1232
  %v1869 = vmul.f32 %v1235, %v1235
  %v1870 = vmul.f32 %v1240, %v1240
  %v1871 = vmul.f32 %v1243, %v1243
  %v1872 = vmul.f32 %v1248, %v1248
  %v1873 = vmul.f32 %v1251, %v1251
  %v1874 = vmul.f32 %v1256, %v1256
  %v1875 = vmul.f32 %v1259, %v1259
  %v1876 = vmul.f32 %v1264, %v1264
  %v1877 = vmul.f32 %v1267, %v1267
  %v1878 = vmul.f32 %v1272, %v1272
  %v1879 = vmul.f32 %v1275, %v1275
  %v1880 = vmul.f32 %v1280, %v1280
  %v1881 = vmul.f32 %v1283, %v1283
  %v1882 = vmul.f32 %v1288, %v1288
  %v1883 = vmul.f32 %v1291, %v1291
  %v1884 = vmul.f32 %v1296, %v1296
  %v1885 = vmul.f32 %v1299, %v1299
  %v1886 = vmul.f32 %v1304, %v1304
  %v1887 = vmul.f32 %v1307, %v1307
  %v1888 = vmul.f32 %v1312, %v1312
  %v1889 = vmul.f32 %v1315, %v1315
  %v1890 = vmul.f32 %v1320, %v1320
  %v1891 = vmul.f32 %v1323, %v1323
  %v1892 = vmul.f32 %v1328, %v1328
  %v1893 = vmul.f32 %v1331, %v1331
  %v1894 = vmul.f32 %v1336, %v1336
  %v1895 = vmul.f32 %v1339, %v1339
  %v1896 = vmul.f32 %v1344, %v1344
  %v1897 = vmul.f32 %v1347, %v1347
  %v1898 = vmul.f32 %v1352, %v1352
  %v1899 = vmul.f32 %v1355, %v1355
  %v1900 = vmul.f32 %v1360, %v1360
  %v1901 = vmul.f32 %v1363, %v1363
  %v1902 = vmul.f32 %v1368, %v1368
  %v1903 = vmul.f32 %v1371, %v1371
  %v1904 = vmul.f32 %v1376, %v1376
  %v1905 = vmul.f32 %v1379, %v1379
  %v1906 = vmul.f32 %v1384, %v1384
  %v1907 = vmul.f32 %v1387, %v1387
  %v1908 = vmul.f32 %v1392, %v1392
  %v1909 = vmul.f32 %v1395, %v1395
  %v1910 = vmul.f32 %v1400, %v1400
  %v1911 = vmul.f32 %v1403, %v1403
  %v1912 = vmul.f32 %v1408, %v1408
  %v1913 = vmul.f32 %v1411, %v1411
  %v1914 = vmul.f32 %v1416, %v1416
  %v1915 = vmul.f32 %v1419, %v1419
  %v1916 = vmul.f32 %v1424, %v1424
  %v1917 = vmul.f32 %v1427, %v1427
  %v1918 = vmul.f32 %v1432, %v1432
  %v1919 = vmul.f32 %v1435, %v1435
  %v1920 = vmul.f32 %v1440, %v1440
  %v1921 = vmul.f32 %v1443, %v1443
  %v1922 = vmul.f32 %v1448, %v1448
  %v1923 = vmul.f32 %v1451, %v1451
  %v1924 = vmul.f32 %v1456, %v1456
  %v1925 = vmul.f32 %v1459, %v1459
  %v1926 = vmul.f32 %v1464, %v1464
  %v1927 = vmul.f32 %v1467, %v1467
  %v1928 = vmul.f32 %v1472, %v1472
  %v1929 = vmul.f32 %v1475, %v1475
  %v1930 = vmul.f32 %v1480, %v1480
  %v1931 = vmul.f32 %v1483, %v1483
  %v1932 = vmul.f32 %v1488, %v1488
  %v1933 = vmul.f32 %v1491, %v1491
  %v1934 = vmul.f32 %v1496, %v1496
  %v1935 = vmul.f32 %v1499, %v1499
  %v1936 = vmul.f32 %v1504, %v1504
  %v1937 = vmul.f32 %v1507, %v1507
  %v1938 = vmul.f32 %v1512, %v1512
  %v1939 = vmul.f32 %v1515, %v1515
  %v1940 = vmul.f32 %v1520, %v1520
  %v1941 = vmul.f32 %v1523, %v1523
  %v1942 = vmul.f32 %v1528, %v1528
  %v1943 = vmul.f32 %v1531, %v1531
  %v1944 = vmul.f32 %v1536, %v1536
  %v1945 = vmul.f32 %v1539, %v1539
  %v1946 = vmul.f32 %v1544, %v1544
  %v1947 = vmul.f32 %v1547, %v1547
  %v1948 = vmul.f32 %v1552, %v1552
  %v1949 = vmul.f32 %v1555, %v1555
  %v1950 = vmul.f32 %v1560, %v1560
  %v1951 = vmul.f32 %v1563, %v1563
  %v1952 = vmul.f32 %v1568, %v1568
  %v1953 = vmul.f32 %v1571, %v1571
  %v1954 = vmul.f32 %v1576, %v1576
  %v1955 = vmul.f32 %v1579, %v1579
  %v1956 = vmul.f32 %v1584, %v1584
  %v1957 = vmul.f32 %v1587, %v1587
  %v1958 = vmul.f32 %v1592, %v1592
  %v1959 = vmul.f32 %v1595, %v1595
  %v1960 = vmul.f32 %v1600, %v1600
  %v1961 = vmul.f32 %v1603, %v1603
  %v1962 = vmul.f32 %v1608, %v1608
  %v1963 = vmul.f32 %v1611, %v1611
  %v1964 = vadd.f32 %v1792, %v1793
  %v1965 = vadd.f32 %v1964, %v1794
  %v1966 = vadd.f32 %v1965, %v1795
  %v1967 = vadd.f32 %v1966, %v1796
  %v1968 = vadd.f32 %v1967, %v1797
  %v1969 = vadd.f32 %v1968, %v1798
  %v1970 = vadd.f32 %v1969, %v1799
  %v1971 = vadd.f32 %v1970, %v1800
  %v1972 = vadd.f32 %v1971, %v1801
  %v1973 = vadd.f32 %v1972, %v1802
  %v1974 = vadd.f32 %v1973, %v1803
  %v1975 = vadd.f32 %v1974, %v1804
  %v1976 = vadd.f32 %v1975, %v1805
  %v1977 = vadd.f32 %v1976, %v1806
  %v1978 = vadd.f32 %v1977, %v1807
  %v1979 = vadd.f32 %v1978, %v1808
  %v1980 = vadd.f32 %v1979, %v1809
  %v1981 = vadd.f32 %v1980, %v1810
  %v1982 = vadd.f32 %v1981, %v1811
  %v1983 = vadd.f32 %v1982, %v1812
  %v1984 = vadd.f32 %v1983, %v1813
  %v1985 = vadd.f32 %v1984, %v1814
  %v1986 = vadd.f32 %v1985, %v1815
  %v1987 = vadd.f32 %v1986, %v1816
  %v1988 = vadd.f32 %v1987, %v1817
  %v1989 = vadd.f32 %v1988, %v1818
  %v1990 = vadd.f32 %v1989, %v1819
  %v1991 = vadd.f32 %v1990, %v1820
  %v1992 = vadd.f32 %v1991, %v1821
  %v1993 = vadd.f32 %v1992, %v1822
  %v1994 = vadd.f32 %v1993, %v1823
  %v1995 = vadd.f32 %v1994, %v1824
  %v1996 = vadd.f32 %v1995, %v1825
  %v1997 = vadd.f32 %v1996, %v1826
  %v1998 = vadd.f32 %v1997, %v1827
  %v1999 = vadd.f32 %v1998, %v1828
  %v2000 = vadd.f32 %v1999, %v1829
  %v2001 = vadd.f32 %v2000, %v1830
  %v2002 = vadd.f32 %v2001, %v1831
  %v2003 = vadd.f32 %v2002, %v1832
  %v2004 = vadd.f32 %v2003, %v1833
  %v2005 = vadd.f32 %v2004, %v1834
  %v2006 = vadd.f32 %v2005, %v1835
  %v2007 = vadd.f32 %v2006, %v1836
  %v2008 = vadd.f32 %v2007, %v1837
  %v2009 = vadd.f32 %v2008, %v1838
  %v2010 = vadd.f32 %v2009, %v1839
  %v2011 = vadd.f32 %v2010, %v1840
  %v2012 = vadd.f32 %v2011, %v1841
  %v2013 = vadd.f32 %v2012, %v1842
  %v2014 = vadd.f32 %v2013, %v1843
  %v2015 = vadd.f32 %v2014, %v1844
  %v2016 = vadd.f32 %v2015, %v1845
  %v2017 = vadd.f32 %v2016, %v1846
  %v2018 = vadd.f32 %v2017, %v1847
  %v2019 = vadd.f32 %v2018, %v1848
  %v2020 = vadd.f32 %v2019, %v1849
  %v2021 = vadd.f32 %v2020, %v1850
  %v2022 = vadd.f32 %v2021, %v1851
  %v2023 = vadd.f32 %v2022, %v1852
  %v2024 = vadd.f32 %v2023, %v1853
  %v2025 = vadd.f32 %v2024, %v1854
  %v2026 = vadd.f32 %v2025, %v1855
  %v2027 = vadd.f32 %v2026, %v1856
  %v2028 = vadd.f32 %v2027, %v1857
  %v2029 = vadd.f32 %v2028, %v1858
  %v2030 = vadd.f32 %v2029, %v1859
  %v2031 = vadd.f32 %v2030, %v1860
  %v2032 = vadd.f32 %v2031, %v1861
  %v2033 = vadd.f32 %v2032, %v1862
  %v2034 = vadd.f32 %v2033, %v1863
  %v2035 = vadd.f32 %v2034, %v1864
  %v2036 = vadd.f32 %v2035, %v1865
  %v2037 = vadd.f32 %v2036, %v1866
  %v2038 = vadd.f32 %v2037, %v1867
  %v2039 = vadd.f32 %v2038, %v1868
  %v2040 = vadd.f32 %v2039, %v1869
  %v2041 = vadd.f32 %v2040, %v1870
  %v2042 = vadd.f32 %v2041, %v1871
  %v2043 = vadd.f32 %v2042, %v1872
  %v2044 = vadd.f32 %v2043, %v1873
  %v2045 = vadd.f32 %v2044, %v1874
  %v2046 = vadd.f32 %v2045, %v1875
  %v2047 = vadd.f32 %v2046, %v1876
  %v2048 = vadd.f32 %v2047, %v1877
  %v2049 = vadd.f32 %v2048, %v1878
  %v2050 = vadd.f32 %v2049, %v1879
  %v2051 = vadd.f32 %v2050, %v1880
  %v2052 = vadd.f32 %v2051, %v1881
  %v2053 = vadd.f32 %v2052, %v1882
  %v2054 = vadd.f32 %v2053, %v1883
  %v2055 = vadd.f32 %v2054, %v1884
  %v2056 = vadd.f32 %v2055, %v1885
  %v2057 = vadd.f32 %v2056, %v1886
  %v2058 = vadd.f32 %v2057, %v1887
  %v2059 = vadd.f32 %v2058, %v1888
  %v2060 = vadd.f32 %v2059, %v1889
  %v2061 = vadd.f32 %v2060, %v1890
  %v2062 = vadd.f32 %v2061, %v1891
  %v2063 = vadd.f32 %v2062, %v1892
  %v2064 = vadd.f32 %v2063, %v1893
  %v2065 = vadd.f32 %v2064, %v1894
  %v2066 = vadd.f32 %v2065, %v1895
  %v2067 = vadd.f32 %v2066, %v1896
  %v2068 = vadd.f32 %v2067, %v1897
  %v2069 = vadd.f32 %v2068, %v1898
  %v2070 = vadd.f32 %v2069, %v1899
  %v2071 = vadd.f32 %v2070, %v1900
  %v2072 = vadd.f32 %v2071, %v1901
  %v2073 = vadd.f32 %v2072, %v1902
  %v2074 = vadd.f32 %v2073, %v1903
  %v2075 = vadd.f32 %v2074, %v1904
  %v2076 = vadd.f32 %v2075, %v1905
  %v2077 = vadd.f32 %v2076, %v1906
  %v2078 = vadd.f32 %v2077, %v1907
  %v2079 = vadd.f32 %v2078, %v1908
  %v2080 = vadd.f32 %v2079, %v1909
  %v2081 = vadd.f32 %v2080, %v1910
  %v2082 = vadd.f32 %v2081, %v1911
  %v2083 = vadd.f32 %v2082, %v1912
  %v2084 = vadd.f32 %v2083, %v1913
  %v2085 = vadd.f32 %v2084, %v1914
  %v2086 = vadd.f32 %v2085, %v1915
  %v2087 = vadd.f32 %v2086, %v1916
  %v2088 = vadd.f32 %v2087, %v1917
  %v2089 = vadd.f32 %v2088, %v1918
  %v2090 = vadd.f32 %v2089, %v1919
  %v2091 = vadd.f32 %v2090, %v1920
  %v2092 = vadd.f32 %v2091, %v1921
  %v2093 = vadd.f32 %v2092, %v1922
  %v2094 = vadd.f32 %v2093, %v1923
  %v2095 = vadd.f32 %v2094, %v1924
  %v2096 = vadd.f32 %v2095, %v1925
  %v2097 = vadd.f32 %v2096, %v1926
  %v2098 = vadd.f32 %v2097, %v1927
  %v2099 = vadd.f32 %v2098, %v1928
  %v2100 = vadd.f32 %v2099, %v1929
  %v2101 = vadd.f32 %v2100, %v1930
  %v2102 = vadd.f32 %v2101, %v1931
  %v2103 = vadd.f32 %v2102, %v1932
  %v2104 = vadd.f32 %v2103, %v1933
  %v2105 = vadd.f32 %v2104, %v1934
  %v2106 = vadd.f32 %v2105, %v1935
  %v2107 = vadd.f32 %v2106, %v1936
  %v2108 = vadd.f32 %v2107, %v1937
  %v2109 = vadd.f32 %v2108, %v1938
  %v2110 = vadd.f32 %v2109, %v1939
  %v2111 = vadd.f32 %v2110, %v1940
  %v2112 = vadd.f32 %v2111, %v1941
  %v2113 = vadd.f32 %v2112, %v1942
  %v2114 = vadd.f32 %v2113, %v1943
  %v2115 = vadd.f32 %v2114, %v1944
  %v2116 = vadd.f32 %v2115, %v1945
  %v2117 = vadd.f32 %v2116, %v1946
  %v2118 = vadd.f32 %v2117, %v1947
  %v2119 = vadd.f32 %v2118, %v1948
  %v2120 = vadd.f32 %v2119, %v1949
  %v2121 = vadd.f32 %v2120, %v1950
  %v2122 = vadd.f32 %v2121, %v1951
  %v2123 = vadd.f32 %v2122, %v1952
  %v2124 = vadd.f32 %v2123, %v1953
  %v2125 = vadd.f32 %v2124, %v1954
  %v2126 = vadd.f32 %v2125, %v1955
  %v2127 = vadd.f32 %v2126, %v1956
  %v2128 = vadd.f32 %v2127, %v1957
  %v2129 = vadd.f32 %v2128, %v1958
  %v2130 = vadd.f32 %v2129, %v1959
  %v2131 = vadd.f32 %v2130, %v1960
  %v2132 = vadd.f32 %v2131, %v1961
  %v2133 = vadd.f32 %v2132, %v1962
  %v2134 = vadd.f32 %v2133, %v1963
  %v2135 = vrot.slane %v2134, 4
  %v2136 = vadd.f32 %v2134, %v2135
  %v2137 = vrot.slane %v2136, 2
  %v2138 = vadd.f32 %v2136, %v2137
  %v2139 = vrot.slane %v2138, 1
  %v2140 = vadd.f32 %v2138, %v2139
  %v2141 = vmul.f32 %v2140, 0.000739645
  %v2142 = vmul.f32 %v1791, %v1791
  %v2143 = vsub.f32 %v2141, %v2142
  %v2144 = vmax.f32 %v2143, 0.0
  %v2145 = vadd.f32 %v2144, 1e-05
  %v2146 = vrsqrt.pop %v2145
  %v2147 = vld [vmem:[%s2] sm:$0x1]
  %v2148 = vmul.f32 %v2146, %v2147
  %v2149 = vld [vmem:[%s3] sm:$0x1]
  %v2150 = vmul.f32 %v1791, %v2148
  %v2151 = vsub.f32 %v2149, %v2150
  %v2152 = vlaneseq
  %v2153 = vshrl.u32 %v2152, 7
  %v2154 = vsub.s32 0, %v2153
  %v2155 = vrot.slane %v2148, %v2154
  %v2156 = vmul.f32 %v928, %v2155
  %v2157 = vmul.f32 %v931, %v2155
  %v2158 = vmul.f32 %v936, %v2155
  %v2159 = vmul.f32 %v939, %v2155
  %v2160 = vmul.f32 %v944, %v2155
  %v2161 = vmul.f32 %v947, %v2155
  %v2162 = vmul.f32 %v952, %v2155
  %v2163 = vmul.f32 %v955, %v2155
  %v2164 = vmul.f32 %v960, %v2155
  %v2165 = vmul.f32 %v963, %v2155
  %v2166 = vmul.f32 %v968, %v2155
  %v2167 = vmul.f32 %v971, %v2155
  %v2168 = vmul.f32 %v976, %v2155
  %v2169 = vmul.f32 %v979, %v2155
  %v2170 = vmul.f32 %v984, %v2155
  %v2171 = vmul.f32 %v987, %v2155
  %v2172 = vmul.f32 %v992, %v2155
  %v2173 = vmul.f32 %v995, %v2155
  %v2174 = vmul.f32 %v1000, %v2155
  %v2175 = vmul.f32 %v1003, %v2155
  %v2176 = vmul.f32 %v1008, %v2155
  %v2177 = vmul.f32 %v1011, %v2155
  %v2178 = vmul.f32 %v1016, %v2155
  %v2179 = vmul.f32 %v1019, %v2155
  %v2180 = vmul.f32 %v1024, %v2155
  %v2181 = vmul.f32 %v1027, %v2155
  %v2182 = vmul.f32 %v1032, %v2155
  %v2183 = vmul.f32 %v1035, %v2155
  %v2184 = vmul.f32 %v1040, %v2155
  %v2185 = vmul.f32 %v1043, %v2155
  %v2186 = vmul.f32 %v1048, %v2155
  %v2187 = vmul.f32 %v1051, %v2155
  %v2188 = vmul.f32 %v1056, %v2155
  %v2189 = vmul.f32 %v1059, %v2155
  %v2190 = vmul.f32 %v1064, %v2155
  %v2191 = vmul.f32 %v1067, %v2155
  %v2192 = vmul.f32 %v1072, %v2155
  %v2193 = vmul.f32 %v1075, %v2155
  %v2194 = vmul.f32 %v1080, %v2155
  %v2195 = vmul.f32 %v1083, %v2155
  %v2196 = vmul.f32 %v1088, %v2155
  %v2197 = vmul.f32 %v1091, %v2155
  %v2198 = vmul.f32 %v1096, %v2155
  %v2199 = vmul.f32 %v1099, %v2155
  %v2200 = vmul.f32 %v1104, %v2155
  %v2201 = vmul.f32 %v1107, %v2155
  %v2202 = vmul.f32 %v1112, %v2155
  %v2203 = vmul.f32 %v1115, %v2155
  %v2204 = vmul.f32 %v1120, %v2155
  %v2205 = vmul.f32 %v1123, %v2155
  %v2206 = vmul.f32 %v1128, %v2155
  %v2207 = vmul.f32 %v1131, %v2155
  %v2208 = vmul.f32 %v1136, %v2155
  %v2209 = vmul.f32 %v1139, %v2155
  %v2210 = vmul.f32 %v1144, %v2155
  %v2211 = vmul.f32 %v1147, %v2155
  %v2212 = vmul.f32 %v1152, %v2155
  %v2213 = vmul.f32 %v1155, %v2155
  %v2214 = vmul.f32 %v1160, %v2155
  %v2215 = vmul.f32 %v1163, %v2155
  %v2216 = vmul.f32 %v1168, %v2155
  %v2217 = vmul.f32 %v1171, %v2155
  %v2218 = vmul.f32 %v1176, %v2155
  %v2219 = vmul.f32 %v1179, %v2155
  %v2220 = vmul.f32 %v1184, %v2155
  %v2221 = vmul.f32 %v1187, %v2155
  %v2222 = vmul.f32 %v1192, %v2155
  %v2223 = vmul.f32 %v1195, %v2155
  %v2224 = vmul.f32 %v1200, %v2155
  %v2225 = vmul.f32 %v1203, %v2155
  %v2226 = vmul.f32 %v1208, %v2155
  %v2227 = vmul.f32 %v1211, %v2155
  %v2228 = vmul.f32 %v1216, %v2155
  %v2229 = vmul.f32 %v1219, %v2155
  %v2230 = vmul.f32 %v1224, %v2155
  %v2231 = vmul.f32 %v1227, %v2155
  %v2232 = vmul.f32 %v1232, %v2155
  %v2233 = vmul.f32 %v1235, %v2155
  %v2234 = vmul.f32 %v1240, %v2155
  %v2235 = vmul.f32 %v1243, %v2155
  %v2236 = vmul.f32 %v1248, %v2155
  %v2237 = vmul.f32 %v1251, %v2155
  %v2238 = vmul.f32 %v1256, %v2155
  %v2239 = vmul.f32 %v1259, %v2155
  %v2240 = vmul.f32 %v1264, %v2155
  %v2241 = vmul.f32 %v1267, %v2155
  %v2242 = vmul.f32 %v1272, %v2155
  %v2243 = vmul.f32 %v1275, %v2155
  %v2244 = vmul.f32 %v1280, %v2155
  %v2245 = vmul.f32 %v1283, %v2155
  %v2246 = vmul.f32 %v1288, %v2155
  %v2247 = vmul.f32 %v1291, %v2155
  %v2248 = vmul.f32 %v1296, %v2155
  %v2249 = vmul.f32 %v1299, %v2155
  %v2250 = vmul.f32 %v1304, %v2155
  %v2251 = vmul.f32 %v1307, %v2155
  %v2252 = vmul.f32 %v1312, %v2155
  %v2253 = vmul.f32 %v1315, %v2155
  %v2254 = vmul.f32 %v1320, %v2155
  %v2255 = vmul.f32 %v1323, %v2155
  %v2256 = vmul.f32 %v1328, %v2155
  %v2257 = vmul.f32 %v1331, %v2155
  %v2258 = vmul.f32 %v1336, %v2155
  %v2259 = vmul.f32 %v1339, %v2155
  %v2260 = vmul.f32 %v1344, %v2155
  %v2261 = vmul.f32 %v1347, %v2155
  %v2262 = vmul.f32 %v1352, %v2155
  %v2263 = vmul.f32 %v1355, %v2155
  %v2264 = vmul.f32 %v1360, %v2155
  %v2265 = vmul.f32 %v1363, %v2155
  %v2266 = vmul.f32 %v1368, %v2155
  %v2267 = vmul.f32 %v1371, %v2155
  %v2268 = vmul.f32 %v1376, %v2155
  %v2269 = vmul.f32 %v1379, %v2155
  %v2270 = vmul.f32 %v1384, %v2155
  %v2271 = vmul.f32 %v1387, %v2155
  %v2272 = vmul.f32 %v1392, %v2155
  %v2273 = vmul.f32 %v1395, %v2155
  %v2274 = vmul.f32 %v1400, %v2155
  %v2275 = vmul.f32 %v1403, %v2155
  %v2276 = vmul.f32 %v1408, %v2155
  %v2277 = vmul.f32 %v1411, %v2155
  %v2278 = vmul.f32 %v1416, %v2155
  %v2279 = vmul.f32 %v1419, %v2155
  %v2280 = vmul.f32 %v1424, %v2155
  %v2281 = vmul.f32 %v1427, %v2155
  %v2282 = vmul.f32 %v1432, %v2155
  %v2283 = vmul.f32 %v1435, %v2155
  %v2284 = vmul.f32 %v1440, %v2155
  %v2285 = vmul.f32 %v1443, %v2155
  %v2286 = vmul.f32 %v1448, %v2155
  %v2287 = vmul.f32 %v1451, %v2155
  %v2288 = vmul.f32 %v1456, %v2155
  %v2289 = vmul.f32 %v1459, %v2155
  %v2290 = vmul.f32 %v1464, %v2155
  %v2291 = vmul.f32 %v1467, %v2155
  %v2292 = vmul.f32 %v1472, %v2155
  %v2293 = vmul.f32 %v1475, %v2155
  %v2294 = vmul.f32 %v1480, %v2155
  %v2295 = vmul.f32 %v1483, %v2155
  %v2296 = vmul.f32 %v1488, %v2155
  %v2297 = vmul.f32 %v1491, %v2155
  %v2298 = vmul.f32 %v1496, %v2155
  %v2299 = vmul.f32 %v1499, %v2155
  %v2300 = vmul.f32 %v1504, %v2155
  %v2301 = vmul.f32 %v1507, %v2155
  %v2302 = vmul.f32 %v1512, %v2155
  %v2303 = vmul.f32 %v1515, %v2155
  %v2304 = vmul.f32 %v1520, %v2155
  %v2305 = vmul.f32 %v1523, %v2155
  %v2306 = vmul.f32 %v1528, %v2155
  %v2307 = vmul.f32 %v1531, %v2155
  %v2308 = vmul.f32 %v1536, %v2155
  %v2309 = vmul.f32 %v1539, %v2155
  %v2310 = vmul.f32 %v1544, %v2155
  %v2311 = vmul.f32 %v1547, %v2155
  %v2312 = vmul.f32 %v1552, %v2155
  %v2313 = vmul.f32 %v1555, %v2155
  %v2314 = vmul.f32 %v1560, %v2155
  %v2315 = vmul.f32 %v1563, %v2155
  %v2316 = vmul.f32 %v1568, %v2155
  %v2317 = vmul.f32 %v1571, %v2155
  %v2318 = vmul.f32 %v1576, %v2155
  %v2319 = vmul.f32 %v1579, %v2155
  %v2320 = vmul.f32 %v1584, %v2155
  %v2321 = vmul.f32 %v1587, %v2155
  %v2322 = vmul.f32 %v1592, %v2155
  %v2323 = vmul.f32 %v1595, %v2155
  %v2324 = vmul.f32 %v1600, %v2155
  %v2325 = vmul.f32 %v1603, %v2155
  %v2326 = vmul.f32 %v1608, %v2155
  %v2327 = vmul.f32 %v1611, %v2155
  %v2329 = vlaneseq
  %v2330 = vshrl.u32 %v2329, 7
  %v2331 = vsub.s32 0, %v2330
  %v2332 = vrot.slane %v2151, %v2331
  %v2334 = vadd.f32 %v2156, %v2332
  %v2335 = vadd.f32 %v2157, %v2332
  %v2336 = vadd.f32 %v2158, %v2332
  %v2337 = vadd.f32 %v2159, %v2332
  %v2338 = vadd.f32 %v2160, %v2332
  %v2339 = vadd.f32 %v2161, %v2332
  %v2340 = vadd.f32 %v2162, %v2332
  %v2341 = vadd.f32 %v2163, %v2332
  %v2342 = vadd.f32 %v2164, %v2332
  %v2343 = vadd.f32 %v2165, %v2332
  %v2344 = vadd.f32 %v2166, %v2332
  %v2345 = vadd.f32 %v2167, %v2332
  %v2346 = vadd.f32 %v2168, %v2332
  %v2347 = vadd.f32 %v2169, %v2332
  %v2348 = vadd.f32 %v2170, %v2332
  %v2349 = vadd.f32 %v2171, %v2332
  %v2350 = vadd.f32 %v2172, %v2332
  %v2351 = vadd.f32 %v2173, %v2332
  %v2352 = vadd.f32 %v2174, %v2332
  %v2353 = vadd.f32 %v2175, %v2332
  %v2354 = vadd.f32 %v2176, %v2332
  %v2355 = vadd.f32 %v2177, %v2332
  %v2356 = vadd.f32 %v2178, %v2332
  %v2357 = vadd.f32 %v2179, %v2332
  %v2358 = vadd.f32 %v2180, %v2332
  %v2359 = vadd.f32 %v2181, %v2332
  %v2360 = vadd.f32 %v2182, %v2332
  %v2361 = vadd.f32 %v2183, %v2332
  %v2362 = vadd.f32 %v2184, %v2332
  %v2363 = vadd.f32 %v2185, %v2332
  %v2364 = vadd.f32 %v2186, %v2332
  %v2365 = vadd.f32 %v2187, %v2332
  %v2366 = vadd.f32 %v2188, %v2332
  %v2367 = vadd.f32 %v2189, %v2332
  %v2368 = vadd.f32 %v2190, %v2332
  %v2369 = vadd.f32 %v2191, %v2332
  %v2370 = vadd.f32 %v2192, %v2332
  %v2371 = vadd.f32 %v2193, %v2332
  %v2372 = vadd.f32 %v2194, %v2332
  %v2373 = vadd.f32 %v2195, %v2332
  %v2374 = vadd.f32 %v2196, %v2332
  %v2375 = vadd.f32 %v2197, %v2332
  %v2376 = vadd.f32 %v2198, %v2332
  %v2377 = vadd.f32 %v2199, %v2332
  %v2378 = vadd.f32 %v2200, %v2332
  %v2379 = vadd.f32 %v2201, %v2332
  %v2380 = vadd.f32 %v2202, %v2332
  %v2381 = vadd.f32 %v2203, %v2332
  %v2382 = vadd.f32 %v2204, %v2332
  %v2383 = vadd.f32 %v2205, %v2332
  %v2384 = vadd.f32 %v2206, %v2332
  %v2385 = vadd.f32 %v2207, %v2332
  %v2386 = vadd.f32 %v2208, %v2332
  %v2387 = vadd.f32 %v2209, %v2332
  %v2388 = vadd.f32 %v2210, %v2332
  %v2389 = vadd.f32 %v2211, %v2332
  %v2390 = vadd.f32 %v2212, %v2332
  %v2391 = vadd.f32 %v2213, %v2332
  %v2392 = vadd.f32 %v2214, %v2332
  %v2393 = vadd.f32 %v2215, %v2332
  %v2394 = vadd.f32 %v2216, %v2332
  %v2395 = vadd.f32 %v2217, %v2332
  %v2396 = vadd.f32 %v2218, %v2332
  %v2397 = vadd.f32 %v2219, %v2332
  %v2398 = vadd.f32 %v2220, %v2332
  %v2399 = vadd.f32 %v2221, %v2332
  %v2400 = vadd.f32 %v2222, %v2332
  %v2401 = vadd.f32 %v2223, %v2332
  %v2402 = vadd.f32 %v2224, %v2332
  %v2403 = vadd.f32 %v2225, %v2332
  %v2404 = vadd.f32 %v2226, %v2332
  %v2405 = vadd.f32 %v2227, %v2332
  %v2406 = vadd.f32 %v2228, %v2332
  %v2407 = vadd.f32 %v2229, %v2332
  %v2408 = vadd.f32 %v2230, %v2332
  %v2409 = vadd.f32 %v2231, %v2332
  %v2410 = vadd.f32 %v2232, %v2332
  %v2411 = vadd.f32 %v2233, %v2332
  %v2412 = vadd.f32 %v2234, %v2332
  %v2413 = vadd.f32 %v2235, %v2332
  %v2414 = vadd.f32 %v2236, %v2332
  %v2415 = vadd.f32 %v2237, %v2332
  %v2416 = vadd.f32 %v2238, %v2332
  %v2417 = vadd.f32 %v2239, %v2332
  %v2418 = vadd.f32 %v2240, %v2332
  %v2419 = vadd.f32 %v2241, %v2332
  %v2420 = vadd.f32 %v2242, %v2332
  %v2421 = vadd.f32 %v2243, %v2332
  %v2422 = vadd.f32 %v2244, %v2332
  %v2423 = vadd.f32 %v2245, %v2332
  %v2424 = vadd.f32 %v2246, %v2332
  %v2425 = vadd.f32 %v2247, %v2332
  %v2426 = vadd.f32 %v2248, %v2332
  %v2427 = vadd.f32 %v2249, %v2332
  %v2428 = vadd.f32 %v2250, %v2332
  %v2429 = vadd.f32 %v2251, %v2332
  %v2430 = vadd.f32 %v2252, %v2332
  %v2431 = vadd.f32 %v2253, %v2332
  %v2432 = vadd.f32 %v2254, %v2332
  %v2433 = vadd.f32 %v2255, %v2332
  %v2434 = vadd.f32 %v2256, %v2332
  %v2435 = vadd.f32 %v2257, %v2332
  %v2436 = vadd.f32 %v2258, %v2332
  %v2437 = vadd.f32 %v2259, %v2332
  %v2438 = vadd.f32 %v2260, %v2332
  %v2439 = vadd.f32 %v2261, %v2332
  %v2440 = vadd.f32 %v2262, %v2332
  %v2441 = vadd.f32 %v2263, %v2332
  %v2442 = vadd.f32 %v2264, %v2332
  %v2443 = vadd.f32 %v2265, %v2332
  %v2444 = vadd.f32 %v2266, %v2332
  %v2445 = vadd.f32 %v2267, %v2332
  %v2446 = vadd.f32 %v2268, %v2332
  %v2447 = vadd.f32 %v2269, %v2332
  %v2448 = vadd.f32 %v2270, %v2332
  %v2449 = vadd.f32 %v2271, %v2332
  %v2450 = vadd.f32 %v2272, %v2332
  %v2451 = vadd.f32 %v2273, %v2332
  %v2452 = vadd.f32 %v2274, %v2332
  %v2453 = vadd.f32 %v2275, %v2332
  %v2454 = vadd.f32 %v2276, %v2332
  %v2455 = vadd.f32 %v2277, %v2332
  %v2456 = vadd.f32 %v2278, %v2332
  %v2457 = vadd.f32 %v2279, %v2332
  %v2458 = vadd.f32 %v2280, %v2332
  %v2459 = vadd.f32 %v2281, %v2332
  %v2460 = vadd.f32 %v2282, %v2332
  %v2461 = vadd.f32 %v2283, %v2332
  %v2462 = vadd.f32 %v2284, %v2332
  %v2463 = vadd.f32 %v2285, %v2332
  %v2464 = vadd.f32 %v2286, %v2332
  %v2465 = vadd.f32 %v2287, %v2332
  %v2466 = vadd.f32 %v2288, %v2332
  %v2467 = vadd.f32 %v2289, %v2332
  %v2468 = vadd.f32 %v2290, %v2332
  %v2469 = vadd.f32 %v2291, %v2332
  %v2470 = vadd.f32 %v2292, %v2332
  %v2471 = vadd.f32 %v2293, %v2332
  %v2472 = vadd.f32 %v2294, %v2332
  %v2473 = vadd.f32 %v2295, %v2332
  %v2474 = vadd.f32 %v2296, %v2332
  %v2475 = vadd.f32 %v2297, %v2332
  %v2476 = vadd.f32 %v2298, %v2332
  %v2477 = vadd.f32 %v2299, %v2332
  %v2478 = vadd.f32 %v2300, %v2332
  %v2479 = vadd.f32 %v2301, %v2332
  %v2480 = vadd.f32 %v2302, %v2332
  %v2481 = vadd.f32 %v2303, %v2332
  %v2482 = vadd.f32 %v2304, %v2332
  %v2483 = vadd.f32 %v2305, %v2332
  %v2484 = vadd.f32 %v2306, %v2332
  %v2485 = vadd.f32 %v2307, %v2332
  %v2486 = vadd.f32 %v2308, %v2332
  %v2487 = vadd.f32 %v2309, %v2332
  %v2488 = vadd.f32 %v2310, %v2332
  %v2489 = vadd.f32 %v2311, %v2332
  %v2490 = vadd.f32 %v2312, %v2332
  %v2491 = vadd.f32 %v2313, %v2332
  %v2492 = vadd.f32 %v2314, %v2332
  %v2493 = vadd.f32 %v2315, %v2332
  %v2494 = vadd.f32 %v2316, %v2332
  %v2495 = vadd.f32 %v2317, %v2332
  %v2496 = vadd.f32 %v2318, %v2332
  %v2497 = vadd.f32 %v2319, %v2332
  %v2498 = vadd.f32 %v2320, %v2332
  %v2499 = vadd.f32 %v2321, %v2332
  %v2500 = vadd.f32 %v2322, %v2332
  %v2501 = vadd.f32 %v2323, %v2332
  %v2502 = vadd.f32 %v2324, %v2332
  %v2503 = vadd.f32 %v2325, %v2332
  %v2504 = vadd.f32 %v2326, %v2332
  %v2505 = vadd.f32 %v2327, %v2332
  %v2506 = vmax.f32 %v2334, 0.0
  %v2507 = vmax.f32 %v2335, 0.0
  %v2508 = vmax.f32 %v2336, 0.0
  %v2509 = vmax.f32 %v2337, 0.0
  %v2510 = vmax.f32 %v2338, 0.0
  %v2511 = vmax.f32 %v2339, 0.0
  %v2512 = vmax.f32 %v2340, 0.0
  %v2513 = vmax.f32 %v2341, 0.0
  %v2514 = vmax.f32 %v2342, 0.0
  %v2515 = vmax.f32 %v2343, 0.0
  %v2516 = vmax.f32 %v2344, 0.0
  %v2517 = vmax.f32 %v2345, 0.0
  %v2518 = vmax.f32 %v2346, 0.0
  %v2519 = vmax.f32 %v2347, 0.0
  %v2520 = vmax.f32 %v2348, 0.0
  %v2521 = vmax.f32 %v2349, 0.0
  %v2522 = vmax.f32 %v2350, 0.0
  %v2523 = vmax.f32 %v2351, 0.0
  %v2524 = vmax.f32 %v2352, 0.0
  %v2525 = vmax.f32 %v2353, 0.0
  %v2526 = vmax.f32 %v2354, 0.0
  %v2527 = vmax.f32 %v2355, 0.0
  %v2528 = vmax.f32 %v2356, 0.0
  %v2529 = vmax.f32 %v2357, 0.0
  %v2530 = vmax.f32 %v2358, 0.0
  %v2531 = vmax.f32 %v2359, 0.0
  %v2532 = vmax.f32 %v2360, 0.0
  %v2533 = vmax.f32 %v2361, 0.0
  %v2534 = vmax.f32 %v2362, 0.0
  %v2535 = vmax.f32 %v2363, 0.0
  %v2536 = vmax.f32 %v2364, 0.0
  %v2537 = vmax.f32 %v2365, 0.0
  %v2538 = vmax.f32 %v2366, 0.0
  %v2539 = vmax.f32 %v2367, 0.0
  %v2540 = vmax.f32 %v2368, 0.0
  %v2541 = vmax.f32 %v2369, 0.0
  %v2542 = vmax.f32 %v2370, 0.0
  %v2543 = vmax.f32 %v2371, 0.0
  %v2544 = vmax.f32 %v2372, 0.0
  %v2545 = vmax.f32 %v2373, 0.0
  %v2546 = vmax.f32 %v2374, 0.0
  %v2547 = vmax.f32 %v2375, 0.0
  %v2548 = vmax.f32 %v2376, 0.0
  %v2549 = vmax.f32 %v2377, 0.0
  %v2550 = vmax.f32 %v2378, 0.0
  %v2551 = vmax.f32 %v2379, 0.0
  %v2552 = vmax.f32 %v2380, 0.0
  %v2553 = vmax.f32 %v2381, 0.0
  %v2554 = vmax.f32 %v2382, 0.0
  %v2555 = vmax.f32 %v2383, 0.0
  %v2556 = vmax.f32 %v2384, 0.0
  %v2557 = vmax.f32 %v2385, 0.0
  %v2558 = vmax.f32 %v2386, 0.0
  %v2559 = vmax.f32 %v2387, 0.0
  %v2560 = vmax.f32 %v2388, 0.0
  %v2561 = vmax.f32 %v2389, 0.0
  %v2562 = vmax.f32 %v2390, 0.0
  %v2563 = vmax.f32 %v2391, 0.0
  %v2564 = vmax.f32 %v2392, 0.0
  %v2565 = vmax.f32 %v2393, 0.0
  %v2566 = vmax.f32 %v2394, 0.0
  %v2567 = vmax.f32 %v2395, 0.0
  %v2568 = vmax.f32 %v2396, 0.0
  %v2569 = vmax.f32 %v2397, 0.0
  %v2570 = vmax.f32 %v2398, 0.0
  %v2571 = vmax.f32 %v2399, 0.0
  %v2572 = vmax.f32 %v2400, 0.0
  %v2573 = vmax.f32 %v2401, 0.0
  %v2574 = vmax.f32 %v2402, 0.0
  %v2575 = vmax.f32 %v2403, 0.0
  %v2576 = vmax.f32 %v2404, 0.0
  %v2577 = vmax.f32 %v2405, 0.0
  %v2578 = vmax.f32 %v2406, 0.0
  %v2579 = vmax.f32 %v2407, 0.0
  %v2580 = vmax.f32 %v2408, 0.0
  %v2581 = vmax.f32 %v2409, 0.0
  %v2582 = vmax.f32 %v2410, 0.0
  %v2583 = vmax.f32 %v2411, 0.0
  %v2584 = vmax.f32 %v2412, 0.0
  %v2585 = vmax.f32 %v2413, 0.0
  %v2586 = vmax.f32 %v2414, 0.0
  %v2587 = vmax.f32 %v2415, 0.0
  %v2588 = vmax.f32 %v2416, 0.0
  %v2589 = vmax.f32 %v2417, 0.0
  %v2590 = vmax.f32 %v2418, 0.0
  %v2591 = vmax.f32 %v2419, 0.0
  %v2592 = vmax.f32 %v2420, 0.0
  %v2593 = vmax.f32 %v2421, 0.0
  %v2594 = vmax.f32 %v2422, 0.0
  %v2595 = vmax.f32 %v2423, 0.0
  %v2596 = vmax.f32 %v2424, 0.0
  %v2597 = vmax.f32 %v2425, 0.0
  %v2598 = vmax.f32 %v2426, 0.0
  %v2599 = vmax.f32 %v2427, 0.0
  %v2600 = vmax.f32 %v2428, 0.0
  %v2601 = vmax.f32 %v2429, 0.0
  %v2602 = vmax.f32 %v2430, 0.0
  %v2603 = vmax.f32 %v2431, 0.0
  %v2604 = vmax.f32 %v2432, 0.0
  %v2605 = vmax.f32 %v2433, 0.0
  %v2606 = vmax.f32 %v2434, 0.0
  %v2607 = vmax.f32 %v2435, 0.0
  %v2608 = vmax.f32 %v2436, 0.0
  %v2609 = vmax.f32 %v2437, 0.0
  %v2610 = vmax.f32 %v2438, 0.0
  %v2611 = vmax.f32 %v2439, 0.0
  %v2612 = vmax.f32 %v2440, 0.0
  %v2613 = vmax.f32 %v2441, 0.0
  %v2614 = vmax.f32 %v2442, 0.0
  %v2615 = vmax.f32 %v2443, 0.0
  %v2616 = vmax.f32 %v2444, 0.0
  %v2617 = vmax.f32 %v2445, 0.0
  %v2618 = vmax.f32 %v2446, 0.0
  %v2619 = vmax.f32 %v2447, 0.0
  %v2620 = vmax.f32 %v2448, 0.0
  %v2621 = vmax.f32 %v2449, 0.0
  %v2622 = vmax.f32 %v2450, 0.0
  %v2623 = vmax.f32 %v2451, 0.0
  %v2624 = vmax.f32 %v2452, 0.0
  %v2625 = vmax.f32 %v2453, 0.0
  %v2626 = vmax.f32 %v2454, 0.0
  %v2627 = vmax.f32 %v2455, 0.0
  %v2628 = vmax.f32 %v2456, 0.0
  %v2629 = vmax.f32 %v2457, 0.0
  %v2630 = vmax.f32 %v2458, 0.0
  %v2631 = vmax.f32 %v2459, 0.0
  %v2632 = vmax.f32 %v2460, 0.0
  %v2633 = vmax.f32 %v2461, 0.0
  %v2634 = vmax.f32 %v2462, 0.0
  %v2635 = vmax.f32 %v2463, 0.0
  %v2636 = vmax.f32 %v2464, 0.0
  %v2637 = vmax.f32 %v2465, 0.0
  %v2638 = vmax.f32 %v2466, 0.0
  %v2639 = vmax.f32 %v2467, 0.0
  %v2640 = vmax.f32 %v2468, 0.0
  %v2641 = vmax.f32 %v2469, 0.0
  %v2642 = vmax.f32 %v2470, 0.0
  %v2643 = vmax.f32 %v2471, 0.0
  %v2644 = vmax.f32 %v2472, 0.0
  %v2645 = vmax.f32 %v2473, 0.0
  %v2646 = vmax.f32 %v2474, 0.0
  %v2647 = vmax.f32 %v2475, 0.0
  %v2648 = vmax.f32 %v2476, 0.0
  %v2649 = vmax.f32 %v2477, 0.0
  %v2650 = vmax.f32 %v2478, 0.0
  %v2651 = vmax.f32 %v2479, 0.0
  %v2652 = vmax.f32 %v2480, 0.0
  %v2653 = vmax.f32 %v2481, 0.0
  %v2654 = vmax.f32 %v2482, 0.0
  %v2655 = vmax.f32 %v2483, 0.0
  %v2656 = vmax.f32 %v2484, 0.0
  %v2657 = vmax.f32 %v2485, 0.0
  %v2658 = vmax.f32 %v2486, 0.0
  %v2659 = vmax.f32 %v2487, 0.0
  %v2660 = vmax.f32 %v2488, 0.0
  %v2661 = vmax.f32 %v2489, 0.0
  %v2662 = vmax.f32 %v2490, 0.0
  %v2663 = vmax.f32 %v2491, 0.0
  %v2664 = vmax.f32 %v2492, 0.0
  %v2665 = vmax.f32 %v2493, 0.0
  %v2666 = vmax.f32 %v2494, 0.0
  %v2667 = vmax.f32 %v2495, 0.0
  %v2668 = vmax.f32 %v2496, 0.0
  %v2669 = vmax.f32 %v2497, 0.0
  %v2670 = vmax.f32 %v2498, 0.0
  %v2671 = vmax.f32 %v2499, 0.0
  %v2672 = vmax.f32 %v2500, 0.0
  %v2673 = vmax.f32 %v2501, 0.0
  %v2674 = vmax.f32 %v2502, 0.0
  %v2675 = vmax.f32 %v2503, 0.0
  %v2676 = vmax.f32 %v2504, 0.0
  %v2677 = vmax.f32 %v2505, 0.0
  %v2678 = vmax.f32 %v2506, %v2549
  %v2679 = vmax.f32 %v2507, %v2550
  %v2680 = vmax.f32 %v2508, %v2551
  %v2681 = vmax.f32 %v2509, %v2552
  %v2682 = vmax.f32 %v2510, %v2553
  %v2683 = vmax.f32 %v2511, %v2554
  %v2684 = vmax.f32 %v2512, %v2555
  %v2685 = vmax.f32 %v2513, %v2556
  %v2686 = vmax.f32 %v2514, %v2557
  %v2687 = vmax.f32 %v2515, %v2558
  %v2688 = vmax.f32 %v2516, %v2559
  %v2689 = vmax.f32 %v2517, %v2560
  %v2690 = vmax.f32 %v2518, %v2561
  %v2691 = vmax.f32 %v2519, %v2562
  %v2692 = vmax.f32 %v2520, %v2563
  %v2693 = vmax.f32 %v2521, %v2564
  %v2694 = vmax.f32 %v2522, %v2565
  %v2695 = vmax.f32 %v2523, %v2566
  %v2696 = vmax.f32 %v2524, %v2567
  %v2697 = vmax.f32 %v2525, %v2568
  %v2698 = vmax.f32 %v2526, %v2569
  %v2699 = vmax.f32 %v2527, %v2570
  %v2700 = vmax.f32 %v2528, %v2571
  %v2701 = vmax.f32 %v2529, %v2572
  %v2702 = vmax.f32 %v2530, %v2573
  %v2703 = vmax.f32 %v2531, %v2574
  %v2704 = vmax.f32 %v2532, %v2575
  %v2705 = vmax.f32 %v2533, %v2576
  %v2706 = vmax.f32 %v2534, %v2577
  %v2707 = vmax.f32 %v2535, %v2578
  %v2708 = vmax.f32 %v2536, %v2579
  %v2709 = vmax.f32 %v2537, %v2580
  %v2710 = vmax.f32 %v2538, %v2581
  %v2711 = vmax.f32 %v2539, %v2582
  %v2712 = vmax.f32 %v2540, %v2583
  %v2713 = vmax.f32 %v2541, %v2584
  %v2714 = vmax.f32 %v2542, %v2585
  %v2715 = vmax.f32 %v2543, %v2586
  %v2716 = vmax.f32 %v2544, %v2587
  %v2717 = vmax.f32 %v2545, %v2588
  %v2718 = vmax.f32 %v2546, %v2589
  %v2719 = vmax.f32 %v2547, %v2590
  %v2720 = vmax.f32 %v2548, %v2591
  %v2721 = vmax.f32 %v2592, %v2635
  %v2722 = vmax.f32 %v2593, %v2636
  %v2723 = vmax.f32 %v2594, %v2637
  %v2724 = vmax.f32 %v2595, %v2638
  %v2725 = vmax.f32 %v2596, %v2639
  %v2726 = vmax.f32 %v2597, %v2640
  %v2727 = vmax.f32 %v2598, %v2641
  %v2728 = vmax.f32 %v2599, %v2642
  %v2729 = vmax.f32 %v2600, %v2643
  %v2730 = vmax.f32 %v2601, %v2644
  %v2731 = vmax.f32 %v2602, %v2645
  %v2732 = vmax.f32 %v2603, %v2646
  %v2733 = vmax.f32 %v2604, %v2647
  %v2734 = vmax.f32 %v2605, %v2648
  %v2735 = vmax.f32 %v2606, %v2649
  %v2736 = vmax.f32 %v2607, %v2650
  %v2737 = vmax.f32 %v2608, %v2651
  %v2738 = vmax.f32 %v2609, %v2652
  %v2739 = vmax.f32 %v2610, %v2653
  %v2740 = vmax.f32 %v2611, %v2654
  %v2741 = vmax.f32 %v2612, %v2655
  %v2742 = vmax.f32 %v2613, %v2656
  %v2743 = vmax.f32 %v2614, %v2657
  %v2744 = vmax.f32 %v2615, %v2658
  %v2745 = vmax.f32 %v2616, %v2659
  %v2746 = vmax.f32 %v2617, %v2660
  %v2747 = vmax.f32 %v2618, %v2661
  %v2748 = vmax.f32 %v2619, %v2662
  %v2749 = vmax.f32 %v2620, %v2663
  %v2750 = vmax.f32 %v2621, %v2664
  %v2751 = vmax.f32 %v2622, %v2665
  %v2752 = vmax.f32 %v2623, %v2666
  %v2753 = vmax.f32 %v2624, %v2667
  %v2754 = vmax.f32 %v2625, %v2668
  %v2755 = vmax.f32 %v2626, %v2669
  %v2756 = vmax.f32 %v2627, %v2670
  %v2757 = vmax.f32 %v2628, %v2671
  %v2758 = vmax.f32 %v2629, %v2672
  %v2759 = vmax.f32 %v2630, %v2673
  %v2760 = vmax.f32 %v2631, %v2674
  %v2761 = vmax.f32 %v2632, %v2675
  %v2762 = vmax.f32 %v2633, %v2676
  %v2763 = vmax.f32 %v2634, %v2677
  %v2764 = vmax.f32 %v2678, %v2721
  %v2765 = vmax.f32 %v2679, %v2722
  %v2766 = vmax.f32 %v2680, %v2723
  %v2767 = vmax.f32 %v2681, %v2724
  %v2768 = vmax.f32 %v2682, %v2725
  %v2769 = vmax.f32 %v2683, %v2726
  %v2770 = vmax.f32 %v2684, %v2727
  %v2771 = vmax.f32 %v2685, %v2728
  %v2772 = vmax.f32 %v2686, %v2729
  %v2773 = vmax.f32 %v2687, %v2730
  %v2774 = vmax.f32 %v2688, %v2731
  %v2775 = vmax.f32 %v2689, %v2732
  %v2776 = vmax.f32 %v2690, %v2733
  %v2777 = vmax.f32 %v2691, %v2734
  %v2778 = vmax.f32 %v2692, %v2735
  %v2779 = vmax.f32 %v2693, %v2736
  %v2780 = vmax.f32 %v2694, %v2737
  %v2781 = vmax.f32 %v2695, %v2738
  %v2782 = vmax.f32 %v2696, %v2739
  %v2783 = vmax.f32 %v2697, %v2740
  %v2784 = vmax.f32 %v2698, %v2741
  %v2785 = vmax.f32 %v2699, %v2742
  %v2786 = vmax.f32 %v2700, %v2743
  %v2787 = vmax.f32 %v2701, %v2744
  %v2788 = vmax.f32 %v2702, %v2745
  %v2789 = vmax.f32 %v2703, %v2746
  %v2790 = vmax.f32 %v2704, %v2747
  %v2791 = vmax.f32 %v2705, %v2748
  %v2792 = vmax.f32 %v2706, %v2749
  %v2793 = vmax.f32 %v2707, %v2750
  %v2794 = vmax.f32 %v2708, %v2751
  %v2795 = vmax.f32 %v2709, %v2752
  %v2796 = vmax.f32 %v2710, %v2753
  %v2797 = vmax.f32 %v2711, %v2754
  %v2798 = vmax.f32 %v2712, %v2755
  %v2799 = vmax.f32 %v2713, %v2756
  %v2800 = vmax.f32 %v2714, %v2757
  %v2801 = vmax.f32 %v2715, %v2758
  %v2802 = vmax.f32 %v2716, %v2759
  %v2803 = vmax.f32 %v2717, %v2760
  %v2804 = vmax.f32 %v2718, %v2761
  %v2805 = vmax.f32 %v2719, %v2762
  %v2806 = vmax.f32 %v2720, %v2763
  %2807 = vst [vmem:[%s4] sm:$0xff] %v2764
  %2808 = vst [vmem:[%s4 + $0x8] sm:$0xff] %v2765
  %2809 = vst [vmem:[%s4 + $0x10] sm:$0xff] %v2766
  %2810 = vst [vmem:[%s4 + $0x18] sm:$0xff] %v2767
  %2811 = vst [vmem:[%s4 + $0x20] sm:$0xff] %v2768
  %2812 = vst [vmem:[%s4 + $0x28] sm:$0xff] %v2769
  %2813 = vst [vmem:[%s4 + $0x30] sm:$0xff] %v2770
  %2814 = vst [vmem:[%s4 + $0x38] sm:$0xff] %v2771
  %2815 = vst [vmem:[%s4 + $0x40] sm:$0xff] %v2772
  %2816 = vst [vmem:[%s4 + $0x48] sm:$0xff] %v2773
  %2817 = vst [vmem:[%s4 + $0x50] sm:$0xff] %v2774
  %2818 = vst [vmem:[%s4 + $0x58] sm:$0xff] %v2775
  %2819 = vst [vmem:[%s4 + $0x60] sm:$0xff] %v2776
  %2820 = vst [vmem:[%s4 + $0x68] sm:$0xff] %v2777
  %2821 = vst [vmem:[%s4 + $0x70] sm:$0xff] %v2778
  %2822 = vst [vmem:[%s4 + $0x78] sm:$0xff] %v2779
  %2823 = vst [vmem:[%s4 + $0x80] sm:$0xff] %v2780
  %2824 = vst [vmem:[%s4 + $0x88] sm:$0xff] %v2781
  %2825 = vst [vmem:[%s4 + $0x90] sm:$0xff] %v2782
  %2826 = vst [vmem:[%s4 + $0x98] sm:$0xff] %v2783
  %2827 = vst [vmem:[%s4 + $0xa0] sm:$0xff] %v2784
  %2828 = vst [vmem:[%s4 + $0xa8] sm:$0xff] %v2785
  %2829 = vst [vmem:[%s4 + $0xb0] sm:$0xff] %v2786
  %2830 = vst [vmem:[%s4 + $0xb8] sm:$0xff] %v2787
  %2831 = vst [vmem:[%s4 + $0xc0] sm:$0xff] %v2788
  %2832 = vst [vmem:[%s4 + $0xc8] sm:$0xff] %v2789
  %2833 = vst [vmem:[%s4 + $0xd0] sm:$0xff] %v2790
  %2834 = vst [vmem:[%s4 + $0xd8] sm:$0xff] %v2791
  %2835 = vst [vmem:[%s4 + $0xe0] sm:$0xff] %v2792
  %2836 = vst [vmem:[%s4 + $0xe8] sm:$0xff] %v2793
  %2837 = vst [vmem:[%s4 + $0xf0] sm:$0xff] %v2794
  %2838 = vst [vmem:[%s4 + $0xf8] sm:$0xff] %v2795
  %2839 = vst [vmem:[%s4 + $0x100] sm:$0xff] %v2796
  %2840 = vst [vmem:[%s4 + $0x108] sm:$0xff] %v2797
  %2841 = vst [vmem:[%s4 + $0x110] sm:$0xff] %v2798
  %2842 = vst [vmem:[%s4 + $0x118] sm:$0xff] %v2799
  %2843 = vst [vmem:[%s4 + $0x120] sm:$0xff] %v2800
  %2844 = vst [vmem:[%s4 + $0x128] sm:$0xff] %v2801
  %2845 = vst [vmem:[%s4 + $0x130] sm:$0xff] %v2802
  %2846 = vst [vmem:[%s4 + $0x138] sm:$0xff] %v2803
  %2847 = vst [vmem:[%s4 + $0x140] sm:$0xff] %v2804
  %2848 = vst [vmem:[%s4 + $0x148] sm:$0xff] %v2805
  %2849 = vst [vmem:[%s4 + $0x150] sm:$0xff] %v2806
  // Predicated region
  $region18: #{cnn_forward.3} parent=0 // pred_check
    _
  $region19: #{cnn_forward.3} parent=0 // pred_check_branch
    %2851 = sbr.rel (0) target = $region21
  $region20: #{cnn_forward.3} parent=0 // pred_region
    _
  $region21: #{cnn_forward.3} parent=0 // pred_fallthru
    _
  // Predicated region
  $region22: #{cnn_forward.3} parent=0 // pred_check
    _
  $region23: #{cnn_forward.3} parent=0 // pred_check_branch
    %2853 = sbr.rel (0) target = $region25
  $region24: #{cnn_forward.3} parent=0 // pred_region
    _
  $region25: #{cnn_forward.3} parent=0 // pred_fallthru
    _

// kernel: cnn_forward.4
$region0: #{cnn_forward.4}
  #allocation0 [shape = 'u32[]', space=smem, size = 0x4, offset = 0x4, fixed_abs, tag = 'smem constant byte address 0x4 - core index']
  #allocation1 [shape = 'u32[144,128]{1,0:T(1,128)}', space=vmem, size = 0x12000, scoped, tag = 'internal scratch']
  %s0 = inlined_call_operand.vmem [shape: bf16[272,1152], index: 0, kind: input, shape index: {}]
  %s1 = inlined_call_operand.vmem [shape: bf16[1152,128], index: 1, kind: input, shape index: {}]
  %s2 = inlined_call_operand.vmem [shape: f32[1,128], index: 2, kind: input, shape index: {}]
  %s3 = inlined_call_operand.vmem [shape: f32[1,128], index: 3, kind: input, shape index: {}]
  %s4 = inlined_call_operand.vmem [shape: f32[56,128], index: 4, kind: output, shape index: {}]
  %s5 = sld [smem:[#allocation0]]
  $region26: #{cnn_forward.4} parent=0
    _
  %s7 = ssub.s32 1, %s5
  %s8 = scalar_select 0, %s7, %s5
  // Predicated region
  $region2: #{cnn_forward.4} parent=0 // pred_check
    _
  $region3: #{cnn_forward.4} parent=0 // pred_check_branch
    %10 = sbr.rel (0) target = $region5
  $region4: #{cnn_forward.4} parent=0 // pred_region
    _
  $region5: #{cnn_forward.4} parent=0 // pred_fallthru
    _
  // Predicated region
  $region6: #{cnn_forward.4} parent=0 // pred_check
    _
  $region7: #{cnn_forward.4} parent=0 // pred_check_branch
    %12 = sbr.rel (0) target = $region9
  $region8: #{cnn_forward.4} parent=0 // pred_region
    _
  $region9: #{cnn_forward.4} parent=0 // pred_fallthru
    _
  // Predicated region
  $region10: #{cnn_forward.4} parent=0 // pred_check
    _
  $region11: #{cnn_forward.4} parent=0 // pred_check_branch
    %14 = sbr.rel (0) target = $region13
  $region12: #{cnn_forward.4} parent=0 // pred_region
    _
  $region13: #{cnn_forward.4} parent=0 // pred_fallthru
    _
  // Predicated region
  $region14: #{cnn_forward.4} parent=0 // pred_check
    _
  $region15: #{cnn_forward.4} parent=0 // pred_check_branch
    %16 = sbr.rel (0) target = $region17
  $region16: #{cnn_forward.4} parent=0 // pred_region
    _
  $region17: #{cnn_forward.4} parent=0 // pred_fallthru
    _
  %v18 = vld [vmem:[%s0] sm:$0xff]
  %v19 = vld [vmem:[%s0 + $0x8] sm:$0xff]
  %v20 = vld [vmem:[%s0 + $0x10] sm:$0xff]
  %v21 = vld [vmem:[%s0 + $0x18] sm:$0xff]
  %v22 = vld [vmem:[%s0 + $0x20] sm:$0xf]
  %v23 = vld [vmem:[%s0 + $0x24] sm:$0xff]
  %v24 = vld [vmem:[%s0 + $0x2c] sm:$0xff]
  %v25 = vld [vmem:[%s0 + $0x34] sm:$0xff]
  %v26 = vld [vmem:[%s0 + $0x3c] sm:$0xff]
  %v27 = vld [vmem:[%s0 + $0x44] sm:$0xf]
  %v28 = vld [vmem:[%s0 + $0x48] sm:$0xff]
  %v29 = vld [vmem:[%s0 + $0x50] sm:$0xff]
  %v30 = vld [vmem:[%s0 + $0x58] sm:$0xff]
  %v31 = vld [vmem:[%s0 + $0x60] sm:$0xff]
  %v32 = vld [vmem:[%s0 + $0x68] sm:$0xf]
  %v33 = vld [vmem:[%s0 + $0x6c] sm:$0xff]
  %v34 = vld [vmem:[%s0 + $0x74] sm:$0xff]
  %v35 = vld [vmem:[%s0 + $0x7c] sm:$0xff]
  %v36 = vld [vmem:[%s0 + $0x84] sm:$0xff]
  %v37 = vld [vmem:[%s0 + $0x8c] sm:$0xf]
  %v38 = vld [vmem:[%s0 + $0x90] sm:$0xff]
  %v39 = vld [vmem:[%s0 + $0x98] sm:$0xff]
  %v40 = vld [vmem:[%s0 + $0xa0] sm:$0xff]
  %v41 = vld [vmem:[%s0 + $0xa8] sm:$0xff]
  %v42 = vld [vmem:[%s0 + $0xb0] sm:$0xf]
  %v43 = vld [vmem:[%s0 + $0xb4] sm:$0xff]
  %v44 = vld [vmem:[%s0 + $0xbc] sm:$0xff]
  %v45 = vld [vmem:[%s0 + $0xc4] sm:$0xff]
  %v46 = vld [vmem:[%s0 + $0xcc] sm:$0xff]
  %v47 = vld [vmem:[%s0 + $0xd4] sm:$0xf]
  %v48 = vld [vmem:[%s0 + $0xd8] sm:$0xff]
  %v49 = vld [vmem:[%s0 + $0xe0] sm:$0xff]
  %v50 = vld [vmem:[%s0 + $0xe8] sm:$0xff]
  %v51 = vld [vmem:[%s0 + $0xf0] sm:$0xff]
  %v52 = vld [vmem:[%s0 + $0xf8] sm:$0xf]
  %v53 = vld [vmem:[%s0 + $0xfc] sm:$0xff]
  %v54 = vld [vmem:[%s0 + $0x104] sm:$0xff]
  %v55 = vld [vmem:[%s0 + $0x10c] sm:$0xff]
  %v56 = vld [vmem:[%s0 + $0x114] sm:$0xff]
  %v57 = vld [vmem:[%s0 + $0x11c] sm:$0xf]
  %v58 = vld [vmem:[%s0 + $0x120] sm:$0xff]
  %v59 = vld [vmem:[%s0 + $0x128] sm:$0xff]
  %v60 = vld [vmem:[%s0 + $0x130] sm:$0xff]
  %v61 = vld [vmem:[%s0 + $0x138] sm:$0xff]
  %v62 = vld [vmem:[%s0 + $0x140] sm:$0xf]
  %v63 = vld [vmem:[%s0 + $0x144] sm:$0xff]
  %v64 = vld [vmem:[%s0 + $0x14c] sm:$0xff]
  %v65 = vld [vmem:[%s0 + $0x154] sm:$0xff]
  %v66 = vld [vmem:[%s0 + $0x15c] sm:$0xff]
  %v67 = vld [vmem:[%s0 + $0x164] sm:$0xf]
  %v68 = vld [vmem:[%s0 + $0x168] sm:$0xff]
  %v69 = vld [vmem:[%s0 + $0x170] sm:$0xff]
  %v70 = vld [vmem:[%s0 + $0x178] sm:$0xff]
  %v71 = vld [vmem:[%s0 + $0x180] sm:$0xff]
  %v72 = vld [vmem:[%s0 + $0x188] sm:$0xf]
  %v73 = vld [vmem:[%s0 + $0x18c] sm:$0xff]
  %v74 = vld [vmem:[%s0 + $0x194] sm:$0xff]
  %v75 = vld [vmem:[%s0 + $0x19c] sm:$0xff]
  %v76 = vld [vmem:[%s0 + $0x1a4] sm:$0xff]
  %v77 = vld [vmem:[%s0 + $0x1ac] sm:$0xf]
  %v78 = vld [vmem:[%s0 + $0x1b0] sm:$0xff]
  %v79 = vld [vmem:[%s0 + $0x1b8] sm:$0xff]
  %v80 = vld [vmem:[%s0 + $0x1c0] sm:$0xff]
  %v81 = vld [vmem:[%s0 + $0x1c8] sm:$0xff]
  %v82 = vld [vmem:[%s0 + $0x1d0] sm:$0xf]
  %v83 = vld [vmem:[%s0 + $0x1d4] sm:$0xff]
  %v84 = vld [vmem:[%s0 + $0x1dc] sm:$0xff]
  %v85 = vld [vmem:[%s0 + $0x1e4] sm:$0xff]
  %v86 = vld [vmem:[%s0 + $0x1ec] sm:$0xff]
  %v87 = vld [vmem:[%s0 + $0x1f4] sm:$0xf]
  %v88 = vld [vmem:[%s0 + $0x1f8] sm:$0xff]
  %v89 = vld [vmem:[%s0 + $0x200] sm:$0xff]
  %v90 = vld [vmem:[%s0 + $0x208] sm:$0xff]
  %v91 = vld [vmem:[%s0 + $0x210] sm:$0xff]
  %v92 = vld [vmem:[%s0 + $0x218] sm:$0xf]
  %v93 = vld [vmem:[%s0 + $0x21c] sm:$0xff]
  %v94 = vld [vmem:[%s0 + $0x224] sm:$0xff]
  %v95 = vld [vmem:[%s0 + $0x22c] sm:$0xff]
  %v96 = vld [vmem:[%s0 + $0x234] sm:$0xff]
  %v97 = vld [vmem:[%s0 + $0x23c] sm:$0xf]
  %v98 = vld [vmem:[%s0 + $0x240] sm:$0xff]
  %v99 = vld [vmem:[%s0 + $0x248] sm:$0xff]
  %v100 = vld [vmem:[%s0 + $0x250] sm:$0xff]
  %v101 = vld [vmem:[%s0 + $0x258] sm:$0xff]
  %v102 = vld [vmem:[%s0 + $0x260] sm:$0xf]
  %v103 = vld [vmem:[%s0 + $0x264] sm:$0xff]
  %v104 = vld [vmem:[%s0 + $0x26c] sm:$0xff]
  %v105 = vld [vmem:[%s0 + $0x274] sm:$0xff]
  %v106 = vld [vmem:[%s0 + $0x27c] sm:$0xff]
  %v107 = vld [vmem:[%s0 + $0x284] sm:$0xf]
  %v108 = vld [vmem:[%s0 + $0x288] sm:$0xff]
  %v109 = vld [vmem:[%s0 + $0x290] sm:$0xff]
  %v110 = vld [vmem:[%s0 + $0x298] sm:$0xff]
  %v111 = vld [vmem:[%s0 + $0x2a0] sm:$0xff]
  %v112 = vld [vmem:[%s0 + $0x2a8] sm:$0xf]
  %v113 = vld [vmem:[%s0 + $0x2ac] sm:$0xff]
  %v114 = vld [vmem:[%s0 + $0x2b4] sm:$0xff]
  %v115 = vld [vmem:[%s0 + $0x2bc] sm:$0xff]
  %v116 = vld [vmem:[%s0 + $0x2c4] sm:$0xff]
  %v117 = vld [vmem:[%s0 + $0x2cc] sm:$0xf]
  %v118 = vld [vmem:[%s0 + $0x2d0] sm:$0xff]
  %v119 = vld [vmem:[%s0 + $0x2d8] sm:$0xff]
  %v120 = vld [vmem:[%s0 + $0x2e0] sm:$0xff]
  %v121 = vld [vmem:[%s0 + $0x2e8] sm:$0xff]
  %v122 = vld [vmem:[%s0 + $0x2f0] sm:$0xf]
  %v123 = vld [vmem:[%s0 + $0x2f4] sm:$0xff]
  %v124 = vld [vmem:[%s0 + $0x2fc] sm:$0xff]
  %v125 = vld [vmem:[%s0 + $0x304] sm:$0xff]
  %v126 = vld [vmem:[%s0 + $0x30c] sm:$0xff]
  %v127 = vld [vmem:[%s0 + $0x314] sm:$0xf]
  %v128 = vld [vmem:[%s0 + $0x318] sm:$0xff]
  %v129 = vld [vmem:[%s0 + $0x320] sm:$0xff]
  %v130 = vld [vmem:[%s0 + $0x328] sm:$0xff]
  %v131 = vld [vmem:[%s0 + $0x330] sm:$0xff]
  %v132 = vld [vmem:[%s0 + $0x338] sm:$0xf]
  %v133 = vld [vmem:[%s0 + $0x33c] sm:$0xff]
  %v134 = vld [vmem:[%s0 + $0x344] sm:$0xff]
  %v135 = vld [vmem:[%s0 + $0x34c] sm:$0xff]
  %v136 = vld [vmem:[%s0 + $0x354] sm:$0xff]
  %v137 = vld [vmem:[%s0 + $0x35c] sm:$0xf]
  %v138 = vld [vmem:[%s0 + $0x360] sm:$0xff]
  %v139 = vld [vmem:[%s0 + $0x368] sm:$0xff]
  %v140 = vld [vmem:[%s0 + $0x370] sm:$0xff]
  %v141 = vld [vmem:[%s0 + $0x378] sm:$0xff]
  %v142 = vld [vmem:[%s0 + $0x380] sm:$0xf]
  %v143 = vld [vmem:[%s0 + $0x384] sm:$0xff]
  %v144 = vld [vmem:[%s0 + $0x38c] sm:$0xff]
  %v145 = vld [vmem:[%s0 + $0x394] sm:$0xff]
  %v146 = vld [vmem:[%s0 + $0x39c] sm:$0xff]
  %v147 = vld [vmem:[%s0 + $0x3a4] sm:$0xf]
  %v148 = vld [vmem:[%s0 + $0x3a8] sm:$0xff]
  %v149 = vld [vmem:[%s0 + $0x3b0] sm:$0xff]
  %v150 = vld [vmem:[%s0 + $0x3b8] sm:$0xff]
  %v151 = vld [vmem:[%s0 + $0x3c0] sm:$0xff]
  %v152 = vld [vmem:[%s0 + $0x3c8] sm:$0xf]
  %v153 = vld [vmem:[%s0 + $0x3cc] sm:$0xff]
  %v154 = vld [vmem:[%s0 + $0x3d4] sm:$0xff]
  %v155 = vld [vmem:[%s0 + $0x3dc] sm:$0xff]
  %v156 = vld [vmem:[%s0 + $0x3e4] sm:$0xff]
  %v157 = vld [vmem:[%s0 + $0x3ec] sm:$0xf]
  %v158 = vld [vmem:[%s0 + $0x3f0] sm:$0xff]
  %v159 = vld [vmem:[%s0 + $0x3f8] sm:$0xff]
  %v160 = vld [vmem:[%s0 + $0x400] sm:$0xff]
  %v161 = vld [vmem:[%s0 + $0x408] sm:$0xff]
  %v162 = vld [vmem:[%s0 + $0x410] sm:$0xf]
  %v163 = vld [vmem:[%s0 + $0x414] sm:$0xff]
  %v164 = vld [vmem:[%s0 + $0x41c] sm:$0xff]
  %v165 = vld [vmem:[%s0 + $0x424] sm:$0xff]
  %v166 = vld [vmem:[%s0 + $0x42c] sm:$0xff]
  %v167 = vld [vmem:[%s0 + $0x434] sm:$0xf]
  %v168 = vld [vmem:[%s0 + $0x438] sm:$0xff]
  %v169 = vld [vmem:[%s0 + $0x440] sm:$0xff]
  %v170 = vld [vmem:[%s0 + $0x448] sm:$0xff]
  %v171 = vld [vmem:[%s0 + $0x450] sm:$0xff]
  %v172 = vld [vmem:[%s0 + $0x458] sm:$0xf]
  %v173 = vld [vmem:[%s0 + $0x45c] sm:$0xff]
  %v174 = vld [vmem:[%s0 + $0x464] sm:$0xff]
  %v175 = vld [vmem:[%s0 + $0x46c] sm:$0xff]
  %v176 = vld [vmem:[%s0 + $0x474] sm:$0xff]
  %v177 = vld [vmem:[%s0 + $0x47c] sm:$0xf]
  %v178 = vld [vmem:[%s0 + $0x480] sm:$0xff]
  %v179 = vld [vmem:[%s0 + $0x488] sm:$0xff]
  %v180 = vld [vmem:[%s0 + $0x490] sm:$0xff]
  %v181 = vld [vmem:[%s0 + $0x498] sm:$0xff]
  %v182 = vld [vmem:[%s0 + $0x4a0] sm:$0xf]
  %v183 = vld [vmem:[%s0 + $0x4a4] sm:$0xff]
  %v184 = vld [vmem:[%s0 + $0x4ac] sm:$0xff]
  %v185 = vld [vmem:[%s0 + $0x4b4] sm:$0xff]
  %v186 = vld [vmem:[%s0 + $0x4bc] sm:$0xff]
  %v187 = vld [vmem:[%s0 + $0x4c4] sm:$0xf]
  %v188 = vld [vmem:[%s1] sm:$0xf]
  %v189 = vld [vmem:[%s1 + $0x4] sm:$0xf]
  %v190 = vld [vmem:[%s1 + $0x8] sm:$0xf]
  %v191 = vld [vmem:[%s1 + $0xc] sm:$0xf]
  %v192 = vld [vmem:[%s1 + $0x10] sm:$0xf]
  %v193 = vld [vmem:[%s1 + $0x14] sm:$0xf]
  %v194 = vld [vmem:[%s1 + $0x18] sm:$0xf]
  %v195 = vld [vmem:[%s1 + $0x1c] sm:$0xf]
  %v196 = vld [vmem:[%s1 + $0x20] sm:$0xf]
  %v197 = vld [vmem:[%s1 + $0x24] sm:$0xf]
  %v198 = vld [vmem:[%s1 + $0x28] sm:$0xf]
  %v199 = vld [vmem:[%s1 + $0x2c] sm:$0xf]
  %v200 = vld [vmem:[%s1 + $0x30] sm:$0xf]
  %v201 = vld [vmem:[%s1 + $0x34] sm:$0xf]
  %v202 = vld [vmem:[%s1 + $0x38] sm:$0xf]
  %v203 = vld [vmem:[%s1 + $0x3c] sm:$0xf]
  %v204 = vld [vmem:[%s1 + $0x40] sm:$0xf]
  %v205 = vld [vmem:[%s1 + $0x44] sm:$0xf]
  %v206 = vld [vmem:[%s1 + $0x48] sm:$0xf]
  %v207 = vld [vmem:[%s1 + $0x4c] sm:$0xf]
  %v208 = vld [vmem:[%s1 + $0x50] sm:$0xf]
  %v209 = vld [vmem:[%s1 + $0x54] sm:$0xf]
  %v210 = vld [vmem:[%s1 + $0x58] sm:$0xf]
  %v211 = vld [vmem:[%s1 + $0x5c] sm:$0xf]
  %v212 = vld [vmem:[%s1 + $0x60] sm:$0xf]
  %v213 = vld [vmem:[%s1 + $0x64] sm:$0xf]
  %v214 = vld [vmem:[%s1 + $0x68] sm:$0xf]
  %v215 = vld [vmem:[%s1 + $0x6c] sm:$0xf]
  %v216 = vld [vmem:[%s1 + $0x70] sm:$0xf]
  %v217 = vld [vmem:[%s1 + $0x74] sm:$0xf]
  %v218 = vld [vmem:[%s1 + $0x78] sm:$0xf]
  %v219 = vld [vmem:[%s1 + $0x7c] sm:$0xf]
  %v220 = vld [vmem:[%s1 + $0x80] sm:$0xf]
  %v221 = vld [vmem:[%s1 + $0x84] sm:$0xf]
  %v222 = vld [vmem:[%s1 + $0x88] sm:$0xf]
  %v223 = vld [vmem:[%s1 + $0x8c] sm:$0xf]
  %v224 = vld [vmem:[%s1 + $0x90] sm:$0xf]
  %v225 = vld [vmem:[%s1 + $0x94] sm:$0xf]
  %v226 = vld [vmem:[%s1 + $0x98] sm:$0xf]
  %v227 = vld [vmem:[%s1 + $0x9c] sm:$0xf]
  %v228 = vld [vmem:[%s1 + $0xa0] sm:$0xf]
  %v229 = vld [vmem:[%s1 + $0xa4] sm:$0xf]
  %v230 = vld [vmem:[%s1 + $0xa8] sm:$0xf]
  %v231 = vld [vmem:[%s1 + $0xac] sm:$0xf]
  %v232 = vld [vmem:[%s1 + $0xb0] sm:$0xf]
  %v233 = vld [vmem:[%s1 + $0xb4] sm:$0xf]
  %v234 = vld [vmem:[%s1 + $0xb8] sm:$0xf]
  %v235 = vld [vmem:[%s1 + $0xbc] sm:$0xf]
  %v236 = vld [vmem:[%s1 + $0xc0] sm:$0xf]
  %v237 = vld [vmem:[%s1 + $0xc4] sm:$0xf]
  %v238 = vld [vmem:[%s1 + $0xc8] sm:$0xf]
  %v239 = vld [vmem:[%s1 + $0xcc] sm:$0xf]
  %v240 = vld [vmem:[%s1 + $0xd0] sm:$0xf]
  %v241 = vld [vmem:[%s1 + $0xd4] sm:$0xf]
  %v242 = vld [vmem:[%s1 + $0xd8] sm:$0xf]
  %v243 = vld [vmem:[%s1 + $0xdc] sm:$0xf]
  %v244 = vld [vmem:[%s1 + $0xe0] sm:$0xf]
  %v245 = vld [vmem:[%s1 + $0xe4] sm:$0xf]
  %v246 = vld [vmem:[%s1 + $0xe8] sm:$0xf]
  %v247 = vld [vmem:[%s1 + $0xec] sm:$0xf]
  %v248 = vld [vmem:[%s1 + $0xf0] sm:$0xf]
  %v249 = vld [vmem:[%s1 + $0xf4] sm:$0xf]
  %v250 = vld [vmem:[%s1 + $0xf8] sm:$0xf]
  %v251 = vld [vmem:[%s1 + $0xfc] sm:$0xf]
  %v252 = vld [vmem:[%s1 + $0x100] sm:$0xf]
  %v253 = vld [vmem:[%s1 + $0x104] sm:$0xf]
  %v254 = vld [vmem:[%s1 + $0x108] sm:$0xf]
  %v255 = vld [vmem:[%s1 + $0x10c] sm:$0xf]
  %v256 = vld [vmem:[%s1 + $0x110] sm:$0xf]
  %v257 = vld [vmem:[%s1 + $0x114] sm:$0xf]
  %v258 = vld [vmem:[%s1 + $0x118] sm:$0xf]
  %v259 = vld [vmem:[%s1 + $0x11c] sm:$0xf]
  %v260 = vld [vmem:[%s1 + $0x120] sm:$0xf]
  %v261 = vld [vmem:[%s1 + $0x124] sm:$0xf]
  %v262 = vld [vmem:[%s1 + $0x128] sm:$0xf]
  %v263 = vld [vmem:[%s1 + $0x12c] sm:$0xf]
  %v264 = vld [vmem:[%s1 + $0x130] sm:$0xf]
  %v265 = vld [vmem:[%s1 + $0x134] sm:$0xf]
  %v266 = vld [vmem:[%s1 + $0x138] sm:$0xf]
  %v267 = vld [vmem:[%s1 + $0x13c] sm:$0xf]
  %v268 = vld [vmem:[%s1 + $0x140] sm:$0xf]
  %v269 = vld [vmem:[%s1 + $0x144] sm:$0xf]
  %v270 = vld [vmem:[%s1 + $0x148] sm:$0xf]
  %v271 = vld [vmem:[%s1 + $0x14c] sm:$0xf]
  %v272 = vld [vmem:[%s1 + $0x150] sm:$0xf]
  %v273 = vld [vmem:[%s1 + $0x154] sm:$0xf]
  %v274 = vld [vmem:[%s1 + $0x158] sm:$0xf]
  %v275 = vld [vmem:[%s1 + $0x15c] sm:$0xf]
  %v276 = vld [vmem:[%s1 + $0x160] sm:$0xf]
  %v277 = vld [vmem:[%s1 + $0x164] sm:$0xf]
  %v278 = vld [vmem:[%s1 + $0x168] sm:$0xf]
  %v279 = vld [vmem:[%s1 + $0x16c] sm:$0xf]
  %v280 = vld [vmem:[%s1 + $0x170] sm:$0xf]
  %v281 = vld [vmem:[%s1 + $0x174] sm:$0xf]
  %v282 = vld [vmem:[%s1 + $0x178] sm:$0xf]
  %v283 = vld [vmem:[%s1 + $0x17c] sm:$0xf]
  %v284 = vld [vmem:[%s1 + $0x180] sm:$0xf]
  %v285 = vld [vmem:[%s1 + $0x184] sm:$0xf]
  %v286 = vld [vmem:[%s1 + $0x188] sm:$0xf]
  %v287 = vld [vmem:[%s1 + $0x18c] sm:$0xf]
  %v288 = vld [vmem:[%s1 + $0x190] sm:$0xf]
  %v289 = vld [vmem:[%s1 + $0x194] sm:$0xf]
  %v290 = vld [vmem:[%s1 + $0x198] sm:$0xf]
  %v291 = vld [vmem:[%s1 + $0x19c] sm:$0xf]
  %v292 = vld [vmem:[%s1 + $0x1a0] sm:$0xf]
  %v293 = vld [vmem:[%s1 + $0x1a4] sm:$0xf]
  %v294 = vld [vmem:[%s1 + $0x1a8] sm:$0xf]
  %v295 = vld [vmem:[%s1 + $0x1ac] sm:$0xf]
  %v296 = vld [vmem:[%s1 + $0x1b0] sm:$0xf]
  %v297 = vld [vmem:[%s1 + $0x1b4] sm:$0xf]
  %v298 = vld [vmem:[%s1 + $0x1b8] sm:$0xf]
  %v299 = vld [vmem:[%s1 + $0x1bc] sm:$0xf]
  %v300 = vld [vmem:[%s1 + $0x1c0] sm:$0xf]
  %v301 = vld [vmem:[%s1 + $0x1c4] sm:$0xf]
  %v302 = vld [vmem:[%s1 + $0x1c8] sm:$0xf]
  %v303 = vld [vmem:[%s1 + $0x1cc] sm:$0xf]
  %v304 = vld [vmem:[%s1 + $0x1d0] sm:$0xf]
  %v305 = vld [vmem:[%s1 + $0x1d4] sm:$0xf]
  %v306 = vld [vmem:[%s1 + $0x1d8] sm:$0xf]
  %v307 = vld [vmem:[%s1 + $0x1dc] sm:$0xf]
  %v308 = vld [vmem:[%s1 + $0x1e0] sm:$0xf]
  %v309 = vld [vmem:[%s1 + $0x1e4] sm:$0xf]
  %v310 = vld [vmem:[%s1 + $0x1e8] sm:$0xf]
  %v311 = vld [vmem:[%s1 + $0x1ec] sm:$0xf]
  %v312 = vld [vmem:[%s1 + $0x1f0] sm:$0xf]
  %v313 = vld [vmem:[%s1 + $0x1f4] sm:$0xf]
  %v314 = vld [vmem:[%s1 + $0x1f8] sm:$0xf]
  %v315 = vld [vmem:[%s1 + $0x1fc] sm:$0xf]
  %v316 = vld [vmem:[%s1 + $0x200] sm:$0xf]
  %v317 = vld [vmem:[%s1 + $0x204] sm:$0xf]
  %v318 = vld [vmem:[%s1 + $0x208] sm:$0xf]
  %v319 = vld [vmem:[%s1 + $0x20c] sm:$0xf]
  %v320 = vld [vmem:[%s1 + $0x210] sm:$0xf]
  %v321 = vld [vmem:[%s1 + $0x214] sm:$0xf]
  %v322 = vld [vmem:[%s1 + $0x218] sm:$0xf]
  %v323 = vld [vmem:[%s1 + $0x21c] sm:$0xf]
  %v324 = vld [vmem:[%s1 + $0x220] sm:$0xf]
  %v325 = vld [vmem:[%s1 + $0x224] sm:$0xf]
  %v326 = vld [vmem:[%s1 + $0x228] sm:$0xf]
  %v327 = vld [vmem:[%s1 + $0x22c] sm:$0xf]
  %v328 = vld [vmem:[%s1 + $0x230] sm:$0xf]
  %v329 = vld [vmem:[%s1 + $0x234] sm:$0xf]
  %v330 = vld [vmem:[%s1 + $0x238] sm:$0xf]
  %v331 = vld [vmem:[%s1 + $0x23c] sm:$0xf]
  %v502 = vunpack.c.l.b16 %v18
  %v503 = vunpack.c.h.b16 %v18
  %v504 = vunpack.c.l.b16 %v19
  %v505 = vunpack.c.h.b16 %v19
  %v506 = vunpack.c.l.b16 %v20
  %v507 = vunpack.c.h.b16 %v20
  %v508 = vunpack.c.l.b16 %v21
  %v509 = vunpack.c.h.b16 %v21
  %v510 = vunpack.c.l.b16 %v22
  %v511 = vunpack.c.l.b16 %v23
  %v512 = vunpack.c.h.b16 %v23
  %v513 = vunpack.c.l.b16 %v24
  %v514 = vunpack.c.h.b16 %v24
  %v515 = vunpack.c.l.b16 %v25
  %v516 = vunpack.c.h.b16 %v25
  %v517 = vunpack.c.l.b16 %v26
  %v518 = vunpack.c.h.b16 %v26
  %v519 = vunpack.c.l.b16 %v27
  %v520 = vunpack.c.l.b16 %v28
  %v521 = vunpack.c.h.b16 %v28
  %v522 = vunpack.c.l.b16 %v29
  %v523 = vunpack.c.h.b16 %v29
  %v524 = vunpack.c.l.b16 %v30
  %v525 = vunpack.c.h.b16 %v30
  %v526 = vunpack.c.l.b16 %v31
  %v527 = vunpack.c.h.b16 %v31
  %v528 = vunpack.c.l.b16 %v32
  %v529 = vunpack.c.l.b16 %v33
  %v530 = vunpack.c.h.b16 %v33
  %v531 = vunpack.c.l.b16 %v34
  %v532 = vunpack.c.h.b16 %v34
  %v533 = vunpack.c.l.b16 %v35
  %v534 = vunpack.c.h.b16 %v35
  %v535 = vunpack.c.l.b16 %v36
  %v536 = vunpack.c.h.b16 %v36
  %v537 = vunpack.c.l.b16 %v37
  %v538 = vunpack.c.l.b16 %v38
  %v539 = vunpack.c.h.b16 %v38
  %v540 = vunpack.c.l.b16 %v39
  %v541 = vunpack.c.h.b16 %v39
  %v542 = vunpack.c.l.b16 %v40
  %v543 = vunpack.c.h.b16 %v40
  %v544 = vunpack.c.l.b16 %v41
  %v545 = vunpack.c.h.b16 %v41
  %v546 = vunpack.c.l.b16 %v42
  %v547 = vunpack.c.l.b16 %v43
  %v548 = vunpack.c.h.b16 %v43
  %v549 = vunpack.c.l.b16 %v44
  %v550 = vunpack.c.h.b16 %v44
  %v551 = vunpack.c.l.b16 %v45
  %v552 = vunpack.c.h.b16 %v45
  %v553 = vunpack.c.l.b16 %v46
  %v554 = vunpack.c.h.b16 %v46
  %v555 = vunpack.c.l.b16 %v47
  %v556 = vunpack.c.l.b16 %v48
  %v557 = vunpack.c.h.b16 %v48
  %v558 = vunpack.c.l.b16 %v49
  %v559 = vunpack.c.h.b16 %v49
  %v560 = vunpack.c.l.b16 %v50
  %v561 = vunpack.c.h.b16 %v50
  %v562 = vunpack.c.l.b16 %v51
  %v563 = vunpack.c.h.b16 %v51
  %v564 = vunpack.c.l.b16 %v52
  %v565 = vunpack.c.l.b16 %v53
  %v566 = vunpack.c.h.b16 %v53
  %v567 = vunpack.c.l.b16 %v54
  %v568 = vunpack.c.h.b16 %v54
  %v569 = vunpack.c.l.b16 %v55
  %v570 = vunpack.c.h.b16 %v55
  %v571 = vunpack.c.l.b16 %v56
  %v572 = vunpack.c.h.b16 %v56
  %v573 = vunpack.c.l.b16 %v57
  %v574 = vunpack.c.l.b16 %v58
  %v575 = vunpack.c.h.b16 %v58
  %v576 = vunpack.c.l.b16 %v59
  %v577 = vunpack.c.h.b16 %v59
  %v578 = vunpack.c.l.b16 %v60
  %v579 = vunpack.c.h.b16 %v60
  %v580 = vunpack.c.l.b16 %v61
  %v581 = vunpack.c.h.b16 %v61
  %v582 = vunpack.c.l.b16 %v62
  %v583 = vunpack.c.l.b16 %v63
  %v584 = vunpack.c.h.b16 %v63
  %v585 = vunpack.c.l.b16 %v64
  %v586 = vunpack.c.h.b16 %v64
  %v587 = vunpack.c.l.b16 %v65
  %v588 = vunpack.c.h.b16 %v65
  %v589 = vunpack.c.l.b16 %v66
  %v590 = vunpack.c.h.b16 %v66
  %v591 = vunpack.c.l.b16 %v67
  %v592 = vunpack.c.l.b16 %v68
  %v593 = vunpack.c.h.b16 %v68
  %v594 = vunpack.c.l.b16 %v69
  %v595 = vunpack.c.h.b16 %v69
  %v596 = vunpack.c.l.b16 %v70
  %v597 = vunpack.c.h.b16 %v70
  %v598 = vunpack.c.l.b16 %v71
  %v599 = vunpack.c.h.b16 %v71
  %v600 = vunpack.c.l.b16 %v72
  %v601 = vunpack.c.l.b16 %v73
  %v602 = vunpack.c.h.b16 %v73
  %v603 = vunpack.c.l.b16 %v74
  %v604 = vunpack.c.h.b16 %v74
  %v605 = vunpack.c.l.b16 %v75
  %v606 = vunpack.c.h.b16 %v75
  %v607 = vunpack.c.l.b16 %v76
  %v608 = vunpack.c.h.b16 %v76
  %v609 = vunpack.c.l.b16 %v77
  %v610 = vunpack.c.l.b16 %v78
  %v611 = vunpack.c.h.b16 %v78
  %v612 = vunpack.c.l.b16 %v79
  %v613 = vunpack.c.h.b16 %v79
  %v614 = vunpack.c.l.b16 %v80
  %v615 = vunpack.c.h.b16 %v80
  %v616 = vunpack.c.l.b16 %v81
  %v617 = vunpack.c.h.b16 %v81
  %v618 = vunpack.c.l.b16 %v82
  %v619 = vunpack.c.l.b16 %v83
  %v620 = vunpack.c.h.b16 %v83
  %v621 = vunpack.c.l.b16 %v84
  %v622 = vunpack.c.h.b16 %v84
  %v623 = vunpack.c.l.b16 %v85
  %v624 = vunpack.c.h.b16 %v85
  %v625 = vunpack.c.l.b16 %v86
  %v626 = vunpack.c.h.b16 %v86
  %v627 = vunpack.c.l.b16 %v87
  %v628 = vunpack.c.l.b16 %v88
  %v629 = vunpack.c.h.b16 %v88
  %v630 = vunpack.c.l.b16 %v89
  %v631 = vunpack.c.h.b16 %v89
  %v632 = vunpack.c.l.b16 %v90
  %v633 = vunpack.c.h.b16 %v90
  %v634 = vunpack.c.l.b16 %v91
  %v635 = vunpack.c.h.b16 %v91
  %v636 = vunpack.c.l.b16 %v92
  %v637 = vunpack.c.l.b16 %v93
  %v638 = vunpack.c.h.b16 %v93
  %v639 = vunpack.c.l.b16 %v94
  %v640 = vunpack.c.h.b16 %v94
  %v641 = vunpack.c.l.b16 %v95
  %v642 = vunpack.c.h.b16 %v95
  %v643 = vunpack.c.l.b16 %v96
  %v644 = vunpack.c.h.b16 %v96
  %v645 = vunpack.c.l.b16 %v97
  %v646 = vunpack.c.l.b16 %v98
  %v647 = vunpack.c.h.b16 %v98
  %v648 = vunpack.c.l.b16 %v99
  %v649 = vunpack.c.h.b16 %v99
  %v650 = vunpack.c.l.b16 %v100
  %v651 = vunpack.c.h.b16 %v100
  %v652 = vunpack.c.l.b16 %v101
  %v653 = vunpack.c.h.b16 %v101
  %v654 = vunpack.c.l.b16 %v102
  %v655 = vunpack.c.l.b16 %v103
  %v656 = vunpack.c.h.b16 %v103
  %v657 = vunpack.c.l.b16 %v104
  %v658 = vunpack.c.h.b16 %v104
  %v659 = vunpack.c.l.b16 %v105
  %v660 = vunpack.c.h.b16 %v105
  %v661 = vunpack.c.l.b16 %v106
  %v662 = vunpack.c.h.b16 %v106
  %v663 = vunpack.c.l.b16 %v107
  %v664 = vunpack.c.l.b16 %v108
  %v665 = vunpack.c.h.b16 %v108
  %v666 = vunpack.c.l.b16 %v109
  %v667 = vunpack.c.h.b16 %v109
  %v668 = vunpack.c.l.b16 %v110
  %v669 = vunpack.c.h.b16 %v110
  %v670 = vunpack.c.l.b16 %v111
  %v671 = vunpack.c.h.b16 %v111
  %v672 = vunpack.c.l.b16 %v112
  %v673 = vunpack.c.l.b16 %v113
  %v674 = vunpack.c.h.b16 %v113
  %v675 = vunpack.c.l.b16 %v114
  %v676 = vunpack.c.h.b16 %v114
  %v677 = vunpack.c.l.b16 %v115
  %v678 = vunpack.c.h.b16 %v115
  %v679 = vunpack.c.l.b16 %v116
  %v680 = vunpack.c.h.b16 %v116
  %v681 = vunpack.c.l.b16 %v117
  %v682 = vunpack.c.l.b16 %v118
  %v683 = vunpack.c.h.b16 %v118
  %v684 = vunpack.c.l.b16 %v119
  %v685 = vunpack.c.h.b16 %v119
  %v686 = vunpack.c.l.b16 %v120
  %v687 = vunpack.c.h.b16 %v120
  %v688 = vunpack.c.l.b16 %v121
  %v689 = vunpack.c.h.b16 %v121
  %v690 = vunpack.c.l.b16 %v122
  %v691 = vunpack.c.l.b16 %v123
  %v692 = vunpack.c.h.b16 %v123
  %v693 = vunpack.c.l.b16 %v124
  %v694 = vunpack.c.h.b16 %v124
  %v695 = vunpack.c.l.b16 %v125
  %v696 = vunpack.c.h.b16 %v125
  %v697 = vunpack.c.l.b16 %v126
  %v698 = vunpack.c.h.b16 %v126
  %v699 = vunpack.c.l.b16 %v127
  %v700 = vunpack.c.l.b16 %v128
  %v701 = vunpack.c.h.b16 %v128
  %v702 = vunpack.c.l.b16 %v129
  %v703 = vunpack.c.h.b16 %v129
  %v704 = vunpack.c.l.b16 %v130
  %v705 = vunpack.c.h.b16 %v130
  %v706 = vunpack.c.l.b16 %v131
  %v707 = vunpack.c.h.b16 %v131
  %v708 = vunpack.c.l.b16 %v132
  %v709 = vunpack.c.l.b16 %v133
  %v710 = vunpack.c.h.b16 %v133
  %v711 = vunpack.c.l.b16 %v134
  %v712 = vunpack.c.h.b16 %v134
  %v713 = vunpack.c.l.b16 %v135
  %v714 = vunpack.c.h.b16 %v135
  %v715 = vunpack.c.l.b16 %v136
  %v716 = vunpack.c.h.b16 %v136
  %v717 = vunpack.c.l.b16 %v137
  %v718 = vunpack.c.l.b16 %v138
  %v719 = vunpack.c.h.b16 %v138
  %v720 = vunpack.c.l.b16 %v139
  %v721 = vunpack.c.h.b16 %v139
  %v722 = vunpack.c.l.b16 %v140
  %v723 = vunpack.c.h.b16 %v140
  %v724 = vunpack.c.l.b16 %v141
  %v725 = vunpack.c.h.b16 %v141
  %v726 = vunpack.c.l.b16 %v142
  %v727 = vunpack.c.l.b16 %v143
  %v728 = vunpack.c.h.b16 %v143
  %v729 = vunpack.c.l.b16 %v144
  %v730 = vunpack.c.h.b16 %v144
  %v731 = vunpack.c.l.b16 %v145
  %v732 = vunpack.c.h.b16 %v145
  %v733 = vunpack.c.l.b16 %v146
  %v734 = vunpack.c.h.b16 %v146
  %v735 = vunpack.c.l.b16 %v147
  %v736 = vunpack.c.l.b16 %v148
  %v737 = vunpack.c.h.b16 %v148
  %v738 = vunpack.c.l.b16 %v149
  %v739 = vunpack.c.h.b16 %v149
  %v740 = vunpack.c.l.b16 %v150
  %v741 = vunpack.c.h.b16 %v150
  %v742 = vunpack.c.l.b16 %v151
  %v743 = vunpack.c.h.b16 %v151
  %v744 = vunpack.c.l.b16 %v152
  %v745 = vunpack.c.l.b16 %v153
  %v746 = vunpack.c.h.b16 %v153
  %v747 = vunpack.c.l.b16 %v154
  %v748 = vunpack.c.h.b16 %v154
  %v749 = vunpack.c.l.b16 %v155
  %v750 = vunpack.c.h.b16 %v155
  %v751 = vunpack.c.l.b16 %v156
  %v752 = vunpack.c.h.b16 %v156
  %v753 = vunpack.c.l.b16 %v157
  %v754 = vunpack.c.l.b16 %v158
  %v755 = vunpack.c.h.b16 %v158
  %v756 = vunpack.c.l.b16 %v159
  %v757 = vunpack.c.h.b16 %v159
  %v758 = vunpack.c.l.b16 %v160
  %v759 = vunpack.c.h.b16 %v160
  %v760 = vunpack.c.l.b16 %v161
  %v761 = vunpack.c.h.b16 %v161
  %v762 = vunpack.c.l.b16 %v162
  %v763 = vunpack.c.l.b16 %v163
  %v764 = vunpack.c.h.b16 %v163
  %v765 = vunpack.c.l.b16 %v164
  %v766 = vunpack.c.h.b16 %v164
  %v767 = vunpack.c.l.b16 %v165
  %v768 = vunpack.c.h.b16 %v165
  %v769 = vunpack.c.l.b16 %v166
  %v770 = vunpack.c.h.b16 %v166
  %v771 = vunpack.c.l.b16 %v167
  %v772 = vunpack.c.l.b16 %v168
  %v773 = vunpack.c.h.b16 %v168
  %v774 = vunpack.c.l.b16 %v169
  %v775 = vunpack.c.h.b16 %v169
  %v776 = vunpack.c.l.b16 %v170
  %v777 = vunpack.c.h.b16 %v170
  %v778 = vunpack.c.l.b16 %v171
  %v779 = vunpack.c.h.b16 %v171
  %v780 = vunpack.c.l.b16 %v172
  %v781 = vunpack.c.l.b16 %v173
  %v782 = vunpack.c.h.b16 %v173
  %v783 = vunpack.c.l.b16 %v174
  %v784 = vunpack.c.h.b16 %v174
  %v785 = vunpack.c.l.b16 %v175
  %v786 = vunpack.c.h.b16 %v175
  %v787 = vunpack.c.l.b16 %v176
  %v788 = vunpack.c.h.b16 %v176
  %v789 = vunpack.c.l.b16 %v177
  %v790 = vunpack.c.l.b16 %v178
  %v791 = vunpack.c.h.b16 %v178
  %v792 = vunpack.c.l.b16 %v179
  %v793 = vunpack.c.h.b16 %v179
  %v794 = vunpack.c.l.b16 %v180
  %v795 = vunpack.c.h.b16 %v180
  %v796 = vunpack.c.l.b16 %v181
  %v797 = vunpack.c.h.b16 %v181
  %v798 = vunpack.c.l.b16 %v182
  %v799 = vunpack.c.l.b16 %v183
  %v800 = vunpack.c.h.b16 %v183
  %v801 = vunpack.c.l.b16 %v184
  %v802 = vunpack.c.h.b16 %v184
  %v803 = vunpack.c.l.b16 %v185
  %v804 = vunpack.c.h.b16 %v185
  %v805 = vunpack.c.l.b16 %v186
  %v806 = vunpack.c.h.b16 %v186
  %v807 = vunpack.c.l.b16 %v187
  %v808 = vpack.c.b16 %v511, %v502
  %v809 = vpack.c.b16 %v512, %v503
  %v810 = vpack.c.b16 %v513, %v504
  %v811 = vpack.c.b16 %v514, %v505
  %v812 = vpack.c.b16 %v515, %v506
  %v813 = vpack.c.b16 %v516, %v507
  %v814 = vpack.c.b16 %v517, %v508
  %v815 = vpack.c.b16 %v518, %v509
  %v816 = vpack.c.b16 %v519, %v510
  %v817 = vpack.c.b16 %v529, %v520
  %v818 = vpack.c.b16 %v530, %v521
  %v819 = vpack.c.b16 %v531, %v522
  %v820 = vpack.c.b16 %v532, %v523
  %v821 = vpack.c.b16 %v533, %v524
  %v822 = vpack.c.b16 %v534, %v525
  %v823 = vpack.c.b16 %v535, %v526
  %v824 = vpack.c.b16 %v536, %v527
  %v825 = vpack.c.b16 %v537, %v528
  %v826 = vpack.c.b16 %v547, %v538
  %v827 = vpack.c.b16 %v548, %v539
  %v828 = vpack.c.b16 %v549, %v540
  %v829 = vpack.c.b16 %v550, %v541
  %v830 = vpack.c.b16 %v551, %v542
  %v831 = vpack.c.b16 %v552, %v543
  %v832 = vpack.c.b16 %v553, %v544
  %v833 = vpack.c.b16 %v554, %v545
  %v834 = vpack.c.b16 %v555, %v546
  %v835 = vpack.c.b16 %v565, %v556
  %v836 = vpack.c.b16 %v566, %v557
  %v837 = vpack.c.b16 %v567, %v558
  %v838 = vpack.c.b16 %v568, %v559
  %v839 = vpack.c.b16 %v569, %v560
  %v840 = vpack.c.b16 %v570, %v561
  %v841 = vpack.c.b16 %v571, %v562
  %v842 = vpack.c.b16 %v572, %v563
  %v843 = vpack.c.b16 %v573, %v564
  %v844 = vpack.c.b16 %v583, %v574
  %v845 = vpack.c.b16 %v584, %v575
  %v846 = vpack.c.b16 %v585, %v576
  %v847 = vpack.c.b16 %v586, %v577
  %v848 = vpack.c.b16 %v587, %v578
  %v849 = vpack.c.b16 %v588, %v579
  %v850 = vpack.c.b16 %v589, %v580
  %v851 = vpack.c.b16 %v590, %v581
  %v852 = vpack.c.b16 %v591, %v582
  %v853 = vpack.c.b16 %v601, %v592
  %v854 = vpack.c.b16 %v602, %v593
  %v855 = vpack.c.b16 %v603, %v594
  %v856 = vpack.c.b16 %v604, %v595
  %v857 = vpack.c.b16 %v605, %v596
  %v858 = vpack.c.b16 %v606, %v597
  %v859 = vpack.c.b16 %v607, %v598
  %v860 = vpack.c.b16 %v608, %v599
  %v861 = vpack.c.b16 %v609, %v600
  %v862 = vpack.c.b16 %v619, %v610
  %v863 = vpack.c.b16 %v620, %v611
  %v864 = vpack.c.b16 %v621, %v612
  %v865 = vpack.c.b16 %v622, %v613
  %v866 = vpack.c.b16 %v623, %v614
  %v867 = vpack.c.b16 %v624, %v615
  %v868 = vpack.c.b16 %v625, %v616
  %v869 = vpack.c.b16 %v626, %v617
  %v870 = vpack.c.b16 %v627, %v618
  %v871 = vpack.c.b16 %v637, %v628
  %v872 = vpack.c.b16 %v638, %v629
  %v873 = vpack.c.b16 %v639, %v630
  %v874 = vpack.c.b16 %v640, %v631
  %v875 = vpack.c.b16 %v641, %v632
  %v876 = vpack.c.b16 %v642, %v633
  %v877 = vpack.c.b16 %v643, %v634
  %v878 = vpack.c.b16 %v644, %v635
  %v879 = vpack.c.b16 %v645, %v636
  %v880 = vpack.c.b16 %v655, %v646
  %v881 = vpack.c.b16 %v656, %v647
  %v882 = vpack.c.b16 %v657, %v648
  %v883 = vpack.c.b16 %v658, %v649
  %v884 = vpack.c.b16 %v659, %v650
  %v885 = vpack.c.b16 %v660, %v651
  %v886 = vpack.c.b16 %v661, %v652
  %v887 = vpack.c.b16 %v662, %v653
  %v888 = vpack.c.b16 %v663, %v654
  %v889 = vpack.c.b16 %v673, %v664
  %v890 = vpack.c.b16 %v674, %v665
  %v891 = vpack.c.b16 %v675, %v666
  %v892 = vpack.c.b16 %v676, %v667
  %v893 = vpack.c.b16 %v677, %v668
  %v894 = vpack.c.b16 %v678, %v669
  %v895 = vpack.c.b16 %v679, %v670
  %v896 = vpack.c.b16 %v680, %v671
  %v897 = vpack.c.b16 %v681, %v672
  %v898 = vpack.c.b16 %v691, %v682
  %v899 = vpack.c.b16 %v692, %v683
  %v900 = vpack.c.b16 %v693, %v684
  %v901 = vpack.c.b16 %v694, %v685
  %v902 = vpack.c.b16 %v695, %v686
  %v903 = vpack.c.b16 %v696, %v687
  %v904 = vpack.c.b16 %v697, %v688
  %v905 = vpack.c.b16 %v698, %v689
  %v906 = vpack.c.b16 %v699, %v690
  %v907 = vpack.c.b16 %v709, %v700
  %v908 = vpack.c.b16 %v710, %v701
  %v909 = vpack.c.b16 %v711, %v702
  %v910 = vpack.c.b16 %v712, %v703
  %v911 = vpack.c.b16 %v713, %v704
  %v912 = vpack.c.b16 %v714, %v705
  %v913 = vpack.c.b16 %v715, %v706
  %v914 = vpack.c.b16 %v716, %v707
  %v915 = vpack.c.b16 %v717, %v708
  %v916 = vpack.c.b16 %v727, %v718
  %v917 = vpack.c.b16 %v728, %v719
  %v918 = vpack.c.b16 %v729, %v720
  %v919 = vpack.c.b16 %v730, %v721
  %v920 = vpack.c.b16 %v731, %v722
  %v921 = vpack.c.b16 %v732, %v723
  %v922 = vpack.c.b16 %v733, %v724
  %v923 = vpack.c.b16 %v734, %v725
  %v924 = vpack.c.b16 %v735, %v726
  %v925 = vpack.c.b16 %v745, %v736
  %v926 = vpack.c.b16 %v746, %v737
  %v927 = vpack.c.b16 %v747, %v738
  %v928 = vpack.c.b16 %v748, %v739
  %v929 = vpack.c.b16 %v749, %v740
  %v930 = vpack.c.b16 %v750, %v741
  %v931 = vpack.c.b16 %v751, %v742
  %v932 = vpack.c.b16 %v752, %v743
  %v933 = vpack.c.b16 %v753, %v744
  %v934 = vpack.c.b16 %v763, %v754
  %v935 = vpack.c.b16 %v764, %v755
  %v936 = vpack.c.b16 %v765, %v756
  %v937 = vpack.c.b16 %v766, %v757
  %v938 = vpack.c.b16 %v767, %v758
  %v939 = vpack.c.b16 %v768, %v759
  %v940 = vpack.c.b16 %v769, %v760
  %v941 = vpack.c.b16 %v770, %v761
  %v942 = vpack.c.b16 %v771, %v762
  %v943 = vpack.c.b16 %v781, %v772
  %v944 = vpack.c.b16 %v782, %v773
  %v945 = vpack.c.b16 %v783, %v774
  %v946 = vpack.c.b16 %v784, %v775
  %v947 = vpack.c.b16 %v785, %v776
  %v948 = vpack.c.b16 %v786, %v777
  %v949 = vpack.c.b16 %v787, %v778
  %v950 = vpack.c.b16 %v788, %v779
  %v951 = vpack.c.b16 %v789, %v780
  %v952 = vpack.c.b16 %v799, %v790
  %v953 = vpack.c.b16 %v800, %v791
  %v954 = vpack.c.b16 %v801, %v792
  %v955 = vpack.c.b16 %v802, %v793
  %v956 = vpack.c.b16 %v803, %v794
  %v957 = vpack.c.b16 %v804, %v795
  %v958 = vpack.c.b16 %v805, %v796
  %v959 = vpack.c.b16 %v806, %v797
  %v960 = vpack.c.b16 %v807, %v798
  %v1258 = vunpack.c.l.b16 %v188
  %v1259 = vunpack.c.l.b16 %v189
  %v1260 = vunpack.c.l.b16 %v190
  %v1261 = vunpack.c.l.b16 %v191
  %v1262 = vunpack.c.l.b16 %v192
  %v1263 = vunpack.c.l.b16 %v193
  %v1264 = vunpack.c.l.b16 %v194
  %v1265 = vunpack.c.l.b16 %v195
  %v1266 = vunpack.c.l.b16 %v196
  %v1267 = vunpack.c.l.b16 %v197
  %v1268 = vunpack.c.l.b16 %v198
  %v1269 = vunpack.c.l.b16 %v199
  %v1270 = vunpack.c.l.b16 %v200
  %v1271 = vunpack.c.l.b16 %v201
  %v1272 = vunpack.c.l.b16 %v202
  %v1273 = vunpack.c.l.b16 %v203
  %v1274 = vunpack.c.l.b16 %v204
  %v1275 = vunpack.c.l.b16 %v205
  %v1276 = vunpack.c.l.b16 %v206
  %v1277 = vunpack.c.l.b16 %v207
  %v1278 = vunpack.c.l.b16 %v208
  %v1279 = vunpack.c.l.b16 %v209
  %v1280 = vunpack.c.l.b16 %v210
  %v1281 = vunpack.c.l.b16 %v211
  %v1282 = vunpack.c.l.b16 %v212
  %v1283 = vunpack.c.l.b16 %v213
  %v1284 = vunpack.c.l.b16 %v214
  %v1285 = vunpack.c.l.b16 %v215
  %v1286 = vunpack.c.l.b16 %v216
  %v1287 = vunpack.c.l.b16 %v217
  %v1288 = vunpack.c.l.b16 %v218
  %v1289 = vunpack.c.l.b16 %v219
  %v1290 = vunpack.c.l.b16 %v220
  %v1291 = vunpack.c.l.b16 %v221
  %v1292 = vunpack.c.l.b16 %v222
  %v1293 = vunpack.c.l.b16 %v223
  %v1294 = vunpack.c.l.b16 %v224
  %v1295 = vunpack.c.l.b16 %v225
  %v1296 = vunpack.c.l.b16 %v226
  %v1297 = vunpack.c.l.b16 %v227
  %v1298 = vunpack.c.l.b16 %v228
  %v1299 = vunpack.c.l.b16 %v229
  %v1300 = vunpack.c.l.b16 %v230
  %v1301 = vunpack.c.l.b16 %v231
  %v1302 = vunpack.c.l.b16 %v232
  %v1303 = vunpack.c.l.b16 %v233
  %v1304 = vunpack.c.l.b16 %v234
  %v1305 = vunpack.c.l.b16 %v235
  %v1306 = vunpack.c.l.b16 %v236
  %v1307 = vunpack.c.l.b16 %v237
  %v1308 = vunpack.c.l.b16 %v238
  %v1309 = vunpack.c.l.b16 %v239
  %v1310 = vunpack.c.l.b16 %v240
  %v1311 = vunpack.c.l.b16 %v241
  %v1312 = vunpack.c.l.b16 %v242
  %v1313 = vunpack.c.l.b16 %v243
  %v1314 = vunpack.c.l.b16 %v244
  %v1315 = vunpack.c.l.b16 %v245
  %v1316 = vunpack.c.l.b16 %v246
  %v1317 = vunpack.c.l.b16 %v247
  %v1318 = vunpack.c.l.b16 %v248
  %v1319 = vunpack.c.l.b16 %v249
  %v1320 = vunpack.c.l.b16 %v250
  %v1321 = vunpack.c.l.b16 %v251
  %v1322 = vunpack.c.l.b16 %v252
  %v1323 = vunpack.c.l.b16 %v253
  %v1324 = vunpack.c.l.b16 %v254
  %v1325 = vunpack.c.l.b16 %v255
  %v1326 = vunpack.c.l.b16 %v256
  %v1327 = vunpack.c.l.b16 %v257
  %v1328 = vunpack.c.l.b16 %v258
  %v1329 = vunpack.c.l.b16 %v259
  %v1330 = vunpack.c.l.b16 %v260
  %v1331 = vunpack.c.l.b16 %v261
  %v1332 = vunpack.c.l.b16 %v262
  %v1333 = vunpack.c.l.b16 %v263
  %v1334 = vunpack.c.l.b16 %v264
  %v1335 = vunpack.c.l.b16 %v265
  %v1336 = vunpack.c.l.b16 %v266
  %v1337 = vunpack.c.l.b16 %v267
  %v1338 = vunpack.c.l.b16 %v268
  %v1339 = vunpack.c.l.b16 %v269
  %v1340 = vunpack.c.l.b16 %v270
  %v1341 = vunpack.c.l.b16 %v271
  %v1342 = vunpack.c.l.b16 %v272
  %v1343 = vunpack.c.l.b16 %v273
  %v1344 = vunpack.c.l.b16 %v274
  %v1345 = vunpack.c.l.b16 %v275
  %v1346 = vunpack.c.l.b16 %v276
  %v1347 = vunpack.c.l.b16 %v277
  %v1348 = vunpack.c.l.b16 %v278
  %v1349 = vunpack.c.l.b16 %v279
  %v1350 = vunpack.c.l.b16 %v280
  %v1351 = vunpack.c.l.b16 %v281
  %v1352 = vunpack.c.l.b16 %v282
  %v1353 = vunpack.c.l.b16 %v283
  %v1354 = vunpack.c.l.b16 %v284
  %v1355 = vunpack.c.l.b16 %v285
  %v1356 = vunpack.c.l.b16 %v286
  %v1357 = vunpack.c.l.b16 %v287
  %v1358 = vunpack.c.l.b16 %v288
  %v1359 = vunpack.c.l.b16 %v289
  %v1360 = vunpack.c.l.b16 %v290
  %v1361 = vunpack.c.l.b16 %v291
  %v1362 = vunpack.c.l.b16 %v292
  %v1363 = vunpack.c.l.b16 %v293
  %v1364 = vunpack.c.l.b16 %v294
  %v1365 = vunpack.c.l.b16 %v295
  %v1366 = vunpack.c.l.b16 %v296
  %v1367 = vunpack.c.l.b16 %v297
  %v1368 = vunpack.c.l.b16 %v298
  %v1369 = vunpack.c.l.b16 %v299
  %v1370 = vunpack.c.l.b16 %v300
  %v1371 = vunpack.c.l.b16 %v301
  %v1372 = vunpack.c.l.b16 %v302
  %v1373 = vunpack.c.l.b16 %v303
  %v1374 = vunpack.c.l.b16 %v304
  %v1375 = vunpack.c.l.b16 %v305
  %v1376 = vunpack.c.l.b16 %v306
  %v1377 = vunpack.c.l.b16 %v307
  %v1378 = vunpack.c.l.b16 %v308
  %v1379 = vunpack.c.l.b16 %v309
  %v1380 = vunpack.c.l.b16 %v310
  %v1381 = vunpack.c.l.b16 %v311
  %v1382 = vunpack.c.l.b16 %v312
  %v1383 = vunpack.c.l.b16 %v313
  %v1384 = vunpack.c.l.b16 %v314
  %v1385 = vunpack.c.l.b16 %v315
  %v1386 = vunpack.c.l.b16 %v316
  %v1387 = vunpack.c.l.b16 %v317
  %v1388 = vunpack.c.l.b16 %v318
  %v1389 = vunpack.c.l.b16 %v319
  %v1390 = vunpack.c.l.b16 %v320
  %v1391 = vunpack.c.l.b16 %v321
  %v1392 = vunpack.c.l.b16 %v322
  %v1393 = vunpack.c.l.b16 %v323
  %v1394 = vunpack.c.l.b16 %v324
  %v1395 = vunpack.c.l.b16 %v325
  %v1396 = vunpack.c.l.b16 %v326
  %v1397 = vunpack.c.l.b16 %v327
  %v1398 = vunpack.c.l.b16 %v328
  %v1399 = vunpack.c.l.b16 %v329
  %v1400 = vunpack.c.l.b16 %v330
  %v1401 = vunpack.c.l.b16 %v331
  %v1402 = vpack.c.b16 %v1259, %v1258
  %v1403 = vpack.c.b16 %v1261, %v1260
  %v1404 = vpack.c.b16 %v1263, %v1262
  %v1405 = vpack.c.b16 %v1265, %v1264
  %v1406 = vpack.c.b16 %v1267, %v1266
  %v1407 = vpack.c.b16 %v1269, %v1268
  %v1408 = vpack.c.b16 %v1271, %v1270
  %v1409 = vpack.c.b16 %v1273, %v1272
  %v1410 = vpack.c.b16 %v1275, %v1274
  %v1411 = vpack.c.b16 %v1277, %v1276
  %v1412 = vpack.c.b16 %v1279, %v1278
  %v1413 = vpack.c.b16 %v1281, %v1280
  %v1414 = vpack.c.b16 %v1283, %v1282
  %v1415 = vpack.c.b16 %v1285, %v1284
  %v1416 = vpack.c.b16 %v1287, %v1286
  %v1417 = vpack.c.b16 %v1289, %v1288
  %v1418 = vpack.c.b16 %v1291, %v1290
  %v1419 = vpack.c.b16 %v1293, %v1292
  %v1420 = vpack.c.b16 %v1295, %v1294
  %v1421 = vpack.c.b16 %v1297, %v1296
  %v1422 = vpack.c.b16 %v1299, %v1298
  %v1423 = vpack.c.b16 %v1301, %v1300
  %v1424 = vpack.c.b16 %v1303, %v1302
  %v1425 = vpack.c.b16 %v1305, %v1304
  %v1426 = vpack.c.b16 %v1307, %v1306
  %v1427 = vpack.c.b16 %v1309, %v1308
  %v1428 = vpack.c.b16 %v1311, %v1310
  %v1429 = vpack.c.b16 %v1313, %v1312
  %v1430 = vpack.c.b16 %v1315, %v1314
  %v1431 = vpack.c.b16 %v1317, %v1316
  %v1432 = vpack.c.b16 %v1319, %v1318
  %v1433 = vpack.c.b16 %v1321, %v1320
  %v1434 = vpack.c.b16 %v1323, %v1322
  %v1435 = vpack.c.b16 %v1325, %v1324
  %v1436 = vpack.c.b16 %v1327, %v1326
  %v1437 = vpack.c.b16 %v1329, %v1328
  %v1438 = vpack.c.b16 %v1331, %v1330
  %v1439 = vpack.c.b16 %v1333, %v1332
  %v1440 = vpack.c.b16 %v1335, %v1334
  %v1441 = vpack.c.b16 %v1337, %v1336
  %v1442 = vpack.c.b16 %v1339, %v1338
  %v1443 = vpack.c.b16 %v1341, %v1340
  %v1444 = vpack.c.b16 %v1343, %v1342
  %v1445 = vpack.c.b16 %v1345, %v1344
  %v1446 = vpack.c.b16 %v1347, %v1346
  %v1447 = vpack.c.b16 %v1349, %v1348
  %v1448 = vpack.c.b16 %v1351, %v1350
  %v1449 = vpack.c.b16 %v1353, %v1352
  %v1450 = vpack.c.b16 %v1355, %v1354
  %v1451 = vpack.c.b16 %v1357, %v1356
  %v1452 = vpack.c.b16 %v1359, %v1358
  %v1453 = vpack.c.b16 %v1361, %v1360
  %v1454 = vpack.c.b16 %v1363, %v1362
  %v1455 = vpack.c.b16 %v1365, %v1364
  %v1456 = vpack.c.b16 %v1367, %v1366
  %v1457 = vpack.c.b16 %v1369, %v1368
  %v1458 = vpack.c.b16 %v1371, %v1370
  %v1459 = vpack.c.b16 %v1373, %v1372
  %v1460 = vpack.c.b16 %v1375, %v1374
  %v1461 = vpack.c.b16 %v1377, %v1376
  %v1462 = vpack.c.b16 %v1379, %v1378
  %v1463 = vpack.c.b16 %v1381, %v1380
  %v1464 = vpack.c.b16 %v1383, %v1382
  %v1465 = vpack.c.b16 %v1385, %v1384
  %v1466 = vpack.c.b16 %v1387, %v1386
  %v1467 = vpack.c.b16 %v1389, %v1388
  %v1468 = vpack.c.b16 %v1391, %v1390
  %v1469 = vpack.c.b16 %v1393, %v1392
  %v1470 = vpack.c.b16 %v1395, %v1394
  %v1471 = vpack.c.b16 %v1397, %v1396
  %v1472 = vpack.c.b16 %v1399, %v1398
  %v1473 = vpack.c.b16 %v1401, %v1400
  %1546 = vmatprep.subr.bf16.mxu0 0
  %1547 = vmatpush1.bf16.msra.mxu0 %v1402
  %1548 = vmatprep.subr.bf16.mxu0 0
  %1549 = vmatpush1.bf16.msra.mxu0 %v1403
  %1550 = vmatprep.subr.bf16.mxu0 0
  %1551 = vmatpush1.bf16.msra.mxu0 %v1404
  %1552 = vmatprep.subr.bf16.mxu0 0
  %1553 = vmatpush1.bf16.msra.mxu0 %v1405
  %1554 = vmatprep.subr.bf16.mxu0 0
  %1555 = vmatpush1.bf16.msra.mxu0 %v1406
  %1556 = vmatprep.subr.bf16.mxu0 0
  %1557 = vmatpush1.bf16.msra.mxu0 %v1407
  %1558 = vmatprep.subr.bf16.mxu0 0
  %1559 = vmatpush1.bf16.msra.mxu0 %v1408
  %1560 = vmatprep.subr.bf16.mxu0 0
  %1561 = vmatpush1.bf16.msra.mxu0 %v1409
  %1562 = vmatprep.subr.bf16.mxu0 0
  %1563 = vmatpush1.bf16.msra.mxu0 %v1410
  %1564 = vmatprep.subr.bf16.mxu0 0
  %1565 = vmatpush1.bf16.msra.mxu0 %v1411
  %1566 = vmatprep.subr.bf16.mxu0 0
  %1567 = vmatpush1.bf16.msra.mxu0 %v1412
  %1568 = vmatprep.subr.bf16.mxu0 0
  %1569 = vmatpush1.bf16.msra.mxu0 %v1413
  %1570 = vmatprep.subr.bf16.mxu0 0
  %1571 = vmatpush1.bf16.msra.mxu0 %v1414
  %1572 = vmatprep.subr.bf16.mxu0 0
  %1573 = vmatpush1.bf16.msra.mxu0 %v1415
  %1574 = vmatprep.subr.bf16.mxu0 0
  %1575 = vmatpush1.bf16.msra.mxu0 %v1416
  %1576 = vmatprep.subr.bf16.mxu0 0
  %1577 = vmatpush1.bf16.msra.mxu0 %v1417
  %1578 = vmatprep.mubr.bf16.mxu0 %v809
  %1579 = vmatmul.mubr.bf16.gmra.mrb[0].mxu0 %v808
  %v1580 = vpop.f32.mrb[0].mxu0
  %v1581 = vadd.f32 0.0, %v1580
  %v1582 = vpop.f32.mrb[0].mxu0
  %v1583 = vpop.f32.mrb[0].mxu0
  %v1584 = vadd.f32 0.0, %v1583
  %v1585 = vpop.f32.mrb[0].mxu0
  %1586 = vmatprep.mubr.bf16.mxu0 %v818
  %1587 = vmatmul.mubr.bf16.gmra.mrb[0].mxu0 %v817
  %v1588 = vpop.f32.mrb[0].mxu0
  %v1589 = vadd.f32 0.0, %v1588
  %v1590 = vpop.f32.mrb[0].mxu0
  %v1591 = vpop.f32.mrb[0].mxu0
  %v1592 = vadd.f32 0.0, %v1591
  %v1593 = vpop.f32.mrb[0].mxu0
  %1594 = vmatprep.mubr.bf16.mxu0 %v827
  %1595 = vmatmul.mubr.bf16.gmra.mrb[0].mxu0 %v826
  %v1596 = vpop.f32.mrb[0].mxu0
  %v1597 = vadd.f32 0.0, %v1596
  %v1598 = vpop.f32.mrb[0].mxu0
  %v1599 = vpop.f32.mrb[0].mxu0
  %v1600 = vadd.f32 0.0, %v1599
  %v1601 = vpop.f32.mrb[0].mxu0
  %1602 = vmatprep.mubr.bf16.mxu0 %v836
  %1603 = vmatmul.mubr.bf16.gmra.mrb[0].mxu0 %v835
  %v1604 = vpop.f32.mrb[0].mxu0
  %v1605 = vadd.f32 0.0, %v1604
  %v1606 = vpop.f32.mrb[0].mxu0
  %v1607 = vpop.f32.mrb[0].mxu0
  %v1608 = vadd.f32 0.0, %v1607
  %v1609 = vpop.f32.mrb[0].mxu0
  %1610 = vmatprep.mubr.bf16.mxu0 %v845
  %1611 = vmatmul.mubr.bf16.gmra.mrb[0].mxu0 %v844
  %v1612 = vpop.f32.mrb[0].mxu0
  %v1613 = vadd.f32 0.0, %v1612
  %v1614 = vpop.f32.mrb[0].mxu0
  %v1615 = vpop.f32.mrb[0].mxu0
  %v1616 = vadd.f32 0.0, %v1615
  %v1617 = vpop.f32.mrb[0].mxu0
  %1618 = vmatprep.mubr.bf16.mxu0 %v854
  %1619 = vmatmul.mubr.bf16.gmra.mrb[0].mxu0 %v853
  %v1620 = vpop.f32.mrb[0].mxu0
  %v1621 = vadd.f32 0.0, %v1620
  %v1622 = vpop.f32.mrb[0].mxu0
  %v1623 = vpop.f32.mrb[0].mxu0
  %v1624 = vadd.f32 0.0, %v1623
  %v1625 = vpop.f32.mrb[0].mxu0
  %1626 = vmatprep.mubr.bf16.mxu0 %v863
  %1627 = vmatmul.mubr.bf16.gmra.mrb[0].mxu0 %v862
  %v1628 = vpop.f32.mrb[0].mxu0
  %v1629 = vadd.f32 0.0, %v1628
  %v1630 = vpop.f32.mrb[0].mxu0
  %v1631 = vpop.f32.mrb[0].mxu0
  %v1632 = vadd.f32 0.0, %v1631
  %v1633 = vpop.f32.mrb[0].mxu0
  %1634 = vmatprep.mubr.bf16.mxu0 %v872
  %1635 = vmatmul.mubr.bf16.gmra.mrb[0].mxu0 %v871
  %v1636 = vpop.f32.mrb[0].mxu0
  %v1637 = vadd.f32 0.0, %v1636
  %v1638 = vpop.f32.mrb[0].mxu0
  %v1639 = vpop.f32.mrb[0].mxu0
  %v1640 = vadd.f32 0.0, %v1639
  %v1641 = vpop.f32.mrb[0].mxu0
  %1642 = vmatprep.mubr.bf16.mxu0 %v881
  %1643 = vmatmul.mubr.bf16.gmra.mrb[0].mxu0 %v880
  %v1644 = vpop.f32.mrb[0].mxu0
  %v1645 = vadd.f32 0.0, %v1644
  %v1646 = vpop.f32.mrb[0].mxu0
  %v1647 = vpop.f32.mrb[0].mxu0
  %v1648 = vadd.f32 0.0, %v1647
  %v1649 = vpop.f32.mrb[0].mxu0
  %1650 = vmatprep.mubr.bf16.mxu0 %v890
  %1651 = vmatmul.mubr.bf16.gmra.mrb[0].mxu0 %v889
  %v1652 = vpop.f32.mrb[0].mxu0
  %v1653 = vadd.f32 0.0, %v1652
  %v1654 = vpop.f32.mrb[0].mxu0
  %v1655 = vpop.f32.mrb[0].mxu0
  %v1656 = vadd.f32 0.0, %v1655
  %v1657 = vpop.f32.mrb[0].mxu0
  %1658 = vmatprep.mubr.bf16.mxu0 %v899
  %1659 = vmatmul.mubr.bf16.gmra.mrb[0].mxu0 %v898
  %v1660 = vpop.f32.mrb[0].mxu0
  %v1661 = vadd.f32 0.0, %v1660
  %v1662 = vpop.f32.mrb[0].mxu0
  %v1663 = vpop.f32.mrb[0].mxu0
  %v1664 = vadd.f32 0.0, %v1663
  %v1665 = vpop.f32.mrb[0].mxu0
  %1666 = vmatprep.mubr.bf16.mxu0 %v908
  %1667 = vmatmul.mubr.bf16.gmra.mrb[0].mxu0 %v907
  %v1668 = vpop.f32.mrb[0].mxu0
  %v1669 = vadd.f32 0.0, %v1668
  %v1670 = vpop.f32.mrb[0].mxu0
  %v1671 = vpop.f32.mrb[0].mxu0
  %v1672 = vadd.f32 0.0, %v1671
  %v1673 = vpop.f32.mrb[0].mxu0
  %1674 = vmatprep.mubr.bf16.mxu0 %v917
  %1675 = vmatmul.mubr.bf16.gmra.mrb[0].mxu0 %v916
  %v1676 = vpop.f32.mrb[0].mxu0
  %v1677 = vadd.f32 0.0, %v1676
  %v1678 = vpop.f32.mrb[0].mxu0
  %v1679 = vpop.f32.mrb[0].mxu0
  %v1680 = vadd.f32 0.0, %v1679
  %v1681 = vpop.f32.mrb[0].mxu0
  %1682 = vmatprep.mubr.bf16.mxu0 %v926
  %1683 = vmatmul.mubr.bf16.gmra.mrb[0].mxu0 %v925
  %v1684 = vpop.f32.mrb[0].mxu0
  %v1685 = vadd.f32 0.0, %v1684
  %v1686 = vpop.f32.mrb[0].mxu0
  %v1687 = vpop.f32.mrb[0].mxu0
  %v1688 = vadd.f32 0.0, %v1687
  %v1689 = vpop.f32.mrb[0].mxu0
  %1690 = vmatprep.mubr.bf16.mxu0 %v935
  %1691 = vmatmul.mubr.bf16.gmra.mrb[0].mxu0 %v934
  %v1692 = vpop.f32.mrb[0].mxu0
  %v1693 = vadd.f32 0.0, %v1692
  %v1694 = vpop.f32.mrb[0].mxu0
  %v1695 = vpop.f32.mrb[0].mxu0
  %v1696 = vadd.f32 0.0, %v1695
  %v1697 = vpop.f32.mrb[0].mxu0
  %1698 = vmatprep.mubr.bf16.mxu0 %v944
  %1699 = vmatmul.mubr.bf16.gmra.mrb[0].mxu0 %v943
  %v1700 = vpop.f32.mrb[0].mxu0
  %v1701 = vadd.f32 0.0, %v1700
  %v1702 = vpop.f32.mrb[0].mxu0
  %v1703 = vpop.f32.mrb[0].mxu0
  %v1704 = vadd.f32 0.0, %v1703
  %v1705 = vpop.f32.mrb[0].mxu0
  %1706 = vmatprep.mubr.bf16.mxu0 %v953
  %1707 = vmatmul.mubr.bf16.gmra.mrb[0].mxu0 %v952
  %v1708 = vpop.f32.mrb[0].mxu0
  %v1709 = vadd.f32 0.0, %v1708
  %v1710 = vpop.f32.mrb[0].mxu0
  %v1711 = vpop.f32.mrb[0].mxu0
  %v1712 = vadd.f32 0.0, %v1711
  %v1713 = vpop.f32.mrb[0].mxu0
  %1714 = vdwg.mxu0
  %1715 = vmatprep.subr.bf16.mxu0 0
  %1716 = vmatpush1.bf16.msra.mxu0 %v1418
  %1717 = vmatprep.subr.bf16.mxu0 0
  %1718 = vmatpush1.bf16.msra.mxu0 %v1419
  %1719 = vmatprep.subr.bf16.mxu0 0
  %1720 = vmatpush1.bf16.msra.mxu0 %v1420
  %1721 = vmatprep.subr.bf16.mxu0 0
  %1722 = vmatpush1.bf16.msra.mxu0 %v1421
  %1723 = vmatprep.subr.bf16.mxu0 0
  %1724 = vmatpush1.bf16.msra.mxu0 %v1422
  %1725 = vmatprep.subr.bf16.mxu0 0
  %1726 = vmatpush1.bf16.msra.mxu0 %v1423
  %1727 = vmatprep.subr.bf16.mxu0 0
  %1728 = vmatpush1.bf16.msra.mxu0 %v1424
  %1729 = vmatprep.subr.bf16.mxu0 0
  %1730 = vmatpush1.bf16.msra.mxu0 %v1425
  %1731 = vmatprep.subr.bf16.mxu0 0
  %1732 = vmatpush1.bf16.msra.mxu0 %v1426
  %1733 = vmatprep.subr.bf16.mxu0 0
  %1734 = vmatpush1.bf16.msra.mxu0 %v1427
  %1735 = vmatprep.subr.bf16.mxu0 0
  %1736 = vmatpush1.bf16.msra.mxu0 %v1428
  %1737 = vmatprep.subr.bf16.mxu0 0
  %1738 = vmatpush1.bf16.msra.mxu0 %v1429
  %1739 = vmatprep.subr.bf16.mxu0 0
  %1740 = vmatpush1.bf16.msra.mxu0 %v1430
  %1741 = vmatprep.subr.bf16.mxu0 0
  %1742 = vmatpush1.bf16.msra.mxu0 %v1431
  %1743 = vmatprep.subr.bf16.mxu0 0
  %1744 = vmatpush1.bf16.msra.mxu0 %v1432
  %1745 = vmatprep.subr.bf16.mxu0 0
  %1746 = vmatpush1.bf16.msra.mxu0 %v1433
  %1747 = vmatprep.mubr.bf16.mxu0 %v811
  %1748 = vmatmul.mubr.bf16.gmra.mrb[0].mxu0 %v810
  %v1749 = vpop.f32.mrb[0].mxu0
  %v1750 = vadd.f32 %v1581, %v1749
  %v1751 = vpop.f32.mrb[0].mxu0
  %v1752 = vpop.f32.mrb[0].mxu0
  %v1753 = vadd.f32 %v1584, %v1752
  %v1754 = vpop.f32.mrb[0].mxu0
  %1755 = vmatprep.mubr.bf16.mxu0 %v820
  %1756 = vmatmul.mubr.bf16.gmra.mrb[0].mxu0 %v819
  %v1757 = vpop.f32.mrb[0].mxu0
  %v1758 = vadd.f32 %v1589, %v1757
  %v1759 = vpop.f32.mrb[0].mxu0
  %v1760 = vpop.f32.mrb[0].mxu0
  %v1761 = vadd.f32 %v1592, %v1760
  %v1762 = vpop.f32.mrb[0].mxu0
  %1763 = vmatprep.mubr.bf16.mxu0 %v829
  %1764 = vmatmul.mubr.bf16.gmra.mrb[0].mxu0 %v828
  %v1765 = vpop.f32.mrb[0].mxu0
  %v1766 = vadd.f32 %v1597, %v1765
  %v1767 = vpop.f32.mrb[0].mxu0
  %v1768 = vpop.f32.mrb[0].mxu0
  %v1769 = vadd.f32 %v1600, %v1768
  %v1770 = vpop.f32.mrb[0].mxu0
  %1771 = vmatprep.mubr.bf16.mxu0 %v838
  %1772 = vmatmul.mubr.bf16.gmra.mrb[0].mxu0 %v837
  %v1773 = vpop.f32.mrb[0].mxu0
  %v1774 = vadd.f32 %v1605, %v1773
  %v1775 = vpop.f32.mrb[0].mxu0
  %v1776 = vpop.f32.mrb[0].mxu0
  %v1777 = vadd.f32 %v1608, %v1776
  %v1778 = vpop.f32.mrb[0].mxu0
  %1779 = vmatprep.mubr.bf16.mxu0 %v847
  %1780 = vmatmul.mubr.bf16.gmra.mrb[0].mxu0 %v846
  %v1781 = vpop.f32.mrb[0].mxu0
  %v1782 = vadd.f32 %v1613, %v1781
  %v1783 = vpop.f32.mrb[0].mxu0
  %v1784 = vpop.f32.mrb[0].mxu0
  %v1785 = vadd.f32 %v1616, %v1784
  %v1786 = vpop.f32.mrb[0].mxu0
  %1787 = vmatprep.mubr.bf16.mxu0 %v856
  %1788 = vmatmul.mubr.bf16.gmra.mrb[0].mxu0 %v855
  %v1789 = vpop.f32.mrb[0].mxu0
  %v1790 = vadd.f32 %v1621, %v1789
  %v1791 = vpop.f32.mrb[0].mxu0
  %v1792 = vpop.f32.mrb[0].mxu0
  %v1793 = vadd.f32 %v1624, %v1792
  %v1794 = vpop.f32.mrb[0].mxu0
  %1795 = vmatprep.mubr.bf16.mxu0 %v865
  %1796 = vmatmul.mubr.bf16.gmra.mrb[0].mxu0 %v864
  %v1797 = vpop.f32.mrb[0].mxu0
  %v1798 = vadd.f32 %v1629, %v1797
  %v1799 = vpop.f32.mrb[0].mxu0
  %v1800 = vpop.f32.mrb[0].mxu0
  %v1801 = vadd.f32 %v1632, %v1800
  %v1802 = vpop.f32.mrb[0].mxu0
  %1803 = vmatprep.mubr.bf16.mxu0 %v874
  %1804 = vmatmul.mubr.bf16.gmra.mrb[0].mxu0 %v873
  %v1805 = vpop.f32.mrb[0].mxu0
  %v1806 = vadd.f32 %v1637, %v1805
  %v1807 = vpop.f32.mrb[0].mxu0
  %v1808 = vpop.f32.mrb[0].mxu0
  %v1809 = vadd.f32 %v1640, %v1808
  %v1810 = vpop.f32.mrb[0].mxu0
  %1811 = vmatprep.mubr.bf16.mxu0 %v883
  %1812 = vmatmul.mubr.bf16.gmra.mrb[0].mxu0 %v882
  %v1813 = vpop.f32.mrb[0].mxu0
  %v1814 = vadd.f32 %v1645, %v1813
  %v1815 = vpop.f32.mrb[0].mxu0
  %v1816 = vpop.f32.mrb[0].mxu0
  %v1817 = vadd.f32 %v1648, %v1816
  %v1818 = vpop.f32.mrb[0].mxu0
  %1819 = vmatprep.mubr.bf16.mxu0 %v892
  %1820 = vmatmul.mubr.bf16.gmra.mrb[0].mxu0 %v891
  %v1821 = vpop.f32.mrb[0].mxu0
  %v1822 = vadd.f32 %v1653, %v1821
  %v1823 = vpop.f32.mrb[0].mxu0
  %v1824 = vpop.f32.mrb[0].mxu0
  %v1825 = vadd.f32 %v1656, %v1824
  %v1826 = vpop.f32.mrb[0].mxu0
  %1827 = vmatprep.mubr.bf16.mxu0 %v901
  %1828 = vmatmul.mubr.bf16.gmra.mrb[0].mxu0 %v900
  %v1829 = vpop.f32.mrb[0].mxu0
  %v1830 = vadd.f32 %v1661, %v1829
  %v1831 = vpop.f32.mrb[0].mxu0
  %v1832 = vpop.f32.mrb[0].mxu0
  %v1833 = vadd.f32 %v1664, %v1832
  %v1834 = vpop.f32.mrb[0].mxu0
  %1835 = vmatprep.mubr.bf16.mxu0 %v910
  %1836 = vmatmul.mubr.bf16.gmra.mrb[0].mxu0 %v909
  %v1837 = vpop.f32.mrb[0].mxu0
  %v1838 = vadd.f32 %v1669, %v1837
  %v1839 = vpop.f32.mrb[0].mxu0
  %v1840 = vpop.f32.mrb[0].mxu0
  %v1841 = vadd.f32 %v1672, %v1840
  %v1842 = vpop.f32.mrb[0].mxu0
  %1843 = vmatprep.mubr.bf16.mxu0 %v919
  %1844 = vmatmul.mubr.bf16.gmra.mrb[0].mxu0 %v918
  %v1845 = vpop.f32.mrb[0].mxu0
  %v1846 = vadd.f32 %v1677, %v1845
  %v1847 = vpop.f32.mrb[0].mxu0
  %v1848 = vpop.f32.mrb[0].mxu0
  %v1849 = vadd.f32 %v1680, %v1848
  %v1850 = vpop.f32.mrb[0].mxu0
  %1851 = vmatprep.mubr.bf16.mxu0 %v928
  %1852 = vmatmul.mubr.bf16.gmra.mrb[0].mxu0 %v927
  %v1853 = vpop.f32.mrb[0].mxu0
  %v1854 = vadd.f32 %v1685, %v1853
  %v1855 = vpop.f32.mrb[0].mxu0
  %v1856 = vpop.f32.mrb[0].mxu0
  %v1857 = vadd.f32 %v1688, %v1856
  %v1858 = vpop.f32.mrb[0].mxu0
  %1859 = vmatprep.mubr.bf16.mxu0 %v937
  %1860 = vmatmul.mubr.bf16.gmra.mrb[0].mxu0 %v936
  %v1861 = vpop.f32.mrb[0].mxu0
  %v1862 = vadd.f32 %v1693, %v1861
  %v1863 = vpop.f32.mrb[0].mxu0
  %v1864 = vpop.f32.mrb[0].mxu0
  %v1865 = vadd.f32 %v1696, %v1864
  %v1866 = vpop.f32.mrb[0].mxu0
  %1867 = vmatprep.mubr.bf16.mxu0 %v946
  %1868 = vmatmul.mubr.bf16.gmra.mrb[0].mxu0 %v945
  %v1869 = vpop.f32.mrb[0].mxu0
  %v1870 = vadd.f32 %v1701, %v1869
  %v1871 = vpop.f32.mrb[0].mxu0
  %v1872 = vpop.f32.mrb[0].mxu0
  %v1873 = vadd.f32 %v1704, %v1872
  %v1874 = vpop.f32.mrb[0].mxu0
  %1875 = vmatprep.mubr.bf16.mxu0 %v955
  %1876 = vmatmul.mubr.bf16.gmra.mrb[0].mxu0 %v954
  %v1877 = vpop.f32.mrb[0].mxu0
  %v1878 = vadd.f32 %v1709, %v1877
  %v1879 = vpop.f32.mrb[0].mxu0
  %v1880 = vpop.f32.mrb[0].mxu0
  %v1881 = vadd.f32 %v1712, %v1880
  %v1882 = vpop.f32.mrb[0].mxu0
  %1883 = vdwg.mxu0
  %1884 = vmatprep.subr.bf16.mxu0 0
  %1885 = vmatpush1.bf16.msra.mxu0 %v1434
  %1886 = vmatprep.subr.bf16.mxu0 0
  %1887 = vmatpush1.bf16.msra.mxu0 %v1435
  %1888 = vmatprep.subr.bf16.mxu0 0
  %1889 = vmatpush1.bf16.msra.mxu0 %v1436
  %1890 = vmatprep.subr.bf16.mxu0 0
  %1891 = vmatpush1.bf16.msra.mxu0 %v1437
  %1892 = vmatprep.subr.bf16.mxu0 0
  %1893 = vmatpush1.bf16.msra.mxu0 %v1438
  %1894 = vmatprep.subr.bf16.mxu0 0
  %1895 = vmatpush1.bf16.msra.mxu0 %v1439
  %1896 = vmatprep.subr.bf16.mxu0 0
  %1897 = vmatpush1.bf16.msra.mxu0 %v1440
  %1898 = vmatprep.subr.bf16.mxu0 0
  %1899 = vmatpush1.bf16.msra.mxu0 %v1441
  %1900 = vmatprep.subr.bf16.mxu0 0
  %1901 = vmatpush1.bf16.msra.mxu0 %v1442
  %1902 = vmatprep.subr.bf16.mxu0 0
  %1903 = vmatpush1.bf16.msra.mxu0 %v1443
  %1904 = vmatprep.subr.bf16.mxu0 0
  %1905 = vmatpush1.bf16.msra.mxu0 %v1444
  %1906 = vmatprep.subr.bf16.mxu0 0
  %1907 = vmatpush1.bf16.msra.mxu0 %v1445
  %1908 = vmatprep.subr.bf16.mxu0 0
  %1909 = vmatpush1.bf16.msra.mxu0 %v1446
  %1910 = vmatprep.subr.bf16.mxu0 0
  %1911 = vmatpush1.bf16.msra.mxu0 %v1447
  %1912 = vmatprep.subr.bf16.mxu0 0
  %1913 = vmatpush1.bf16.msra.mxu0 %v1448
  %1914 = vmatprep.subr.bf16.mxu0 0
  %1915 = vmatpush1.bf16.msra.mxu0 %v1449
  %1916 = vmatprep.mubr.bf16.mxu0 %v813
  %1917 = vmatmul.mubr.bf16.gmra.mrb[0].mxu0 %v812
  %v1918 = vpop.f32.mrb[0].mxu0
  %v1919 = vadd.f32 %v1750, %v1918
  %v1920 = vpop.f32.mrb[0].mxu0
  %v1921 = vpop.f32.mrb[0].mxu0
  %v1922 = vadd.f32 %v1753, %v1921
  %v1923 = vpop.f32.mrb[0].mxu0
  %1924 = vmatprep.mubr.bf16.mxu0 %v822
  %1925 = vmatmul.mubr.bf16.gmra.mrb[0].mxu0 %v821
  %v1926 = vpop.f32.mrb[0].mxu0
  %v1927 = vadd.f32 %v1758, %v1926
  %v1928 = vpop.f32.mrb[0].mxu0
  %v1929 = vpop.f32.mrb[0].mxu0
  %v1930 = vadd.f32 %v1761, %v1929
  %v1931 = vpop.f32.mrb[0].mxu0
  %1932 = vmatprep.mubr.bf16.mxu0 %v831
  %1933 = vmatmul.mubr.bf16.gmra.mrb[0].mxu0 %v830
  %v1934 = vpop.f32.mrb[0].mxu0
  %v1935 = vadd.f32 %v1766, %v1934
  %v1936 = vpop.f32.mrb[0].mxu0
  %v1937 = vpop.f32.mrb[0].mxu0
  %v1938 = vadd.f32 %v1769, %v1937
  %v1939 = vpop.f32.mrb[0].mxu0
  %1940 = vmatprep.mubr.bf16.mxu0 %v840
  %1941 = vmatmul.mubr.bf16.gmra.mrb[0].mxu0 %v839
  %v1942 = vpop.f32.mrb[0].mxu0
  %v1943 = vadd.f32 %v1774, %v1942
  %v1944 = vpop.f32.mrb[0].mxu0
  %v1945 = vpop.f32.mrb[0].mxu0
  %v1946 = vadd.f32 %v1777, %v1945
  %v1947 = vpop.f32.mrb[0].mxu0
  %1948 = vmatprep.mubr.bf16.mxu0 %v849
  %1949 = vmatmul.mubr.bf16.gmra.mrb[0].mxu0 %v848
  %v1950 = vpop.f32.mrb[0].mxu0
  %v1951 = vadd.f32 %v1782, %v1950
  %v1952 = vpop.f32.mrb[0].mxu0
  %v1953 = vpop.f32.mrb[0].mxu0
  %v1954 = vadd.f32 %v1785, %v1953
  %v1955 = vpop.f32.mrb[0].mxu0
  %1956 = vmatprep.mubr.bf16.mxu0 %v858
  %1957 = vmatmul.mubr.bf16.gmra.mrb[0].mxu0 %v857
  %v1958 = vpop.f32.mrb[0].mxu0
  %v1959 = vadd.f32 %v1790, %v1958
  %v1960 = vpop.f32.mrb[0].mxu0
  %v1961 = vpop.f32.mrb[0].mxu0
  %v1962 = vadd.f32 %v1793, %v1961
  %v1963 = vpop.f32.mrb[0].mxu0
  %1964 = vmatprep.mubr.bf16.mxu0 %v867
  %1965 = vmatmul.mubr.bf16.gmra.mrb[0].mxu0 %v866
  %v1966 = vpop.f32.mrb[0].mxu0
  %v1967 = vadd.f32 %v1798, %v1966
  %v1968 = vpop.f32.mrb[0].mxu0
  %v1969 = vpop.f32.mrb[0].mxu0
  %v1970 = vadd.f32 %v1801, %v1969
  %v1971 = vpop.f32.mrb[0].mxu0
  %1972 = vmatprep.mubr.bf16.mxu0 %v876
  %1973 = vmatmul.mubr.bf16.gmra.mrb[0].mxu0 %v875
  %v1974 = vpop.f32.mrb[0].mxu0
  %v1975 = vadd.f32 %v1806, %v1974
  %v1976 = vpop.f32.mrb[0].mxu0
  %v1977 = vpop.f32.mrb[0].mxu0
  %v1978 = vadd.f32 %v1809, %v1977
  %v1979 = vpop.f32.mrb[0].mxu0
  %1980 = vmatprep.mubr.bf16.mxu0 %v885
  %1981 = vmatmul.mubr.bf16.gmra.mrb[0].mxu0 %v884
  %v1982 = vpop.f32.mrb[0].mxu0
  %v1983 = vadd.f32 %v1814, %v1982
  %v1984 = vpop.f32.mrb[0].mxu0
  %v1985 = vpop.f32.mrb[0].mxu0
  %v1986 = vadd.f32 %v1817, %v1985
  %v1987 = vpop.f32.mrb[0].mxu0
  %1988 = vmatprep.mubr.bf16.mxu0 %v894
  %1989 = vmatmul.mubr.bf16.gmra.mrb[0].mxu0 %v893
  %v1990 = vpop.f32.mrb[0].mxu0
  %v1991 = vadd.f32 %v1822, %v1990
  %v1992 = vpop.f32.mrb[0].mxu0
  %v1993 = vpop.f32.mrb[0].mxu0
  %v1994 = vadd.f32 %v1825, %v1993
  %v1995 = vpop.f32.mrb[0].mxu0
  %1996 = vmatprep.mubr.bf16.mxu0 %v903
  %1997 = vmatmul.mubr.bf16.gmra.mrb[0].mxu0 %v902
  %v1998 = vpop.f32.mrb[0].mxu0
  %v1999 = vadd.f32 %v1830, %v1998
  %v2000 = vpop.f32.mrb[0].mxu0
  %v2001 = vpop.f32.mrb[0].mxu0
  %v2002 = vadd.f32 %v1833, %v2001
  %v2003 = vpop.f32.mrb[0].mxu0
  %2004 = vmatprep.mubr.bf16.mxu0 %v912
  %2005 = vmatmul.mubr.bf16.gmra.mrb[0].mxu0 %v911
  %v2006 = vpop.f32.mrb[0].mxu0
  %v2007 = vadd.f32 %v1838, %v2006
  %v2008 = vpop.f32.mrb[0].mxu0
  %v2009 = vpop.f32.mrb[0].mxu0
  %v2010 = vadd.f32 %v1841, %v2009
  %v2011 = vpop.f32.mrb[0].mxu0
  %2012 = vmatprep.mubr.bf16.mxu0 %v921
  %2013 = vmatmul.mubr.bf16.gmra.mrb[0].mxu0 %v920
  %v2014 = vpop.f32.mrb[0].mxu0
  %v2015 = vadd.f32 %v1846, %v2014
  %v2016 = vpop.f32.mrb[0].mxu0
  %v2017 = vpop.f32.mrb[0].mxu0
  %v2018 = vadd.f32 %v1849, %v2017
  %v2019 = vpop.f32.mrb[0].mxu0
  %2020 = vmatprep.mubr.bf16.mxu0 %v930
  %2021 = vmatmul.mubr.bf16.gmra.mrb[0].mxu0 %v929
  %v2022 = vpop.f32.mrb[0].mxu0
  %v2023 = vadd.f32 %v1854, %v2022
  %v2024 = vpop.f32.mrb[0].mxu0
  %v2025 = vpop.f32.mrb[0].mxu0
  %v2026 = vadd.f32 %v1857, %v2025
  %v2027 = vpop.f32.mrb[0].mxu0
  %2028 = vmatprep.mubr.bf16.mxu0 %v939
  %2029 = vmatmul.mubr.bf16.gmra.mrb[0].mxu0 %v938
  %v2030 = vpop.f32.mrb[0].mxu0
  %v2031 = vadd.f32 %v1862, %v2030
  %v2032 = vpop.f32.mrb[0].mxu0
  %v2033 = vpop.f32.mrb[0].mxu0
  %v2034 = vadd.f32 %v1865, %v2033
  %v2035 = vpop.f32.mrb[0].mxu0
  %2036 = vmatprep.mubr.bf16.mxu0 %v948
  %2037 = vmatmul.mubr.bf16.gmra.mrb[0].mxu0 %v947
  %v2038 = vpop.f32.mrb[0].mxu0
  %v2039 = vadd.f32 %v1870, %v2038
  %v2040 = vpop.f32.mrb[0].mxu0
  %v2041 = vpop.f32.mrb[0].mxu0
  %v2042 = vadd.f32 %v1873, %v2041
  %v2043 = vpop.f32.mrb[0].mxu0
  %2044 = vmatprep.mubr.bf16.mxu0 %v957
  %2045 = vmatmul.mubr.bf16.gmra.mrb[0].mxu0 %v956
  %v2046 = vpop.f32.mrb[0].mxu0
  %v2047 = vadd.f32 %v1878, %v2046
  %v2048 = vpop.f32.mrb[0].mxu0
  %v2049 = vpop.f32.mrb[0].mxu0
  %v2050 = vadd.f32 %v1881, %v2049
  %v2051 = vpop.f32.mrb[0].mxu0
  %2052 = vdwg.mxu0
  %2053 = vmatprep.subr.bf16.mxu0 0
  %2054 = vmatpush1.bf16.msra.mxu0 %v1450
  %2055 = vmatprep.subr.bf16.mxu0 0
  %2056 = vmatpush1.bf16.msra.mxu0 %v1451
  %2057 = vmatprep.subr.bf16.mxu0 0
  %2058 = vmatpush1.bf16.msra.mxu0 %v1452
  %2059 = vmatprep.subr.bf16.mxu0 0
  %2060 = vmatpush1.bf16.msra.mxu0 %v1453
  %2061 = vmatprep.subr.bf16.mxu0 0
  %2062 = vmatpush1.bf16.msra.mxu0 %v1454
  %2063 = vmatprep.subr.bf16.mxu0 0
  %2064 = vmatpush1.bf16.msra.mxu0 %v1455
  %2065 = vmatprep.subr.bf16.mxu0 0
  %2066 = vmatpush1.bf16.msra.mxu0 %v1456
  %2067 = vmatprep.subr.bf16.mxu0 0
  %2068 = vmatpush1.bf16.msra.mxu0 %v1457
  %2069 = vmatprep.subr.bf16.mxu0 0
  %2070 = vmatpush1.bf16.msra.mxu0 %v1458
  %2071 = vmatprep.subr.bf16.mxu0 0
  %2072 = vmatpush1.bf16.msra.mxu0 %v1459
  %2073 = vmatprep.subr.bf16.mxu0 0
  %2074 = vmatpush1.bf16.msra.mxu0 %v1460
  %2075 = vmatprep.subr.bf16.mxu0 0
  %2076 = vmatpush1.bf16.msra.mxu0 %v1461
  %2077 = vmatprep.subr.bf16.mxu0 0
  %2078 = vmatpush1.bf16.msra.mxu0 %v1462
  %2079 = vmatprep.subr.bf16.mxu0 0
  %2080 = vmatpush1.bf16.msra.mxu0 %v1463
  %2081 = vmatprep.subr.bf16.mxu0 0
  %2082 = vmatpush1.bf16.msra.mxu0 %v1464
  %2083 = vmatprep.subr.bf16.mxu0 0
  %2084 = vmatpush1.bf16.msra.mxu0 %v1465
  %2085 = vmatprep.mubr.bf16.mxu0 %v815
  %2086 = vmatmul.mubr.bf16.gmra.mrb[0].mxu0 %v814
  %v2087 = vpop.f32.mrb[0].mxu0
  %v2088 = vadd.f32 %v1919, %v2087
  %v2089 = vpop.f32.mrb[0].mxu0
  %v2090 = vpop.f32.mrb[0].mxu0
  %v2091 = vadd.f32 %v1922, %v2090
  %v2092 = vpop.f32.mrb[0].mxu0
  %2093 = vmatprep.mubr.bf16.mxu0 %v824
  %2094 = vmatmul.mubr.bf16.gmra.mrb[0].mxu0 %v823
  %v2095 = vpop.f32.mrb[0].mxu0
  %v2096 = vadd.f32 %v1927, %v2095
  %v2097 = vpop.f32.mrb[0].mxu0
  %v2098 = vpop.f32.mrb[0].mxu0
  %v2099 = vadd.f32 %v1930, %v2098
  %v2100 = vpop.f32.mrb[0].mxu0
  %2101 = vmatprep.mubr.bf16.mxu0 %v833
  %2102 = vmatmul.mubr.bf16.gmra.mrb[0].mxu0 %v832
  %v2103 = vpop.f32.mrb[0].mxu0
  %v2104 = vadd.f32 %v1935, %v2103
  %v2105 = vpop.f32.mrb[0].mxu0
  %v2106 = vpop.f32.mrb[0].mxu0
  %v2107 = vadd.f32 %v1938, %v2106
  %v2108 = vpop.f32.mrb[0].mxu0
  %2109 = vmatprep.mubr.bf16.mxu0 %v842
  %2110 = vmatmul.mubr.bf16.gmra.mrb[0].mxu0 %v841
  %v2111 = vpop.f32.mrb[0].mxu0
  %v2112 = vadd.f32 %v1943, %v2111
  %v2113 = vpop.f32.mrb[0].mxu0
  %v2114 = vpop.f32.mrb[0].mxu0
  %v2115 = vadd.f32 %v1946, %v2114
  %v2116 = vpop.f32.mrb[0].mxu0
  %2117 = vmatprep.mubr.bf16.mxu0 %v851
  %2118 = vmatmul.mubr.bf16.gmra.mrb[0].mxu0 %v850
  %v2119 = vpop.f32.mrb[0].mxu0
  %v2120 = vadd.f32 %v1951, %v2119
  %v2121 = vpop.f32.mrb[0].mxu0
  %v2122 = vpop.f32.mrb[0].mxu0
  %v2123 = vadd.f32 %v1954, %v2122
  %v2124 = vpop.f32.mrb[0].mxu0
  %2125 = vmatprep.mubr.bf16.mxu0 %v860
  %2126 = vmatmul.mubr.bf16.gmra.mrb[0].mxu0 %v859
  %v2127 = vpop.f32.mrb[0].mxu0
  %v2128 = vadd.f32 %v1959, %v2127
  %v2129 = vpop.f32.mrb[0].mxu0
  %v2130 = vpop.f32.mrb[0].mxu0
  %v2131 = vadd.f32 %v1962, %v2130
  %v2132 = vpop.f32.mrb[0].mxu0
  %2133 = vmatprep.mubr.bf16.mxu0 %v869
  %2134 = vmatmul.mubr.bf16.gmra.mrb[0].mxu0 %v868
  %v2135 = vpop.f32.mrb[0].mxu0
  %v2136 = vadd.f32 %v1967, %v2135
  %v2137 = vpop.f32.mrb[0].mxu0
  %v2138 = vpop.f32.mrb[0].mxu0
  %v2139 = vadd.f32 %v1970, %v2138
  %v2140 = vpop.f32.mrb[0].mxu0
  %2141 = vmatprep.mubr.bf16.mxu0 %v878
  %2142 = vmatmul.mubr.bf16.gmra.mrb[0].mxu0 %v877
  %v2143 = vpop.f32.mrb[0].mxu0
  %v2144 = vadd.f32 %v1975, %v2143
  %v2145 = vpop.f32.mrb[0].mxu0
  %v2146 = vpop.f32.mrb[0].mxu0
  %v2147 = vadd.f32 %v1978, %v2146
  %v2148 = vpop.f32.mrb[0].mxu0
  %2149 = vmatprep.mubr.bf16.mxu0 %v887
  %2150 = vmatmul.mubr.bf16.gmra.mrb[0].mxu0 %v886
  %v2151 = vpop.f32.mrb[0].mxu0
  %v2152 = vadd.f32 %v1983, %v2151
  %v2153 = vpop.f32.mrb[0].mxu0
  %v2154 = vpop.f32.mrb[0].mxu0
  %v2155 = vadd.f32 %v1986, %v2154
  %v2156 = vpop.f32.mrb[0].mxu0
  %2157 = vmatprep.mubr.bf16.mxu0 %v896
  %2158 = vmatmul.mubr.bf16.gmra.mrb[0].mxu0 %v895
  %v2159 = vpop.f32.mrb[0].mxu0
  %v2160 = vadd.f32 %v1991, %v2159
  %v2161 = vpop.f32.mrb[0].mxu0
  %v2162 = vpop.f32.mrb[0].mxu0
  %v2163 = vadd.f32 %v1994, %v2162
  %v2164 = vpop.f32.mrb[0].mxu0
  %2165 = vmatprep.mubr.bf16.mxu0 %v905
  %2166 = vmatmul.mubr.bf16.gmra.mrb[0].mxu0 %v904
  %v2167 = vpop.f32.mrb[0].mxu0
  %v2168 = vadd.f32 %v1999, %v2167
  %v2169 = vpop.f32.mrb[0].mxu0
  %v2170 = vpop.f32.mrb[0].mxu0
  %v2171 = vadd.f32 %v2002, %v2170
  %v2172 = vpop.f32.mrb[0].mxu0
  %2173 = vmatprep.mubr.bf16.mxu0 %v914
  %2174 = vmatmul.mubr.bf16.gmra.mrb[0].mxu0 %v913
  %v2175 = vpop.f32.mrb[0].mxu0
  %v2176 = vadd.f32 %v2007, %v2175
  %v2177 = vpop.f32.mrb[0].mxu0
  %v2178 = vpop.f32.mrb[0].mxu0
  %v2179 = vadd.f32 %v2010, %v2178
  %v2180 = vpop.f32.mrb[0].mxu0
  %2181 = vmatprep.mubr.bf16.mxu0 %v923
  %2182 = vmatmul.mubr.bf16.gmra.mrb[0].mxu0 %v922
  %v2183 = vpop.f32.mrb[0].mxu0
  %v2184 = vadd.f32 %v2015, %v2183
  %v2185 = vpop.f32.mrb[0].mxu0
  %v2186 = vpop.f32.mrb[0].mxu0
  %v2187 = vadd.f32 %v2018, %v2186
  %v2188 = vpop.f32.mrb[0].mxu0
  %2189 = vmatprep.mubr.bf16.mxu0 %v932
  %2190 = vmatmul.mubr.bf16.gmra.mrb[0].mxu0 %v931
  %v2191 = vpop.f32.mrb[0].mxu0
  %v2192 = vadd.f32 %v2023, %v2191
  %v2193 = vpop.f32.mrb[0].mxu0
  %v2194 = vpop.f32.mrb[0].mxu0
  %v2195 = vadd.f32 %v2026, %v2194
  %v2196 = vpop.f32.mrb[0].mxu0
  %2197 = vmatprep.mubr.bf16.mxu0 %v941
  %2198 = vmatmul.mubr.bf16.gmra.mrb[0].mxu0 %v940
  %v2199 = vpop.f32.mrb[0].mxu0
  %v2200 = vadd.f32 %v2031, %v2199
  %v2201 = vpop.f32.mrb[0].mxu0
  %v2202 = vpop.f32.mrb[0].mxu0
  %v2203 = vadd.f32 %v2034, %v2202
  %v2204 = vpop.f32.mrb[0].mxu0
  %2205 = vmatprep.mubr.bf16.mxu0 %v950
  %2206 = vmatmul.mubr.bf16.gmra.mrb[0].mxu0 %v949
  %v2207 = vpop.f32.mrb[0].mxu0
  %v2208 = vadd.f32 %v2039, %v2207
  %v2209 = vpop.f32.mrb[0].mxu0
  %v2210 = vpop.f32.mrb[0].mxu0
  %v2211 = vadd.f32 %v2042, %v2210
  %v2212 = vpop.f32.mrb[0].mxu0
  %2213 = vmatprep.mubr.bf16.mxu0 %v959
  %2214 = vmatmul.mubr.bf16.gmra.mrb[0].mxu0 %v958
  %v2215 = vpop.f32.mrb[0].mxu0
  %v2216 = vadd.f32 %v2047, %v2215
  %v2217 = vpop.f32.mrb[0].mxu0
  %v2218 = vpop.f32.mrb[0].mxu0
  %v2219 = vadd.f32 %v2050, %v2218
  %v2220 = vpop.f32.mrb[0].mxu0
  %2221 = vdwg.mxu0
  %2222 = vmatprep.subr.bf16.mxu0 0
  %2223 = vmatpush1.bf16.msra.mxu0 %v1466
  %2224 = vmatprep.subr.bf16.mxu0 0
  %2225 = vmatpush1.bf16.msra.mxu0 %v1467
  %2226 = vmatprep.subr.bf16.mxu0 0
  %2227 = vmatpush1.bf16.msra.mxu0 %v1468
  %2228 = vmatprep.subr.bf16.mxu0 0
  %2229 = vmatpush1.bf16.msra.mxu0 %v1469
  %2230 = vmatprep.subr.bf16.mxu0 0
  %2231 = vmatpush1.bf16.msra.mxu0 %v1470
  %2232 = vmatprep.subr.bf16.mxu0 0
  %2233 = vmatpush1.bf16.msra.mxu0 %v1471
  %2234 = vmatprep.subr.bf16.mxu0 0
  %2235 = vmatpush1.bf16.msra.mxu0 %v1472
  %2236 = vmatprep.subr.bf16.mxu0 0
  %2237 = vmatpush1.bf16.msra.mxu0 %v1473
  %2238 = vmatprep.subr.bf16.mxu0 0
  %2239 = vmatpush1.bf16.msra.mxu0 0
  %2240 = vmatprep.subr.bf16.mxu0 0
  %2241 = vmatpush1.bf16.msra.mxu0 0
  %2242 = vmatprep.subr.bf16.mxu0 0
  %2243 = vmatpush1.bf16.msra.mxu0 0
  %2244 = vmatprep.subr.bf16.mxu0 0
  %2245 = vmatpush1.bf16.msra.mxu0 0
  %2246 = vmatprep.subr.bf16.mxu0 0
  %2247 = vmatpush1.bf16.msra.mxu0 0
  %2248 = vmatprep.subr.bf16.mxu0 0
  %2249 = vmatpush1.bf16.msra.mxu0 0
  %2250 = vmatprep.subr.bf16.mxu0 0
  %2251 = vmatpush1.bf16.msra.mxu0 0
  %2252 = vmatprep.subr.bf16.mxu0 0
  %2253 = vmatpush1.bf16.msra.mxu0 0
  %2254 = vmatprep.mubr.bf16.mxu0 0
  %2255 = vmatmul.mubr.bf16.gmra.mrb[0].mxu0 %v816
  %v2256 = vpop.f32.mrb[0].mxu0
  %v2257 = vadd.f32 %v2088, %v2256
  %v2258 = vpop.f32.mrb[0].mxu0
  %v2259 = vpop.f32.mrb[0].mxu0
  %v2260 = vadd.f32 %v2091, %v2259
  %v2261 = vpop.f32.mrb[0].mxu0
  %2262 = vmatprep.mubr.bf16.mxu0 0
  %2263 = vmatmul.mubr.bf16.gmra.mrb[0].mxu0 %v825
  %v2264 = vpop.f32.mrb[0].mxu0
  %v2265 = vadd.f32 %v2096, %v2264
  %v2266 = vpop.f32.mrb[0].mxu0
  %v2267 = vpop.f32.mrb[0].mxu0
  %v2268 = vadd.f32 %v2099, %v2267
  %v2269 = vpop.f32.mrb[0].mxu0
  %2270 = vmatprep.mubr.bf16.mxu0 0
  %2271 = vmatmul.mubr.bf16.gmra.mrb[0].mxu0 %v834
  %v2272 = vpop.f32.mrb[0].mxu0
  %v2273 = vadd.f32 %v2104, %v2272
  %v2274 = vpop.f32.mrb[0].mxu0
  %v2275 = vpop.f32.mrb[0].mxu0
  %v2276 = vadd.f32 %v2107, %v2275
  %v2277 = vpop.f32.mrb[0].mxu0
  %2278 = vmatprep.mubr.bf16.mxu0 0
  %2279 = vmatmul.mubr.bf16.gmra.mrb[0].mxu0 %v843
  %v2280 = vpop.f32.mrb[0].mxu0
  %v2281 = vadd.f32 %v2112, %v2280
  %v2282 = vpop.f32.mrb[0].mxu0
  %v2283 = vpop.f32.mrb[0].mxu0
  %v2284 = vadd.f32 %v2115, %v2283
  %v2285 = vpop.f32.mrb[0].mxu0
  %2286 = vmatprep.mubr.bf16.mxu0 0
  %2287 = vmatmul.mubr.bf16.gmra.mrb[0].mxu0 %v852
  %v2288 = vpop.f32.mrb[0].mxu0
  %v2289 = vadd.f32 %v2120, %v2288
  %v2290 = vpop.f32.mrb[0].mxu0
  %v2291 = vpop.f32.mrb[0].mxu0
  %v2292 = vadd.f32 %v2123, %v2291
  %v2293 = vpop.f32.mrb[0].mxu0
  %2294 = vmatprep.mubr.bf16.mxu0 0
  %2295 = vmatmul.mubr.bf16.gmra.mrb[0].mxu0 %v861
  %v2296 = vpop.f32.mrb[0].mxu0
  %v2297 = vadd.f32 %v2128, %v2296
  %v2298 = vpop.f32.mrb[0].mxu0
  %v2299 = vpop.f32.mrb[0].mxu0
  %v2300 = vadd.f32 %v2131, %v2299
  %v2301 = vpop.f32.mrb[0].mxu0
  %2302 = vmatprep.mubr.bf16.mxu0 0
  %2303 = vmatmul.mubr.bf16.gmra.mrb[0].mxu0 %v870
  %v2304 = vpop.f32.mrb[0].mxu0
  %v2305 = vadd.f32 %v2136, %v2304
  %v2306 = vpop.f32.mrb[0].mxu0
  %v2307 = vpop.f32.mrb[0].mxu0
  %v2308 = vadd.f32 %v2139, %v2307
  %v2309 = vpop.f32.mrb[0].mxu0
  %2310 = vmatprep.mubr.bf16.mxu0 0
  %2311 = vmatmul.mubr.bf16.gmra.mrb[0].mxu0 %v879
  %v2312 = vpop.f32.mrb[0].mxu0
  %v2313 = vadd.f32 %v2144, %v2312
  %v2314 = vpop.f32.mrb[0].mxu0
  %v2315 = vpop.f32.mrb[0].mxu0
  %v2316 = vadd.f32 %v2147, %v2315
  %v2317 = vpop.f32.mrb[0].mxu0
  %2318 = vmatprep.mubr.bf16.mxu0 0
  %2319 = vmatmul.mubr.bf16.gmra.mrb[0].mxu0 %v888
  %v2320 = vpop.f32.mrb[0].mxu0
  %v2321 = vadd.f32 %v2152, %v2320
  %v2322 = vpop.f32.mrb[0].mxu0
  %v2323 = vpop.f32.mrb[0].mxu0
  %v2324 = vadd.f32 %v2155, %v2323
  %v2325 = vpop.f32.mrb[0].mxu0
  %2326 = vmatprep.mubr.bf16.mxu0 0
  %2327 = vmatmul.mubr.bf16.gmra.mrb[0].mxu0 %v897
  %v2328 = vpop.f32.mrb[0].mxu0
  %v2329 = vadd.f32 %v2160, %v2328
  %v2330 = vpop.f32.mrb[0].mxu0
  %v2331 = vpop.f32.mrb[0].mxu0
  %v2332 = vadd.f32 %v2163, %v2331
  %v2333 = vpop.f32.mrb[0].mxu0
  %2334 = vmatprep.mubr.bf16.mxu0 0
  %2335 = vmatmul.mubr.bf16.gmra.mrb[0].mxu0 %v906
  %v2336 = vpop.f32.mrb[0].mxu0
  %v2337 = vadd.f32 %v2168, %v2336
  %v2338 = vpop.f32.mrb[0].mxu0
  %v2339 = vpop.f32.mrb[0].mxu0
  %v2340 = vadd.f32 %v2171, %v2339
  %v2341 = vpop.f32.mrb[0].mxu0
  %2342 = vmatprep.mubr.bf16.mxu0 0
  %2343 = vmatmul.mubr.bf16.gmra.mrb[0].mxu0 %v915
  %v2344 = vpop.f32.mrb[0].mxu0
  %v2345 = vadd.f32 %v2176, %v2344
  %v2346 = vpop.f32.mrb[0].mxu0
  %v2347 = vpop.f32.mrb[0].mxu0
  %v2348 = vadd.f32 %v2179, %v2347
  %v2349 = vpop.f32.mrb[0].mxu0
  %2350 = vmatprep.mubr.bf16.mxu0 0
  %2351 = vmatmul.mubr.bf16.gmra.mrb[0].mxu0 %v924
  %v2352 = vpop.f32.mrb[0].mxu0
  %v2353 = vadd.f32 %v2184, %v2352
  %v2354 = vpop.f32.mrb[0].mxu0
  %v2355 = vpop.f32.mrb[0].mxu0
  %v2356 = vadd.f32 %v2187, %v2355
  %v2357 = vpop.f32.mrb[0].mxu0
  %2358 = vmatprep.mubr.bf16.mxu0 0
  %2359 = vmatmul.mubr.bf16.gmra.mrb[0].mxu0 %v933
  %v2360 = vpop.f32.mrb[0].mxu0
  %v2361 = vadd.f32 %v2192, %v2360
  %v2362 = vpop.f32.mrb[0].mxu0
  %v2363 = vpop.f32.mrb[0].mxu0
  %v2364 = vadd.f32 %v2195, %v2363
  %v2365 = vpop.f32.mrb[0].mxu0
  %2366 = vmatprep.mubr.bf16.mxu0 0
  %2367 = vmatmul.mubr.bf16.gmra.mrb[0].mxu0 %v942
  %v2368 = vpop.f32.mrb[0].mxu0
  %v2369 = vadd.f32 %v2200, %v2368
  %v2370 = vpop.f32.mrb[0].mxu0
  %v2371 = vpop.f32.mrb[0].mxu0
  %v2372 = vadd.f32 %v2203, %v2371
  %v2373 = vpop.f32.mrb[0].mxu0
  %2374 = vmatprep.mubr.bf16.mxu0 0
  %2375 = vmatmul.mubr.bf16.gmra.mrb[0].mxu0 %v951
  %v2376 = vpop.f32.mrb[0].mxu0
  %v2377 = vadd.f32 %v2208, %v2376
  %v2378 = vpop.f32.mrb[0].mxu0
  %v2379 = vpop.f32.mrb[0].mxu0
  %v2380 = vadd.f32 %v2211, %v2379
  %v2381 = vpop.f32.mrb[0].mxu0
  %2382 = vmatprep.mubr.bf16.mxu0 0
  %2383 = vmatmul.mubr.bf16.gmra.mrb[0].mxu0 %v960
  %v2384 = vpop.f32.mrb[0].mxu0
  %v2385 = vadd.f32 %v2216, %v2384
  %v2386 = vpop.f32.mrb[0].mxu0
  %v2387 = vpop.f32.mrb[0].mxu0
  %v2388 = vadd.f32 %v2219, %v2387
  %v2389 = vpop.f32.mrb[0].mxu0
  %2390 = vdwg.mxu0
  %v2391 = vadd.f32 %v2257, %v2260
  %v2392 = vadd.f32 %v2391, %v2265
  %v2393 = vadd.f32 %v2392, %v2268
  %v2394 = vadd.f32 %v2393, %v2273
  %v2395 = vadd.f32 %v2394, %v2276
  %v2396 = vadd.f32 %v2395, %v2281
  %v2397 = vadd.f32 %v2396, %v2284
  %v2398 = vadd.f32 %v2397, %v2289
  %v2399 = vadd.f32 %v2398, %v2292
  %v2400 = vadd.f32 %v2399, %v2297
  %v2401 = vadd.f32 %v2400, %v2300
  %v2402 = vadd.f32 %v2401, %v2305
  %v2403 = vadd.f32 %v2402, %v2308
  %v2404 = vadd.f32 %v2403, %v2313
  %v2405 = vadd.f32 %v2404, %v2316
  %v2406 = vadd.f32 %v2405, %v2321
  %v2407 = vadd.f32 %v2406, %v2324
  %v2408 = vadd.f32 %v2407, %v2329
  %v2409 = vadd.f32 %v2408, %v2332
  %v2410 = vadd.f32 %v2409, %v2337
  %v2411 = vadd.f32 %v2410, %v2340
  %v2412 = vadd.f32 %v2411, %v2345
  %v2413 = vadd.f32 %v2412, %v2348
  %v2414 = vadd.f32 %v2413, %v2353
  %v2415 = vadd.f32 %v2414, %v2356
  %v2416 = vadd.f32 %v2415, %v2361
  %v2417 = vadd.f32 %v2416, %v2364
  %v2418 = vadd.f32 %v2417, %v2369
  %v2419 = vadd.f32 %v2418, %v2372
  %v2420 = vadd.f32 %v2419, %v2377
  %v2421 = vadd.f32 %v2420, %v2380
  %v2422 = vadd.f32 %v2421, %v2385
  %v2423 = vadd.f32 %v2422, %v2388
  %v2424 = vrot.slane %v2423, 4
  %v2425 = vadd.f32 %v2423, %v2424
  %v2426 = vrot.slane %v2425, 2
  %v2427 = vadd.f32 %v2425, %v2426
  %v2428 = vrot.slane %v2427, 1
  %v2429 = vadd.f32 %v2427, %v2428
  %v2430 = vmul.f32 %v2429, 0.004132231
  %v2431 = vmul.f32 %v2257, %v2257
  %v2432 = vmul.f32 %v2260, %v2260
  %v2433 = vmul.f32 %v2265, %v2265
  %v2434 = vmul.f32 %v2268, %v2268
  %v2435 = vmul.f32 %v2273, %v2273
  %v2436 = vmul.f32 %v2276, %v2276
  %v2437 = vmul.f32 %v2281, %v2281
  %v2438 = vmul.f32 %v2284, %v2284
  %v2439 = vmul.f32 %v2289, %v2289
  %v2440 = vmul.f32 %v2292, %v2292
  %v2441 = vmul.f32 %v2297, %v2297
  %v2442 = vmul.f32 %v2300, %v2300
  %v2443 = vmul.f32 %v2305, %v2305
  %v2444 = vmul.f32 %v2308, %v2308
  %v2445 = vmul.f32 %v2313, %v2313
  %v2446 = vmul.f32 %v2316, %v2316
  %v2447 = vmul.f32 %v2321, %v2321
  %v2448 = vmul.f32 %v2324, %v2324
  %v2449 = vmul.f32 %v2329, %v2329
  %v2450 = vmul.f32 %v2332, %v2332
  %v2451 = vmul.f32 %v2337, %v2337
  %v2452 = vmul.f32 %v2340, %v2340
  %v2453 = vmul.f32 %v2345, %v2345
  %v2454 = vmul.f32 %v2348, %v2348
  %v2455 = vmul.f32 %v2353, %v2353
  %v2456 = vmul.f32 %v2356, %v2356
  %v2457 = vmul.f32 %v2361, %v2361
  %v2458 = vmul.f32 %v2364, %v2364
  %v2459 = vmul.f32 %v2369, %v2369
  %v2460 = vmul.f32 %v2372, %v2372
  %v2461 = vmul.f32 %v2377, %v2377
  %v2462 = vmul.f32 %v2380, %v2380
  %v2463 = vmul.f32 %v2385, %v2385
  %v2464 = vmul.f32 %v2388, %v2388
  %v2465 = vadd.f32 %v2431, %v2432
  %v2466 = vadd.f32 %v2465, %v2433
  %v2467 = vadd.f32 %v2466, %v2434
  %v2468 = vadd.f32 %v2467, %v2435
  %v2469 = vadd.f32 %v2468, %v2436
  %v2470 = vadd.f32 %v2469, %v2437
  %v2471 = vadd.f32 %v2470, %v2438
  %v2472 = vadd.f32 %v2471, %v2439
  %v2473 = vadd.f32 %v2472, %v2440
  %v2474 = vadd.f32 %v2473, %v2441
  %v2475 = vadd.f32 %v2474, %v2442
  %v2476 = vadd.f32 %v2475, %v2443
  %v2477 = vadd.f32 %v2476, %v2444
  %v2478 = vadd.f32 %v2477, %v2445
  %v2479 = vadd.f32 %v2478, %v2446
  %v2480 = vadd.f32 %v2479, %v2447
  %v2481 = vadd.f32 %v2480, %v2448
  %v2482 = vadd.f32 %v2481, %v2449
  %v2483 = vadd.f32 %v2482, %v2450
  %v2484 = vadd.f32 %v2483, %v2451
  %v2485 = vadd.f32 %v2484, %v2452
  %v2486 = vadd.f32 %v2485, %v2453
  %v2487 = vadd.f32 %v2486, %v2454
  %v2488 = vadd.f32 %v2487, %v2455
  %v2489 = vadd.f32 %v2488, %v2456
  %v2490 = vadd.f32 %v2489, %v2457
  %v2491 = vadd.f32 %v2490, %v2458
  %v2492 = vadd.f32 %v2491, %v2459
  %v2493 = vadd.f32 %v2492, %v2460
  %v2494 = vadd.f32 %v2493, %v2461
  %v2495 = vadd.f32 %v2494, %v2462
  %v2496 = vadd.f32 %v2495, %v2463
  %v2497 = vadd.f32 %v2496, %v2464
  %v2498 = vrot.slane %v2497, 4
  %v2499 = vadd.f32 %v2497, %v2498
  %v2500 = vrot.slane %v2499, 2
  %v2501 = vadd.f32 %v2499, %v2500
  %v2502 = vrot.slane %v2501, 1
  %v2503 = vadd.f32 %v2501, %v2502
  %v2504 = vmul.f32 %v2503, 0.004132231
  %v2505 = vmul.f32 %v2430, %v2430
  %v2506 = vsub.f32 %v2504, %v2505
  %v2507 = vmax.f32 %v2506, 0.0
  %v2508 = vadd.f32 %v2507, 1e-05
  %v2509 = vrsqrt.pop %v2508
  %v2510 = vld [vmem:[%s2] sm:$0x1]
  %v2511 = vmul.f32 %v2509, %v2510
  %v2512 = vld [vmem:[%s3] sm:$0x1]
  %v2513 = vmul.f32 %v2430, %v2511
  %v2514 = vsub.f32 %v2512, %v2513
  %v2515 = vlaneseq
  %v2516 = vshrl.u32 %v2515, 7
  %v2517 = vsub.s32 0, %v2516
  %v2518 = vrot.slane %v2511, %v2517
  %v2519 = vmul.f32 %v2257, %v2518
  %v2520 = vmul.f32 %v2260, %v2518
  %v2521 = vmul.f32 %v2265, %v2518
  %v2522 = vmul.f32 %v2268, %v2518
  %v2523 = vmul.f32 %v2273, %v2518
  %v2524 = vmul.f32 %v2276, %v2518
  %v2525 = vmul.f32 %v2281, %v2518
  %v2526 = vmul.f32 %v2284, %v2518
  %v2527 = vmul.f32 %v2289, %v2518
  %v2528 = vmul.f32 %v2292, %v2518
  %v2529 = vmul.f32 %v2297, %v2518
  %v2530 = vmul.f32 %v2300, %v2518
  %v2531 = vmul.f32 %v2305, %v2518
  %v2532 = vmul.f32 %v2308, %v2518
  %v2533 = vmul.f32 %v2313, %v2518
  %v2534 = vmul.f32 %v2316, %v2518
  %v2535 = vmul.f32 %v2321, %v2518
  %v2536 = vmul.f32 %v2324, %v2518
  %v2537 = vmul.f32 %v2329, %v2518
  %v2538 = vmul.f32 %v2332, %v2518
  %v2539 = vmul.f32 %v2337, %v2518
  %v2540 = vmul.f32 %v2340, %v2518
  %v2541 = vmul.f32 %v2345, %v2518
  %v2542 = vmul.f32 %v2348, %v2518
  %v2543 = vmul.f32 %v2353, %v2518
  %v2544 = vmul.f32 %v2356, %v2518
  %v2545 = vmul.f32 %v2361, %v2518
  %v2546 = vmul.f32 %v2364, %v2518
  %v2548 = vlaneseq
  %v2549 = vshrl.u32 %v2548, 7
  %v2550 = vsub.s32 0, %v2549
  %v2551 = vrot.slane %v2514, %v2550
  %v2553 = vadd.f32 %v2519, %v2551
  %v2554 = vadd.f32 %v2520, %v2551
  %v2555 = vadd.f32 %v2521, %v2551
  %v2556 = vadd.f32 %v2522, %v2551
  %v2557 = vadd.f32 %v2523, %v2551
  %v2558 = vadd.f32 %v2524, %v2551
  %v2559 = vadd.f32 %v2525, %v2551
  %v2560 = vadd.f32 %v2526, %v2551
  %v2561 = vadd.f32 %v2527, %v2551
  %v2562 = vadd.f32 %v2528, %v2551
  %v2563 = vadd.f32 %v2529, %v2551
  %v2564 = vadd.f32 %v2530, %v2551
  %v2565 = vadd.f32 %v2531, %v2551
  %v2566 = vadd.f32 %v2532, %v2551
  %v2567 = vadd.f32 %v2533, %v2551
  %v2568 = vadd.f32 %v2534, %v2551
  %v2569 = vadd.f32 %v2535, %v2551
  %v2570 = vadd.f32 %v2536, %v2551
  %v2571 = vadd.f32 %v2537, %v2551
  %v2572 = vadd.f32 %v2538, %v2551
  %v2573 = vadd.f32 %v2539, %v2551
  %v2574 = vadd.f32 %v2540, %v2551
  %v2575 = vadd.f32 %v2541, %v2551
  %v2576 = vadd.f32 %v2542, %v2551
  %v2577 = vadd.f32 %v2543, %v2551
  %v2578 = vadd.f32 %v2544, %v2551
  %v2579 = vadd.f32 %v2545, %v2551
  %v2580 = vadd.f32 %v2546, %v2551
  %v2581 = vmax.f32 %v2553, 0.0
  %v2582 = vmax.f32 %v2554, 0.0
  %v2583 = vmax.f32 %v2555, 0.0
  %v2584 = vmax.f32 %v2556, 0.0
  %v2585 = vmax.f32 %v2557, 0.0
  %v2586 = vmax.f32 %v2558, 0.0
  %v2587 = vmax.f32 %v2559, 0.0
  %v2588 = vmax.f32 %v2560, 0.0
  %v2589 = vmax.f32 %v2561, 0.0
  %v2590 = vmax.f32 %v2562, 0.0
  %v2591 = vmax.f32 %v2563, 0.0
  %v2592 = vmax.f32 %v2564, 0.0
  %v2593 = vmax.f32 %v2565, 0.0
  %v2594 = vmax.f32 %v2566, 0.0
  %v2595 = vmax.f32 %v2567, 0.0
  %v2596 = vmax.f32 %v2568, 0.0
  %v2597 = vmax.f32 %v2569, 0.0
  %v2598 = vmax.f32 %v2570, 0.0
  %v2599 = vmax.f32 %v2571, 0.0
  %v2600 = vmax.f32 %v2572, 0.0
  %v2601 = vmax.f32 %v2573, 0.0
  %v2602 = vmax.f32 %v2574, 0.0
  %v2603 = vmax.f32 %v2575, 0.0
  %v2604 = vmax.f32 %v2576, 0.0
  %v2605 = vmax.f32 %v2577, 0.0
  %v2606 = vmax.f32 %v2578, 0.0
  %v2607 = vmax.f32 %v2579, 0.0
  %v2608 = vmax.f32 %v2580, 0.0
  %v2609 = vmax.f32 %v2581, %v2588
  %v2610 = vmax.f32 %v2582, %v2589
  %v2611 = vmax.f32 %v2583, %v2590
  %v2612 = vmax.f32 %v2584, %v2591
  %v2613 = vmax.f32 %v2585, %v2592
  %v2614 = vmax.f32 %v2586, %v2593
  %v2615 = vmax.f32 %v2587, %v2594
  %v2616 = vmax.f32 %v2595, %v2602
  %v2617 = vmax.f32 %v2596, %v2603
  %v2618 = vmax.f32 %v2597, %v2604
  %v2619 = vmax.f32 %v2598, %v2605
  %v2620 = vmax.f32 %v2599, %v2606
  %v2621 = vmax.f32 %v2600, %v2607
  %v2622 = vmax.f32 %v2601, %v2608
  %v2623 = vmax.f32 %v2609, %v2616
  %v2624 = vmax.f32 %v2610, %v2617
  %v2625 = vmax.f32 %v2611, %v2618
  %v2626 = vmax.f32 %v2612, %v2619
  %v2627 = vmax.f32 %v2613, %v2620
  %v2628 = vmax.f32 %v2614, %v2621
  %v2629 = vmax.f32 %v2615, %v2622
  %2630 = vst [vmem:[%s4] sm:$0xff] %v2623
  %2631 = vst [vmem:[%s4 + $0x8] sm:$0xff] %v2624
  %2632 = vst [vmem:[%s4 + $0x10] sm:$0xff] %v2625
  %2633 = vst [vmem:[%s4 + $0x18] sm:$0xff] %v2626
  %2634 = vst [vmem:[%s4 + $0x20] sm:$0xff] %v2627
  %2635 = vst [vmem:[%s4 + $0x28] sm:$0xff] %v2628
  %2636 = vst [vmem:[%s4 + $0x30] sm:$0xff] %v2629
  // Predicated region
  $region18: #{cnn_forward.4} parent=0 // pred_check
    _
  $region19: #{cnn_forward.4} parent=0 // pred_check_branch
    %2638 = sbr.rel (0) target = $region21
  $region20: #{cnn_forward.4} parent=0 // pred_region
    _
  $region21: #{cnn_forward.4} parent=0 // pred_fallthru
    _
  // Predicated region
  $region22: #{cnn_forward.4} parent=0 // pred_check
    _
  $region23: #{cnn_forward.4} parent=0 // pred_check_branch
    %2640 = sbr.rel (0) target = $region25
  $region24: #{cnn_forward.4} parent=0 // pred_region
    _
  $region25: #{cnn_forward.4} parent=0 // pred_fallthru
    _

// kernel: cnn_forward.5
$region0: #{cnn_forward.5}
  #allocation0 [shape = 'u32[]', space=smem, size = 0x4, offset = 0x4, fixed_abs, tag = 'smem constant byte address 0x4 - core index']
  #allocation1 [shape = 'u32[144,128]{1,0:T(1,128)}', space=vmem, size = 0x12000, scoped, tag = 'internal scratch']
  %s0 = inlined_call_operand.vmem [shape: f32[2,1250], index: 0, kind: input, shape index: {}]
  %s1 = inlined_call_operand.vmem [shape: bf16[1250,1024], index: 1, kind: input, shape index: {}]
  %s2 = inlined_call_operand.vmem [shape: f32[1,1024], index: 2, kind: input, shape index: {}]
  %s3 = inlined_call_operand.vmem [shape: bf16[1024,128], index: 3, kind: input, shape index: {}]
  %s4 = inlined_call_operand.vmem [shape: f32[1,128], index: 4, kind: input, shape index: {}]
  %s5 = inlined_call_operand.vmem [shape: bf16[128,128], index: 5, kind: input, shape index: {}]
  %s6 = inlined_call_operand.vmem [shape: f32[1,128], index: 6, kind: input, shape index: {}]
  %s7 = inlined_call_operand.hbm [shape: f32[2,128], index: 7, kind: output, shape index: {}]
  %s8 = sld [smem:[#allocation0]]
  $region38: #{cnn_forward.5} parent=0
    _
  %s10 = ssub.s32 1, %s8
  %s11 = scalar_select 0, %s10, %s8
  $region1: #{cnn_forward.5} parent=0
    #allocation2 [shape = 'u8[1024]{0}', space=vmem, size = 0x400, scoped, tag = 'output window, operand 0, single buffered']
    #allocation3 [shape = 's32[1]{0}', space=sflag, size = 0x4, scoped, tag = 'scoped memory for cnn_forward.5']
    %12 = vsyncpa [#allocation3], 0
    // Predicated region
    $region2: #{cnn_forward.5} parent=1 // pred_check
      _
    $region3: #{cnn_forward.5} parent=1 // pred_check_branch
      %14 = sbr.rel (0) target = $region5
    $region4: #{cnn_forward.5} parent=1 // pred_region
      _
    $region5: #{cnn_forward.5} parent=1 // pred_fallthru
      _
    // Predicated region
    $region6: #{cnn_forward.5} parent=1 // pred_check
      _
    $region7: #{cnn_forward.5} parent=1 // pred_check_branch
      %16 = sbr.rel (0) target = $region9
    $region8: #{cnn_forward.5} parent=1 // pred_region
      _
    $region9: #{cnn_forward.5} parent=1 // pred_fallthru
      _
    // Predicated region
    $region10: #{cnn_forward.5} parent=1 // pred_check
      _
    $region11: #{cnn_forward.5} parent=1 // pred_check_branch
      %18 = sbr.rel (0) target = $region13
    $region12: #{cnn_forward.5} parent=1 // pred_region
      _
    $region13: #{cnn_forward.5} parent=1 // pred_fallthru
      _
    // Predicated region
    $region14: #{cnn_forward.5} parent=1 // pred_check
      _
    $region15: #{cnn_forward.5} parent=1 // pred_check_branch
      %20 = sbr.rel (0) target = $region17
    $region16: #{cnn_forward.5} parent=1 // pred_region
      _
    $region17: #{cnn_forward.5} parent=1 // pred_fallthru
      _
    // Predicated region
    $region18: #{cnn_forward.5} parent=1 // pred_check
      _
    $region19: #{cnn_forward.5} parent=1 // pred_check_branch
      %22 = sbr.rel (0) target = $region21
    $region20: #{cnn_forward.5} parent=1 // pred_region
      _
    $region21: #{cnn_forward.5} parent=1 // pred_fallthru
      _
    // Predicated region
    $region22: #{cnn_forward.5} parent=1 // pred_check
      _
    $region23: #{cnn_forward.5} parent=1 // pred_check_branch
      %24 = sbr.rel (0) target = $region25
    $region24: #{cnn_forward.5} parent=1 // pred_region
      _
    $region25: #{cnn_forward.5} parent=1 // pred_fallthru
      _
    // Predicated region
    $region26: #{cnn_forward.5} parent=1 // pred_check
      _
    $region27: #{cnn_forward.5} parent=1 // pred_check_branch
      %26 = sbr.rel (0) target = $region29
    $region28: #{cnn_forward.5} parent=1 // pred_region
      _
    $region29: #{cnn_forward.5} parent=1 // pred_fallthru
      _
    %v28 = vld [vmem:[%s0] sm:$0xff]
    %v29 = vld [vmem:[%s0 + $0x8] sm:$0xff]
    %v30 = vld [vmem:[%s0 + $0x10] sm:$0xf]
    %v34 = vcombine.high %v28, %v28
    %v36 = vunpack.c.l.s4 1983009808
    %v37 = vunpack.c.0.s8 %v36
    %v38 = vlaneseq
    %v39 = vshrl.u32 %v38, 7
    %v40 = vsub.s32 %v37, %v39
    %v41 = vrot.slane %v28, %v40
    %v43 = vunpack.c.l.s4 1983009808
    %v44 = vunpack.c.0.s8 %v43
    %v45 = vlaneseq
    %v46 = vshrl.u32 %v45, 7
    %v47 = vsub.s32 %v44, %v46
    %v48 = vrot.slane %v34, %v47
    %v49 = vcombine.high %v41, %v41
    %v50 = vcombine.high %v48, %v48
    %v51 = vcombine.high %v29, %v29
    %v53 = vunpack.c.l.s4 1983009808
    %v54 = vunpack.c.0.s8 %v53
    %v55 = vlaneseq
    %v56 = vshrl.u32 %v55, 7
    %v57 = vsub.s32 %v54, %v56
    %v58 = vrot.slane %v29, %v57
    %v60 = vunpack.c.l.s4 1983009808
    %v61 = vunpack.c.0.s8 %v60
    %v62 = vlaneseq
    %v63 = vshrl.u32 %v62, 7
    %v64 = vsub.s32 %v61, %v63
    %v65 = vrot.slane %v51, %v64
    %v66 = vcombine.high %v58, %v58
    %v67 = vcombine.high %v65, %v65
    %v69 = vunpack.c.l.s4 1983009808
    %v70 = vunpack.c.0.s8 %v69
    %v71 = vlaneseq
    %v72 = vshrl.u32 %v71, 7
    %v73 = vsub.s32 %v70, %v72
    %v74 = vrot.slane %v30, %v73
    %v75 = vcombine.high %v74, %v74
    %v86 = vpack.c.bf16 %v41, %v41
    %v87 = vpack.c.bf16 %v49, %v49
    %v88 = vpack.c.bf16 %v48, %v48
    %v89 = vpack.c.bf16 %v50, %v50
    %v90 = vpack.c.bf16 %v58, %v58
    %v91 = vpack.c.bf16 %v66, %v66
    %v92 = vpack.c.bf16 %v65, %v65
    %v93 = vpack.c.bf16 %v67, %v67
    %v94 = vpack.c.bf16 %v74, %v74
    %v95 = vpack.c.bf16 %v75, %v75
    %v96 = vld [vmem:[%s1] sm:$0xff]
    %v97 = vld [vmem:[%s1 + $0x8] sm:$0xff]
    %v98 = vld [vmem:[%s1 + $0x10] sm:$0xff]
    %v99 = vld [vmem:[%s1 + $0x18] sm:$0xff]
    %v100 = vld [vmem:[%s1 + $0x20] sm:$0xff]
    %v101 = vld [vmem:[%s1 + $0x28] sm:$0xff]
    %v102 = vld [vmem:[%s1 + $0x30] sm:$0xff]
    %v103 = vld [vmem:[%s1 + $0x38] sm:$0xff]
    %v104 = vld [vmem:[%s1 + $0x40] sm:$0xff]
    %v105 = vld [vmem:[%s1 + $0x48] sm:$0xff]
    %v106 = vld [vmem:[%s1 + $0x50] sm:$0xff]
    %v107 = vld [vmem:[%s1 + $0x58] sm:$0xff]
    %v108 = vld [vmem:[%s1 + $0x60] sm:$0xff]
    %v109 = vld [vmem:[%s1 + $0x68] sm:$0xff]
    %v110 = vld [vmem:[%s1 + $0x70] sm:$0xff]
    %v111 = vld [vmem:[%s1 + $0x78] sm:$0xff]
    %v112 = vld [vmem:[%s1 + $0x80] sm:$0xff]
    %v113 = vld [vmem:[%s1 + $0x88] sm:$0xff]
    %v114 = vld [vmem:[%s1 + $0x90] sm:$0xff]
    %v115 = vld [vmem:[%s1 + $0x98] sm:$0xff]
    %v116 = vld [vmem:[%s1 + $0xa0] sm:$0xff]
    %v117 = vld [vmem:[%s1 + $0xa8] sm:$0xff]
    %v118 = vld [vmem:[%s1 + $0xb0] sm:$0xff]
    %v119 = vld [vmem:[%s1 + $0xb8] sm:$0xff]
    %v120 = vld [vmem:[%s1 + $0xc0] sm:$0xff]
    %v121 = vld [vmem:[%s1 + $0xc8] sm:$0xff]
    %v122 = vld [vmem:[%s1 + $0xd0] sm:$0xff]
    %v123 = vld [vmem:[%s1 + $0xd8] sm:$0xff]
    %v124 = vld [vmem:[%s1 + $0xe0] sm:$0xff]
    %v125 = vld [vmem:[%s1 + $0xe8] sm:$0xff]
    %v126 = vld [vmem:[%s1 + $0xf0] sm:$0xff]
    %v127 = vld [vmem:[%s1 + $0xf8] sm:$0xff]
    %v128 = vld [vmem:[%s1 + $0x100] sm:$0xff]
    %v129 = vld [vmem:[%s1 + $0x108] sm:$0xff]
    %v130 = vld [vmem:[%s1 + $0x110] sm:$0xff]
    %v131 = vld [vmem:[%s1 + $0x118] sm:$0xff]
    %v132 = vld [vmem:[%s1 + $0x120] sm:$0xff]
    %v133 = vld [vmem:[%s1 + $0x128] sm:$0xff]
    %v134 = vld [vmem:[%s1 + $0x130] sm:$0xff]
    %v135 = vld [vmem:[%s1 + $0x138] sm:$0xff]
    %v136 = vld [vmem:[%s1 + $0x140] sm:$0xff]
    %v137 = vld [vmem:[%s1 + $0x148] sm:$0xff]
    %v138 = vld [vmem:[%s1 + $0x150] sm:$0xff]
    %v139 = vld [vmem:[%s1 + $0x158] sm:$0xff]
    %v140 = vld [vmem:[%s1 + $0x160] sm:$0xff]
    %v141 = vld [vmem:[%s1 + $0x168] sm:$0xff]
    %v142 = vld [vmem:[%s1 + $0x170] sm:$0xff]
    %v143 = vld [vmem:[%s1 + $0x178] sm:$0xff]
    %v144 = vld [vmem:[%s1 + $0x180] sm:$0xff]
    %v145 = vld [vmem:[%s1 + $0x188] sm:$0xff]
    %v146 = vld [vmem:[%s1 + $0x190] sm:$0xff]
    %v147 = vld [vmem:[%s1 + $0x198] sm:$0xff]
    %v148 = vld [vmem:[%s1 + $0x1a0] sm:$0xff]
    %v149 = vld [vmem:[%s1 + $0x1a8] sm:$0xff]
    %v150 = vld [vmem:[%s1 + $0x1b0] sm:$0xff]
    %v151 = vld [vmem:[%s1 + $0x1b8] sm:$0xff]
    %v152 = vld [vmem:[%s1 + $0x1c0] sm:$0xff]
    %v153 = vld [vmem:[%s1 + $0x1c8] sm:$0xff]
    %v154 = vld [vmem:[%s1 + $0x1d0] sm:$0xff]
    %v155 = vld [vmem:[%s1 + $0x1d8] sm:$0xff]
    %v156 = vld [vmem:[%s1 + $0x1e0] sm:$0xff]
    %v157 = vld [vmem:[%s1 + $0x1e8] sm:$0xff]
    %v158 = vld [vmem:[%s1 + $0x1f0] sm:$0xff]
    %v159 = vld [vmem:[%s1 + $0x1f8] sm:$0xff]
    %v160 = vld [vmem:[%s1 + $0x200] sm:$0xff]
    %v161 = vld [vmem:[%s1 + $0x208] sm:$0xff]
    %v162 = vld [vmem:[%s1 + $0x210] sm:$0xff]
    %v163 = vld [vmem:[%s1 + $0x218] sm:$0xff]
    %v164 = vld [vmem:[%s1 + $0x220] sm:$0xff]
    %v165 = vld [vmem:[%s1 + $0x228] sm:$0xff]
    %v166 = vld [vmem:[%s1 + $0x230] sm:$0xff]
    %v167 = vld [vmem:[%s1 + $0x238] sm:$0xff]
    %v168 = vld [vmem:[%s1 + $0x240] sm:$0xff]
    %v169 = vld [vmem:[%s1 + $0x248] sm:$0xff]
    %v170 = vld [vmem:[%s1 + $0x250] sm:$0xff]
    %v171 = vld [vmem:[%s1 + $0x258] sm:$0xff]
    %v172 = vld [vmem:[%s1 + $0x260] sm:$0xff]
    %v173 = vld [vmem:[%s1 + $0x268] sm:$0xff]
    %v174 = vld [vmem:[%s1 + $0x270] sm:$0xff]
    %v175 = vld [vmem:[%s1 + $0x278] sm:$0xff]
    %v176 = vld [vmem:[%s1 + $0x280] sm:$0xff]
    %v177 = vld [vmem:[%s1 + $0x288] sm:$0xff]
    %v178 = vld [vmem:[%s1 + $0x290] sm:$0xff]
    %v179 = vld [vmem:[%s1 + $0x298] sm:$0xff]
    %v180 = vld [vmem:[%s1 + $0x2a0] sm:$0xff]
    %v181 = vld [vmem:[%s1 + $0x2a8] sm:$0xff]
    %v182 = vld [vmem:[%s1 + $0x2b0] sm:$0xff]
    %v183 = vld [vmem:[%s1 + $0x2b8] sm:$0xff]
    %v184 = vld [vmem:[%s1 + $0x2c0] sm:$0xff]
    %v185 = vld [vmem:[%s1 + $0x2c8] sm:$0xff]
    %v186 = vld [vmem:[%s1 + $0x2d0] sm:$0xff]
    %v187 = vld [vmem:[%s1 + $0x2d8] sm:$0xff]
    %v188 = vld [vmem:[%s1 + $0x2e0] sm:$0xff]
    %v189 = vld [vmem:[%s1 + $0x2e8] sm:$0xff]
    %v190 = vld [vmem:[%s1 + $0x2f0] sm:$0xff]
    %v191 = vld [vmem:[%s1 + $0x2f8] sm:$0xff]
    %v192 = vld [vmem:[%s1 + $0x300] sm:$0xff]
    %v193 = vld [vmem:[%s1 + $0x308] sm:$0xff]
    %v194 = vld [vmem:[%s1 + $0x310] sm:$0xff]
    %v195 = vld [vmem:[%s1 + $0x318] sm:$0xff]
    %v196 = vld [vmem:[%s1 + $0x320] sm:$0xff]
    %v197 = vld [vmem:[%s1 + $0x328] sm:$0xff]
    %v198 = vld [vmem:[%s1 + $0x330] sm:$0xff]
    %v199 = vld [vmem:[%s1 + $0x338] sm:$0xff]
    %v200 = vld [vmem:[%s1 + $0x340] sm:$0xff]
    %v201 = vld [vmem:[%s1 + $0x348] sm:$0xff]
    %v202 = vld [vmem:[%s1 + $0x350] sm:$0xff]
    %v203 = vld [vmem:[%s1 + $0x358] sm:$0xff]
    %v204 = vld [vmem:[%s1 + $0x360] sm:$0xff]
    %v205 = vld [vmem:[%s1 + $0x368] sm:$0xff]
    %v206 = vld [vmem:[%s1 + $0x370] sm:$0xff]
    %v207 = vld [vmem:[%s1 + $0x378] sm:$0xff]
    %v208 = vld [vmem:[%s1 + $0x380] sm:$0xff]
    %v209 = vld [vmem:[%s1 + $0x388] sm:$0xff]
    %v210 = vld [vmem:[%s1 + $0x390] sm:$0xff]
    %v211 = vld [vmem:[%s1 + $0x398] sm:$0xff]
    %v212 = vld [vmem:[%s1 + $0x3a0] sm:$0xff]
    %v213 = vld [vmem:[%s1 + $0x3a8] sm:$0xff]
    %v214 = vld [vmem:[%s1 + $0x3b0] sm:$0xff]
    %v215 = vld [vmem:[%s1 + $0x3b8] sm:$0xff]
    %v216 = vld [vmem:[%s1 + $0x3c0] sm:$0xff]
    %v217 = vld [vmem:[%s1 + $0x3c8] sm:$0xff]
    %v218 = vld [vmem:[%s1 + $0x3d0] sm:$0xff]
    %v219 = vld [vmem:[%s1 + $0x3d8] sm:$0xff]
    %v220 = vld [vmem:[%s1 + $0x3e0] sm:$0xff]
    %v221 = vld [vmem:[%s1 + $0x3e8] sm:$0xff]
    %v222 = vld [vmem:[%s1 + $0x3f0] sm:$0xff]
    %v223 = vld [vmem:[%s1 + $0x3f8] sm:$0xff]
    %v224 = vld [vmem:[%s1 + $0x400] sm:$0xff]
    %v225 = vld [vmem:[%s1 + $0x408] sm:$0xff]
    %v226 = vld [vmem:[%s1 + $0x410] sm:$0xff]
    %v227 = vld [vmem:[%s1 + $0x418] sm:$0xff]
    %v228 = vld [vmem:[%s1 + $0x420] sm:$0xff]
    %v229 = vld [vmem:[%s1 + $0x428] sm:$0xff]
    %v230 = vld [vmem:[%s1 + $0x430] sm:$0xff]
    %v231 = vld [vmem:[%s1 + $0x438] sm:$0xff]
    %v232 = vld [vmem:[%s1 + $0x440] sm:$0xff]
    %v233 = vld [vmem:[%s1 + $0x448] sm:$0xff]
    %v234 = vld [vmem:[%s1 + $0x450] sm:$0xff]
    %v235 = vld [vmem:[%s1 + $0x458] sm:$0xff]
    %v236 = vld [vmem:[%s1 + $0x460] sm:$0xff]
    %v237 = vld [vmem:[%s1 + $0x468] sm:$0xff]
    %v238 = vld [vmem:[%s1 + $0x470] sm:$0xff]
    %v239 = vld [vmem:[%s1 + $0x478] sm:$0xff]
    %v240 = vld [vmem:[%s1 + $0x480] sm:$0xff]
    %v241 = vld [vmem:[%s1 + $0x488] sm:$0xff]
    %v242 = vld [vmem:[%s1 + $0x490] sm:$0xff]
    %v243 = vld [vmem:[%s1 + $0x498] sm:$0xff]
    %v244 = vld [vmem:[%s1 + $0x4a0] sm:$0xff]
    %v245 = vld [vmem:[%s1 + $0x4a8] sm:$0xff]
    %v246 = vld [vmem:[%s1 + $0x4b0] sm:$0xff]
    %v247 = vld [vmem:[%s1 + $0x4b8] sm:$0xff]
    %v248 = vld [vmem:[%s1 + $0x4c0] sm:$0xff]
    %v249 = vld [vmem:[%s1 + $0x4c8] sm:$0xff]
    %v250 = vld [vmem:[%s1 + $0x4d0] sm:$0xff]
    %v251 = vld [vmem:[%s1 + $0x4d8] sm:$0xff]
    %v252 = vld [vmem:[%s1 + $0x4e0] sm:$0xff]
    %v253 = vld [vmem:[%s1 + $0x4e8] sm:$0xff]
    %v254 = vld [vmem:[%s1 + $0x4f0] sm:$0xff]
    %v255 = vld [vmem:[%s1 + $0x4f8] sm:$0xff]
    %v256 = vld [vmem:[%s1 + $0x500] sm:$0xff]
    %v257 = vld [vmem:[%s1 + $0x508] sm:$0xff]
    %v258 = vld [vmem:[%s1 + $0x510] sm:$0xff]
    %v259 = vld [vmem:[%s1 + $0x518] sm:$0xff]
    %v260 = vld [vmem:[%s1 + $0x520] sm:$0xff]
    %v261 = vld [vmem:[%s1 + $0x528] sm:$0xff]
    %v262 = vld [vmem:[%s1 + $0x530] sm:$0xff]
    %v263 = vld [vmem:[%s1 + $0x538] sm:$0xff]
    %v264 = vld [vmem:[%s1 + $0x540] sm:$0xff]
    %v265 = vld [vmem:[%s1 + $0x548] sm:$0xff]
    %v266 = vld [vmem:[%s1 + $0x550] sm:$0xff]
    %v267 = vld [vmem:[%s1 + $0x558] sm:$0xff]
    %v268 = vld [vmem:[%s1 + $0x560] sm:$0xff]
    %v269 = vld [vmem:[%s1 + $0x568] sm:$0xff]
    %v270 = vld [vmem:[%s1 + $0x570] sm:$0xff]
    %v271 = vld [vmem:[%s1 + $0x578] sm:$0xff]
    %v272 = vld [vmem:[%s1 + $0x580] sm:$0xff]
    %v273 = vld [vmem:[%s1 + $0x588] sm:$0xff]
    %v274 = vld [vmem:[%s1 + $0x590] sm:$0xff]
    %v275 = vld [vmem:[%s1 + $0x598] sm:$0xff]
    %v276 = vld [vmem:[%s1 + $0x5a0] sm:$0xff]
    %v277 = vld [vmem:[%s1 + $0x5a8] sm:$0xff]
    %v278 = vld [vmem:[%s1 + $0x5b0] sm:$0xff]
    %v279 = vld [vmem:[%s1 + $0x5b8] sm:$0xff]
    %v280 = vld [vmem:[%s1 + $0x5c0] sm:$0xff]
    %v281 = vld [vmem:[%s1 + $0x5c8] sm:$0xff]
    %v282 = vld [vmem:[%s1 + $0x5d0] sm:$0xff]
    %v283 = vld [vmem:[%s1 + $0x5d8] sm:$0xff]
    %v284 = vld [vmem:[%s1 + $0x5e0] sm:$0xff]
    %v285 = vld [vmem:[%s1 + $0x5e8] sm:$0xff]
    %v286 = vld [vmem:[%s1 + $0x5f0] sm:$0xff]
    %v287 = vld [vmem:[%s1 + $0x5f8] sm:$0xff]
    %v288 = vld [vmem:[%s1 + $0x600] sm:$0xff]
    %v289 = vld [vmem:[%s1 + $0x608] sm:$0xff]
    %v290 = vld [vmem:[%s1 + $0x610] sm:$0xff]
    %v291 = vld [vmem:[%s1 + $0x618] sm:$0xff]
    %v292 = vld [vmem:[%s1 + $0x620] sm:$0xff]
    %v293 = vld [vmem:[%s1 + $0x628] sm:$0xff]
    %v294 = vld [vmem:[%s1 + $0x630] sm:$0xff]
    %v295 = vld [vmem:[%s1 + $0x638] sm:$0xff]
    %v296 = vld [vmem:[%s1 + $0x640] sm:$0xff]
    %v297 = vld [vmem:[%s1 + $0x648] sm:$0xff]
    %v298 = vld [vmem:[%s1 + $0x650] sm:$0xff]
    %v299 = vld [vmem:[%s1 + $0x658] sm:$0xff]
    %v300 = vld [vmem:[%s1 + $0x660] sm:$0xff]
    %v301 = vld [vmem:[%s1 + $0x668] sm:$0xff]
    %v302 = vld [vmem:[%s1 + $0x670] sm:$0xff]
    %v303 = vld [vmem:[%s1 + $0x678] sm:$0xff]
    %v304 = vld [vmem:[%s1 + $0x680] sm:$0xff]
    %v305 = vld [vmem:[%s1 + $0x688] sm:$0xff]
    %v306 = vld [vmem:[%s1 + $0x690] sm:$0xff]
    %v307 = vld [vmem:[%s1 + $0x698] sm:$0xff]
    %v308 = vld [vmem:[%s1 + $0x6a0] sm:$0xff]
    %v309 = vld [vmem:[%s1 + $0x6a8] sm:$0xff]
    %v310 = vld [vmem:[%s1 + $0x6b0] sm:$0xff]
    %v311 = vld [vmem:[%s1 + $0x6b8] sm:$0xff]
    %v312 = vld [vmem:[%s1 + $0x6c0] sm:$0xff]
    %v313 = vld [vmem:[%s1 + $0x6c8] sm:$0xff]
    %v314 = vld [vmem:[%s1 + $0x6d0] sm:$0xff]
    %v315 = vld [vmem:[%s1 + $0x6d8] sm:$0xff]
    %v316 = vld [vmem:[%s1 + $0x6e0] sm:$0xff]
    %v317 = vld [vmem:[%s1 + $0x6e8] sm:$0xff]
    %v318 = vld [vmem:[%s1 + $0x6f0] sm:$0xff]
    %v319 = vld [vmem:[%s1 + $0x6f8] sm:$0xff]
    %v320 = vld [vmem:[%s1 + $0x700] sm:$0xff]
    %v321 = vld [vmem:[%s1 + $0x708] sm:$0xff]
    %v322 = vld [vmem:[%s1 + $0x710] sm:$0xff]
    %v323 = vld [vmem:[%s1 + $0x718] sm:$0xff]
    %v324 = vld [vmem:[%s1 + $0x720] sm:$0xff]
    %v325 = vld [vmem:[%s1 + $0x728] sm:$0xff]
    %v326 = vld [vmem:[%s1 + $0x730] sm:$0xff]
    %v327 = vld [vmem:[%s1 + $0x738] sm:$0xff]
    %v328 = vld [vmem:[%s1 + $0x740] sm:$0xff]
    %v329 = vld [vmem:[%s1 + $0x748] sm:$0xff]
    %v330 = vld [vmem:[%s1 + $0x750] sm:$0xff]
    %v331 = vld [vmem:[%s1 + $0x758] sm:$0xff]
    %v332 = vld [vmem:[%s1 + $0x760] sm:$0xff]
    %v333 = vld [vmem:[%s1 + $0x768] sm:$0xff]
    %v334 = vld [vmem:[%s1 + $0x770] sm:$0xff]
    %v335 = vld [vmem:[%s1 + $0x778] sm:$0xff]
    %v336 = vld [vmem:[%s1 + $0x780] sm:$0xff]
    %v337 = vld [vmem:[%s1 + $0x788] sm:$0xff]
    %v338 = vld [vmem:[%s1 + $0x790] sm:$0xff]
    %v339 = vld [vmem:[%s1 + $0x798] sm:$0xff]
    %v340 = vld [vmem:[%s1 + $0x7a0] sm:$0xff]
    %v341 = vld [vmem:[%s1 + $0x7a8] sm:$0xff]
    %v342 = vld [vmem:[%s1 + $0x7b0] sm:$0xff]
    %v343 = vld [vmem:[%s1 + $0x7b8] sm:$0xff]
    %v344 = vld [vmem:[%s1 + $0x7c0] sm:$0xff]
    %v345 = vld [vmem:[%s1 + $0x7c8] sm:$0xff]
    %v346 = vld [vmem:[%s1 + $0x7d0] sm:$0xff]
    %v347 = vld [vmem:[%s1 + $0x7d8] sm:$0xff]
    %v348 = vld [vmem:[%s1 + $0x7e0] sm:$0xff]
    %v349 = vld [vmem:[%s1 + $0x7e8] sm:$0xff]
    %v350 = vld [vmem:[%s1 + $0x7f0] sm:$0xff]
    %v351 = vld [vmem:[%s1 + $0x7f8] sm:$0xff]
    %v352 = vld [vmem:[%s1 + $0x800] sm:$0xff]
    %v353 = vld [vmem:[%s1 + $0x808] sm:$0xff]
    %v354 = vld [vmem:[%s1 + $0x810] sm:$0xff]
    %v355 = vld [vmem:[%s1 + $0x818] sm:$0xff]
    %v356 = vld [vmem:[%s1 + $0x820] sm:$0xff]
    %v357 = vld [vmem:[%s1 + $0x828] sm:$0xff]
    %v358 = vld [vmem:[%s1 + $0x830] sm:$0xff]
    %v359 = vld [vmem:[%s1 + $0x838] sm:$0xff]
    %v360 = vld [vmem:[%s1 + $0x840] sm:$0xff]
    %v361 = vld [vmem:[%s1 + $0x848] sm:$0xff]
    %v362 = vld [vmem:[%s1 + $0x850] sm:$0xff]
    %v363 = vld [vmem:[%s1 + $0x858] sm:$0xff]
    %v364 = vld [vmem:[%s1 + $0x860] sm:$0xff]
    %v365 = vld [vmem:[%s1 + $0x868] sm:$0xff]
    %v366 = vld [vmem:[%s1 + $0x870] sm:$0xff]
    %v367 = vld [vmem:[%s1 + $0x878] sm:$0xff]
    %v368 = vld [vmem:[%s1 + $0x880] sm:$0xff]
    %v369 = vld [vmem:[%s1 + $0x888] sm:$0xff]
    %v370 = vld [vmem:[%s1 + $0x890] sm:$0xff]
    %v371 = vld [vmem:[%s1 + $0x898] sm:$0xff]
    %v372 = vld [vmem:[%s1 + $0x8a0] sm:$0xff]
    %v373 = vld [vmem:[%s1 + $0x8a8] sm:$0xff]
    %v374 = vld [vmem:[%s1 + $0x8b0] sm:$0xff]
    %v375 = vld [vmem:[%s1 + $0x8b8] sm:$0xff]
    %v376 = vld [vmem:[%s1 + $0x8c0] sm:$0xff]
    %v377 = vld [vmem:[%s1 + $0x8c8] sm:$0xff]
    %v378 = vld [vmem:[%s1 + $0x8d0] sm:$0xff]
    %v379 = vld [vmem:[%s1 + $0x8d8] sm:$0xff]
    %v380 = vld [vmem:[%s1 + $0x8e0] sm:$0xff]
    %v381 = vld [vmem:[%s1 + $0x8e8] sm:$0xff]
    %v382 = vld [vmem:[%s1 + $0x8f0] sm:$0xff]
    %v383 = vld [vmem:[%s1 + $0x8f8] sm:$0xff]
    %v384 = vld [vmem:[%s1 + $0x900] sm:$0xff]
    %v385 = vld [vmem:[%s1 + $0x908] sm:$0xff]
    %v386 = vld [vmem:[%s1 + $0x910] sm:$0xff]
    %v387 = vld [vmem:[%s1 + $0x918] sm:$0xff]
    %v388 = vld [vmem:[%s1 + $0x920] sm:$0xff]
    %v389 = vld [vmem:[%s1 + $0x928] sm:$0xff]
    %v390 = vld [vmem:[%s1 + $0x930] sm:$0xff]
    %v391 = vld [vmem:[%s1 + $0x938] sm:$0xff]
    %v392 = vld [vmem:[%s1 + $0x940] sm:$0xff]
    %v393 = vld [vmem:[%s1 + $0x948] sm:$0xff]
    %v394 = vld [vmem:[%s1 + $0x950] sm:$0xff]
    %v395 = vld [vmem:[%s1 + $0x958] sm:$0xff]
    %v396 = vld [vmem:[%s1 + $0x960] sm:$0xff]
    %v397 = vld [vmem:[%s1 + $0x968] sm:$0xff]
    %v398 = vld [vmem:[%s1 + $0x970] sm:$0xff]
    %v399 = vld [vmem:[%s1 + $0x978] sm:$0xff]
    %v400 = vld [vmem:[%s1 + $0x980] sm:$0xff]
    %v401 = vld [vmem:[%s1 + $0x988] sm:$0xff]
    %v402 = vld [vmem:[%s1 + $0x990] sm:$0xff]
    %v403 = vld [vmem:[%s1 + $0x998] sm:$0xff]
    %v404 = vld [vmem:[%s1 + $0x9a0] sm:$0xff]
    %v405 = vld [vmem:[%s1 + $0x9a8] sm:$0xff]
    %v406 = vld [vmem:[%s1 + $0x9b0] sm:$0xff]
    %v407 = vld [vmem:[%s1 + $0x9b8] sm:$0xff]
    %v408 = vld [vmem:[%s1 + $0x9c0] sm:$0xff]
    %v409 = vld [vmem:[%s1 + $0x9c8] sm:$0xff]
    %v410 = vld [vmem:[%s1 + $0x9d0] sm:$0xff]
    %v411 = vld [vmem:[%s1 + $0x9d8] sm:$0xff]
    %v412 = vld [vmem:[%s1 + $0x9e0] sm:$0xff]
    %v413 = vld [vmem:[%s1 + $0x9e8] sm:$0xff]
    %v414 = vld [vmem:[%s1 + $0x9f0] sm:$0xff]
    %v415 = vld [vmem:[%s1 + $0x9f8] sm:$0xff]
    %v416 = vld [vmem:[%s1 + $0xa00] sm:$0xff]
    %v417 = vld [vmem:[%s1 + $0xa08] sm:$0xff]
    %v418 = vld [vmem:[%s1 + $0xa10] sm:$0xff]
    %v419 = vld [vmem:[%s1 + $0xa18] sm:$0xff]
    %v420 = vld [vmem:[%s1 + $0xa20] sm:$0xff]
    %v421 = vld [vmem:[%s1 + $0xa28] sm:$0xff]
    %v422 = vld [vmem:[%s1 + $0xa30] sm:$0xff]
    %v423 = vld [vmem:[%s1 + $0xa38] sm:$0xff]
    %v424 = vld [vmem:[%s1 + $0xa40] sm:$0xff]
    %v425 = vld [vmem:[%s1 + $0xa48] sm:$0xff]
    %v426 = vld [vmem:[%s1 + $0xa50] sm:$0xff]
    %v427 = vld [vmem:[%s1 + $0xa58] sm:$0xff]
    %v428 = vld [vmem:[%s1 + $0xa60] sm:$0xff]
    %v429 = vld [vmem:[%s1 + $0xa68] sm:$0xff]
    %v430 = vld [vmem:[%s1 + $0xa70] sm:$0xff]
    %v431 = vld [vmem:[%s1 + $0xa78] sm:$0xff]
    %v432 = vld [vmem:[%s1 + $0xa80] sm:$0xff]
    %v433 = vld [vmem:[%s1 + $0xa88] sm:$0xff]
    %v434 = vld [vmem:[%s1 + $0xa90] sm:$0xff]
    %v435 = vld [vmem:[%s1 + $0xa98] sm:$0xff]
    %v436 = vld [vmem:[%s1 + $0xaa0] sm:$0xff]
    %v437 = vld [vmem:[%s1 + $0xaa8] sm:$0xff]
    %v438 = vld [vmem:[%s1 + $0xab0] sm:$0xff]
    %v439 = vld [vmem:[%s1 + $0xab8] sm:$0xff]
    %v440 = vld [vmem:[%s1 + $0xac0] sm:$0xff]
    %v441 = vld [vmem:[%s1 + $0xac8] sm:$0xff]
    %v442 = vld [vmem:[%s1 + $0xad0] sm:$0xff]
    %v443 = vld [vmem:[%s1 + $0xad8] sm:$0xff]
    %v444 = vld [vmem:[%s1 + $0xae0] sm:$0xff]
    %v445 = vld [vmem:[%s1 + $0xae8] sm:$0xff]
    %v446 = vld [vmem:[%s1 + $0xaf0] sm:$0xff]
    %v447 = vld [vmem:[%s1 + $0xaf8] sm:$0xff]
    %v448 = vld [vmem:[%s1 + $0xb00] sm:$0xff]
    %v449 = vld [vmem:[%s1 + $0xb08] sm:$0xff]
    %v450 = vld [vmem:[%s1 + $0xb10] sm:$0xff]
    %v451 = vld [vmem:[%s1 + $0xb18] sm:$0xff]
    %v452 = vld [vmem:[%s1 + $0xb20] sm:$0xff]
    %v453 = vld [vmem:[%s1 + $0xb28] sm:$0xff]
    %v454 = vld [vmem:[%s1 + $0xb30] sm:$0xff]
    %v455 = vld [vmem:[%s1 + $0xb38] sm:$0xff]
    %v456 = vld [vmem:[%s1 + $0xb40] sm:$0xff]
    %v457 = vld [vmem:[%s1 + $0xb48] sm:$0xff]
    %v458 = vld [vmem:[%s1 + $0xb50] sm:$0xff]
    %v459 = vld [vmem:[%s1 + $0xb58] sm:$0xff]
    %v460 = vld [vmem:[%s1 + $0xb60] sm:$0xff]
    %v461 = vld [vmem:[%s1 + $0xb68] sm:$0xff]
    %v462 = vld [vmem:[%s1 + $0xb70] sm:$0xff]
    %v463 = vld [vmem:[%s1 + $0xb78] sm:$0xff]
    %v464 = vld [vmem:[%s1 + $0xb80] sm:$0xff]
    %v465 = vld [vmem:[%s1 + $0xb88] sm:$0xff]
    %v466 = vld [vmem:[%s1 + $0xb90] sm:$0xff]
    %v467 = vld [vmem:[%s1 + $0xb98] sm:$0xff]
    %v468 = vld [vmem:[%s1 + $0xba0] sm:$0xff]
    %v469 = vld [vmem:[%s1 + $0xba8] sm:$0xff]
    %v470 = vld [vmem:[%s1 + $0xbb0] sm:$0xff]
    %v471 = vld [vmem:[%s1 + $0xbb8] sm:$0xff]
    %v472 = vld [vmem:[%s1 + $0xbc0] sm:$0xff]
    %v473 = vld [vmem:[%s1 + $0xbc8] sm:$0xff]
    %v474 = vld [vmem:[%s1 + $0xbd0] sm:$0xff]
    %v475 = vld [vmem:[%s1 + $0xbd8] sm:$0xff]
    %v476 = vld [vmem:[%s1 + $0xbe0] sm:$0xff]
    %v477 = vld [vmem:[%s1 + $0xbe8] sm:$0xff]
    %v478 = vld [vmem:[%s1 + $0xbf0] sm:$0xff]
    %v479 = vld [vmem:[%s1 + $0xbf8] sm:$0xff]
    %v480 = vld [vmem:[%s1 + $0xc00] sm:$0xff]
    %v481 = vld [vmem:[%s1 + $0xc08] sm:$0xff]
    %v482 = vld [vmem:[%s1 + $0xc10] sm:$0xff]
    %v483 = vld [vmem:[%s1 + $0xc18] sm:$0xff]
    %v484 = vld [vmem:[%s1 + $0xc20] sm:$0xff]
    %v485 = vld [vmem:[%s1 + $0xc28] sm:$0xff]
    %v486 = vld [vmem:[%s1 + $0xc30] sm:$0xff]
    %v487 = vld [vmem:[%s1 + $0xc38] sm:$0xff]
    %v488 = vld [vmem:[%s1 + $0xc40] sm:$0xff]
    %v489 = vld [vmem:[%s1 + $0xc48] sm:$0xff]
    %v490 = vld [vmem:[%s1 + $0xc50] sm:$0xff]
    %v491 = vld [vmem:[%s1 + $0xc58] sm:$0xff]
    %v492 = vld [vmem:[%s1 + $0xc60] sm:$0xff]
    %v493 = vld [vmem:[%s1 + $0xc68] sm:$0xff]
    %v494 = vld [vmem:[%s1 + $0xc70] sm:$0xff]
    %v495 = vld [vmem:[%s1 + $0xc78] sm:$0xff]
    %v496 = vld [vmem:[%s1 + $0xc80] sm:$0xff]
    %v497 = vld [vmem:[%s1 + $0xc88] sm:$0xff]
    %v498 = vld [vmem:[%s1 + $0xc90] sm:$0xff]
    %v499 = vld [vmem:[%s1 + $0xc98] sm:$0xff]
    %v500 = vld [vmem:[%s1 + $0xca0] sm:$0xff]
    %v501 = vld [vmem:[%s1 + $0xca8] sm:$0xff]
    %v502 = vld [vmem:[%s1 + $0xcb0] sm:$0xff]
    %v503 = vld [vmem:[%s1 + $0xcb8] sm:$0xff]
    %v504 = vld [vmem:[%s1 + $0xcc0] sm:$0xff]
    %v505 = vld [vmem:[%s1 + $0xcc8] sm:$0xff]
    %v506 = vld [vmem:[%s1 + $0xcd0] sm:$0xff]
    %v507 = vld [vmem:[%s1 + $0xcd8] sm:$0xff]
    %v508 = vld [vmem:[%s1 + $0xce0] sm:$0xff]
    %v509 = vld [vmem:[%s1 + $0xce8] sm:$0xff]
    %v510 = vld [vmem:[%s1 + $0xcf0] sm:$0xff]
    %v511 = vld [vmem:[%s1 + $0xcf8] sm:$0xff]
    %v512 = vld [vmem:[%s1 + $0xd00] sm:$0xff]
    %v513 = vld [vmem:[%s1 + $0xd08] sm:$0xff]
    %v514 = vld [vmem:[%s1 + $0xd10] sm:$0xff]
    %v515 = vld [vmem:[%s1 + $0xd18] sm:$0xff]
    %v516 = vld [vmem:[%s1 + $0xd20] sm:$0xff]
    %v517 = vld [vmem:[%s1 + $0xd28] sm:$0xff]
    %v518 = vld [vmem:[%s1 + $0xd30] sm:$0xff]
    %v519 = vld [vmem:[%s1 + $0xd38] sm:$0xff]
    %v520 = vld [vmem:[%s1 + $0xd40] sm:$0xff]
    %v521 = vld [vmem:[%s1 + $0xd48] sm:$0xff]
    %v522 = vld [vmem:[%s1 + $0xd50] sm:$0xff]
    %v523 = vld [vmem:[%s1 + $0xd58] sm:$0xff]
    %v524 = vld [vmem:[%s1 + $0xd60] sm:$0xff]
    %v525 = vld [vmem:[%s1 + $0xd68] sm:$0xff]
    %v526 = vld [vmem:[%s1 + $0xd70] sm:$0xff]
    %v527 = vld [vmem:[%s1 + $0xd78] sm:$0xff]
    %v528 = vld [vmem:[%s1 + $0xd80] sm:$0xff]
    %v529 = vld [vmem:[%s1 + $0xd88] sm:$0xff]
    %v530 = vld [vmem:[%s1 + $0xd90] sm:$0xff]
    %v531 = vld [vmem:[%s1 + $0xd98] sm:$0xff]
    %v532 = vld [vmem:[%s1 + $0xda0] sm:$0xff]
    %v533 = vld [vmem:[%s1 + $0xda8] sm:$0xff]
    %v534 = vld [vmem:[%s1 + $0xdb0] sm:$0xff]
    %v535 = vld [vmem:[%s1 + $0xdb8] sm:$0xff]
    %v536 = vld [vmem:[%s1 + $0xdc0] sm:$0xff]
    %v537 = vld [vmem:[%s1 + $0xdc8] sm:$0xff]
    %v538 = vld [vmem:[%s1 + $0xdd0] sm:$0xff]
    %v539 = vld [vmem:[%s1 + $0xdd8] sm:$0xff]
    %v540 = vld [vmem:[%s1 + $0xde0] sm:$0xff]
    %v541 = vld [vmem:[%s1 + $0xde8] sm:$0xff]
    %v542 = vld [vmem:[%s1 + $0xdf0] sm:$0xff]
    %v543 = vld [vmem:[%s1 + $0xdf8] sm:$0xff]
    %v544 = vld [vmem:[%s1 + $0xe00] sm:$0xff]
    %v545 = vld [vmem:[%s1 + $0xe08] sm:$0xff]
    %v546 = vld [vmem:[%s1 + $0xe10] sm:$0xff]
    %v547 = vld [vmem:[%s1 + $0xe18] sm:$0xff]
    %v548 = vld [vmem:[%s1 + $0xe20] sm:$0xff]
    %v549 = vld [vmem:[%s1 + $0xe28] sm:$0xff]
    %v550 = vld [vmem:[%s1 + $0xe30] sm:$0xff]
    %v551 = vld [vmem:[%s1 + $0xe38] sm:$0xff]
    %v552 = vld [vmem:[%s1 + $0xe40] sm:$0xff]
    %v553 = vld [vmem:[%s1 + $0xe48] sm:$0xff]
    %v554 = vld [vmem:[%s1 + $0xe50] sm:$0xff]
    %v555 = vld [vmem:[%s1 + $0xe58] sm:$0xff]
    %v556 = vld [vmem:[%s1 + $0xe60] sm:$0xff]
    %v557 = vld [vmem:[%s1 + $0xe68] sm:$0xff]
    %v558 = vld [vmem:[%s1 + $0xe70] sm:$0xff]
    %v559 = vld [vmem:[%s1 + $0xe78] sm:$0xff]
    %v560 = vld [vmem:[%s1 + $0xe80] sm:$0xff]
    %v561 = vld [vmem:[%s1 + $0xe88] sm:$0xff]
    %v562 = vld [vmem:[%s1 + $0xe90] sm:$0xff]
    %v563 = vld [vmem:[%s1 + $0xe98] sm:$0xff]
    %v564 = vld [vmem:[%s1 + $0xea0] sm:$0xff]
    %v565 = vld [vmem:[%s1 + $0xea8] sm:$0xff]
    %v566 = vld [vmem:[%s1 + $0xeb0] sm:$0xff]
    %v567 = vld [vmem:[%s1 + $0xeb8] sm:$0xff]
    %v568 = vld [vmem:[%s1 + $0xec0] sm:$0xff]
    %v569 = vld [vmem:[%s1 + $0xec8] sm:$0xff]
    %v570 = vld [vmem:[%s1 + $0xed0] sm:$0xff]
    %v571 = vld [vmem:[%s1 + $0xed8] sm:$0xff]
    %v572 = vld [vmem:[%s1 + $0xee0] sm:$0xff]
    %v573 = vld [vmem:[%s1 + $0xee8] sm:$0xff]
    %v574 = vld [vmem:[%s1 + $0xef0] sm:$0xff]
    %v575 = vld [vmem:[%s1 + $0xef8] sm:$0xff]
    %v576 = vld [vmem:[%s1 + $0xf00] sm:$0xff]
    %v577 = vld [vmem:[%s1 + $0xf08] sm:$0xff]
    %v578 = vld [vmem:[%s1 + $0xf10] sm:$0xff]
    %v579 = vld [vmem:[%s1 + $0xf18] sm:$0xff]
    %v580 = vld [vmem:[%s1 + $0xf20] sm:$0xff]
    %v581 = vld [vmem:[%s1 + $0xf28] sm:$0xff]
    %v582 = vld [vmem:[%s1 + $0xf30] sm:$0xff]
    %v583 = vld [vmem:[%s1 + $0xf38] sm:$0xff]
    %v584 = vld [vmem:[%s1 + $0xf40] sm:$0xff]
    %v585 = vld [vmem:[%s1 + $0xf48] sm:$0xff]
    %v586 = vld [vmem:[%s1 + $0xf50] sm:$0xff]
    %v587 = vld [vmem:[%s1 + $0xf58] sm:$0xff]
    %v588 = vld [vmem:[%s1 + $0xf60] sm:$0xff]
    %v589 = vld [vmem:[%s1 + $0xf68] sm:$0xff]
    %v590 = vld [vmem:[%s1 + $0xf70] sm:$0xff]
    %v591 = vld [vmem:[%s1 + $0xf78] sm:$0xff]
    %v592 = vld [vmem:[%s1 + $0xf80] sm:$0xff]
    %v593 = vld [vmem:[%s1 + $0xf88] sm:$0xff]
    %v594 = vld [vmem:[%s1 + $0xf90] sm:$0xff]
    %v595 = vld [vmem:[%s1 + $0xf98] sm:$0xff]
    %v596 = vld [vmem:[%s1 + $0xfa0] sm:$0xff]
    %v597 = vld [vmem:[%s1 + $0xfa8] sm:$0xff]
    %v598 = vld [vmem:[%s1 + $0xfb0] sm:$0xff]
    %v599 = vld [vmem:[%s1 + $0xfb8] sm:$0xff]
    %v600 = vld [vmem:[%s1 + $0xfc0] sm:$0xff]
    %v601 = vld [vmem:[%s1 + $0xfc8] sm:$0xff]
    %v602 = vld [vmem:[%s1 + $0xfd0] sm:$0xff]
    %v603 = vld [vmem:[%s1 + $0xfd8] sm:$0xff]
    %v604 = vld [vmem:[%s1 + $0xfe0] sm:$0xff]
    %v605 = vld [vmem:[%s1 + $0xfe8] sm:$0xff]
    %v606 = vld [vmem:[%s1 + $0xff0] sm:$0xff]
    %v607 = vld [vmem:[%s1 + $0xff8] sm:$0xff]
    %v608 = vld [vmem:[%s1 + $0x1000] sm:$0xff]
    %v609 = vld [vmem:[%s1 + $0x1008] sm:$0xff]
    %v610 = vld [vmem:[%s1 + $0x1010] sm:$0xff]
    %v611 = vld [vmem:[%s1 + $0x1018] sm:$0xff]
    %v612 = vld [vmem:[%s1 + $0x1020] sm:$0xff]
    %v613 = vld [vmem:[%s1 + $0x1028] sm:$0xff]
    %v614 = vld [vmem:[%s1 + $0x1030] sm:$0xff]
    %v615 = vld [vmem:[%s1 + $0x1038] sm:$0xff]
    %v616 = vld [vmem:[%s1 + $0x1040] sm:$0xff]
    %v617 = vld [vmem:[%s1 + $0x1048] sm:$0xff]
    %v618 = vld [vmem:[%s1 + $0x1050] sm:$0xff]
    %v619 = vld [vmem:[%s1 + $0x1058] sm:$0xff]
    %v620 = vld [vmem:[%s1 + $0x1060] sm:$0xff]
    %v621 = vld [vmem:[%s1 + $0x1068] sm:$0xff]
    %v622 = vld [vmem:[%s1 + $0x1070] sm:$0xff]
    %v623 = vld [vmem:[%s1 + $0x1078] sm:$0xff]
    %v624 = vld [vmem:[%s1 + $0x1080] sm:$0xff]
    %v625 = vld [vmem:[%s1 + $0x1088] sm:$0xff]
    %v626 = vld [vmem:[%s1 + $0x1090] sm:$0xff]
    %v627 = vld [vmem:[%s1 + $0x1098] sm:$0xff]
    %v628 = vld [vmem:[%s1 + $0x10a0] sm:$0xff]
    %v629 = vld [vmem:[%s1 + $0x10a8] sm:$0xff]
    %v630 = vld [vmem:[%s1 + $0x10b0] sm:$0xff]
    %v631 = vld [vmem:[%s1 + $0x10b8] sm:$0xff]
    %v632 = vld [vmem:[%s1 + $0x10c0] sm:$0xff]
    %v633 = vld [vmem:[%s1 + $0x10c8] sm:$0xff]
    %v634 = vld [vmem:[%s1 + $0x10d0] sm:$0xff]
    %v635 = vld [vmem:[%s1 + $0x10d8] sm:$0xff]
    %v636 = vld [vmem:[%s1 + $0x10e0] sm:$0xff]
    %v637 = vld [vmem:[%s1 + $0x10e8] sm:$0xff]
    %v638 = vld [vmem:[%s1 + $0x10f0] sm:$0xff]
    %v639 = vld [vmem:[%s1 + $0x10f8] sm:$0xff]
    %v640 = vld [vmem:[%s1 + $0x1100] sm:$0xff]
    %v641 = vld [vmem:[%s1 + $0x1108] sm:$0xff]
    %v642 = vld [vmem:[%s1 + $0x1110] sm:$0xff]
    %v643 = vld [vmem:[%s1 + $0x1118] sm:$0xff]
    %v644 = vld [vmem:[%s1 + $0x1120] sm:$0xff]
    %v645 = vld [vmem:[%s1 + $0x1128] sm:$0xff]
    %v646 = vld [vmem:[%s1 + $0x1130] sm:$0xff]
    %v647 = vld [vmem:[%s1 + $0x1138] sm:$0xff]
    %v648 = vld [vmem:[%s1 + $0x1140] sm:$0xff]
    %v649 = vld [vmem:[%s1 + $0x1148] sm:$0xff]
    %v650 = vld [vmem:[%s1 + $0x1150] sm:$0xff]
    %v651 = vld [vmem:[%s1 + $0x1158] sm:$0xff]
    %v652 = vld [vmem:[%s1 + $0x1160] sm:$0xff]
    %v653 = vld [vmem:[%s1 + $0x1168] sm:$0xff]
    %v654 = vld [vmem:[%s1 + $0x1170] sm:$0xff]
    %v655 = vld [vmem:[%s1 + $0x1178] sm:$0xff]
    %v656 = vld [vmem:[%s1 + $0x1180] sm:$0xff]
    %v657 = vld [vmem:[%s1 + $0x1188] sm:$0xff]
    %v658 = vld [vmem:[%s1 + $0x1190] sm:$0xff]
    %v659 = vld [vmem:[%s1 + $0x1198] sm:$0xff]
    %v660 = vld [vmem:[%s1 + $0x11a0] sm:$0xff]
    %v661 = vld [vmem:[%s1 + $0x11a8] sm:$0xff]
    %v662 = vld [vmem:[%s1 + $0x11b0] sm:$0xff]
    %v663 = vld [vmem:[%s1 + $0x11b8] sm:$0xff]
    %v664 = vld [vmem:[%s1 + $0x11c0] sm:$0xff]
    %v665 = vld [vmem:[%s1 + $0x11c8] sm:$0xff]
    %v666 = vld [vmem:[%s1 + $0x11d0] sm:$0xff]
    %v667 = vld [vmem:[%s1 + $0x11d8] sm:$0xff]
    %v668 = vld [vmem:[%s1 + $0x11e0] sm:$0xff]
    %v669 = vld [vmem:[%s1 + $0x11e8] sm:$0xff]
    %v670 = vld [vmem:[%s1 + $0x11f0] sm:$0xff]
    %v671 = vld [vmem:[%s1 + $0x11f8] sm:$0xff]
    %v672 = vld [vmem:[%s1 + $0x1200] sm:$0xff]
    %v673 = vld [vmem:[%s1 + $0x1208] sm:$0xff]
    %v674 = vld [vmem:[%s1 + $0x1210] sm:$0xff]
    %v675 = vld [vmem:[%s1 + $0x1218] sm:$0xff]
    %v676 = vld [vmem:[%s1 + $0x1220] sm:$0xff]
    %v677 = vld [vmem:[%s1 + $0x1228] sm:$0xff]
    %v678 = vld [vmem:[%s1 + $0x1230] sm:$0xff]
    %v679 = vld [vmem:[%s1 + $0x1238] sm:$0xff]
    %v680 = vld [vmem:[%s1 + $0x1240] sm:$0xff]
    %v681 = vld [vmem:[%s1 + $0x1248] sm:$0xff]
    %v682 = vld [vmem:[%s1 + $0x1250] sm:$0xff]
    %v683 = vld [vmem:[%s1 + $0x1258] sm:$0xff]
    %v684 = vld [vmem:[%s1 + $0x1260] sm:$0xff]
    %v685 = vld [vmem:[%s1 + $0x1268] sm:$0xff]
    %v686 = vld [vmem:[%s1 + $0x1270] sm:$0xff]
    %v687 = vld [vmem:[%s1 + $0x1278] sm:$0xff]
    %v688 = vld [vmem:[%s1 + $0x1280] sm:$0xff]
    %v689 = vld [vmem:[%s1 + $0x1288] sm:$0xff]
    %v690 = vld [vmem:[%s1 + $0x1290] sm:$0xff]
    %v691 = vld [vmem:[%s1 + $0x1298] sm:$0xff]
    %v692 = vld [vmem:[%s1 + $0x12a0] sm:$0xff]
    %v693 = vld [vmem:[%s1 + $0x12a8] sm:$0xff]
    %v694 = vld [vmem:[%s1 + $0x12b0] sm:$0xff]
    %v695 = vld [vmem:[%s1 + $0x12b8] sm:$0xff]
    %v696 = vld [vmem:[%s1 + $0x12c0] sm:$0xff]
    %v697 = vld [vmem:[%s1 + $0x12c8] sm:$0xff]
    %v698 = vld [vmem:[%s1 + $0x12d0] sm:$0xff]
    %v699 = vld [vmem:[%s1 + $0x12d8] sm:$0xff]
    %v700 = vld [vmem:[%s1 + $0x12e0] sm:$0xff]
    %v701 = vld [vmem:[%s1 + $0x12e8] sm:$0xff]
    %v702 = vld [vmem:[%s1 + $0x12f0] sm:$0xff]
    %v703 = vld [vmem:[%s1 + $0x12f8] sm:$0xff]
    %v704 = vld [vmem:[%s1 + $0x1300] sm:$0xff]
    %v705 = vld [vmem:[%s1 + $0x1308] sm:$0xff]
    %v706 = vld [vmem:[%s1 + $0x1310] sm:$0xff]
    %v707 = vld [vmem:[%s1 + $0x1318] sm:$0xff]
    %v708 = vld [vmem:[%s1 + $0x1320] sm:$0xff]
    %v709 = vld [vmem:[%s1 + $0x1328] sm:$0xff]
    %v710 = vld [vmem:[%s1 + $0x1330] sm:$0xff]
    %v711 = vld [vmem:[%s1 + $0x1338] sm:$0xff]
    %v712 = vld [vmem:[%s1 + $0x1340] sm:$0xff]
    %v713 = vld [vmem:[%s1 + $0x1348] sm:$0xff]
    %v714 = vld [vmem:[%s1 + $0x1350] sm:$0xff]
    %v715 = vld [vmem:[%s1 + $0x1358] sm:$0xff]
    %v716 = vld [vmem:[%s1 + $0x1360] sm:$0xff]
    %v717 = vld [vmem:[%s1 + $0x1368] sm:$0xff]
    %v718 = vld [vmem:[%s1 + $0x1370] sm:$0xff]
    %v719 = vld [vmem:[%s1 + $0x1378] sm:$0xff]
    %v720 = vld [vmem:[%s1 + $0x1380] sm:$0x11]
    %v721 = vld [vmem:[%s1 + $0x1388] sm:$0x11]
    %v722 = vld [vmem:[%s1 + $0x1390] sm:$0x11]
    %v723 = vld [vmem:[%s1 + $0x1398] sm:$0x11]
    %v724 = vld [vmem:[%s2] sm:$0xff]
    %v726 = vlaneseq
    %v727 = vshrl.u32 %v726, 7
    %v728 = vsub.s32 0, %v727
    %v729 = vrot.slane %v724, %v728
    %v730 = vlaneseq
    %v731 = vshrl.u32 %v730, 7
    %v732 = vsub.s32 1, %v731
    %v733 = vrot.slane %v724, %v732
    %v734 = vlaneseq
    %v735 = vshrl.u32 %v734, 7
    %v736 = vsub.s32 2, %v735
    %v737 = vrot.slane %v724, %v736
    %v738 = vlaneseq
    %v739 = vshrl.u32 %v738, 7
    %v740 = vsub.s32 3, %v739
    %v741 = vrot.slane %v724, %v740
    %v742 = vlaneseq
    %v743 = vshrl.u32 %v742, 7
    %v744 = vsub.s32 4, %v743
    %v745 = vrot.slane %v724, %v744
    %v746 = vlaneseq
    %v747 = vshrl.u32 %v746, 7
    %v748 = vsub.s32 5, %v747
    %v749 = vrot.slane %v724, %v748
    %v750 = vlaneseq
    %v751 = vshrl.u32 %v750, 7
    %v752 = vsub.s32 6, %v751
    %v753 = vrot.slane %v724, %v752
    %v754 = vlaneseq
    %v755 = vshrl.u32 %v754, 7
    %v756 = vsub.s32 7, %v755
    %v757 = vrot.slane %v724, %v756
    %v1394 = vunpack.c.l.b16 %v96
    %v1395 = vunpack.c.h.b16 %v96
    %v1396 = vunpack.c.l.b16 %v97
    %v1397 = vunpack.c.h.b16 %v97
    %v1398 = vunpack.c.l.b16 %v98
    %v1399 = vunpack.c.h.b16 %v98
    %v1400 = vunpack.c.l.b16 %v99
    %v1401 = vunpack.c.h.b16 %v99
    %v1402 = vunpack.c.l.b16 %v100
    %v1403 = vunpack.c.h.b16 %v100
    %v1404 = vunpack.c.l.b16 %v101
    %v1405 = vunpack.c.h.b16 %v101
    %v1406 = vunpack.c.l.b16 %v102
    %v1407 = vunpack.c.h.b16 %v102
    %v1408 = vunpack.c.l.b16 %v103
    %v1409 = vunpack.c.h.b16 %v103
    %v1410 = vunpack.c.l.b16 %v104
    %v1411 = vunpack.c.h.b16 %v104
    %v1412 = vunpack.c.l.b16 %v105
    %v1413 = vunpack.c.h.b16 %v105
    %v1414 = vunpack.c.l.b16 %v106
    %v1415 = vunpack.c.h.b16 %v106
    %v1416 = vunpack.c.l.b16 %v107
    %v1417 = vunpack.c.h.b16 %v107
    %v1418 = vunpack.c.l.b16 %v108
    %v1419 = vunpack.c.h.b16 %v108
    %v1420 = vunpack.c.l.b16 %v109
    %v1421 = vunpack.c.h.b16 %v109
    %v1422 = vunpack.c.l.b16 %v110
    %v1423 = vunpack.c.h.b16 %v110
    %v1424 = vunpack.c.l.b16 %v111
    %v1425 = vunpack.c.h.b16 %v111
    %v1426 = vunpack.c.l.b16 %v112
    %v1427 = vunpack.c.h.b16 %v112
    %v1428 = vunpack.c.l.b16 %v113
    %v1429 = vunpack.c.h.b16 %v113
    %v1430 = vunpack.c.l.b16 %v114
    %v1431 = vunpack.c.h.b16 %v114
    %v1432 = vunpack.c.l.b16 %v115
    %v1433 = vunpack.c.h.b16 %v115
    %v1434 = vunpack.c.l.b16 %v116
    %v1435 = vunpack.c.h.b16 %v116
    %v1436 = vunpack.c.l.b16 %v117
    %v1437 = vunpack.c.h.b16 %v117
    %v1438 = vunpack.c.l.b16 %v118
    %v1439 = vunpack.c.h.b16 %v118
    %v1440 = vunpack.c.l.b16 %v119
    %v1441 = vunpack.c.h.b16 %v119
    %v1442 = vunpack.c.l.b16 %v120
    %v1443 = vunpack.c.h.b16 %v120
    %v1444 = vunpack.c.l.b16 %v121
    %v1445 = vunpack.c.h.b16 %v121
    %v1446 = vunpack.c.l.b16 %v122
    %v1447 = vunpack.c.h.b16 %v122
    %v1448 = vunpack.c.l.b16 %v123
    %v1449 = vunpack.c.h.b16 %v123
    %v1450 = vunpack.c.l.b16 %v124
    %v1451 = vunpack.c.h.b16 %v124
    %v1452 = vunpack.c.l.b16 %v125
    %v1453 = vunpack.c.h.b16 %v125
    %v1454 = vunpack.c.l.b16 %v126
    %v1455 = vunpack.c.h.b16 %v126
    %v1456 = vunpack.c.l.b16 %v127
    %v1457 = vunpack.c.h.b16 %v127
    %v1458 = vunpack.c.l.b16 %v128
    %v1459 = vunpack.c.h.b16 %v128
    %v1460 = vunpack.c.l.b16 %v129
    %v1461 = vunpack.c.h.b16 %v129
    %v1462 = vunpack.c.l.b16 %v130
    %v1463 = vunpack.c.h.b16 %v130
    %v1464 = vunpack.c.l.b16 %v131
    %v1465 = vunpack.c.h.b16 %v131
    %v1466 = vunpack.c.l.b16 %v132
    %v1467 = vunpack.c.h.b16 %v132
    %v1468 = vunpack.c.l.b16 %v133
    %v1469 = vunpack.c.h.b16 %v133
    %v1470 = vunpack.c.l.b16 %v134
    %v1471 = vunpack.c.h.b16 %v134
    %v1472 = vunpack.c.l.b16 %v135
    %v1473 = vunpack.c.h.b16 %v135
    %v1474 = vunpack.c.l.b16 %v136
    %v1475 = vunpack.c.h.b16 %v136
    %v1476 = vunpack.c.l.b16 %v137
    %v1477 = vunpack.c.h.b16 %v137
    %v1478 = vunpack.c.l.b16 %v138
    %v1479 = vunpack.c.h.b16 %v138
    %v1480 = vunpack.c.l.b16 %v139
    %v1481 = vunpack.c.h.b16 %v139
    %v1482 = vunpack.c.l.b16 %v140
    %v1483 = vunpack.c.h.b16 %v140
    %v1484 = vunpack.c.l.b16 %v141
    %v1485 = vunpack.c.h.b16 %v141
    %v1486 = vunpack.c.l.b16 %v142
    %v1487 = vunpack.c.h.b16 %v142
    %v1488 = vunpack.c.l.b16 %v143
    %v1489 = vunpack.c.h.b16 %v143
    %v1490 = vunpack.c.l.b16 %v144
    %v1491 = vunpack.c.h.b16 %v144
    %v1492 = vunpack.c.l.b16 %v145
    %v1493 = vunpack.c.h.b16 %v145
    %v1494 = vunpack.c.l.b16 %v146
    %v1495 = vunpack.c.h.b16 %v146
    %v1496 = vunpack.c.l.b16 %v147
    %v1497 = vunpack.c.h.b16 %v147
    %v1498 = vunpack.c.l.b16 %v148
    %v1499 = vunpack.c.h.b16 %v148
    %v1500 = vunpack.c.l.b16 %v149
    %v1501 = vunpack.c.h.b16 %v149
    %v1502 = vunpack.c.l.b16 %v150
    %v1503 = vunpack.c.h.b16 %v150
    %v1504 = vunpack.c.l.b16 %v151
    %v1505 = vunpack.c.h.b16 %v151
    %v1506 = vunpack.c.l.b16 %v152
    %v1507 = vunpack.c.h.b16 %v152
    %v1508 = vunpack.c.l.b16 %v153
    %v1509 = vunpack.c.h.b16 %v153
    %v1510 = vunpack.c.l.b16 %v154
    %v1511 = vunpack.c.h.b16 %v154
    %v1512 = vunpack.c.l.b16 %v155
    %v1513 = vunpack.c.h.b16 %v155
    %v1514 = vunpack.c.l.b16 %v156
    %v1515 = vunpack.c.h.b16 %v156
    %v1516 = vunpack.c.l.b16 %v157
    %v1517 = vunpack.c.h.b16 %v157
    %v1518 = vunpack.c.l.b16 %v158
    %v1519 = vunpack.c.h.b16 %v158
    %v1520 = vunpack.c.l.b16 %v159
    %v1521 = vunpack.c.h.b16 %v159
    %v1522 = vunpack.c.l.b16 %v160
    %v1523 = vunpack.c.h.b16 %v160
    %v1524 = vunpack.c.l.b16 %v161
    %v1525 = vunpack.c.h.b16 %v161
    %v1526 = vunpack.c.l.b16 %v162
    %v1527 = vunpack.c.h.b16 %v162
    %v1528 = vunpack.c.l.b16 %v163
    %v1529 = vunpack.c.h.b16 %v163
    %v1530 = vunpack.c.l.b16 %v164
    %v1531 = vunpack.c.h.b16 %v164
    %v1532 = vunpack.c.l.b16 %v165
    %v1533 = vunpack.c.h.b16 %v165
    %v1534 = vunpack.c.l.b16 %v166
    %v1535 = vunpack.c.h.b16 %v166
    %v1536 = vunpack.c.l.b16 %v167
    %v1537 = vunpack.c.h.b16 %v167
    %v1538 = vunpack.c.l.b16 %v168
    %v1539 = vunpack.c.h.b16 %v168
    %v1540 = vunpack.c.l.b16 %v169
    %v1541 = vunpack.c.h.b16 %v169
    %v1542 = vunpack.c.l.b16 %v170
    %v1543 = vunpack.c.h.b16 %v170
    %v1544 = vunpack.c.l.b16 %v171
    %v1545 = vunpack.c.h.b16 %v171
    %v1546 = vunpack.c.l.b16 %v172
    %v1547 = vunpack.c.h.b16 %v172
    %v1548 = vunpack.c.l.b16 %v173
    %v1549 = vunpack.c.h.b16 %v173
    %v1550 = vunpack.c.l.b16 %v174
    %v1551 = vunpack.c.h.b16 %v174
    %v1552 = vunpack.c.l.b16 %v175
    %v1553 = vunpack.c.h.b16 %v175
    %v1554 = vunpack.c.l.b16 %v176
    %v1555 = vunpack.c.h.b16 %v176
    %v1556 = vunpack.c.l.b16 %v177
    %v1557 = vunpack.c.h.b16 %v177
    %v1558 = vunpack.c.l.b16 %v178
    %v1559 = vunpack.c.h.b16 %v178
    %v1560 = vunpack.c.l.b16 %v179
    %v1561 = vunpack.c.h.b16 %v179
    %v1562 = vunpack.c.l.b16 %v180
    %v1563 = vunpack.c.h.b16 %v180
    %v1564 = vunpack.c.l.b16 %v181
    %v1565 = vunpack.c.h.b16 %v181
    %v1566 = vunpack.c.l.b16 %v182
    %v1567 = vunpack.c.h.b16 %v182
    %v1568 = vunpack.c.l.b16 %v183
    %v1569 = vunpack.c.h.b16 %v183
    %v1570 = vunpack.c.l.b16 %v184
    %v1571 = vunpack.c.h.b16 %v184
    %v1572 = vunpack.c.l.b16 %v185
    %v1573 = vunpack.c.h.b16 %v185
    %v1574 = vunpack.c.l.b16 %v186
    %v1575 = vunpack.c.h.b16 %v186
    %v1576 = vunpack.c.l.b16 %v187
    %v1577 = vunpack.c.h.b16 %v187
    %v1578 = vunpack.c.l.b16 %v188
    %v1579 = vunpack.c.h.b16 %v188
    %v1580 = vunpack.c.l.b16 %v189
    %v1581 = vunpack.c.h.b16 %v189
    %v1582 = vunpack.c.l.b16 %v190
    %v1583 = vunpack.c.h.b16 %v190
    %v1584 = vunpack.c.l.b16 %v191
    %v1585 = vunpack.c.h.b16 %v191
    %v1586 = vunpack.c.l.b16 %v192
    %v1587 = vunpack.c.h.b16 %v192
    %v1588 = vunpack.c.l.b16 %v193
    %v1589 = vunpack.c.h.b16 %v193
    %v1590 = vunpack.c.l.b16 %v194
    %v1591 = vunpack.c.h.b16 %v194
    %v1592 = vunpack.c.l.b16 %v195
    %v1593 = vunpack.c.h.b16 %v195
    %v1594 = vunpack.c.l.b16 %v196
    %v1595 = vunpack.c.h.b16 %v196
    %v1596 = vunpack.c.l.b16 %v197
    %v1597 = vunpack.c.h.b16 %v197
    %v1598 = vunpack.c.l.b16 %v198
    %v1599 = vunpack.c.h.b16 %v198
    %v1600 = vunpack.c.l.b16 %v199
    %v1601 = vunpack.c.h.b16 %v199
    %v1602 = vunpack.c.l.b16 %v200
    %v1603 = vunpack.c.h.b16 %v200
    %v1604 = vunpack.c.l.b16 %v201
    %v1605 = vunpack.c.h.b16 %v201
    %v1606 = vunpack.c.l.b16 %v202
    %v1607 = vunpack.c.h.b16 %v202
    %v1608 = vunpack.c.l.b16 %v203
    %v1609 = vunpack.c.h.b16 %v203
    %v1610 = vunpack.c.l.b16 %v204
    %v1611 = vunpack.c.h.b16 %v204
    %v1612 = vunpack.c.l.b16 %v205
    %v1613 = vunpack.c.h.b16 %v205
    %v1614 = vunpack.c.l.b16 %v206
    %v1615 = vunpack.c.h.b16 %v206
    %v1616 = vunpack.c.l.b16 %v207
    %v1617 = vunpack.c.h.b16 %v207
    %v1618 = vunpack.c.l.b16 %v208
    %v1619 = vunpack.c.h.b16 %v208
    %v1620 = vunpack.c.l.b16 %v209
    %v1621 = vunpack.c.h.b16 %v209
    %v1622 = vunpack.c.l.b16 %v210
    %v1623 = vunpack.c.h.b16 %v210
    %v1624 = vunpack.c.l.b16 %v211
    %v1625 = vunpack.c.h.b16 %v211
    %v1626 = vunpack.c.l.b16 %v212
    %v1627 = vunpack.c.h.b16 %v212
    %v1628 = vunpack.c.l.b16 %v213
    %v1629 = vunpack.c.h.b16 %v213
    %v1630 = vunpack.c.l.b16 %v214
    %v1631 = vunpack.c.h.b16 %v214
    %v1632 = vunpack.c.l.b16 %v215
    %v1633 = vunpack.c.h.b16 %v215
    %v1634 = vunpack.c.l.b16 %v216
    %v1635 = vunpack.c.h.b16 %v216
    %v1636 = vunpack.c.l.b16 %v217
    %v1637 = vunpack.c.h.b16 %v217
    %v1638 = vunpack.c.l.b16 %v218
    %v1639 = vunpack.c.h.b16 %v218
    %v1640 = vunpack.c.l.b16 %v219
    %v1641 = vunpack.c.h.b16 %v219
    %v1642 = vunpack.c.l.b16 %v220
    %v1643 = vunpack.c.h.b16 %v220
    %v1644 = vunpack.c.l.b16 %v221
    %v1645 = vunpack.c.h.b16 %v221
    %v1646 = vunpack.c.l.b16 %v222
    %v1647 = vunpack.c.h.b16 %v222
    %v1648 = vunpack.c.l.b16 %v223
    %v1649 = vunpack.c.h.b16 %v223
    %v1650 = vunpack.c.l.b16 %v224
    %v1651 = vunpack.c.h.b16 %v224
    %v1652 = vunpack.c.l.b16 %v225
    %v1653 = vunpack.c.h.b16 %v225
    %v1654 = vunpack.c.l.b16 %v226
    %v1655 = vunpack.c.h.b16 %v226
    %v1656 = vunpack.c.l.b16 %v227
    %v1657 = vunpack.c.h.b16 %v227
    %v1658 = vunpack.c.l.b16 %v228
    %v1659 = vunpack.c.h.b16 %v228
    %v1660 = vunpack.c.l.b16 %v229
    %v1661 = vunpack.c.h.b16 %v229
    %v1662 = vunpack.c.l.b16 %v230
    %v1663 = vunpack.c.h.b16 %v230
    %v1664 = vunpack.c.l.b16 %v231
    %v1665 = vunpack.c.h.b16 %v231
    %v1666 = vunpack.c.l.b16 %v232
    %v1667 = vunpack.c.h.b16 %v232
    %v1668 = vunpack.c.l.b16 %v233
    %v1669 = vunpack.c.h.b16 %v233
    %v1670 = vunpack.c.l.b16 %v234
    %v1671 = vunpack.c.h.b16 %v234
    %v1672 = vunpack.c.l.b16 %v235
    %v1673 = vunpack.c.h.b16 %v235
    %v1674 = vunpack.c.l.b16 %v236
    %v1675 = vunpack.c.h.b16 %v236
    %v1676 = vunpack.c.l.b16 %v237
    %v1677 = vunpack.c.h.b16 %v237
    %v1678 = vunpack.c.l.b16 %v238
    %v1679 = vunpack.c.h.b16 %v238
    %v1680 = vunpack.c.l.b16 %v239
    %v1681 = vunpack.c.h.b16 %v239
    %v1682 = vunpack.c.l.b16 %v240
    %v1683 = vunpack.c.h.b16 %v240
    %v1684 = vunpack.c.l.b16 %v241
    %v1685 = vunpack.c.h.b16 %v241
    %v1686 = vunpack.c.l.b16 %v242
    %v1687 = vunpack.c.h.b16 %v242
    %v1688 = vunpack.c.l.b16 %v243
    %v1689 = vunpack.c.h.b16 %v243
    %v1690 = vunpack.c.l.b16 %v244
    %v1691 = vunpack.c.h.b16 %v244
    %v1692 = vunpack.c.l.b16 %v245
    %v1693 = vunpack.c.h.b16 %v245
    %v1694 = vunpack.c.l.b16 %v246
    %v1695 = vunpack.c.h.b16 %v246
    %v1696 = vunpack.c.l.b16 %v247
    %v1697 = vunpack.c.h.b16 %v247
    %v1698 = vunpack.c.l.b16 %v248
    %v1699 = vunpack.c.h.b16 %v248
    %v1700 = vunpack.c.l.b16 %v249
    %v1701 = vunpack.c.h.b16 %v249
    %v1702 = vunpack.c.l.b16 %v250
    %v1703 = vunpack.c.h.b16 %v250
    %v1704 = vunpack.c.l.b16 %v251
    %v1705 = vunpack.c.h.b16 %v251
    %v1706 = vunpack.c.l.b16 %v252
    %v1707 = vunpack.c.h.b16 %v252
    %v1708 = vunpack.c.l.b16 %v253
    %v1709 = vunpack.c.h.b16 %v253
    %v1710 = vunpack.c.l.b16 %v254
    %v1711 = vunpack.c.h.b16 %v254
    %v1712 = vunpack.c.l.b16 %v255
    %v1713 = vunpack.c.h.b16 %v255
    %v1714 = vunpack.c.l.b16 %v256
    %v1715 = vunpack.c.h.b16 %v256
    %v1716 = vunpack.c.l.b16 %v257
    %v1717 = vunpack.c.h.b16 %v257
    %v1718 = vunpack.c.l.b16 %v258
    %v1719 = vunpack.c.h.b16 %v258
    %v1720 = vunpack.c.l.b16 %v259
    %v1721 = vunpack.c.h.b16 %v259
    %v1722 = vunpack.c.l.b16 %v260
    %v1723 = vunpack.c.h.b16 %v260
    %v1724 = vunpack.c.l.b16 %v261
    %v1725 = vunpack.c.h.b16 %v261
    %v1726 = vunpack.c.l.b16 %v262
    %v1727 = vunpack.c.h.b16 %v262
    %v1728 = vunpack.c.l.b16 %v263
    %v1729 = vunpack.c.h.b16 %v263
    %v1730 = vunpack.c.l.b16 %v264
    %v1731 = vunpack.c.h.b16 %v264
    %v1732 = vunpack.c.l.b16 %v265
    %v1733 = vunpack.c.h.b16 %v265
    %v1734 = vunpack.c.l.b16 %v266
    %v1735 = vunpack.c.h.b16 %v266
    %v1736 = vunpack.c.l.b16 %v267
    %v1737 = vunpack.c.h.b16 %v267
    %v1738 = vunpack.c.l.b16 %v268
    %v1739 = vunpack.c.h.b16 %v268
    %v1740 = vunpack.c.l.b16 %v269
    %v1741 = vunpack.c.h.b16 %v269
    %v1742 = vunpack.c.l.b16 %v270
    %v1743 = vunpack.c.h.b16 %v270
    %v1744 = vunpack.c.l.b16 %v271
    %v1745 = vunpack.c.h.b16 %v271
    %v1746 = vunpack.c.l.b16 %v272
    %v1747 = vunpack.c.h.b16 %v272
    %v1748 = vunpack.c.l.b16 %v273
    %v1749 = vunpack.c.h.b16 %v273
    %v1750 = vunpack.c.l.b16 %v274
    %v1751 = vunpack.c.h.b16 %v274
    %v1752 = vunpack.c.l.b16 %v275
    %v1753 = vunpack.c.h.b16 %v275
    %v1754 = vunpack.c.l.b16 %v276
    %v1755 = vunpack.c.h.b16 %v276
    %v1756 = vunpack.c.l.b16 %v277
    %v1757 = vunpack.c.h.b16 %v277
    %v1758 = vunpack.c.l.b16 %v278
    %v1759 = vunpack.c.h.b16 %v278
    %v1760 = vunpack.c.l.b16 %v279
    %v1761 = vunpack.c.h.b16 %v279
    %v1762 = vunpack.c.l.b16 %v280
    %v1763 = vunpack.c.h.b16 %v280
    %v1764 = vunpack.c.l.b16 %v281
    %v1765 = vunpack.c.h.b16 %v281
    %v1766 = vunpack.c.l.b16 %v282
    %v1767 = vunpack.c.h.b16 %v282
    %v1768 = vunpack.c.l.b16 %v283
    %v1769 = vunpack.c.h.b16 %v283
    %v1770 = vunpack.c.l.b16 %v284
    %v1771 = vunpack.c.h.b16 %v284
    %v1772 = vunpack.c.l.b16 %v285
    %v1773 = vunpack.c.h.b16 %v285
    %v1774 = vunpack.c.l.b16 %v286
    %v1775 = vunpack.c.h.b16 %v286
    %v1776 = vunpack.c.l.b16 %v287
    %v1777 = vunpack.c.h.b16 %v287
    %v1778 = vunpack.c.l.b16 %v288
    %v1779 = vunpack.c.h.b16 %v288
    %v1780 = vunpack.c.l.b16 %v289
    %v1781 = vunpack.c.h.b16 %v289
    %v1782 = vunpack.c.l.b16 %v290
    %v1783 = vunpack.c.h.b16 %v290
    %v1784 = vunpack.c.l.b16 %v291
    %v1785 = vunpack.c.h.b16 %v291
    %v1786 = vunpack.c.l.b16 %v292
    %v1787 = vunpack.c.h.b16 %v292
    %v1788 = vunpack.c.l.b16 %v293
    %v1789 = vunpack.c.h.b16 %v293
    %v1790 = vunpack.c.l.b16 %v294
    %v1791 = vunpack.c.h.b16 %v294
    %v1792 = vunpack.c.l.b16 %v295
    %v1793 = vunpack.c.h.b16 %v295
    %v1794 = vunpack.c.l.b16 %v296
    %v1795 = vunpack.c.h.b16 %v296
    %v1796 = vunpack.c.l.b16 %v297
    %v1797 = vunpack.c.h.b16 %v297
    %v1798 = vunpack.c.l.b16 %v298
    %v1799 = vunpack.c.h.b16 %v298
    %v1800 = vunpack.c.l.b16 %v299
    %v1801 = vunpack.c.h.b16 %v299
    %v1802 = vunpack.c.l.b16 %v300
    %v1803 = vunpack.c.h.b16 %v300
    %v1804 = vunpack.c.l.b16 %v301
    %v1805 = vunpack.c.h.b16 %v301
    %v1806 = vunpack.c.l.b16 %v302
    %v1807 = vunpack.c.h.b16 %v302
    %v1808 = vunpack.c.l.b16 %v303
    %v1809 = vunpack.c.h.b16 %v303
    %v1810 = vunpack.c.l.b16 %v304
    %v1811 = vunpack.c.h.b16 %v304
    %v1812 = vunpack.c.l.b16 %v305
    %v1813 = vunpack.c.h.b16 %v305
    %v1814 = vunpack.c.l.b16 %v306
    %v1815 = vunpack.c.h.b16 %v306
    %v1816 = vunpack.c.l.b16 %v307
    %v1817 = vunpack.c.h.b16 %v307
    %v1818 = vunpack.c.l.b16 %v308
    %v1819 = vunpack.c.h.b16 %v308
    %v1820 = vunpack.c.l.b16 %v309
    %v1821 = vunpack.c.h.b16 %v309
    %v1822 = vunpack.c.l.b16 %v310
    %v1823 = vunpack.c.h.b16 %v310
    %v1824 = vunpack.c.l.b16 %v311
    %v1825 = vunpack.c.h.b16 %v311
    %v1826 = vunpack.c.l.b16 %v312
    %v1827 = vunpack.c.h.b16 %v312
    %v1828 = vunpack.c.l.b16 %v313
    %v1829 = vunpack.c.h.b16 %v313
    %v1830 = vunpack.c.l.b16 %v314
    %v1831 = vunpack.c.h.b16 %v314
    %v1832 = vunpack.c.l.b16 %v315
    %v1833 = vunpack.c.h.b16 %v315
    %v1834 = vunpack.c.l.b16 %v316
    %v1835 = vunpack.c.h.b16 %v316
    %v1836 = vunpack.c.l.b16 %v317
    %v1837 = vunpack.c.h.b16 %v317
    %v1838 = vunpack.c.l.b16 %v318
    %v1839 = vunpack.c.h.b16 %v318
    %v1840 = vunpack.c.l.b16 %v319
    %v1841 = vunpack.c.h.b16 %v319
    %v1842 = vunpack.c.l.b16 %v320
    %v1843 = vunpack.c.h.b16 %v320
    %v1844 = vunpack.c.l.b16 %v321
    %v1845 = vunpack.c.h.b16 %v321
    %v1846 = vunpack.c.l.b16 %v322
    %v1847 = vunpack.c.h.b16 %v322
    %v1848 = vunpack.c.l.b16 %v323
    %v1849 = vunpack.c.h.b16 %v323
    %v1850 = vunpack.c.l.b16 %v324
    %v1851 = vunpack.c.h.b16 %v324
    %v1852 = vunpack.c.l.b16 %v325
    %v1853 = vunpack.c.h.b16 %v325
    %v1854 = vunpack.c.l.b16 %v326
    %v1855 = vunpack.c.h.b16 %v326
    %v1856 = vunpack.c.l.b16 %v327
    %v1857 = vunpack.c.h.b16 %v327
    %v1858 = vunpack.c.l.b16 %v328
    %v1859 = vunpack.c.h.b16 %v328
    %v1860 = vunpack.c.l.b16 %v329
    %v1861 = vunpack.c.h.b16 %v329
    %v1862 = vunpack.c.l.b16 %v330
    %v1863 = vunpack.c.h.b16 %v330
    %v1864 = vunpack.c.l.b16 %v331
    %v1865 = vunpack.c.h.b16 %v331
    %v1866 = vunpack.c.l.b16 %v332
    %v1867 = vunpack.c.h.b16 %v332
    %v1868 = vunpack.c.l.b16 %v333
    %v1869 = vunpack.c.h.b16 %v333
    %v1870 = vunpack.c.l.b16 %v334
    %v1871 = vunpack.c.h.b16 %v334
    %v1872 = vunpack.c.l.b16 %v335
    %v1873 = vunpack.c.h.b16 %v335
    %v1874 = vunpack.c.l.b16 %v336
    %v1875 = vunpack.c.h.b16 %v336
    %v1876 = vunpack.c.l.b16 %v337
    %v1877 = vunpack.c.h.b16 %v337
    %v1878 = vunpack.c.l.b16 %v338
    %v1879 = vunpack.c.h.b16 %v338
    %v1880 = vunpack.c.l.b16 %v339
    %v1881 = vunpack.c.h.b16 %v339
    %v1882 = vunpack.c.l.b16 %v340
    %v1883 = vunpack.c.h.b16 %v340
    %v1884 = vunpack.c.l.b16 %v341
    %v1885 = vunpack.c.h.b16 %v341
    %v1886 = vunpack.c.l.b16 %v342
    %v1887 = vunpack.c.h.b16 %v342
    %v1888 = vunpack.c.l.b16 %v343
    %v1889 = vunpack.c.h.b16 %v343
    %v1890 = vunpack.c.l.b16 %v344
    %v1891 = vunpack.c.h.b16 %v344
    %v1892 = vunpack.c.l.b16 %v345
    %v1893 = vunpack.c.h.b16 %v345
    %v1894 = vunpack.c.l.b16 %v346
    %v1895 = vunpack.c.h.b16 %v346
    %v1896 = vunpack.c.l.b16 %v347
    %v1897 = vunpack.c.h.b16 %v347
    %v1898 = vunpack.c.l.b16 %v348
    %v1899 = vunpack.c.h.b16 %v348
    %v1900 = vunpack.c.l.b16 %v349
    %v1901 = vunpack.c.h.b16 %v349
    %v1902 = vunpack.c.l.b16 %v350
    %v1903 = vunpack.c.h.b16 %v350
    %v1904 = vunpack.c.l.b16 %v351
    %v1905 = vunpack.c.h.b16 %v351
    %v1906 = vunpack.c.l.b16 %v352
    %v1907 = vunpack.c.h.b16 %v352
    %v1908 = vunpack.c.l.b16 %v353
    %v1909 = vunpack.c.h.b16 %v353
    %v1910 = vunpack.c.l.b16 %v354
    %v1911 = vunpack.c.h.b16 %v354
    %v1912 = vunpack.c.l.b16 %v355
    %v1913 = vunpack.c.h.b16 %v355
    %v1914 = vunpack.c.l.b16 %v356
    %v1915 = vunpack.c.h.b16 %v356
    %v1916 = vunpack.c.l.b16 %v357
    %v1917 = vunpack.c.h.b16 %v357
    %v1918 = vunpack.c.l.b16 %v358
    %v1919 = vunpack.c.h.b16 %v358
    %v1920 = vunpack.c.l.b16 %v359
    %v1921 = vunpack.c.h.b16 %v359
    %v1922 = vunpack.c.l.b16 %v360
    %v1923 = vunpack.c.h.b16 %v360
    %v1924 = vunpack.c.l.b16 %v361
    %v1925 = vunpack.c.h.b16 %v361
    %v1926 = vunpack.c.l.b16 %v362
    %v1927 = vunpack.c.h.b16 %v362
    %v1928 = vunpack.c.l.b16 %v363
    %v1929 = vunpack.c.h.b16 %v363
    %v1930 = vunpack.c.l.b16 %v364
    %v1931 = vunpack.c.h.b16 %v364
    %v1932 = vunpack.c.l.b16 %v365
    %v1933 = vunpack.c.h.b16 %v365
    %v1934 = vunpack.c.l.b16 %v366
    %v1935 = vunpack.c.h.b16 %v366
    %v1936 = vunpack.c.l.b16 %v367
    %v1937 = vunpack.c.h.b16 %v367
    %v1938 = vunpack.c.l.b16 %v368
    %v1939 = vunpack.c.h.b16 %v368
    %v1940 = vunpack.c.l.b16 %v369
    %v1941 = vunpack.c.h.b16 %v369
    %v1942 = vunpack.c.l.b16 %v370
    %v1943 = vunpack.c.h.b16 %v370
    %v1944 = vunpack.c.l.b16 %v371
    %v1945 = vunpack.c.h.b16 %v371
    %v1946 = vunpack.c.l.b16 %v372
    %v1947 = vunpack.c.h.b16 %v372
    %v1948 = vunpack.c.l.b16 %v373
    %v1949 = vunpack.c.h.b16 %v373
    %v1950 = vunpack.c.l.b16 %v374
    %v1951 = vunpack.c.h.b16 %v374
    %v1952 = vunpack.c.l.b16 %v375
    %v1953 = vunpack.c.h.b16 %v375
    %v1954 = vunpack.c.l.b16 %v376
    %v1955 = vunpack.c.h.b16 %v376
    %v1956 = vunpack.c.l.b16 %v377
    %v1957 = vunpack.c.h.b16 %v377
    %v1958 = vunpack.c.l.b16 %v378
    %v1959 = vunpack.c.h.b16 %v378
    %v1960 = vunpack.c.l.b16 %v379
    %v1961 = vunpack.c.h.b16 %v379
    %v1962 = vunpack.c.l.b16 %v380
    %v1963 = vunpack.c.h.b16 %v380
    %v1964 = vunpack.c.l.b16 %v381
    %v1965 = vunpack.c.h.b16 %v381
    %v1966 = vunpack.c.l.b16 %v382
    %v1967 = vunpack.c.h.b16 %v382
    %v1968 = vunpack.c.l.b16 %v383
    %v1969 = vunpack.c.h.b16 %v383
    %v1970 = vunpack.c.l.b16 %v384
    %v1971 = vunpack.c.h.b16 %v384
    %v1972 = vunpack.c.l.b16 %v385
    %v1973 = vunpack.c.h.b16 %v385
    %v1974 = vunpack.c.l.b16 %v386
    %v1975 = vunpack.c.h.b16 %v386
    %v1976 = vunpack.c.l.b16 %v387
    %v1977 = vunpack.c.h.b16 %v387
    %v1978 = vunpack.c.l.b16 %v388
    %v1979 = vunpack.c.h.b16 %v388
    %v1980 = vunpack.c.l.b16 %v389
    %v1981 = vunpack.c.h.b16 %v389
    %v1982 = vunpack.c.l.b16 %v390
    %v1983 = vunpack.c.h.b16 %v390
    %v1984 = vunpack.c.l.b16 %v391
    %v1985 = vunpack.c.h.b16 %v391
    %v1986 = vunpack.c.l.b16 %v392
    %v1987 = vunpack.c.h.b16 %v392
    %v1988 = vunpack.c.l.b16 %v393
    %v1989 = vunpack.c.h.b16 %v393
    %v1990 = vunpack.c.l.b16 %v394
    %v1991 = vunpack.c.h.b16 %v394
    %v1992 = vunpack.c.l.b16 %v395
    %v1993 = vunpack.c.h.b16 %v395
    %v1994 = vunpack.c.l.b16 %v396
    %v1995 = vunpack.c.h.b16 %v396
    %v1996 = vunpack.c.l.b16 %v397
    %v1997 = vunpack.c.h.b16 %v397
    %v1998 = vunpack.c.l.b16 %v398
    %v1999 = vunpack.c.h.b16 %v398
    %v2000 = vunpack.c.l.b16 %v399
    %v2001 = vunpack.c.h.b16 %v399
    %v2002 = vunpack.c.l.b16 %v400
    %v2003 = vunpack.c.h.b16 %v400
    %v2004 = vunpack.c.l.b16 %v401
    %v2005 = vunpack.c.h.b16 %v401
    %v2006 = vunpack.c.l.b16 %v402
    %v2007 = vunpack.c.h.b16 %v402
    %v2008 = vunpack.c.l.b16 %v403
    %v2009 = vunpack.c.h.b16 %v403
    %v2010 = vunpack.c.l.b16 %v404
    %v2011 = vunpack.c.h.b16 %v404
    %v2012 = vunpack.c.l.b16 %v405
    %v2013 = vunpack.c.h.b16 %v405
    %v2014 = vunpack.c.l.b16 %v406
    %v2015 = vunpack.c.h.b16 %v406
    %v2016 = vunpack.c.l.b16 %v407
    %v2017 = vunpack.c.h.b16 %v407
    %v2018 = vunpack.c.l.b16 %v408
    %v2019 = vunpack.c.h.b16 %v408
    %v2020 = vunpack.c.l.b16 %v409
    %v2021 = vunpack.c.h.b16 %v409
    %v2022 = vunpack.c.l.b16 %v410
    %v2023 = vunpack.c.h.b16 %v410
    %v2024 = vunpack.c.l.b16 %v411
    %v2025 = vunpack.c.h.b16 %v411
    %v2026 = vunpack.c.l.b16 %v412
    %v2027 = vunpack.c.h.b16 %v412
    %v2028 = vunpack.c.l.b16 %v413
    %v2029 = vunpack.c.h.b16 %v413
    %v2030 = vunpack.c.l.b16 %v414
    %v2031 = vunpack.c.h.b16 %v414
    %v2032 = vunpack.c.l.b16 %v415
    %v2033 = vunpack.c.h.b16 %v415
    %v2034 = vunpack.c.l.b16 %v416
    %v2035 = vunpack.c.h.b16 %v416
    %v2036 = vunpack.c.l.b16 %v417
    %v2037 = vunpack.c.h.b16 %v417
    %v2038 = vunpack.c.l.b16 %v418
    %v2039 = vunpack.c.h.b16 %v418
    %v2040 = vunpack.c.l.b16 %v419
    %v2041 = vunpack.c.h.b16 %v419
    %v2042 = vunpack.c.l.b16 %v420
    %v2043 = vunpack.c.h.b16 %v420
    %v2044 = vunpack.c.l.b16 %v421
    %v2045 = vunpack.c.h.b16 %v421
    %v2046 = vunpack.c.l.b16 %v422
    %v2047 = vunpack.c.h.b16 %v422
    %v2048 = vunpack.c.l.b16 %v423
    %v2049 = vunpack.c.h.b16 %v423
    %v2050 = vunpack.c.l.b16 %v424
    %v2051 = vunpack.c.h.b16 %v424
    %v2052 = vunpack.c.l.b16 %v425
    %v2053 = vunpack.c.h.b16 %v425
    %v2054 = vunpack.c.l.b16 %v426
    %v2055 = vunpack.c.h.b16 %v426
    %v2056 = vunpack.c.l.b16 %v427
    %v2057 = vunpack.c.h.b16 %v427
    %v2058 = vunpack.c.l.b16 %v428
    %v2059 = vunpack.c.h.b16 %v428
    %v2060 = vunpack.c.l.b16 %v429
    %v2061 = vunpack.c.h.b16 %v429
    %v2062 = vunpack.c.l.b16 %v430
    %v2063 = vunpack.c.h.b16 %v430
    %v2064 = vunpack.c.l.b16 %v431
    %v2065 = vunpack.c.h.b16 %v431
    %v2066 = vunpack.c.l.b16 %v432
    %v2067 = vunpack.c.h.b16 %v432
    %v2068 = vunpack.c.l.b16 %v433
    %v2069 = vunpack.c.h.b16 %v433
    %v2070 = vunpack.c.l.b16 %v434
    %v2071 = vunpack.c.h.b16 %v434
    %v2072 = vunpack.c.l.b16 %v435
    %v2073 = vunpack.c.h.b16 %v435
    %v2074 = vunpack.c.l.b16 %v436
    %v2075 = vunpack.c.h.b16 %v436
    %v2076 = vunpack.c.l.b16 %v437
    %v2077 = vunpack.c.h.b16 %v437
    %v2078 = vunpack.c.l.b16 %v438
    %v2079 = vunpack.c.h.b16 %v438
    %v2080 = vunpack.c.l.b16 %v439
    %v2081 = vunpack.c.h.b16 %v439
    %v2082 = vunpack.c.l.b16 %v440
    %v2083 = vunpack.c.h.b16 %v440
    %v2084 = vunpack.c.l.b16 %v441
    %v2085 = vunpack.c.h.b16 %v441
    %v2086 = vunpack.c.l.b16 %v442
    %v2087 = vunpack.c.h.b16 %v442
    %v2088 = vunpack.c.l.b16 %v443
    %v2089 = vunpack.c.h.b16 %v443
    %v2090 = vunpack.c.l.b16 %v444
    %v2091 = vunpack.c.h.b16 %v444
    %v2092 = vunpack.c.l.b16 %v445
    %v2093 = vunpack.c.h.b16 %v445
    %v2094 = vunpack.c.l.b16 %v446
    %v2095 = vunpack.c.h.b16 %v446
    %v2096 = vunpack.c.l.b16 %v447
    %v2097 = vunpack.c.h.b16 %v447
    %v2098 = vunpack.c.l.b16 %v448
    %v2099 = vunpack.c.h.b16 %v448
    %v2100 = vunpack.c.l.b16 %v449
    %v2101 = vunpack.c.h.b16 %v449
    %v2102 = vunpack.c.l.b16 %v450
    %v2103 = vunpack.c.h.b16 %v450
    %v2104 = vunpack.c.l.b16 %v451
    %v2105 = vunpack.c.h.b16 %v451
    %v2106 = vunpack.c.l.b16 %v452
    %v2107 = vunpack.c.h.b16 %v452
    %v2108 = vunpack.c.l.b16 %v453
    %v2109 = vunpack.c.h.b16 %v453
    %v2110 = vunpack.c.l.b16 %v454
    %v2111 = vunpack.c.h.b16 %v454
    %v2112 = vunpack.c.l.b16 %v455
    %v2113 = vunpack.c.h.b16 %v455
    %v2114 = vunpack.c.l.b16 %v456
    %v2115 = vunpack.c.h.b16 %v456
    %v2116 = vunpack.c.l.b16 %v457
    %v2117 = vunpack.c.h.b16 %v457
    %v2118 = vunpack.c.l.b16 %v458
    %v2119 = vunpack.c.h.b16 %v458
    %v2120 = vunpack.c.l.b16 %v459
    %v2121 = vunpack.c.h.b16 %v459
    %v2122 = vunpack.c.l.b16 %v460
    %v2123 = vunpack.c.h.b16 %v460
    %v2124 = vunpack.c.l.b16 %v461
    %v2125 = vunpack.c.h.b16 %v461
    %v2126 = vunpack.c.l.b16 %v462
    %v2127 = vunpack.c.h.b16 %v462
    %v2128 = vunpack.c.l.b16 %v463
    %v2129 = vunpack.c.h.b16 %v463
    %v2130 = vunpack.c.l.b16 %v464
    %v2131 = vunpack.c.h.b16 %v464
    %v2132 = vunpack.c.l.b16 %v465
    %v2133 = vunpack.c.h.b16 %v465
    %v2134 = vunpack.c.l.b16 %v466
    %v2135 = vunpack.c.h.b16 %v466
    %v2136 = vunpack.c.l.b16 %v467
    %v2137 = vunpack.c.h.b16 %v467
    %v2138 = vunpack.c.l.b16 %v468
    %v2139 = vunpack.c.h.b16 %v468
    %v2140 = vunpack.c.l.b16 %v469
    %v2141 = vunpack.c.h.b16 %v469
    %v2142 = vunpack.c.l.b16 %v470
    %v2143 = vunpack.c.h.b16 %v470
    %v2144 = vunpack.c.l.b16 %v471
    %v2145 = vunpack.c.h.b16 %v471
    %v2146 = vunpack.c.l.b16 %v472
    %v2147 = vunpack.c.h.b16 %v472
    %v2148 = vunpack.c.l.b16 %v473
    %v2149 = vunpack.c.h.b16 %v473
    %v2150 = vunpack.c.l.b16 %v474
    %v2151 = vunpack.c.h.b16 %v474
    %v2152 = vunpack.c.l.b16 %v475
    %v2153 = vunpack.c.h.b16 %v475
    %v2154 = vunpack.c.l.b16 %v476
    %v2155 = vunpack.c.h.b16 %v476
    %v2156 = vunpack.c.l.b16 %v477
    %v2157 = vunpack.c.h.b16 %v477
    %v2158 = vunpack.c.l.b16 %v478
    %v2159 = vunpack.c.h.b16 %v478
    %v2160 = vunpack.c.l.b16 %v479
    %v2161 = vunpack.c.h.b16 %v479
    %v2162 = vunpack.c.l.b16 %v480
    %v2163 = vunpack.c.h.b16 %v480
    %v2164 = vunpack.c.l.b16 %v481
    %v2165 = vunpack.c.h.b16 %v481
    %v2166 = vunpack.c.l.b16 %v482
    %v2167 = vunpack.c.h.b16 %v482
    %v2168 = vunpack.c.l.b16 %v483
    %v2169 = vunpack.c.h.b16 %v483
    %v2170 = vunpack.c.l.b16 %v484
    %v2171 = vunpack.c.h.b16 %v484
    %v2172 = vunpack.c.l.b16 %v485
    %v2173 = vunpack.c.h.b16 %v485
    %v2174 = vunpack.c.l.b16 %v486
    %v2175 = vunpack.c.h.b16 %v486
    %v2176 = vunpack.c.l.b16 %v487
    %v2177 = vunpack.c.h.b16 %v487
    %v2178 = vunpack.c.l.b16 %v488
    %v2179 = vunpack.c.h.b16 %v488
    %v2180 = vunpack.c.l.b16 %v489
    %v2181 = vunpack.c.h.b16 %v489
    %v2182 = vunpack.c.l.b16 %v490
    %v2183 = vunpack.c.h.b16 %v490
    %v2184 = vunpack.c.l.b16 %v491
    %v2185 = vunpack.c.h.b16 %v491
    %v2186 = vunpack.c.l.b16 %v492
    %v2187 = vunpack.c.h.b16 %v492
    %v2188 = vunpack.c.l.b16 %v493
    %v2189 = vunpack.c.h.b16 %v493
    %v2190 = vunpack.c.l.b16 %v494
    %v2191 = vunpack.c.h.b16 %v494
    %v2192 = vunpack.c.l.b16 %v495
    %v2193 = vunpack.c.h.b16 %v495
    %v2194 = vunpack.c.l.b16 %v496
    %v2195 = vunpack.c.h.b16 %v496
    %v2196 = vunpack.c.l.b16 %v497
    %v2197 = vunpack.c.h.b16 %v497
    %v2198 = vunpack.c.l.b16 %v498
    %v2199 = vunpack.c.h.b16 %v498
    %v2200 = vunpack.c.l.b16 %v499
    %v2201 = vunpack.c.h.b16 %v499
    %v2202 = vunpack.c.l.b16 %v500
    %v2203 = vunpack.c.h.b16 %v500
    %v2204 = vunpack.c.l.b16 %v501
    %v2205 = vunpack.c.h.b16 %v501
    %v2206 = vunpack.c.l.b16 %v502
    %v2207 = vunpack.c.h.b16 %v502
    %v2208 = vunpack.c.l.b16 %v503
    %v2209 = vunpack.c.h.b16 %v503
    %v2210 = vunpack.c.l.b16 %v504
    %v2211 = vunpack.c.h.b16 %v504
    %v2212 = vunpack.c.l.b16 %v505
    %v2213 = vunpack.c.h.b16 %v505
    %v2214 = vunpack.c.l.b16 %v506
    %v2215 = vunpack.c.h.b16 %v506
    %v2216 = vunpack.c.l.b16 %v507
    %v2217 = vunpack.c.h.b16 %v507
    %v2218 = vunpack.c.l.b16 %v508
    %v2219 = vunpack.c.h.b16 %v508
    %v2220 = vunpack.c.l.b16 %v509
    %v2221 = vunpack.c.h.b16 %v509
    %v2222 = vunpack.c.l.b16 %v510
    %v2223 = vunpack.c.h.b16 %v510
    %v2224 = vunpack.c.l.b16 %v511
    %v2225 = vunpack.c.h.b16 %v511
    %v2226 = vunpack.c.l.b16 %v512
    %v2227 = vunpack.c.h.b16 %v512
    %v2228 = vunpack.c.l.b16 %v513
    %v2229 = vunpack.c.h.b16 %v513
    %v2230 = vunpack.c.l.b16 %v514
    %v2231 = vunpack.c.h.b16 %v514
    %v2232 = vunpack.c.l.b16 %v515
    %v2233 = vunpack.c.h.b16 %v515
    %v2234 = vunpack.c.l.b16 %v516
    %v2235 = vunpack.c.h.b16 %v516
    %v2236 = vunpack.c.l.b16 %v517
    %v2237 = vunpack.c.h.b16 %v517
    %v2238 = vunpack.c.l.b16 %v518
    %v2239 = vunpack.c.h.b16 %v518
    %v2240 = vunpack.c.l.b16 %v519
    %v2241 = vunpack.c.h.b16 %v519
    %v2242 = vunpack.c.l.b16 %v520
    %v2243 = vunpack.c.h.b16 %v520
    %v2244 = vunpack.c.l.b16 %v521
    %v2245 = vunpack.c.h.b16 %v521
    %v2246 = vunpack.c.l.b16 %v522
    %v2247 = vunpack.c.h.b16 %v522
    %v2248 = vunpack.c.l.b16 %v523
    %v2249 = vunpack.c.h.b16 %v523
    %v2250 = vunpack.c.l.b16 %v524
    %v2251 = vunpack.c.h.b16 %v524
    %v2252 = vunpack.c.l.b16 %v525
    %v2253 = vunpack.c.h.b16 %v525
    %v2254 = vunpack.c.l.b16 %v526
    %v2255 = vunpack.c.h.b16 %v526
    %v2256 = vunpack.c.l.b16 %v527
    %v2257 = vunpack.c.h.b16 %v527
    %v2258 = vunpack.c.l.b16 %v528
    %v2259 = vunpack.c.h.b16 %v528
    %v2260 = vunpack.c.l.b16 %v529
    %v2261 = vunpack.c.h.b16 %v529
    %v2262 = vunpack.c.l.b16 %v530
    %v2263 = vunpack.c.h.b16 %v530
    %v2264 = vunpack.c.l.b16 %v531
    %v2265 = vunpack.c.h.b16 %v531
    %v2266 = vunpack.c.l.b16 %v532
    %v2267 = vunpack.c.h.b16 %v532
    %v2268 = vunpack.c.l.b16 %v533
    %v2269 = vunpack.c.h.b16 %v533
    %v2270 = vunpack.c.l.b16 %v534
    %v2271 = vunpack.c.h.b16 %v534
    %v2272 = vunpack.c.l.b16 %v535
    %v2273 = vunpack.c.h.b16 %v535
    %v2274 = vunpack.c.l.b16 %v536
    %v2275 = vunpack.c.h.b16 %v536
    %v2276 = vunpack.c.l.b16 %v537
    %v2277 = vunpack.c.h.b16 %v537
    %v2278 = vunpack.c.l.b16 %v538
    %v2279 = vunpack.c.h.b16 %v538
    %v2280 = vunpack.c.l.b16 %v539
    %v2281 = vunpack.c.h.b16 %v539
    %v2282 = vunpack.c.l.b16 %v540
    %v2283 = vunpack.c.h.b16 %v540
    %v2284 = vunpack.c.l.b16 %v541
    %v2285 = vunpack.c.h.b16 %v541
    %v2286 = vunpack.c.l.b16 %v542
    %v2287 = vunpack.c.h.b16 %v542
    %v2288 = vunpack.c.l.b16 %v543
    %v2289 = vunpack.c.h.b16 %v543
    %v2290 = vunpack.c.l.b16 %v544
    %v2291 = vunpack.c.h.b16 %v544
    %v2292 = vunpack.c.l.b16 %v545
    %v2293 = vunpack.c.h.b16 %v545
    %v2294 = vunpack.c.l.b16 %v546
    %v2295 = vunpack.c.h.b16 %v546
    %v2296 = vunpack.c.l.b16 %v547
    %v2297 = vunpack.c.h.b16 %v547
    %v2298 = vunpack.c.l.b16 %v548
    %v2299 = vunpack.c.h.b16 %v548
    %v2300 = vunpack.c.l.b16 %v549
    %v2301 = vunpack.c.h.b16 %v549
    %v2302 = vunpack.c.l.b16 %v550
    %v2303 = vunpack.c.h.b16 %v550
    %v2304 = vunpack.c.l.b16 %v551
    %v2305 = vunpack.c.h.b16 %v551
    %v2306 = vunpack.c.l.b16 %v552
    %v2307 = vunpack.c.h.b16 %v552
    %v2308 = vunpack.c.l.b16 %v553
    %v2309 = vunpack.c.h.b16 %v553
    %v2310 = vunpack.c.l.b16 %v554
    %v2311 = vunpack.c.h.b16 %v554
    %v2312 = vunpack.c.l.b16 %v555
    %v2313 = vunpack.c.h.b16 %v555
    %v2314 = vunpack.c.l.b16 %v556
    %v2315 = vunpack.c.h.b16 %v556
    %v2316 = vunpack.c.l.b16 %v557
    %v2317 = vunpack.c.h.b16 %v557
    %v2318 = vunpack.c.l.b16 %v558
    %v2319 = vunpack.c.h.b16 %v558
    %v2320 = vunpack.c.l.b16 %v559
    %v2321 = vunpack.c.h.b16 %v559
    %v2322 = vunpack.c.l.b16 %v560
    %v2323 = vunpack.c.h.b16 %v560
    %v2324 = vunpack.c.l.b16 %v561
    %v2325 = vunpack.c.h.b16 %v561
    %v2326 = vunpack.c.l.b16 %v562
    %v2327 = vunpack.c.h.b16 %v562
    %v2328 = vunpack.c.l.b16 %v563
    %v2329 = vunpack.c.h.b16 %v563
    %v2330 = vunpack.c.l.b16 %v564
    %v2331 = vunpack.c.h.b16 %v564
    %v2332 = vunpack.c.l.b16 %v565
    %v2333 = vunpack.c.h.b16 %v565
    %v2334 = vunpack.c.l.b16 %v566
    %v2335 = vunpack.c.h.b16 %v566
    %v2336 = vunpack.c.l.b16 %v567
    %v2337 = vunpack.c.h.b16 %v567
    %v2338 = vunpack.c.l.b16 %v568
    %v2339 = vunpack.c.h.b16 %v568
    %v2340 = vunpack.c.l.b16 %v569
    %v2341 = vunpack.c.h.b16 %v569
    %v2342 = vunpack.c.l.b16 %v570
    %v2343 = vunpack.c.h.b16 %v570
    %v2344 = vunpack.c.l.b16 %v571
    %v2345 = vunpack.c.h.b16 %v571
    %v2346 = vunpack.c.l.b16 %v572
    %v2347 = vunpack.c.h.b16 %v572
    %v2348 = vunpack.c.l.b16 %v573
    %v2349 = vunpack.c.h.b16 %v573
    %v2350 = vunpack.c.l.b16 %v574
    %v2351 = vunpack.c.h.b16 %v574
    %v2352 = vunpack.c.l.b16 %v575
    %v2353 = vunpack.c.h.b16 %v575
    %v2354 = vunpack.c.l.b16 %v576
    %v2355 = vunpack.c.h.b16 %v576
    %v2356 = vunpack.c.l.b16 %v577
    %v2357 = vunpack.c.h.b16 %v577
    %v2358 = vunpack.c.l.b16 %v578
    %v2359 = vunpack.c.h.b16 %v578
    %v2360 = vunpack.c.l.b16 %v579
    %v2361 = vunpack.c.h.b16 %v579
    %v2362 = vunpack.c.l.b16 %v580
    %v2363 = vunpack.c.h.b16 %v580
    %v2364 = vunpack.c.l.b16 %v581
    %v2365 = vunpack.c.h.b16 %v581
    %v2366 = vunpack.c.l.b16 %v582
    %v2367 = vunpack.c.h.b16 %v582
    %v2368 = vunpack.c.l.b16 %v583
    %v2369 = vunpack.c.h.b16 %v583
    %v2370 = vunpack.c.l.b16 %v584
    %v2371 = vunpack.c.h.b16 %v584
    %v2372 = vunpack.c.l.b16 %v585
    %v2373 = vunpack.c.h.b16 %v585
    %v2374 = vunpack.c.l.b16 %v586
    %v2375 = vunpack.c.h.b16 %v586
    %v2376 = vunpack.c.l.b16 %v587
    %v2377 = vunpack.c.h.b16 %v587
    %v2378 = vunpack.c.l.b16 %v588
    %v2379 = vunpack.c.h.b16 %v588
    %v2380 = vunpack.c.l.b16 %v589
    %v2381 = vunpack.c.h.b16 %v589
    %v2382 = vunpack.c.l.b16 %v590
    %v2383 = vunpack.c.h.b16 %v590
    %v2384 = vunpack.c.l.b16 %v591
    %v2385 = vunpack.c.h.b16 %v591
    %v2386 = vunpack.c.l.b16 %v592
    %v2387 = vunpack.c.h.b16 %v592
    %v2388 = vunpack.c.l.b16 %v593
    %v2389 = vunpack.c.h.b16 %v593
    %v2390 = vunpack.c.l.b16 %v594
    %v2391 = vunpack.c.h.b16 %v594
    %v2392 = vunpack.c.l.b16 %v595
    %v2393 = vunpack.c.h.b16 %v595
    %v2394 = vunpack.c.l.b16 %v596
    %v2395 = vunpack.c.h.b16 %v596
    %v2396 = vunpack.c.l.b16 %v597
    %v2397 = vunpack.c.h.b16 %v597
    %v2398 = vunpack.c.l.b16 %v598
    %v2399 = vunpack.c.h.b16 %v598
    %v2400 = vunpack.c.l.b16 %v599
    %v2401 = vunpack.c.h.b16 %v599
    %v2402 = vunpack.c.l.b16 %v600
    %v2403 = vunpack.c.h.b16 %v600
    %v2404 = vunpack.c.l.b16 %v601
    %v2405 = vunpack.c.h.b16 %v601
    %v2406 = vunpack.c.l.b16 %v602
    %v2407 = vunpack.c.h.b16 %v602
    %v2408 = vunpack.c.l.b16 %v603
    %v2409 = vunpack.c.h.b16 %v603
    %v2410 = vunpack.c.l.b16 %v604
    %v2411 = vunpack.c.h.b16 %v604
    %v2412 = vunpack.c.l.b16 %v605
    %v2413 = vunpack.c.h.b16 %v605
    %v2414 = vunpack.c.l.b16 %v606
    %v2415 = vunpack.c.h.b16 %v606
    %v2416 = vunpack.c.l.b16 %v607
    %v2417 = vunpack.c.h.b16 %v607
    %v2418 = vunpack.c.l.b16 %v608
    %v2419 = vunpack.c.h.b16 %v608
    %v2420 = vunpack.c.l.b16 %v609
    %v2421 = vunpack.c.h.b16 %v609
    %v2422 = vunpack.c.l.b16 %v610
    %v2423 = vunpack.c.h.b16 %v610
    %v2424 = vunpack.c.l.b16 %v611
    %v2425 = vunpack.c.h.b16 %v611
    %v2426 = vunpack.c.l.b16 %v612
    %v2427 = vunpack.c.h.b16 %v612
    %v2428 = vunpack.c.l.b16 %v613
    %v2429 = vunpack.c.h.b16 %v613
    %v2430 = vunpack.c.l.b16 %v614
    %v2431 = vunpack.c.h.b16 %v614
    %v2432 = vunpack.c.l.b16 %v615
    %v2433 = vunpack.c.h.b16 %v615
    %v2434 = vunpack.c.l.b16 %v616
    %v2435 = vunpack.c.h.b16 %v616
    %v2436 = vunpack.c.l.b16 %v617
    %v2437 = vunpack.c.h.b16 %v617
    %v2438 = vunpack.c.l.b16 %v618
    %v2439 = vunpack.c.h.b16 %v618
    %v2440 = vunpack.c.l.b16 %v619
    %v2441 = vunpack.c.h.b16 %v619
    %v2442 = vunpack.c.l.b16 %v620
    %v2443 = vunpack.c.h.b16 %v620
    %v2444 = vunpack.c.l.b16 %v621
    %v2445 = vunpack.c.h.b16 %v621
    %v2446 = vunpack.c.l.b16 %v622
    %v2447 = vunpack.c.h.b16 %v622
    %v2448 = vunpack.c.l.b16 %v623
    %v2449 = vunpack.c.h.b16 %v623
    %v2450 = vunpack.c.l.b16 %v624
    %v2451 = vunpack.c.h.b16 %v624
    %v2452 = vunpack.c.l.b16 %v625
    %v2453 = vunpack.c.h.b16 %v625
    %v2454 = vunpack.c.l.b16 %v626
    %v2455 = vunpack.c.h.b16 %v626
    %v2456 = vunpack.c.l.b16 %v627
    %v2457 = vunpack.c.h.b16 %v627
    %v2458 = vunpack.c.l.b16 %v628
    %v2459 = vunpack.c.h.b16 %v628
    %v2460 = vunpack.c.l.b16 %v629
    %v2461 = vunpack.c.h.b16 %v629
    %v2462 = vunpack.c.l.b16 %v630
    %v2463 = vunpack.c.h.b16 %v630
    %v2464 = vunpack.c.l.b16 %v631
    %v2465 = vunpack.c.h.b16 %v631
    %v2466 = vunpack.c.l.b16 %v632
    %v2467 = vunpack.c.h.b16 %v632
    %v2468 = vunpack.c.l.b16 %v633
    %v2469 = vunpack.c.h.b16 %v633
    %v2470 = vunpack.c.l.b16 %v634
    %v2471 = vunpack.c.h.b16 %v634
    %v2472 = vunpack.c.l.b16 %v635
    %v2473 = vunpack.c.h.b16 %v635
    %v2474 = vunpack.c.l.b16 %v636
    %v2475 = vunpack.c.h.b16 %v636
    %v2476 = vunpack.c.l.b16 %v637
    %v2477 = vunpack.c.h.b16 %v637
    %v2478 = vunpack.c.l.b16 %v638
    %v2479 = vunpack.c.h.b16 %v638
    %v2480 = vunpack.c.l.b16 %v639
    %v2481 = vunpack.c.h.b16 %v639
    %v2482 = vunpack.c.l.b16 %v640
    %v2483 = vunpack.c.h.b16 %v640
    %v2484 = vunpack.c.l.b16 %v641
    %v2485 = vunpack.c.h.b16 %v641
    %v2486 = vunpack.c.l.b16 %v642
    %v2487 = vunpack.c.h.b16 %v642
    %v2488 = vunpack.c.l.b16 %v643
    %v2489 = vunpack.c.h.b16 %v643
    %v2490 = vunpack.c.l.b16 %v644
    %v2491 = vunpack.c.h.b16 %v644
    %v2492 = vunpack.c.l.b16 %v645
    %v2493 = vunpack.c.h.b16 %v645
    %v2494 = vunpack.c.l.b16 %v646
    %v2495 = vunpack.c.h.b16 %v646
    %v2496 = vunpack.c.l.b16 %v647
    %v2497 = vunpack.c.h.b16 %v647
    %v2498 = vunpack.c.l.b16 %v648
    %v2499 = vunpack.c.h.b16 %v648
    %v2500 = vunpack.c.l.b16 %v649
    %v2501 = vunpack.c.h.b16 %v649
    %v2502 = vunpack.c.l.b16 %v650
    %v2503 = vunpack.c.h.b16 %v650
    %v2504 = vunpack.c.l.b16 %v651
    %v2505 = vunpack.c.h.b16 %v651
    %v2506 = vunpack.c.l.b16 %v652
    %v2507 = vunpack.c.h.b16 %v652
    %v2508 = vunpack.c.l.b16 %v653
    %v2509 = vunpack.c.h.b16 %v653
    %v2510 = vunpack.c.l.b16 %v654
    %v2511 = vunpack.c.h.b16 %v654
    %v2512 = vunpack.c.l.b16 %v655
    %v2513 = vunpack.c.h.b16 %v655
    %v2514 = vunpack.c.l.b16 %v656
    %v2515 = vunpack.c.h.b16 %v656
    %v2516 = vunpack.c.l.b16 %v657
    %v2517 = vunpack.c.h.b16 %v657
    %v2518 = vunpack.c.l.b16 %v658
    %v2519 = vunpack.c.h.b16 %v658
    %v2520 = vunpack.c.l.b16 %v659
    %v2521 = vunpack.c.h.b16 %v659
    %v2522 = vunpack.c.l.b16 %v660
    %v2523 = vunpack.c.h.b16 %v660
    %v2524 = vunpack.c.l.b16 %v661
    %v2525 = vunpack.c.h.b16 %v661
    %v2526 = vunpack.c.l.b16 %v662
    %v2527 = vunpack.c.h.b16 %v662
    %v2528 = vunpack.c.l.b16 %v663
    %v2529 = vunpack.c.h.b16 %v663
    %v2530 = vunpack.c.l.b16 %v664
    %v2531 = vunpack.c.h.b16 %v664
    %v2532 = vunpack.c.l.b16 %v665
    %v2533 = vunpack.c.h.b16 %v665
    %v2534 = vunpack.c.l.b16 %v666
    %v2535 = vunpack.c.h.b16 %v666
    %v2536 = vunpack.c.l.b16 %v667
    %v2537 = vunpack.c.h.b16 %v667
    %v2538 = vunpack.c.l.b16 %v668
    %v2539 = vunpack.c.h.b16 %v668
    %v2540 = vunpack.c.l.b16 %v669
    %v2541 = vunpack.c.h.b16 %v669
    %v2542 = vunpack.c.l.b16 %v670
    %v2543 = vunpack.c.h.b16 %v670
    %v2544 = vunpack.c.l.b16 %v671
    %v2545 = vunpack.c.h.b16 %v671
    %v2546 = vunpack.c.l.b16 %v672
    %v2547 = vunpack.c.h.b16 %v672
    %v2548 = vunpack.c.l.b16 %v673
    %v2549 = vunpack.c.h.b16 %v673
    %v2550 = vunpack.c.l.b16 %v674
    %v2551 = vunpack.c.h.b16 %v674
    %v2552 = vunpack.c.l.b16 %v675
    %v2553 = vunpack.c.h.b16 %v675
    %v2554 = vunpack.c.l.b16 %v676
    %v2555 = vunpack.c.h.b16 %v676
    %v2556 = vunpack.c.l.b16 %v677
    %v2557 = vunpack.c.h.b16 %v677
    %v2558 = vunpack.c.l.b16 %v678
    %v2559 = vunpack.c.h.b16 %v678
    %v2560 = vunpack.c.l.b16 %v679
    %v2561 = vunpack.c.h.b16 %v679
    %v2562 = vunpack.c.l.b16 %v680
    %v2563 = vunpack.c.h.b16 %v680
    %v2564 = vunpack.c.l.b16 %v681
    %v2565 = vunpack.c.h.b16 %v681
    %v2566 = vunpack.c.l.b16 %v682
    %v2567 = vunpack.c.h.b16 %v682
    %v2568 = vunpack.c.l.b16 %v683
    %v2569 = vunpack.c.h.b16 %v683
    %v2570 = vunpack.c.l.b16 %v684
    %v2571 = vunpack.c.h.b16 %v684
    %v2572 = vunpack.c.l.b16 %v685
    %v2573 = vunpack.c.h.b16 %v685
    %v2574 = vunpack.c.l.b16 %v686
    %v2575 = vunpack.c.h.b16 %v686
    %v2576 = vunpack.c.l.b16 %v687
    %v2577 = vunpack.c.h.b16 %v687
    %v2578 = vunpack.c.l.b16 %v688
    %v2579 = vunpack.c.h.b16 %v688
    %v2580 = vunpack.c.l.b16 %v689
    %v2581 = vunpack.c.h.b16 %v689
    %v2582 = vunpack.c.l.b16 %v690
    %v2583 = vunpack.c.h.b16 %v690
    %v2584 = vunpack.c.l.b16 %v691
    %v2585 = vunpack.c.h.b16 %v691
    %v2586 = vunpack.c.l.b16 %v692
    %v2587 = vunpack.c.h.b16 %v692
    %v2588 = vunpack.c.l.b16 %v693
    %v2589 = vunpack.c.h.b16 %v693
    %v2590 = vunpack.c.l.b16 %v694
    %v2591 = vunpack.c.h.b16 %v694
    %v2592 = vunpack.c.l.b16 %v695
    %v2593 = vunpack.c.h.b16 %v695
    %v2594 = vunpack.c.l.b16 %v696
    %v2595 = vunpack.c.h.b16 %v696
    %v2596 = vunpack.c.l.b16 %v697
    %v2597 = vunpack.c.h.b16 %v697
    %v2598 = vunpack.c.l.b16 %v698
    %v2599 = vunpack.c.h.b16 %v698
    %v2600 = vunpack.c.l.b16 %v699
    %v2601 = vunpack.c.h.b16 %v699
    %v2602 = vunpack.c.l.b16 %v700
    %v2603 = vunpack.c.h.b16 %v700
    %v2604 = vunpack.c.l.b16 %v701
    %v2605 = vunpack.c.h.b16 %v701
    %v2606 = vunpack.c.l.b16 %v702
    %v2607 = vunpack.c.h.b16 %v702
    %v2608 = vunpack.c.l.b16 %v703
    %v2609 = vunpack.c.h.b16 %v703
    %v2610 = vunpack.c.l.b16 %v704
    %v2611 = vunpack.c.h.b16 %v704
    %v2612 = vunpack.c.l.b16 %v705
    %v2613 = vunpack.c.h.b16 %v705
    %v2614 = vunpack.c.l.b16 %v706
    %v2615 = vunpack.c.h.b16 %v706
    %v2616 = vunpack.c.l.b16 %v707
    %v2617 = vunpack.c.h.b16 %v707
    %v2618 = vunpack.c.l.b16 %v708
    %v2619 = vunpack.c.h.b16 %v708
    %v2620 = vunpack.c.l.b16 %v709
    %v2621 = vunpack.c.h.b16 %v709
    %v2622 = vunpack.c.l.b16 %v710
    %v2623 = vunpack.c.h.b16 %v710
    %v2624 = vunpack.c.l.b16 %v711
    %v2625 = vunpack.c.h.b16 %v711
    %v2626 = vunpack.c.l.b16 %v712
    %v2627 = vunpack.c.h.b16 %v712
    %v2628 = vunpack.c.l.b16 %v713
    %v2629 = vunpack.c.h.b16 %v713
    %v2630 = vunpack.c.l.b16 %v714
    %v2631 = vunpack.c.h.b16 %v714
    %v2632 = vunpack.c.l.b16 %v715
    %v2633 = vunpack.c.h.b16 %v715
    %v2634 = vunpack.c.l.b16 %v716
    %v2635 = vunpack.c.h.b16 %v716
    %v2636 = vunpack.c.l.b16 %v717
    %v2637 = vunpack.c.h.b16 %v717
    %v2638 = vunpack.c.l.b16 %v718
    %v2639 = vunpack.c.h.b16 %v718
    %v2640 = vunpack.c.l.b16 %v719
    %v2641 = vunpack.c.h.b16 %v719
    %v2642 = vunpack.c.l.b16 %v720
    %v2643 = vunpack.c.h.b16 %v720
    %v2644 = vunpack.c.l.b16 %v721
    %v2645 = vunpack.c.h.b16 %v721
    %v2646 = vunpack.c.l.b16 %v722
    %v2647 = vunpack.c.h.b16 %v722
    %v2648 = vunpack.c.l.b16 %v723
    %v2649 = vunpack.c.h.b16 %v723
    %v2650 = vpack.c.b16 %v1402, %v1394
    %v2651 = vpack.c.b16 %v1403, %v1395
    %v2652 = vpack.c.b16 %v1404, %v1396
    %v2653 = vpack.c.b16 %v1405, %v1397
    %v2654 = vpack.c.b16 %v1406, %v1398
    %v2655 = vpack.c.b16 %v1407, %v1399
    %v2656 = vpack.c.b16 %v1408, %v1400
    %v2657 = vpack.c.b16 %v1409, %v1401
    %v2658 = vpack.c.b16 %v1418, %v1410
    %v2659 = vpack.c.b16 %v1419, %v1411
    %v2660 = vpack.c.b16 %v1420, %v1412
    %v2661 = vpack.c.b16 %v1421, %v1413
    %v2662 = vpack.c.b16 %v1422, %v1414
    %v2663 = vpack.c.b16 %v1423, %v1415
    %v2664 = vpack.c.b16 %v1424, %v1416
    %v2665 = vpack.c.b16 %v1425, %v1417
    %v2666 = vpack.c.b16 %v1434, %v1426
    %v2667 = vpack.c.b16 %v1435, %v1427
    %v2668 = vpack.c.b16 %v1436, %v1428
    %v2669 = vpack.c.b16 %v1437, %v1429
    %v2670 = vpack.c.b16 %v1438, %v1430
    %v2671 = vpack.c.b16 %v1439, %v1431
    %v2672 = vpack.c.b16 %v1440, %v1432
    %v2673 = vpack.c.b16 %v1441, %v1433
    %v2674 = vpack.c.b16 %v1450, %v1442
    %v2675 = vpack.c.b16 %v1451, %v1443
    %v2676 = vpack.c.b16 %v1452, %v1444
    %v2677 = vpack.c.b16 %v1453, %v1445
    %v2678 = vpack.c.b16 %v1454, %v1446
    %v2679 = vpack.c.b16 %v1455, %v1447
    %v2680 = vpack.c.b16 %v1456, %v1448
    %v2681 = vpack.c.b16 %v1457, %v1449
    %v2682 = vpack.c.b16 %v1466, %v1458
    %v2683 = vpack.c.b16 %v1467, %v1459
    %v2684 = vpack.c.b16 %v1468, %v1460
    %v2685 = vpack.c.b16 %v1469, %v1461
    %v2686 = vpack.c.b16 %v1470, %v1462
    %v2687 = vpack.c.b16 %v1471, %v1463
    %v2688 = vpack.c.b16 %v1472, %v1464
    %v2689 = vpack.c.b16 %v1473, %v1465
    %v2690 = vpack.c.b16 %v1482, %v1474
    %v2691 = vpack.c.b16 %v1483, %v1475
    %v2692 = vpack.c.b16 %v1484, %v1476
    %v2693 = vpack.c.b16 %v1485, %v1477
    %v2694 = vpack.c.b16 %v1486, %v1478
    %v2695 = vpack.c.b16 %v1487, %v1479
    %v2696 = vpack.c.b16 %v1488, %v1480
    %v2697 = vpack.c.b16 %v1489, %v1481
    %v2698 = vpack.c.b16 %v1498, %v1490
    %v2699 = vpack.c.b16 %v1499, %v1491
    %v2700 = vpack.c.b16 %v1500, %v1492
    %v2701 = vpack.c.b16 %v1501, %v1493
    %v2702 = vpack.c.b16 %v1502, %v1494
    %v2703 = vpack.c.b16 %v1503, %v1495
    %v2704 = vpack.c.b16 %v1504, %v1496
    %v2705 = vpack.c.b16 %v1505, %v1497
    %v2706 = vpack.c.b16 %v1514, %v1506
    %v2707 = vpack.c.b16 %v1515, %v1507
    %v2708 = vpack.c.b16 %v1516, %v1508
    %v2709 = vpack.c.b16 %v1517, %v1509
    %v2710 = vpack.c.b16 %v1518, %v1510
    %v2711 = vpack.c.b16 %v1519, %v1511
    %v2712 = vpack.c.b16 %v1520, %v1512
    %v2713 = vpack.c.b16 %v1521, %v1513
    %v2714 = vpack.c.b16 %v1530, %v1522
    %v2715 = vpack.c.b16 %v1531, %v1523
    %v2716 = vpack.c.b16 %v1532, %v1524
    %v2717 = vpack.c.b16 %v1533, %v1525
    %v2718 = vpack.c.b16 %v1534, %v1526
    %v2719 = vpack.c.b16 %v1535, %v1527
    %v2720 = vpack.c.b16 %v1536, %v1528
    %v2721 = vpack.c.b16 %v1537, %v1529
    %v2722 = vpack.c.b16 %v1546, %v1538
    %v2723 = vpack.c.b16 %v1547, %v1539
    %v2724 = vpack.c.b16 %v1548, %v1540
    %v2725 = vpack.c.b16 %v1549, %v1541
    %v2726 = vpack.c.b16 %v1550, %v1542
    %v2727 = vpack.c.b16 %v1551, %v1543
    %v2728 = vpack.c.b16 %v1552, %v1544
    %v2729 = vpack.c.b16 %v1553, %v1545
    %v2730 = vpack.c.b16 %v1562, %v1554
    %v2731 = vpack.c.b16 %v1563, %v1555
    %v2732 = vpack.c.b16 %v1564, %v1556
    %v2733 = vpack.c.b16 %v1565, %v1557
    %v2734 = vpack.c.b16 %v1566, %v1558
    %v2735 = vpack.c.b16 %v1567, %v1559
    %v2736 = vpack.c.b16 %v1568, %v1560
    %v2737 = vpack.c.b16 %v1569, %v1561
    %v2738 = vpack.c.b16 %v1578, %v1570
    %v2739 = vpack.c.b16 %v1579, %v1571
    %v2740 = vpack.c.b16 %v1580, %v1572
    %v2741 = vpack.c.b16 %v1581, %v1573
    %v2742 = vpack.c.b16 %v1582, %v1574
    %v2743 = vpack.c.b16 %v1583, %v1575
    %v2744 = vpack.c.b16 %v1584, %v1576
    %v2745 = vpack.c.b16 %v1585, %v1577
    %v2746 = vpack.c.b16 %v1594, %v1586
    %v2747 = vpack.c.b16 %v1595, %v1587
    %v2748 = vpack.c.b16 %v1596, %v1588
    %v2749 = vpack.c.b16 %v1597, %v1589
    %v2750 = vpack.c.b16 %v1598, %v1590
    %v2751 = vpack.c.b16 %v1599, %v1591
    %v2752 = vpack.c.b16 %v1600, %v1592
    %v2753 = vpack.c.b16 %v1601, %v1593
    %v2754 = vpack.c.b16 %v1610, %v1602
    %v2755 = vpack.c.b16 %v1611, %v1603
    %v2756 = vpack.c.b16 %v1612, %v1604
    %v2757 = vpack.c.b16 %v1613, %v1605
    %v2758 = vpack.c.b16 %v1614, %v1606
    %v2759 = vpack.c.b16 %v1615, %v1607
    %v2760 = vpack.c.b16 %v1616, %v1608
    %v2761 = vpack.c.b16 %v1617, %v1609
    %v2762 = vpack.c.b16 %v1626, %v1618
    %v2763 = vpack.c.b16 %v1627, %v1619
    %v2764 = vpack.c.b16 %v1628, %v1620
    %v2765 = vpack.c.b16 %v1629, %v1621
    %v2766 = vpack.c.b16 %v1630, %v1622
    %v2767 = vpack.c.b16 %v1631, %v1623
    %v2768 = vpack.c.b16 %v1632, %v1624
    %v2769 = vpack.c.b16 %v1633, %v1625
    %v2770 = vpack.c.b16 %v1642, %v1634
    %v2771 = vpack.c.b16 %v1643, %v1635
    %v2772 = vpack.c.b16 %v1644, %v1636
    %v2773 = vpack.c.b16 %v1645, %v1637
    %v2774 = vpack.c.b16 %v1646, %v1638
    %v2775 = vpack.c.b16 %v1647, %v1639
    %v2776 = vpack.c.b16 %v1648, %v1640
    %v2777 = vpack.c.b16 %v1649, %v1641
    %v2778 = vpack.c.b16 %v1658, %v1650
    %v2779 = vpack.c.b16 %v1659, %v1651
    %v2780 = vpack.c.b16 %v1660, %v1652
    %v2781 = vpack.c.b16 %v1661, %v1653
    %v2782 = vpack.c.b16 %v1662, %v1654
    %v2783 = vpack.c.b16 %v1663, %v1655
    %v2784 = vpack.c.b16 %v1664, %v1656
    %v2785 = vpack.c.b16 %v1665, %v1657
    %v2786 = vpack.c.b16 %v1674, %v1666
    %v2787 = vpack.c.b16 %v1675, %v1667
    %v2788 = vpack.c.b16 %v1676, %v1668
    %v2789 = vpack.c.b16 %v1677, %v1669
    %v2790 = vpack.c.b16 %v1678, %v1670
    %v2791 = vpack.c.b16 %v1679, %v1671
    %v2792 = vpack.c.b16 %v1680, %v1672
    %v2793 = vpack.c.b16 %v1681, %v1673
    %v2794 = vpack.c.b16 %v1690, %v1682
    %v2795 = vpack.c.b16 %v1691, %v1683
    %v2796 = vpack.c.b16 %v1692, %v1684
    %v2797 = vpack.c.b16 %v1693, %v1685
    %v2798 = vpack.c.b16 %v1694, %v1686
    %v2799 = vpack.c.b16 %v1695, %v1687
    %v2800 = vpack.c.b16 %v1696, %v1688
    %v2801 = vpack.c.b16 %v1697, %v1689
    %v2802 = vpack.c.b16 %v1706, %v1698
    %v2803 = vpack.c.b16 %v1707, %v1699
    %v2804 = vpack.c.b16 %v1708, %v1700
    %v2805 = vpack.c.b16 %v1709, %v1701
    %v2806 = vpack.c.b16 %v1710, %v1702
    %v2807 = vpack.c.b16 %v1711, %v1703
    %v2808 = vpack.c.b16 %v1712, %v1704
    %v2809 = vpack.c.b16 %v1713, %v1705
    %v2810 = vpack.c.b16 %v1722, %v1714
    %v2811 = vpack.c.b16 %v1723, %v1715
    %v2812 = vpack.c.b16 %v1724, %v1716
    %v2813 = vpack.c.b16 %v1725, %v1717
    %v2814 = vpack.c.b16 %v1726, %v1718
    %v2815 = vpack.c.b16 %v1727, %v1719
    %v2816 = vpack.c.b16 %v1728, %v1720
    %v2817 = vpack.c.b16 %v1729, %v1721
    %v2818 = vpack.c.b16 %v1738, %v1730
    %v2819 = vpack.c.b16 %v1739, %v1731
    %v2820 = vpack.c.b16 %v1740, %v1732
    %v2821 = vpack.c.b16 %v1741, %v1733
    %v2822 = vpack.c.b16 %v1742, %v1734
    %v2823 = vpack.c.b16 %v1743, %v1735
    %v2824 = vpack.c.b16 %v1744, %v1736
    %v2825 = vpack.c.b16 %v1745, %v1737
    %v2826 = vpack.c.b16 %v1754, %v1746
    %v2827 = vpack.c.b16 %v1755, %v1747
    %v2828 = vpack.c.b16 %v1756, %v1748
    %v2829 = vpack.c.b16 %v1757, %v1749
    %v2830 = vpack.c.b16 %v1758, %v1750
    %v2831 = vpack.c.b16 %v1759, %v1751
    %v2832 = vpack.c.b16 %v1760, %v1752
    %v2833 = vpack.c.b16 %v1761, %v1753
    %v2834 = vpack.c.b16 %v1770, %v1762
    %v2835 = vpack.c.b16 %v1771, %v1763
    %v2836 = vpack.c.b16 %v1772, %v1764
    %v2837 = vpack.c.b16 %v1773, %v1765
    %v2838 = vpack.c.b16 %v1774, %v1766
    %v2839 = vpack.c.b16 %v1775, %v1767
    %v2840 = vpack.c.b16 %v1776, %v1768
    %v2841 = vpack.c.b16 %v1777, %v1769
    %v2842 = vpack.c.b16 %v1786, %v1778
    %v2843 = vpack.c.b16 %v1787, %v1779
    %v2844 = vpack.c.b16 %v1788, %v1780
    %v2845 = vpack.c.b16 %v1789, %v1781
    %v2846 = vpack.c.b16 %v1790, %v1782
    %v2847 = vpack.c.b16 %v1791, %v1783
    %v2848 = vpack.c.b16 %v1792, %v1784
    %v2849 = vpack.c.b16 %v1793, %v1785
    %v2850 = vpack.c.b16 %v1802, %v1794
    %v2851 = vpack.c.b16 %v1803, %v1795
    %v2852 = vpack.c.b16 %v1804, %v1796
    %v2853 = vpack.c.b16 %v1805, %v1797
    %v2854 = vpack.c.b16 %v1806, %v1798
    %v2855 = vpack.c.b16 %v1807, %v1799
    %v2856 = vpack.c.b16 %v1808, %v1800
    %v2857 = vpack.c.b16 %v1809, %v1801
    %v2858 = vpack.c.b16 %v1818, %v1810
    %v2859 = vpack.c.b16 %v1819, %v1811
    %v2860 = vpack.c.b16 %v1820, %v1812
    %v2861 = vpack.c.b16 %v1821, %v1813
    %v2862 = vpack.c.b16 %v1822, %v1814
    %v2863 = vpack.c.b16 %v1823, %v1815
    %v2864 = vpack.c.b16 %v1824, %v1816
    %v2865 = vpack.c.b16 %v1825, %v1817
    %v2866 = vpack.c.b16 %v1834, %v1826
    %v2867 = vpack.c.b16 %v1835, %v1827
    %v2868 = vpack.c.b16 %v1836, %v1828
    %v2869 = vpack.c.b16 %v1837, %v1829
    %v2870 = vpack.c.b16 %v1838, %v1830
    %v2871 = vpack.c.b16 %v1839, %v1831
    %v2872 = vpack.c.b16 %v1840, %v1832
    %v2873 = vpack.c.b16 %v1841, %v1833
    %v2874 = vpack.c.b16 %v1850, %v1842
    %v2875 = vpack.c.b16 %v1851, %v1843
    %v2876 = vpack.c.b16 %v1852, %v1844
    %v2877 = vpack.c.b16 %v1853, %v1845
    %v2878 = vpack.c.b16 %v1854, %v1846
    %v2879 = vpack.c.b16 %v1855, %v1847
    %v2880 = vpack.c.b16 %v1856, %v1848
    %v2881 = vpack.c.b16 %v1857, %v1849
    %v2882 = vpack.c.b16 %v1866, %v1858
    %v2883 = vpack.c.b16 %v1867, %v1859
    %v2884 = vpack.c.b16 %v1868, %v1860
    %v2885 = vpack.c.b16 %v1869, %v1861
    %v2886 = vpack.c.b16 %v1870, %v1862
    %v2887 = vpack.c.b16 %v1871, %v1863
    %v2888 = vpack.c.b16 %v1872, %v1864
    %v2889 = vpack.c.b16 %v1873, %v1865
    %v2890 = vpack.c.b16 %v1882, %v1874
    %v2891 = vpack.c.b16 %v1883, %v1875
    %v2892 = vpack.c.b16 %v1884, %v1876
    %v2893 = vpack.c.b16 %v1885, %v1877
    %v2894 = vpack.c.b16 %v1886, %v1878
    %v2895 = vpack.c.b16 %v1887, %v1879
    %v2896 = vpack.c.b16 %v1888, %v1880
    %v2897 = vpack.c.b16 %v1889, %v1881
    %v2898 = vpack.c.b16 %v1898, %v1890
    %v2899 = vpack.c.b16 %v1899, %v1891
    %v2900 = vpack.c.b16 %v1900, %v1892
    %v2901 = vpack.c.b16 %v1901, %v1893
    %v2902 = vpack.c.b16 %v1902, %v1894
    %v2903 = vpack.c.b16 %v1903, %v1895
    %v2904 = vpack.c.b16 %v1904, %v1896
    %v2905 = vpack.c.b16 %v1905, %v1897
    %v2906 = vpack.c.b16 %v1914, %v1906
    %v2907 = vpack.c.b16 %v1915, %v1907
    %v2908 = vpack.c.b16 %v1916, %v1908
    %v2909 = vpack.c.b16 %v1917, %v1909
    %v2910 = vpack.c.b16 %v1918, %v1910
    %v2911 = vpack.c.b16 %v1919, %v1911
    %v2912 = vpack.c.b16 %v1920, %v1912
    %v2913 = vpack.c.b16 %v1921, %v1913
    %v2914 = vpack.c.b16 %v1930, %v1922
    %v2915 = vpack.c.b16 %v1931, %v1923
    %v2916 = vpack.c.b16 %v1932, %v1924
    %v2917 = vpack.c.b16 %v1933, %v1925
    %v2918 = vpack.c.b16 %v1934, %v1926
    %v2919 = vpack.c.b16 %v1935, %v1927
    %v2920 = vpack.c.b16 %v1936, %v1928
    %v2921 = vpack.c.b16 %v1937, %v1929
    %v2922 = vpack.c.b16 %v1946, %v1938
    %v2923 = vpack.c.b16 %v1947, %v1939
    %v2924 = vpack.c.b16 %v1948, %v1940
    %v2925 = vpack.c.b16 %v1949, %v1941
    %v2926 = vpack.c.b16 %v1950, %v1942
    %v2927 = vpack.c.b16 %v1951, %v1943
    %v2928 = vpack.c.b16 %v1952, %v1944
    %v2929 = vpack.c.b16 %v1953, %v1945
    %v2930 = vpack.c.b16 %v1962, %v1954
    %v2931 = vpack.c.b16 %v1963, %v1955
    %v2932 = vpack.c.b16 %v1964, %v1956
    %v2933 = vpack.c.b16 %v1965, %v1957
    %v2934 = vpack.c.b16 %v1966, %v1958
    %v2935 = vpack.c.b16 %v1967, %v1959
    %v2936 = vpack.c.b16 %v1968, %v1960
    %v2937 = vpack.c.b16 %v1969, %v1961
    %v2938 = vpack.c.b16 %v1978, %v1970
    %v2939 = vpack.c.b16 %v1979, %v1971
    %v2940 = vpack.c.b16 %v1980, %v1972
    %v2941 = vpack.c.b16 %v1981, %v1973
    %v2942 = vpack.c.b16 %v1982, %v1974
    %v2943 = vpack.c.b16 %v1983, %v1975
    %v2944 = vpack.c.b16 %v1984, %v1976
    %v2945 = vpack.c.b16 %v1985, %v1977
    %v2946 = vpack.c.b16 %v1994, %v1986
    %v2947 = vpack.c.b16 %v1995, %v1987
    %v2948 = vpack.c.b16 %v1996, %v1988
    %v2949 = vpack.c.b16 %v1997, %v1989
    %v2950 = vpack.c.b16 %v1998, %v1990
    %v2951 = vpack.c.b16 %v1999, %v1991
    %v2952 = vpack.c.b16 %v2000, %v1992
    %v2953 = vpack.c.b16 %v2001, %v1993
    %v2954 = vpack.c.b16 %v2010, %v2002
    %v2955 = vpack.c.b16 %v2011, %v2003
    %v2956 = vpack.c.b16 %v2012, %v2004
    %v2957 = vpack.c.b16 %v2013, %v2005
    %v2958 = vpack.c.b16 %v2014, %v2006
    %v2959 = vpack.c.b16 %v2015, %v2007
    %v2960 = vpack.c.b16 %v2016, %v2008
    %v2961 = vpack.c.b16 %v2017, %v2009
    %v2962 = vpack.c.b16 %v2026, %v2018
    %v2963 = vpack.c.b16 %v2027, %v2019
    %v2964 = vpack.c.b16 %v2028, %v2020
    %v2965 = vpack.c.b16 %v2029, %v2021
    %v2966 = vpack.c.b16 %v2030, %v2022
    %v2967 = vpack.c.b16 %v2031, %v2023
    %v2968 = vpack.c.b16 %v2032, %v2024
    %v2969 = vpack.c.b16 %v2033, %v2025
    %v2970 = vpack.c.b16 %v2042, %v2034
    %v2971 = vpack.c.b16 %v2043, %v2035
    %v2972 = vpack.c.b16 %v2044, %v2036
    %v2973 = vpack.c.b16 %v2045, %v2037
    %v2974 = vpack.c.b16 %v2046, %v2038
    %v2975 = vpack.c.b16 %v2047, %v2039
    %v2976 = vpack.c.b16 %v2048, %v2040
    %v2977 = vpack.c.b16 %v2049, %v2041
    %v2978 = vpack.c.b16 %v2058, %v2050
    %v2979 = vpack.c.b16 %v2059, %v2051
    %v2980 = vpack.c.b16 %v2060, %v2052
    %v2981 = vpack.c.b16 %v2061, %v2053
    %v2982 = vpack.c.b16 %v2062, %v2054
    %v2983 = vpack.c.b16 %v2063, %v2055
    %v2984 = vpack.c.b16 %v2064, %v2056
    %v2985 = vpack.c.b16 %v2065, %v2057
    %v2986 = vpack.c.b16 %v2074, %v2066
    %v2987 = vpack.c.b16 %v2075, %v2067
    %v2988 = vpack.c.b16 %v2076, %v2068
    %v2989 = vpack.c.b16 %v2077, %v2069
    %v2990 = vpack.c.b16 %v2078, %v2070
    %v2991 = vpack.c.b16 %v2079, %v2071
    %v2992 = vpack.c.b16 %v2080, %v2072
    %v2993 = vpack.c.b16 %v2081, %v2073
    %v2994 = vpack.c.b16 %v2090, %v2082
    %v2995 = vpack.c.b16 %v2091, %v2083
    %v2996 = vpack.c.b16 %v2092, %v2084
    %v2997 = vpack.c.b16 %v2093, %v2085
    %v2998 = vpack.c.b16 %v2094, %v2086
    %v2999 = vpack.c.b16 %v2095, %v2087
    %v3000 = vpack.c.b16 %v2096, %v2088
    %v3001 = vpack.c.b16 %v2097, %v2089
    %v3002 = vpack.c.b16 %v2106, %v2098
    %v3003 = vpack.c.b16 %v2107, %v2099
    %v3004 = vpack.c.b16 %v2108, %v2100
    %v3005 = vpack.c.b16 %v2109, %v2101
    %v3006 = vpack.c.b16 %v2110, %v2102
    %v3007 = vpack.c.b16 %v2111, %v2103
    %v3008 = vpack.c.b16 %v2112, %v2104
    %v3009 = vpack.c.b16 %v2113, %v2105
    %v3010 = vpack.c.b16 %v2122, %v2114
    %v3011 = vpack.c.b16 %v2123, %v2115
    %v3012 = vpack.c.b16 %v2124, %v2116
    %v3013 = vpack.c.b16 %v2125, %v2117
    %v3014 = vpack.c.b16 %v2126, %v2118
    %v3015 = vpack.c.b16 %v2127, %v2119
    %v3016 = vpack.c.b16 %v2128, %v2120
    %v3017 = vpack.c.b16 %v2129, %v2121
    %v3018 = vpack.c.b16 %v2138, %v2130
    %v3019 = vpack.c.b16 %v2139, %v2131
    %v3020 = vpack.c.b16 %v2140, %v2132
    %v3021 = vpack.c.b16 %v2141, %v2133
    %v3022 = vpack.c.b16 %v2142, %v2134
    %v3023 = vpack.c.b16 %v2143, %v2135
    %v3024 = vpack.c.b16 %v2144, %v2136
    %v3025 = vpack.c.b16 %v2145, %v2137
    %v3026 = vpack.c.b16 %v2154, %v2146
    %v3027 = vpack.c.b16 %v2155, %v2147
    %v3028 = vpack.c.b16 %v2156, %v2148
    %v3029 = vpack.c.b16 %v2157, %v2149
    %v3030 = vpack.c.b16 %v2158, %v2150
    %v3031 = vpack.c.b16 %v2159, %v2151
    %v3032 = vpack.c.b16 %v2160, %v2152
    %v3033 = vpack.c.b16 %v2161, %v2153
    %v3034 = vpack.c.b16 %v2170, %v2162
    %v3035 = vpack.c.b16 %v2171, %v2163
    %v3036 = vpack.c.b16 %v2172, %v2164
    %v3037 = vpack.c.b16 %v2173, %v2165
    %v3038 = vpack.c.b16 %v2174, %v2166
    %v3039 = vpack.c.b16 %v2175, %v2167
    %v3040 = vpack.c.b16 %v2176, %v2168
    %v3041 = vpack.c.b16 %v2177, %v2169
    %v3042 = vpack.c.b16 %v2186, %v2178
    %v3043 = vpack.c.b16 %v2187, %v2179
    %v3044 = vpack.c.b16 %v2188, %v2180
    %v3045 = vpack.c.b16 %v2189, %v2181
    %v3046 = vpack.c.b16 %v2190, %v2182
    %v3047 = vpack.c.b16 %v2191, %v2183
    %v3048 = vpack.c.b16 %v2192, %v2184
    %v3049 = vpack.c.b16 %v2193, %v2185
    %v3050 = vpack.c.b16 %v2202, %v2194
    %v3051 = vpack.c.b16 %v2203, %v2195
    %v3052 = vpack.c.b16 %v2204, %v2196
    %v3053 = vpack.c.b16 %v2205, %v2197
    %v3054 = vpack.c.b16 %v2206, %v2198
    %v3055 = vpack.c.b16 %v2207, %v2199
    %v3056 = vpack.c.b16 %v2208, %v2200
    %v3057 = vpack.c.b16 %v2209, %v2201
    %v3058 = vpack.c.b16 %v2218, %v2210
    %v3059 = vpack.c.b16 %v2219, %v2211
    %v3060 = vpack.c.b16 %v2220, %v2212
    %v3061 = vpack.c.b16 %v2221, %v2213
    %v3062 = vpack.c.b16 %v2222, %v2214
    %v3063 = vpack.c.b16 %v2223, %v2215
    %v3064 = vpack.c.b16 %v2224, %v2216
    %v3065 = vpack.c.b16 %v2225, %v2217
    %v3066 = vpack.c.b16 %v2234, %v2226
    %v3067 = vpack.c.b16 %v2235, %v2227
    %v3068 = vpack.c.b16 %v2236, %v2228
    %v3069 = vpack.c.b16 %v2237, %v2229
    %v3070 = vpack.c.b16 %v2238, %v2230
    %v3071 = vpack.c.b16 %v2239, %v2231
    %v3072 = vpack.c.b16 %v2240, %v2232
    %v3073 = vpack.c.b16 %v2241, %v2233
    %v3074 = vpack.c.b16 %v2250, %v2242
    %v3075 = vpack.c.b16 %v2251, %v2243
    %v3076 = vpack.c.b16 %v2252, %v2244
    %v3077 = vpack.c.b16 %v2253, %v2245
    %v3078 = vpack.c.b16 %v2254, %v2246
    %v3079 = vpack.c.b16 %v2255, %v2247
    %v3080 = vpack.c.b16 %v2256, %v2248
    %v3081 = vpack.c.b16 %v2257, %v2249
    %v3082 = vpack.c.b16 %v2266, %v2258
    %v3083 = vpack.c.b16 %v2267, %v2259
    %v3084 = vpack.c.b16 %v2268, %v2260
    %v3085 = vpack.c.b16 %v2269, %v2261
    %v3086 = vpack.c.b16 %v2270, %v2262
    %v3087 = vpack.c.b16 %v2271, %v2263
    %v3088 = vpack.c.b16 %v2272, %v2264
    %v3089 = vpack.c.b16 %v2273, %v2265
    %v3090 = vpack.c.b16 %v2282, %v2274
    %v3091 = vpack.c.b16 %v2283, %v2275
    %v3092 = vpack.c.b16 %v2284, %v2276
    %v3093 = vpack.c.b16 %v2285, %v2277
    %v3094 = vpack.c.b16 %v2286, %v2278
    %v3095 = vpack.c.b16 %v2287, %v2279
    %v3096 = vpack.c.b16 %v2288, %v2280
    %v3097 = vpack.c.b16 %v2289, %v2281
    %v3098 = vpack.c.b16 %v2298, %v2290
    %v3099 = vpack.c.b16 %v2299, %v2291
    %v3100 = vpack.c.b16 %v2300, %v2292
    %v3101 = vpack.c.b16 %v2301, %v2293
    %v3102 = vpack.c.b16 %v2302, %v2294
    %v3103 = vpack.c.b16 %v2303, %v2295
    %v3104 = vpack.c.b16 %v2304, %v2296
    %v3105 = vpack.c.b16 %v2305, %v2297
    %v3106 = vpack.c.b16 %v2314, %v2306
    %v3107 = vpack.c.b16 %v2315, %v2307
    %v3108 = vpack.c.b16 %v2316, %v2308
    %v3109 = vpack.c.b16 %v2317, %v2309
    %v3110 = vpack.c.b16 %v2318, %v2310
    %v3111 = vpack.c.b16 %v2319, %v2311
    %v3112 = vpack.c.b16 %v2320, %v2312
    %v3113 = vpack.c.b16 %v2321, %v2313
    %v3114 = vpack.c.b16 %v2330, %v2322
    %v3115 = vpack.c.b16 %v2331, %v2323
    %v3116 = vpack.c.b16 %v2332, %v2324
    %v3117 = vpack.c.b16 %v2333, %v2325
    %v3118 = vpack.c.b16 %v2334, %v2326
    %v3119 = vpack.c.b16 %v2335, %v2327
    %v3120 = vpack.c.b16 %v2336, %v2328
    %v3121 = vpack.c.b16 %v2337, %v2329
    %v3122 = vpack.c.b16 %v2346, %v2338
    %v3123 = vpack.c.b16 %v2347, %v2339
    %v3124 = vpack.c.b16 %v2348, %v2340
    %v3125 = vpack.c.b16 %v2349, %v2341
    %v3126 = vpack.c.b16 %v2350, %v2342
    %v3127 = vpack.c.b16 %v2351, %v2343
    %v3128 = vpack.c.b16 %v2352, %v2344
    %v3129 = vpack.c.b16 %v2353, %v2345
    %v3130 = vpack.c.b16 %v2362, %v2354
    %v3131 = vpack.c.b16 %v2363, %v2355
    %v3132 = vpack.c.b16 %v2364, %v2356
    %v3133 = vpack.c.b16 %v2365, %v2357
    %v3134 = vpack.c.b16 %v2366, %v2358
    %v3135 = vpack.c.b16 %v2367, %v2359
    %v3136 = vpack.c.b16 %v2368, %v2360
    %v3137 = vpack.c.b16 %v2369, %v2361
    %v3138 = vpack.c.b16 %v2378, %v2370
    %v3139 = vpack.c.b16 %v2379, %v2371
    %v3140 = vpack.c.b16 %v2380, %v2372
    %v3141 = vpack.c.b16 %v2381, %v2373
    %v3142 = vpack.c.b16 %v2382, %v2374
    %v3143 = vpack.c.b16 %v2383, %v2375
    %v3144 = vpack.c.b16 %v2384, %v2376
    %v3145 = vpack.c.b16 %v2385, %v2377
    %v3146 = vpack.c.b16 %v2394, %v2386
    %v3147 = vpack.c.b16 %v2395, %v2387
    %v3148 = vpack.c.b16 %v2396, %v2388
    %v3149 = vpack.c.b16 %v2397, %v2389
    %v3150 = vpack.c.b16 %v2398, %v2390
    %v3151 = vpack.c.b16 %v2399, %v2391
    %v3152 = vpack.c.b16 %v2400, %v2392
    %v3153 = vpack.c.b16 %v2401, %v2393
    %v3154 = vpack.c.b16 %v2410, %v2402
    %v3155 = vpack.c.b16 %v2411, %v2403
    %v3156 = vpack.c.b16 %v2412, %v2404
    %v3157 = vpack.c.b16 %v2413, %v2405
    %v3158 = vpack.c.b16 %v2414, %v2406
    %v3159 = vpack.c.b16 %v2415, %v2407
    %v3160 = vpack.c.b16 %v2416, %v2408
    %v3161 = vpack.c.b16 %v2417, %v2409
    %v3162 = vpack.c.b16 %v2426, %v2418
    %v3163 = vpack.c.b16 %v2427, %v2419
    %v3164 = vpack.c.b16 %v2428, %v2420
    %v3165 = vpack.c.b16 %v2429, %v2421
    %v3166 = vpack.c.b16 %v2430, %v2422
    %v3167 = vpack.c.b16 %v2431, %v2423
    %v3168 = vpack.c.b16 %v2432, %v2424
    %v3169 = vpack.c.b16 %v2433, %v2425
    %v3170 = vpack.c.b16 %v2442, %v2434
    %v3171 = vpack.c.b16 %v2443, %v2435
    %v3172 = vpack.c.b16 %v2444, %v2436
    %v3173 = vpack.c.b16 %v2445, %v2437
    %v3174 = vpack.c.b16 %v2446, %v2438
    %v3175 = vpack.c.b16 %v2447, %v2439
    %v3176 = vpack.c.b16 %v2448, %v2440
    %v3177 = vpack.c.b16 %v2449, %v2441
    %v3178 = vpack.c.b16 %v2458, %v2450
    %v3179 = vpack.c.b16 %v2459, %v2451
    %v3180 = vpack.c.b16 %v2460, %v2452
    %v3181 = vpack.c.b16 %v2461, %v2453
    %v3182 = vpack.c.b16 %v2462, %v2454
    %v3183 = vpack.c.b16 %v2463, %v2455
    %v3184 = vpack.c.b16 %v2464, %v2456
    %v3185 = vpack.c.b16 %v2465, %v2457
    %v3186 = vpack.c.b16 %v2474, %v2466
    %v3187 = vpack.c.b16 %v2475, %v2467
    %v3188 = vpack.c.b16 %v2476, %v2468
    %v3189 = vpack.c.b16 %v2477, %v2469
    %v3190 = vpack.c.b16 %v2478, %v2470
    %v3191 = vpack.c.b16 %v2479, %v2471
    %v3192 = vpack.c.b16 %v2480, %v2472
    %v3193 = vpack.c.b16 %v2481, %v2473
    %v3194 = vpack.c.b16 %v2490, %v2482
    %v3195 = vpack.c.b16 %v2491, %v2483
    %v3196 = vpack.c.b16 %v2492, %v2484
    %v3197 = vpack.c.b16 %v2493, %v2485
    %v3198 = vpack.c.b16 %v2494, %v2486
    %v3199 = vpack.c.b16 %v2495, %v2487
    %v3200 = vpack.c.b16 %v2496, %v2488
    %v3201 = vpack.c.b16 %v2497, %v2489
    %v3202 = vpack.c.b16 %v2506, %v2498
    %v3203 = vpack.c.b16 %v2507, %v2499
    %v3204 = vpack.c.b16 %v2508, %v2500
    %v3205 = vpack.c.b16 %v2509, %v2501
    %v3206 = vpack.c.b16 %v2510, %v2502
    %v3207 = vpack.c.b16 %v2511, %v2503
    %v3208 = vpack.c.b16 %v2512, %v2504
    %v3209 = vpack.c.b16 %v2513, %v2505
    %v3210 = vpack.c.b16 %v2522, %v2514
    %v3211 = vpack.c.b16 %v2523, %v2515
    %v3212 = vpack.c.b16 %v2524, %v2516
    %v3213 = vpack.c.b16 %v2525, %v2517
    %v3214 = vpack.c.b16 %v2526, %v2518
    %v3215 = vpack.c.b16 %v2527, %v2519
    %v3216 = vpack.c.b16 %v2528, %v2520
    %v3217 = vpack.c.b16 %v2529, %v2521
    %v3218 = vpack.c.b16 %v2538, %v2530
    %v3219 = vpack.c.b16 %v2539, %v2531
    %v3220 = vpack.c.b16 %v2540, %v2532
    %v3221 = vpack.c.b16 %v2541, %v2533
    %v3222 = vpack.c.b16 %v2542, %v2534
    %v3223 = vpack.c.b16 %v2543, %v2535
    %v3224 = vpack.c.b16 %v2544, %v2536
    %v3225 = vpack.c.b16 %v2545, %v2537
    %v3226 = vpack.c.b16 %v2554, %v2546
    %v3227 = vpack.c.b16 %v2555, %v2547
    %v3228 = vpack.c.b16 %v2556, %v2548
    %v3229 = vpack.c.b16 %v2557, %v2549
    %v3230 = vpack.c.b16 %v2558, %v2550
    %v3231 = vpack.c.b16 %v2559, %v2551
    %v3232 = vpack.c.b16 %v2560, %v2552
    %v3233 = vpack.c.b16 %v2561, %v2553
    %v3234 = vpack.c.b16 %v2570, %v2562
    %v3235 = vpack.c.b16 %v2571, %v2563
    %v3236 = vpack.c.b16 %v2572, %v2564
    %v3237 = vpack.c.b16 %v2573, %v2565
    %v3238 = vpack.c.b16 %v2574, %v2566
    %v3239 = vpack.c.b16 %v2575, %v2567
    %v3240 = vpack.c.b16 %v2576, %v2568
    %v3241 = vpack.c.b16 %v2577, %v2569
    %v3242 = vpack.c.b16 %v2586, %v2578
    %v3243 = vpack.c.b16 %v2587, %v2579
    %v3244 = vpack.c.b16 %v2588, %v2580
    %v3245 = vpack.c.b16 %v2589, %v2581
    %v3246 = vpack.c.b16 %v2590, %v2582
    %v3247 = vpack.c.b16 %v2591, %v2583
    %v3248 = vpack.c.b16 %v2592, %v2584
    %v3249 = vpack.c.b16 %v2593, %v2585
    %v3250 = vpack.c.b16 %v2602, %v2594
    %v3251 = vpack.c.b16 %v2603, %v2595
    %v3252 = vpack.c.b16 %v2604, %v2596
    %v3253 = vpack.c.b16 %v2605, %v2597
    %v3254 = vpack.c.b16 %v2606, %v2598
    %v3255 = vpack.c.b16 %v2607, %v2599
    %v3256 = vpack.c.b16 %v2608, %v2600
    %v3257 = vpack.c.b16 %v2609, %v2601
    %v3258 = vpack.c.b16 %v2618, %v2610
    %v3259 = vpack.c.b16 %v2619, %v2611
    %v3260 = vpack.c.b16 %v2620, %v2612
    %v3261 = vpack.c.b16 %v2621, %v2613
    %v3262 = vpack.c.b16 %v2622, %v2614
    %v3263 = vpack.c.b16 %v2623, %v2615
    %v3264 = vpack.c.b16 %v2624, %v2616
    %v3265 = vpack.c.b16 %v2625, %v2617
    %v3266 = vpack.c.b16 %v2634, %v2626
    %v3267 = vpack.c.b16 %v2635, %v2627
    %v3268 = vpack.c.b16 %v2636, %v2628
    %v3269 = vpack.c.b16 %v2637, %v2629
    %v3270 = vpack.c.b16 %v2638, %v2630
    %v3271 = vpack.c.b16 %v2639, %v2631
    %v3272 = vpack.c.b16 %v2640, %v2632
    %v3273 = vpack.c.b16 %v2641, %v2633
    %v3274 = vpack.c.b16 %v2642, %v2642
    %v3275 = vpack.c.b16 %v2643, %v2643
    %v3276 = vpack.c.b16 %v2644, %v2644
    %v3277 = vpack.c.b16 %v2645, %v2645
    %v3278 = vpack.c.b16 %v2646, %v2646
    %v3279 = vpack.c.b16 %v2647, %v2647
    %v3280 = vpack.c.b16 %v2648, %v2648
    %v3281 = vpack.c.b16 %v2649, %v2649
    %vm3906 = vcmask 801792
    %v3908 = vsel %vm3906, %v95, 0
    %vm3910 = vcmask 1040384
    %v3912 = vsel %vm3910, %v3274, 0
    %v3915 = vsel %vm3910, %v3275, 0
    %v3918 = vsel %vm3910, %v3276, 0
    %v3921 = vsel %vm3910, %v3277, 0
    %v3924 = vsel %vm3910, %v3278, 0
    %v3927 = vsel %vm3910, %v3279, 0
    %v3930 = vsel %vm3910, %v3280, 0
    %v3933 = vsel %vm3910, %v3281, 0
    %3935 = vmatprep.subr.bf16.mxu0 %v2651
    %3936 = vmatpush1.bf16.msra.mxu0 %v2650
    %3937 = vmatprep.subr.bf16.mxu0 %v2659
    %3938 = vmatpush1.bf16.msra.mxu0 %v2658
    %3939 = vmatprep.subr.bf16.mxu0 %v2667
    %3940 = vmatpush1.bf16.msra.mxu0 %v2666
    %3941 = vmatprep.subr.bf16.mxu0 %v2675
    %3942 = vmatpush1.bf16.msra.mxu0 %v2674
    %3943 = vmatprep.subr.bf16.mxu0 %v2683
    %3944 = vmatpush1.bf16.msra.mxu0 %v2682
    %3945 = vmatprep.subr.bf16.mxu0 %v2691
    %3946 = vmatpush1.bf16.msra.mxu0 %v2690
    %3947 = vmatprep.subr.bf16.mxu0 %v2699
    %3948 = vmatpush1.bf16.msra.mxu0 %v2698
    %3949 = vmatprep.subr.bf16.mxu0 %v2707
    %3950 = vmatpush1.bf16.msra.mxu0 %v2706
    %3951 = vmatprep.subr.bf16.mxu0 %v2715
    %3952 = vmatpush1.bf16.msra.mxu0 %v2714
    %3953 = vmatprep.subr.bf16.mxu0 %v2723
    %3954 = vmatpush1.bf16.msra.mxu0 %v2722
    %3955 = vmatprep.subr.bf16.mxu0 %v2731
    %3956 = vmatpush1.bf16.msra.mxu0 %v2730
    %3957 = vmatprep.subr.bf16.mxu0 %v2739
    %3958 = vmatpush1.bf16.msra.mxu0 %v2738
    %3959 = vmatprep.subr.bf16.mxu0 %v2747
    %3960 = vmatpush1.bf16.msra.mxu0 %v2746
    %3961 = vmatprep.subr.bf16.mxu0 %v2755
    %3962 = vmatpush1.bf16.msra.mxu0 %v2754
    %3963 = vmatprep.subr.bf16.mxu0 %v2763
    %3964 = vmatpush1.bf16.msra.mxu0 %v2762
    %3965 = vmatprep.subr.bf16.mxu0 %v2771
    %3966 = vmatpush1.bf16.msra.mxu0 %v2770
    %3967 = vmatprep.mubr.bf16.mxu0 %v87
    %3968 = vmatmul.mubr.bf16.gmra.mrb[0].mxu0 %v86
    %v3969 = vpop.f32.mrb[0].mxu0
    %v3970 = vadd.f32 %v729, %v3969
    %v3971 = vpop.f32.mrb[0].mxu0
    %v3972 = vadd.f32 %v733, %v3971
    %v3973 = vpop.f32.mrb[0].mxu0
    %v3974 = vpop.f32.mrb[0].mxu0
    %3975 = vdwg.mxu0
    %3976 = vmatprep.subr.bf16.mxu0 %v2779
    %3977 = vmatpush1.bf16.msra.mxu0 %v2778
    %3978 = vmatprep.subr.bf16.mxu0 %v2787
    %3979 = vmatpush1.bf16.msra.mxu0 %v2786
    %3980 = vmatprep.subr.bf16.mxu0 %v2795
    %3981 = vmatpush1.bf16.msra.mxu0 %v2794
    %3982 = vmatprep.subr.bf16.mxu0 %v2803
    %3983 = vmatpush1.bf16.msra.mxu0 %v2802
    %3984 = vmatprep.subr.bf16.mxu0 %v2811
    %3985 = vmatpush1.bf16.msra.mxu0 %v2810
    %3986 = vmatprep.subr.bf16.mxu0 %v2819
    %3987 = vmatpush1.bf16.msra.mxu0 %v2818
    %3988 = vmatprep.subr.bf16.mxu0 %v2827
    %3989 = vmatpush1.bf16.msra.mxu0 %v2826
    %3990 = vmatprep.subr.bf16.mxu0 %v2835
    %3991 = vmatpush1.bf16.msra.mxu0 %v2834
    %3992 = vmatprep.subr.bf16.mxu0 %v2843
    %3993 = vmatpush1.bf16.msra.mxu0 %v2842
    %3994 = vmatprep.subr.bf16.mxu0 %v2851
    %3995 = vmatpush1.bf16.msra.mxu0 %v2850
    %3996 = vmatprep.subr.bf16.mxu0 %v2859
    %3997 = vmatpush1.bf16.msra.mxu0 %v2858
    %3998 = vmatprep.subr.bf16.mxu0 %v2867
    %3999 = vmatpush1.bf16.msra.mxu0 %v2866
    %4000 = vmatprep.subr.bf16.mxu0 %v2875
    %4001 = vmatpush1.bf16.msra.mxu0 %v2874
    %4002 = vmatprep.subr.bf16.mxu0 %v2883
    %4003 = vmatpush1.bf16.msra.mxu0 %v2882
    %4004 = vmatprep.subr.bf16.mxu0 %v2891
    %4005 = vmatpush1.bf16.msra.mxu0 %v2890
    %4006 = vmatprep.subr.bf16.mxu0 %v2899
    %4007 = vmatpush1.bf16.msra.mxu0 %v2898
    %4008 = vmatprep.mubr.bf16.mxu0 %v89
    %4009 = vmatmul.mubr.bf16.gmra.mrb[0].mxu0 %v88
    %v4010 = vpop.f32.mrb[0].mxu0
    %v4011 = vadd.f32 %v3970, %v4010
    %v4012 = vpop.f32.mrb[0].mxu0
    %v4013 = vadd.f32 %v3972, %v4012
    %v4014 = vpop.f32.mrb[0].mxu0
    %v4015 = vpop.f32.mrb[0].mxu0
    %4016 = vdwg.mxu0
    %4017 = vmatprep.subr.bf16.mxu0 %v2907
    %4018 = vmatpush1.bf16.msra.mxu0 %v2906
    %4019 = vmatprep.subr.bf16.mxu0 %v2915
    %4020 = vmatpush1.bf16.msra.mxu0 %v2914
    %4021 = vmatprep.subr.bf16.mxu0 %v2923
    %4022 = vmatpush1.bf16.msra.mxu0 %v2922
    %4023 = vmatprep.subr.bf16.mxu0 %v2931
    %4024 = vmatpush1.bf16.msra.mxu0 %v2930
    %4025 = vmatprep.subr.bf16.mxu0 %v2939
    %4026 = vmatpush1.bf16.msra.mxu0 %v2938
    %4027 = vmatprep.subr.bf16.mxu0 %v2947
    %4028 = vmatpush1.bf16.msra.mxu0 %v2946
    %4029 = vmatprep.subr.bf16.mxu0 %v2955
    %4030 = vmatpush1.bf16.msra.mxu0 %v2954
    %4031 = vmatprep.subr.bf16.mxu0 %v2963
    %4032 = vmatpush1.bf16.msra.mxu0 %v2962
    %4033 = vmatprep.subr.bf16.mxu0 %v2971
    %4034 = vmatpush1.bf16.msra.mxu0 %v2970
    %4035 = vmatprep.subr.bf16.mxu0 %v2979
    %4036 = vmatpush1.bf16.msra.mxu0 %v2978
    %4037 = vmatprep.subr.bf16.mxu0 %v2987
    %4038 = vmatpush1.bf16.msra.mxu0 %v2986
    %4039 = vmatprep.subr.bf16.mxu0 %v2995
    %4040 = vmatpush1.bf16.msra.mxu0 %v2994
    %4041 = vmatprep.subr.bf16.mxu0 %v3003
    %4042 = vmatpush1.bf16.msra.mxu0 %v3002
    %4043 = vmatprep.subr.bf16.mxu0 %v3011
    %4044 = vmatpush1.bf16.msra.mxu0 %v3010
    %4045 = vmatprep.subr.bf16.mxu0 %v3019
    %4046 = vmatpush1.bf16.msra.mxu0 %v3018
    %4047 = vmatprep.subr.bf16.mxu0 %v3027
    %4048 = vmatpush1.bf16.msra.mxu0 %v3026
    %4049 = vmatprep.mubr.bf16.mxu0 %v91
    %4050 = vmatmul.mubr.bf16.gmra.mrb[0].mxu0 %v90
    %v4051 = vpop.f32.mrb[0].mxu0
    %v4052 = vadd.f32 %v4011, %v4051
    %v4053 = vpop.f32.mrb[0].mxu0
    %v4054 = vadd.f32 %v4013, %v4053
    %v4055 = vpop.f32.mrb[0].mxu0
    %v4056 = vpop.f32.mrb[0].mxu0
    %4057 = vdwg.mxu0
    %4058 = vmatprep.subr.bf16.mxu0 %v3035
    %4059 = vmatpush1.bf16.msra.mxu0 %v3034
    %4060 = vmatprep.subr.bf16.mxu0 %v3043
    %4061 = vmatpush1.bf16.msra.mxu0 %v3042
    %4062 = vmatprep.subr.bf16.mxu0 %v3051
    %4063 = vmatpush1.bf16.msra.mxu0 %v3050
    %4064 = vmatprep.subr.bf16.mxu0 %v3059
    %4065 = vmatpush1.bf16.msra.mxu0 %v3058
    %4066 = vmatprep.subr.bf16.mxu0 %v3067
    %4067 = vmatpush1.bf16.msra.mxu0 %v3066
    %4068 = vmatprep.subr.bf16.mxu0 %v3075
    %4069 = vmatpush1.bf16.msra.mxu0 %v3074
    %4070 = vmatprep.subr.bf16.mxu0 %v3083
    %4071 = vmatpush1.bf16.msra.mxu0 %v3082
    %4072 = vmatprep.subr.bf16.mxu0 %v3091
    %4073 = vmatpush1.bf16.msra.mxu0 %v3090
    %4074 = vmatprep.subr.bf16.mxu0 %v3099
    %4075 = vmatpush1.bf16.msra.mxu0 %v3098
    %4076 = vmatprep.subr.bf16.mxu0 %v3107
    %4077 = vmatpush1.bf16.msra.mxu0 %v3106
    %4078 = vmatprep.subr.bf16.mxu0 %v3115
    %4079 = vmatpush1.bf16.msra.mxu0 %v3114
    %4080 = vmatprep.subr.bf16.mxu0 %v3123
    %4081 = vmatpush1.bf16.msra.mxu0 %v3122
    %4082 = vmatprep.subr.bf16.mxu0 %v3131
    %4083 = vmatpush1.bf16.msra.mxu0 %v3130
    %4084 = vmatprep.subr.bf16.mxu0 %v3139
    %4085 = vmatpush1.bf16.msra.mxu0 %v3138
    %4086 = vmatprep.subr.bf16.mxu0 %v3147
    %4087 = vmatpush1.bf16.msra.mxu0 %v3146
    %4088 = vmatprep.subr.bf16.mxu0 %v3155
    %4089 = vmatpush1.bf16.msra.mxu0 %v3154
    %4090 = vmatprep.mubr.bf16.mxu0 %v93
    %4091 = vmatmul.mubr.bf16.gmra.mrb[0].mxu0 %v92
    %v4092 = vpop.f32.mrb[0].mxu0
    %v4093 = vadd.f32 %v4052, %v4092
    %v4094 = vpop.f32.mrb[0].mxu0
    %v4095 = vadd.f32 %v4054, %v4094
    %v4096 = vpop.f32.mrb[0].mxu0
    %v4097 = vpop.f32.mrb[0].mxu0
    %4098 = vdwg.mxu0
    %4099 = vmatprep.subr.bf16.mxu0 %v3163
    %4100 = vmatpush1.bf16.msra.mxu0 %v3162
    %4101 = vmatprep.subr.bf16.mxu0 %v3171
    %4102 = vmatpush1.bf16.msra.mxu0 %v3170
    %4103 = vmatprep.subr.bf16.mxu0 %v3179
    %4104 = vmatpush1.bf16.msra.mxu0 %v3178
    %4105 = vmatprep.subr.bf16.mxu0 %v3187
    %4106 = vmatpush1.bf16.msra.mxu0 %v3186
    %4107 = vmatprep.subr.bf16.mxu0 %v3195
    %4108 = vmatpush1.bf16.msra.mxu0 %v3194
    %4109 = vmatprep.subr.bf16.mxu0 %v3203
    %4110 = vmatpush1.bf16.msra.mxu0 %v3202
    %4111 = vmatprep.subr.bf16.mxu0 %v3211
    %4112 = vmatpush1.bf16.msra.mxu0 %v3210
    %4113 = vmatprep.subr.bf16.mxu0 %v3219
    %4114 = vmatpush1.bf16.msra.mxu0 %v3218
    %4115 = vmatprep.subr.bf16.mxu0 %v3227
    %4116 = vmatpush1.bf16.msra.mxu0 %v3226
    %4117 = vmatprep.subr.bf16.mxu0 %v3235
    %4118 = vmatpush1.bf16.msra.mxu0 %v3234
    %4119 = vmatprep.subr.bf16.mxu0 %v3243
    %4120 = vmatpush1.bf16.msra.mxu0 %v3242
    %4121 = vmatprep.subr.bf16.mxu0 %v3251
    %4122 = vmatpush1.bf16.msra.mxu0 %v3250
    %4123 = vmatprep.subr.bf16.mxu0 %v3259
    %4124 = vmatpush1.bf16.msra.mxu0 %v3258
    %4125 = vmatprep.subr.bf16.mxu0 %v3267
    %4126 = vmatpush1.bf16.msra.mxu0 %v3266
    %4127 = vmatprep.subr.bf16.mxu0 %v3915
    %4128 = vmatpush1.bf16.msra.mxu0 %v3912
    %4129 = vmatprep.subr.bf16.mxu0 0
    %4130 = vmatpush1.bf16.msra.mxu0 0
    %4131 = vmatprep.mubr.bf16.mxu0 %v3908
    %4132 = vmatmul.mubr.bf16.gmra.mrb[0].mxu0 %v94
    %v4133 = vpop.f32.mrb[0].mxu0
    %v4134 = vadd.f32 %v4093, %v4133
    %v4135 = vpop.f32.mrb[0].mxu0
    %v4136 = vadd.f32 %v4095, %v4135
    %v4137 = vpop.f32.mrb[0].mxu0
    %v4138 = vpop.f32.mrb[0].mxu0
    %4139 = vdwg.mxu0
    %4140 = vmatprep.subr.bf16.mxu0 %v2653
    %4141 = vmatpush1.bf16.msra.mxu0 %v2652
    %4142 = vmatprep.subr.bf16.mxu0 %v2661
    %4143 = vmatpush1.bf16.msra.mxu0 %v2660
    %4144 = vmatprep.subr.bf16.mxu0 %v2669
    %4145 = vmatpush1.bf16.msra.mxu0 %v2668
    %4146 = vmatprep.subr.bf16.mxu0 %v2677
    %4147 = vmatpush1.bf16.msra.mxu0 %v2676
    %4148 = vmatprep.subr.bf16.mxu0 %v2685
    %4149 = vmatpush1.bf16.msra.mxu0 %v2684
    %4150 = vmatprep.subr.bf16.mxu0 %v2693
    %4151 = vmatpush1.bf16.msra.mxu0 %v2692
    %4152 = vmatprep.subr.bf16.mxu0 %v2701
    %4153 = vmatpush1.bf16.msra.mxu0 %v2700
    %4154 = vmatprep.subr.bf16.mxu0 %v2709
    %4155 = vmatpush1.bf16.msra.mxu0 %v2708
    %4156 = vmatprep.subr.bf16.mxu0 %v2717
    %4157 = vmatpush1.bf16.msra.mxu0 %v2716
    %4158 = vmatprep.subr.bf16.mxu0 %v2725
    %4159 = vmatpush1.bf16.msra.mxu0 %v2724
    %4160 = vmatprep.subr.bf16.mxu0 %v2733
    %4161 = vmatpush1.bf16.msra.mxu0 %v2732
    %4162 = vmatprep.subr.bf16.mxu0 %v2741
    %4163 = vmatpush1.bf16.msra.mxu0 %v2740
    %4164 = vmatprep.subr.bf16.mxu0 %v2749
    %4165 = vmatpush1.bf16.msra.mxu0 %v2748
    %4166 = vmatprep.subr.bf16.mxu0 %v2757
    %4167 = vmatpush1.bf16.msra.mxu0 %v2756
    %4168 = vmatprep.subr.bf16.mxu0 %v2765
    %4169 = vmatpush1.bf16.msra.mxu0 %v2764
    %4170 = vmatprep.subr.bf16.mxu0 %v2773
    %4171 = vmatpush1.bf16.msra.mxu0 %v2772
    %4172 = vmatprep.mubr.bf16.mxu0 %v87
    %4173 = vmatmul.mubr.bf16.gmra.mrb[0].mxu0 %v86
    %v4174 = vpop.f32.mrb[0].mxu0
    %v4175 = vadd.f32 %v737, %v4174
    %v4176 = vpop.f32.mrb[0].mxu0
    %v4177 = vadd.f32 %v741, %v4176
    %v4178 = vpop.f32.mrb[0].mxu0
    %v4179 = vpop.f32.mrb[0].mxu0
    %4180 = vdwg.mxu0
    %4181 = vmatprep.subr.bf16.mxu0 %v2781
    %4182 = vmatpush1.bf16.msra.mxu0 %v2780
    %4183 = vmatprep.subr.bf16.mxu0 %v2789
    %4184 = vmatpush1.bf16.msra.mxu0 %v2788
    %4185 = vmatprep.subr.bf16.mxu0 %v2797
    %4186 = vmatpush1.bf16.msra.mxu0 %v2796
    %4187 = vmatprep.subr.bf16.mxu0 %v2805
    %4188 = vmatpush1.bf16.msra.mxu0 %v2804
    %4189 = vmatprep.subr.bf16.mxu0 %v2813
    %4190 = vmatpush1.bf16.msra.mxu0 %v2812
    %4191 = vmatprep.subr.bf16.mxu0 %v2821
    %4192 = vmatpush1.bf16.msra.mxu0 %v2820
    %4193 = vmatprep.subr.bf16.mxu0 %v2829
    %4194 = vmatpush1.bf16.msra.mxu0 %v2828
    %4195 = vmatprep.subr.bf16.mxu0 %v2837
    %4196 = vmatpush1.bf16.msra.mxu0 %v2836
    %4197 = vmatprep.subr.bf16.mxu0 %v2845
    %4198 = vmatpush1.bf16.msra.mxu0 %v2844
    %4199 = vmatprep.subr.bf16.mxu0 %v2853
    %4200 = vmatpush1.bf16.msra.mxu0 %v2852
    %4201 = vmatprep.subr.bf16.mxu0 %v2861
    %4202 = vmatpush1.bf16.msra.mxu0 %v2860
    %4203 = vmatprep.subr.bf16.mxu0 %v2869
    %4204 = vmatpush1.bf16.msra.mxu0 %v2868
    %4205 = vmatprep.subr.bf16.mxu0 %v2877
    %4206 = vmatpush1.bf16.msra.mxu0 %v2876
    %4207 = vmatprep.subr.bf16.mxu0 %v2885
    %4208 = vmatpush1.bf16.msra.mxu0 %v2884
    %4209 = vmatprep.subr.bf16.mxu0 %v2893
    %4210 = vmatpush1.bf16.msra.mxu0 %v2892
    %4211 = vmatprep.subr.bf16.mxu0 %v2901
    %4212 = vmatpush1.bf16.msra.mxu0 %v2900
    %4213 = vmatprep.mubr.bf16.mxu0 %v89
    %4214 = vmatmul.mubr.bf16.gmra.mrb[0].mxu0 %v88
    %v4215 = vpop.f32.mrb[0].mxu0
    %v4216 = vadd.f32 %v4175, %v4215
    %v4217 = vpop.f32.mrb[0].mxu0
    %v4218 = vadd.f32 %v4177, %v4217
    %v4219 = vpop.f32.mrb[0].mxu0
    %v4220 = vpop.f32.mrb[0].mxu0
    %4221 = vdwg.mxu0
    %4222 = vmatprep.subr.bf16.mxu0 %v2909
    %4223 = vmatpush1.bf16.msra.mxu0 %v2908
    %4224 = vmatprep.subr.bf16.mxu0 %v2917
    %4225 = vmatpush1.bf16.msra.mxu0 %v2916
    %4226 = vmatprep.subr.bf16.mxu0 %v2925
    %4227 = vmatpush1.bf16.msra.mxu0 %v2924
    %4228 = vmatprep.subr.bf16.mxu0 %v2933
    %4229 = vmatpush1.bf16.msra.mxu0 %v2932
    %4230 = vmatprep.subr.bf16.mxu0 %v2941
    %4231 = vmatpush1.bf16.msra.mxu0 %v2940
    %4232 = vmatprep.subr.bf16.mxu0 %v2949
    %4233 = vmatpush1.bf16.msra.mxu0 %v2948
    %4234 = vmatprep.subr.bf16.mxu0 %v2957
    %4235 = vmatpush1.bf16.msra.mxu0 %v2956
    %4236 = vmatprep.subr.bf16.mxu0 %v2965
    %4237 = vmatpush1.bf16.msra.mxu0 %v2964
    %4238 = vmatprep.subr.bf16.mxu0 %v2973
    %4239 = vmatpush1.bf16.msra.mxu0 %v2972
    %4240 = vmatprep.subr.bf16.mxu0 %v2981
    %4241 = vmatpush1.bf16.msra.mxu0 %v2980
    %4242 = vmatprep.subr.bf16.mxu0 %v2989
    %4243 = vmatpush1.bf16.msra.mxu0 %v2988
    %4244 = vmatprep.subr.bf16.mxu0 %v2997
    %4245 = vmatpush1.bf16.msra.mxu0 %v2996
    %4246 = vmatprep.subr.bf16.mxu0 %v3005
    %4247 = vmatpush1.bf16.msra.mxu0 %v3004
    %4248 = vmatprep.subr.bf16.mxu0 %v3013
    %4249 = vmatpush1.bf16.msra.mxu0 %v3012
    %4250 = vmatprep.subr.bf16.mxu0 %v3021
    %4251 = vmatpush1.bf16.msra.mxu0 %v3020
    %4252 = vmatprep.subr.bf16.mxu0 %v3029
    %4253 = vmatpush1.bf16.msra.mxu0 %v3028
    %4254 = vmatprep.mubr.bf16.mxu0 %v91
    %4255 = vmatmul.mubr.bf16.gmra.mrb[0].mxu0 %v90
    %v4256 = vpop.f32.mrb[0].mxu0
    %v4257 = vadd.f32 %v4216, %v4256
    %v4258 = vpop.f32.mrb[0].mxu0
    %v4259 = vadd.f32 %v4218, %v4258
    %v4260 = vpop.f32.mrb[0].mxu0
    %v4261 = vpop.f32.mrb[0].mxu0
    %4262 = vdwg.mxu0
    %4263 = vmatprep.subr.bf16.mxu0 %v3037
    %4264 = vmatpush1.bf16.msra.mxu0 %v3036
    %4265 = vmatprep.subr.bf16.mxu0 %v3045
    %4266 = vmatpush1.bf16.msra.mxu0 %v3044
    %4267 = vmatprep.subr.bf16.mxu0 %v3053
    %4268 = vmatpush1.bf16.msra.mxu0 %v3052
    %4269 = vmatprep.subr.bf16.mxu0 %v3061
    %4270 = vmatpush1.bf16.msra.mxu0 %v3060
    %4271 = vmatprep.subr.bf16.mxu0 %v3069
    %4272 = vmatpush1.bf16.msra.mxu0 %v3068
    %4273 = vmatprep.subr.bf16.mxu0 %v3077
    %4274 = vmatpush1.bf16.msra.mxu0 %v3076
    %4275 = vmatprep.subr.bf16.mxu0 %v3085
    %4276 = vmatpush1.bf16.msra.mxu0 %v3084
    %4277 = vmatprep.subr.bf16.mxu0 %v3093
    %4278 = vmatpush1.bf16.msra.mxu0 %v3092
    %4279 = vmatprep.subr.bf16.mxu0 %v3101
    %4280 = vmatpush1.bf16.msra.mxu0 %v3100
    %4281 = vmatprep.subr.bf16.mxu0 %v3109
    %4282 = vmatpush1.bf16.msra.mxu0 %v3108
    %4283 = vmatprep.subr.bf16.mxu0 %v3117
    %4284 = vmatpush1.bf16.msra.mxu0 %v3116
    %4285 = vmatprep.subr.bf16.mxu0 %v3125
    %4286 = vmatpush1.bf16.msra.mxu0 %v3124
    %4287 = vmatprep.subr.bf16.mxu0 %v3133
    %4288 = vmatpush1.bf16.msra.mxu0 %v3132
    %4289 = vmatprep.subr.bf16.mxu0 %v3141
    %4290 = vmatpush1.bf16.msra.mxu0 %v3140
    %4291 = vmatprep.subr.bf16.mxu0 %v3149
    %4292 = vmatpush1.bf16.msra.mxu0 %v3148
    %4293 = vmatprep.subr.bf16.mxu0 %v3157
    %4294 = vmatpush1.bf16.msra.mxu0 %v3156
    %4295 = vmatprep.mubr.bf16.mxu0 %v93
    %4296 = vmatmul.mubr.bf16.gmra.mrb[0].mxu0 %v92
    %v4297 = vpop.f32.mrb[0].mxu0
    %v4298 = vadd.f32 %v4257, %v4297
    %v4299 = vpop.f32.mrb[0].mxu0
    %v4300 = vadd.f32 %v4259, %v4299
    %v4301 = vpop.f32.mrb[0].mxu0
    %v4302 = vpop.f32.mrb[0].mxu0
    %4303 = vdwg.mxu0
    %4304 = vmatprep.subr.bf16.mxu0 %v3165
    %4305 = vmatpush1.bf16.msra.mxu0 %v3164
    %4306 = vmatprep.subr.bf16.mxu0 %v3173
    %4307 = vmatpush1.bf16.msra.mxu0 %v3172
    %4308 = vmatprep.subr.bf16.mxu0 %v3181
    %4309 = vmatpush1.bf16.msra.mxu0 %v3180
    %4310 = vmatprep.subr.bf16.mxu0 %v3189
    %4311 = vmatpush1.bf16.msra.mxu0 %v3188
    %4312 = vmatprep.subr.bf16.mxu0 %v3197
    %4313 = vmatpush1.bf16.msra.mxu0 %v3196
    %4314 = vmatprep.subr.bf16.mxu0 %v3205
    %4315 = vmatpush1.bf16.msra.mxu0 %v3204
    %4316 = vmatprep.subr.bf16.mxu0 %v3213
    %4317 = vmatpush1.bf16.msra.mxu0 %v3212
    %4318 = vmatprep.subr.bf16.mxu0 %v3221
    %4319 = vmatpush1.bf16.msra.mxu0 %v3220
    %4320 = vmatprep.subr.bf16.mxu0 %v3229
    %4321 = vmatpush1.bf16.msra.mxu0 %v3228
    %4322 = vmatprep.subr.bf16.mxu0 %v3237
    %4323 = vmatpush1.bf16.msra.mxu0 %v3236
    %4324 = vmatprep.subr.bf16.mxu0 %v3245
    %4325 = vmatpush1.bf16.msra.mxu0 %v3244
    %4326 = vmatprep.subr.bf16.mxu0 %v3253
    %4327 = vmatpush1.bf16.msra.mxu0 %v3252
    %4328 = vmatprep.subr.bf16.mxu0 %v3261
    %4329 = vmatpush1.bf16.msra.mxu0 %v3260
    %4330 = vmatprep.subr.bf16.mxu0 %v3269
    %4331 = vmatpush1.bf16.msra.mxu0 %v3268
    %4332 = vmatprep.subr.bf16.mxu0 %v3921
    %4333 = vmatpush1.bf16.msra.mxu0 %v3918
    %4334 = vmatprep.subr.bf16.mxu0 0
    %4335 = vmatpush1.bf16.msra.mxu0 0
    %4336 = vmatprep.mubr.bf16.mxu0 %v3908
    %4337 = vmatmul.mubr.bf16.gmra.mrb[0].mxu0 %v94
    %v4338 = vpop.f32.mrb[0].mxu0
    %v4339 = vadd.f32 %v4298, %v4338
    %v4340 = vpop.f32.mrb[0].mxu0
    %v4341 = vadd.f32 %v4300, %v4340
    %v4342 = vpop.f32.mrb[0].mxu0
    %v4343 = vpop.f32.mrb[0].mxu0
    %4344 = vdwg.mxu0
    %4345 = vmatprep.subr.bf16.mxu0 %v2655
    %4346 = vmatpush1.bf16.msra.mxu0 %v2654
    %4347 = vmatprep.subr.bf16.mxu0 %v2663
    %4348 = vmatpush1.bf16.msra.mxu0 %v2662
    %4349 = vmatprep.subr.bf16.mxu0 %v2671
    %4350 = vmatpush1.bf16.msra.mxu0 %v2670
    %4351 = vmatprep.subr.bf16.mxu0 %v2679
    %4352 = vmatpush1.bf16.msra.mxu0 %v2678
    %4353 = vmatprep.subr.bf16.mxu0 %v2687
    %4354 = vmatpush1.bf16.msra.mxu0 %v2686
    %4355 = vmatprep.subr.bf16.mxu0 %v2695
    %4356 = vmatpush1.bf16.msra.mxu0 %v2694
    %4357 = vmatprep.subr.bf16.mxu0 %v2703
    %4358 = vmatpush1.bf16.msra.mxu0 %v2702
    %4359 = vmatprep.subr.bf16.mxu0 %v2711
    %4360 = vmatpush1.bf16.msra.mxu0 %v2710
    %4361 = vmatprep.subr.bf16.mxu0 %v2719
    %4362 = vmatpush1.bf16.msra.mxu0 %v2718
    %4363 = vmatprep.subr.bf16.mxu0 %v2727
    %4364 = vmatpush1.bf16.msra.mxu0 %v2726
    %4365 = vmatprep.subr.bf16.mxu0 %v2735
    %4366 = vmatpush1.bf16.msra.mxu0 %v2734
    %4367 = vmatprep.subr.bf16.mxu0 %v2743
    %4368 = vmatpush1.bf16.msra.mxu0 %v2742
    %4369 = vmatprep.subr.bf16.mxu0 %v2751
    %4370 = vmatpush1.bf16.msra.mxu0 %v2750
    %4371 = vmatprep.subr.bf16.mxu0 %v2759
    %4372 = vmatpush1.bf16.msra.mxu0 %v2758
    %4373 = vmatprep.subr.bf16.mxu0 %v2767
    %4374 = vmatpush1.bf16.msra.mxu0 %v2766
    %4375 = vmatprep.subr.bf16.mxu0 %v2775
    %4376 = vmatpush1.bf16.msra.mxu0 %v2774
    %4377 = vmatprep.mubr.bf16.mxu0 %v87
    %4378 = vmatmul.mubr.bf16.gmra.mrb[0].mxu0 %v86
    %v4379 = vpop.f32.mrb[0].mxu0
    %v4380 = vadd.f32 %v745, %v4379
    %v4381 = vpop.f32.mrb[0].mxu0
    %v4382 = vadd.f32 %v749, %v4381
    %v4383 = vpop.f32.mrb[0].mxu0
    %v4384 = vpop.f32.mrb[0].mxu0
    %4385 = vdwg.mxu0
    %4386 = vmatprep.subr.bf16.mxu0 %v2783
    %4387 = vmatpush1.bf16.msra.mxu0 %v2782
    %4388 = vmatprep.subr.bf16.mxu0 %v2791
    %4389 = vmatpush1.bf16.msra.mxu0 %v2790
    %4390 = vmatprep.subr.bf16.mxu0 %v2799
    %4391 = vmatpush1.bf16.msra.mxu0 %v2798
    %4392 = vmatprep.subr.bf16.mxu0 %v2807
    %4393 = vmatpush1.bf16.msra.mxu0 %v2806
    %4394 = vmatprep.subr.bf16.mxu0 %v2815
    %4395 = vmatpush1.bf16.msra.mxu0 %v2814
    %4396 = vmatprep.subr.bf16.mxu0 %v2823
    %4397 = vmatpush1.bf16.msra.mxu0 %v2822
    %4398 = vmatprep.subr.bf16.mxu0 %v2831
    %4399 = vmatpush1.bf16.msra.mxu0 %v2830
    %4400 = vmatprep.subr.bf16.mxu0 %v2839
    %4401 = vmatpush1.bf16.msra.mxu0 %v2838
    %4402 = vmatprep.subr.bf16.mxu0 %v2847
    %4403 = vmatpush1.bf16.msra.mxu0 %v2846
    %4404 = vmatprep.subr.bf16.mxu0 %v2855
    %4405 = vmatpush1.bf16.msra.mxu0 %v2854
    %4406 = vmatprep.subr.bf16.mxu0 %v2863
    %4407 = vmatpush1.bf16.msra.mxu0 %v2862
    %4408 = vmatprep.subr.bf16.mxu0 %v2871
    %4409 = vmatpush1.bf16.msra.mxu0 %v2870
    %4410 = vmatprep.subr.bf16.mxu0 %v2879
    %4411 = vmatpush1.bf16.msra.mxu0 %v2878
    %4412 = vmatprep.subr.bf16.mxu0 %v2887
    %4413 = vmatpush1.bf16.msra.mxu0 %v2886
    %4414 = vmatprep.subr.bf16.mxu0 %v2895
    %4415 = vmatpush1.bf16.msra.mxu0 %v2894
    %4416 = vmatprep.subr.bf16.mxu0 %v2903
    %4417 = vmatpush1.bf16.msra.mxu0 %v2902
    %4418 = vmatprep.mubr.bf16.mxu0 %v89
    %4419 = vmatmul.mubr.bf16.gmra.mrb[0].mxu0 %v88
    %v4420 = vpop.f32.mrb[0].mxu0
    %v4421 = vadd.f32 %v4380, %v4420
    %v4422 = vpop.f32.mrb[0].mxu0
    %v4423 = vadd.f32 %v4382, %v4422
    %v4424 = vpop.f32.mrb[0].mxu0
    %v4425 = vpop.f32.mrb[0].mxu0
    %4426 = vdwg.mxu0
    %4427 = vmatprep.subr.bf16.mxu0 %v2911
    %4428 = vmatpush1.bf16.msra.mxu0 %v2910
    %4429 = vmatprep.subr.bf16.mxu0 %v2919
    %4430 = vmatpush1.bf16.msra.mxu0 %v2918
    %4431 = vmatprep.subr.bf16.mxu0 %v2927
    %4432 = vmatpush1.bf16.msra.mxu0 %v2926
    %4433 = vmatprep.subr.bf16.mxu0 %v2935
    %4434 = vmatpush1.bf16.msra.mxu0 %v2934
    %4435 = vmatprep.subr.bf16.mxu0 %v2943
    %4436 = vmatpush1.bf16.msra.mxu0 %v2942
    %4437 = vmatprep.subr.bf16.mxu0 %v2951
    %4438 = vmatpush1.bf16.msra.mxu0 %v2950
    %4439 = vmatprep.subr.bf16.mxu0 %v2959
    %4440 = vmatpush1.bf16.msra.mxu0 %v2958
    %4441 = vmatprep.subr.bf16.mxu0 %v2967
    %4442 = vmatpush1.bf16.msra.mxu0 %v2966
    %4443 = vmatprep.subr.bf16.mxu0 %v2975
    %4444 = vmatpush1.bf16.msra.mxu0 %v2974
    %4445 = vmatprep.subr.bf16.mxu0 %v2983
    %4446 = vmatpush1.bf16.msra.mxu0 %v2982
    %4447 = vmatprep.subr.bf16.mxu0 %v2991
    %4448 = vmatpush1.bf16.msra.mxu0 %v2990
    %4449 = vmatprep.subr.bf16.mxu0 %v2999
    %4450 = vmatpush1.bf16.msra.mxu0 %v2998
    %4451 = vmatprep.subr.bf16.mxu0 %v3007
    %4452 = vmatpush1.bf16.msra.mxu0 %v3006
    %4453 = vmatprep.subr.bf16.mxu0 %v3015
    %4454 = vmatpush1.bf16.msra.mxu0 %v3014
    %4455 = vmatprep.subr.bf16.mxu0 %v3023
    %4456 = vmatpush1.bf16.msra.mxu0 %v3022
    %4457 = vmatprep.subr.bf16.mxu0 %v3031
    %4458 = vmatpush1.bf16.msra.mxu0 %v3030
    %4459 = vmatprep.mubr.bf16.mxu0 %v91
    %4460 = vmatmul.mubr.bf16.gmra.mrb[0].mxu0 %v90
    %v4461 = vpop.f32.mrb[0].mxu0
    %v4462 = vadd.f32 %v4421, %v4461
    %v4463 = vpop.f32.mrb[0].mxu0
    %v4464 = vadd.f32 %v4423, %v4463
    %v4465 = vpop.f32.mrb[0].mxu0
    %v4466 = vpop.f32.mrb[0].mxu0
    %4467 = vdwg.mxu0
    %4468 = vmatprep.subr.bf16.mxu0 %v3039
    %4469 = vmatpush1.bf16.msra.mxu0 %v3038
    %4470 = vmatprep.subr.bf16.mxu0 %v3047
    %4471 = vmatpush1.bf16.msra.mxu0 %v3046
    %4472 = vmatprep.subr.bf16.mxu0 %v3055
    %4473 = vmatpush1.bf16.msra.mxu0 %v3054
    %4474 = vmatprep.subr.bf16.mxu0 %v3063
    %4475 = vmatpush1.bf16.msra.mxu0 %v3062
    %4476 = vmatprep.subr.bf16.mxu0 %v3071
    %4477 = vmatpush1.bf16.msra.mxu0 %v3070
    %4478 = vmatprep.subr.bf16.mxu0 %v3079
    %4479 = vmatpush1.bf16.msra.mxu0 %v3078
    %4480 = vmatprep.subr.bf16.mxu0 %v3087
    %4481 = vmatpush1.bf16.msra.mxu0 %v3086
    %4482 = vmatprep.subr.bf16.mxu0 %v3095
    %4483 = vmatpush1.bf16.msra.mxu0 %v3094
    %4484 = vmatprep.subr.bf16.mxu0 %v3103
    %4485 = vmatpush1.bf16.msra.mxu0 %v3102
    %4486 = vmatprep.subr.bf16.mxu0 %v3111
    %4487 = vmatpush1.bf16.msra.mxu0 %v3110
    %4488 = vmatprep.subr.bf16.mxu0 %v3119
    %4489 = vmatpush1.bf16.msra.mxu0 %v3118
    %4490 = vmatprep.subr.bf16.mxu0 %v3127
    %4491 = vmatpush1.bf16.msra.mxu0 %v3126
    %4492 = vmatprep.subr.bf16.mxu0 %v3135
    %4493 = vmatpush1.bf16.msra.mxu0 %v3134
    %4494 = vmatprep.subr.bf16.mxu0 %v3143
    %4495 = vmatpush1.bf16.msra.mxu0 %v3142
    %4496 = vmatprep.subr.bf16.mxu0 %v3151
    %4497 = vmatpush1.bf16.msra.mxu0 %v3150
    %4498 = vmatprep.subr.bf16.mxu0 %v3159
    %4499 = vmatpush1.bf16.msra.mxu0 %v3158
    %4500 = vmatprep.mubr.bf16.mxu0 %v93
    %4501 = vmatmul.mubr.bf16.gmra.mrb[0].mxu0 %v92
    %v4502 = vpop.f32.mrb[0].mxu0
    %v4503 = vadd.f32 %v4462, %v4502
    %v4504 = vpop.f32.mrb[0].mxu0
    %v4505 = vadd.f32 %v4464, %v4504
    %v4506 = vpop.f32.mrb[0].mxu0
    %v4507 = vpop.f32.mrb[0].mxu0
    %4508 = vdwg.mxu0
    %4509 = vmatprep.subr.bf16.mxu0 %v3167
    %4510 = vmatpush1.bf16.msra.mxu0 %v3166
    %4511 = vmatprep.subr.bf16.mxu0 %v3175
    %4512 = vmatpush1.bf16.msra.mxu0 %v3174
    %4513 = vmatprep.subr.bf16.mxu0 %v3183
    %4514 = vmatpush1.bf16.msra.mxu0 %v3182
    %4515 = vmatprep.subr.bf16.mxu0 %v3191
    %4516 = vmatpush1.bf16.msra.mxu0 %v3190
    %4517 = vmatprep.subr.bf16.mxu0 %v3199
    %4518 = vmatpush1.bf16.msra.mxu0 %v3198
    %4519 = vmatprep.subr.bf16.mxu0 %v3207
    %4520 = vmatpush1.bf16.msra.mxu0 %v3206
    %4521 = vmatprep.subr.bf16.mxu0 %v3215
    %4522 = vmatpush1.bf16.msra.mxu0 %v3214
    %4523 = vmatprep.subr.bf16.mxu0 %v3223
    %4524 = vmatpush1.bf16.msra.mxu0 %v3222
    %4525 = vmatprep.subr.bf16.mxu0 %v3231
    %4526 = vmatpush1.bf16.msra.mxu0 %v3230
    %4527 = vmatprep.subr.bf16.mxu0 %v3239
    %4528 = vmatpush1.bf16.msra.mxu0 %v3238
    %4529 = vmatprep.subr.bf16.mxu0 %v3247
    %4530 = vmatpush1.bf16.msra.mxu0 %v3246
    %4531 = vmatprep.subr.bf16.mxu0 %v3255
    %4532 = vmatpush1.bf16.msra.mxu0 %v3254
    %4533 = vmatprep.subr.bf16.mxu0 %v3263
    %4534 = vmatpush1.bf16.msra.mxu0 %v3262
    %4535 = vmatprep.subr.bf16.mxu0 %v3271
    %4536 = vmatpush1.bf16.msra.mxu0 %v3270
    %4537 = vmatprep.subr.bf16.mxu0 %v3927
    %4538 = vmatpush1.bf16.msra.mxu0 %v3924
    %4539 = vmatprep.subr.bf16.mxu0 0
    %4540 = vmatpush1.bf16.msra.mxu0 0
    %4541 = vmatprep.mubr.bf16.mxu0 %v3908
    %4542 = vmatmul.mubr.bf16.gmra.mrb[0].mxu0 %v94
    %v4543 = vpop.f32.mrb[0].mxu0
    %v4544 = vadd.f32 %v4503, %v4543
    %v4545 = vpop.f32.mrb[0].mxu0
    %v4546 = vadd.f32 %v4505, %v4545
    %v4547 = vpop.f32.mrb[0].mxu0
    %v4548 = vpop.f32.mrb[0].mxu0
    %4549 = vdwg.mxu0
    %4550 = vmatprep.subr.bf16.mxu0 %v2657
    %4551 = vmatpush1.bf16.msra.mxu0 %v2656
    %4552 = vmatprep.subr.bf16.mxu0 %v2665
    %4553 = vmatpush1.bf16.msra.mxu0 %v2664
    %4554 = vmatprep.subr.bf16.mxu0 %v2673
    %4555 = vmatpush1.bf16.msra.mxu0 %v2672
    %4556 = vmatprep.subr.bf16.mxu0 %v2681
    %4557 = vmatpush1.bf16.msra.mxu0 %v2680
    %4558 = vmatprep.subr.bf16.mxu0 %v2689
    %4559 = vmatpush1.bf16.msra.mxu0 %v2688
    %4560 = vmatprep.subr.bf16.mxu0 %v2697
    %4561 = vmatpush1.bf16.msra.mxu0 %v2696
    %4562 = vmatprep.subr.bf16.mxu0 %v2705
    %4563 = vmatpush1.bf16.msra.mxu0 %v2704
    %4564 = vmatprep.subr.bf16.mxu0 %v2713
    %4565 = vmatpush1.bf16.msra.mxu0 %v2712
    %4566 = vmatprep.subr.bf16.mxu0 %v2721
    %4567 = vmatpush1.bf16.msra.mxu0 %v2720
    %4568 = vmatprep.subr.bf16.mxu0 %v2729
    %4569 = vmatpush1.bf16.msra.mxu0 %v2728
    %4570 = vmatprep.subr.bf16.mxu0 %v2737
    %4571 = vmatpush1.bf16.msra.mxu0 %v2736
    %4572 = vmatprep.subr.bf16.mxu0 %v2745
    %4573 = vmatpush1.bf16.msra.mxu0 %v2744
    %4574 = vmatprep.subr.bf16.mxu0 %v2753
    %4575 = vmatpush1.bf16.msra.mxu0 %v2752
    %4576 = vmatprep.subr.bf16.mxu0 %v2761
    %4577 = vmatpush1.bf16.msra.mxu0 %v2760
    %4578 = vmatprep.subr.bf16.mxu0 %v2769
    %4579 = vmatpush1.bf16.msra.mxu0 %v2768
    %4580 = vmatprep.subr.bf16.mxu0 %v2777
    %4581 = vmatpush1.bf16.msra.mxu0 %v2776
    %4582 = vmatprep.mubr.bf16.mxu0 %v87
    %4583 = vmatmul.mubr.bf16.gmra.mrb[0].mxu0 %v86
    %v4584 = vpop.f32.mrb[0].mxu0
    %v4585 = vadd.f32 %v753, %v4584
    %v4586 = vpop.f32.mrb[0].mxu0
    %v4587 = vadd.f32 %v757, %v4586
    %v4588 = vpop.f32.mrb[0].mxu0
    %v4589 = vpop.f32.mrb[0].mxu0
    %4590 = vdwg.mxu0
    %4591 = vmatprep.subr.bf16.mxu0 %v2785
    %4592 = vmatpush1.bf16.msra.mxu0 %v2784
    %4593 = vmatprep.subr.bf16.mxu0 %v2793
    %4594 = vmatpush1.bf16.msra.mxu0 %v2792
    %4595 = vmatprep.subr.bf16.mxu0 %v2801
    %4596 = vmatpush1.bf16.msra.mxu0 %v2800
    %4597 = vmatprep.subr.bf16.mxu0 %v2809
    %4598 = vmatpush1.bf16.msra.mxu0 %v2808
    %4599 = vmatprep.subr.bf16.mxu0 %v2817
    %4600 = vmatpush1.bf16.msra.mxu0 %v2816
    %4601 = vmatprep.subr.bf16.mxu0 %v2825
    %4602 = vmatpush1.bf16.msra.mxu0 %v2824
    %4603 = vmatprep.subr.bf16.mxu0 %v2833
    %4604 = vmatpush1.bf16.msra.mxu0 %v2832
    %4605 = vmatprep.subr.bf16.mxu0 %v2841
    %4606 = vmatpush1.bf16.msra.mxu0 %v2840
    %4607 = vmatprep.subr.bf16.mxu0 %v2849
    %4608 = vmatpush1.bf16.msra.mxu0 %v2848
    %4609 = vmatprep.subr.bf16.mxu0 %v2857
    %4610 = vmatpush1.bf16.msra.mxu0 %v2856
    %4611 = vmatprep.subr.bf16.mxu0 %v2865
    %4612 = vmatpush1.bf16.msra.mxu0 %v2864
    %4613 = vmatprep.subr.bf16.mxu0 %v2873
    %4614 = vmatpush1.bf16.msra.mxu0 %v2872
    %4615 = vmatprep.subr.bf16.mxu0 %v2881
    %4616 = vmatpush1.bf16.msra.mxu0 %v2880
    %4617 = vmatprep.subr.bf16.mxu0 %v2889
    %4618 = vmatpush1.bf16.msra.mxu0 %v2888
    %4619 = vmatprep.subr.bf16.mxu0 %v2897
    %4620 = vmatpush1.bf16.msra.mxu0 %v2896
    %4621 = vmatprep.subr.bf16.mxu0 %v2905
    %4622 = vmatpush1.bf16.msra.mxu0 %v2904
    %4623 = vmatprep.mubr.bf16.mxu0 %v89
    %4624 = vmatmul.mubr.bf16.gmra.mrb[0].mxu0 %v88
    %v4625 = vpop.f32.mrb[0].mxu0
    %v4626 = vadd.f32 %v4585, %v4625
    %v4627 = vpop.f32.mrb[0].mxu0
    %v4628 = vadd.f32 %v4587, %v4627
    %v4629 = vpop.f32.mrb[0].mxu0
    %v4630 = vpop.f32.mrb[0].mxu0
    %4631 = vdwg.mxu0
    %4632 = vmatprep.subr.bf16.mxu0 %v2913
    %4633 = vmatpush1.bf16.msra.mxu0 %v2912
    %4634 = vmatprep.subr.bf16.mxu0 %v2921
    %4635 = vmatpush1.bf16.msra.mxu0 %v2920
    %4636 = vmatprep.subr.bf16.mxu0 %v2929
    %4637 = vmatpush1.bf16.msra.mxu0 %v2928
    %4638 = vmatprep.subr.bf16.mxu0 %v2937
    %4639 = vmatpush1.bf16.msra.mxu0 %v2936
    %4640 = vmatprep.subr.bf16.mxu0 %v2945
    %4641 = vmatpush1.bf16.msra.mxu0 %v2944
    %4642 = vmatprep.subr.bf16.mxu0 %v2953
    %4643 = vmatpush1.bf16.msra.mxu0 %v2952
    %4644 = vmatprep.subr.bf16.mxu0 %v2961
    %4645 = vmatpush1.bf16.msra.mxu0 %v2960
    %4646 = vmatprep.subr.bf16.mxu0 %v2969
    %4647 = vmatpush1.bf16.msra.mxu0 %v2968
    %4648 = vmatprep.subr.bf16.mxu0 %v2977
    %4649 = vmatpush1.bf16.msra.mxu0 %v2976
    %4650 = vmatprep.subr.bf16.mxu0 %v2985
    %4651 = vmatpush1.bf16.msra.mxu0 %v2984
    %4652 = vmatprep.subr.bf16.mxu0 %v2993
    %4653 = vmatpush1.bf16.msra.mxu0 %v2992
    %4654 = vmatprep.subr.bf16.mxu0 %v3001
    %4655 = vmatpush1.bf16.msra.mxu0 %v3000
    %4656 = vmatprep.subr.bf16.mxu0 %v3009
    %4657 = vmatpush1.bf16.msra.mxu0 %v3008
    %4658 = vmatprep.subr.bf16.mxu0 %v3017
    %4659 = vmatpush1.bf16.msra.mxu0 %v3016
    %4660 = vmatprep.subr.bf16.mxu0 %v3025
    %4661 = vmatpush1.bf16.msra.mxu0 %v3024
    %4662 = vmatprep.subr.bf16.mxu0 %v3033
    %4663 = vmatpush1.bf16.msra.mxu0 %v3032
    %4664 = vmatprep.mubr.bf16.mxu0 %v91
    %4665 = vmatmul.mubr.bf16.gmra.mrb[0].mxu0 %v90
    %v4666 = vpop.f32.mrb[0].mxu0
    %v4667 = vadd.f32 %v4626, %v4666
    %v4668 = vpop.f32.mrb[0].mxu0
    %v4669 = vadd.f32 %v4628, %v4668
    %v4670 = vpop.f32.mrb[0].mxu0
    %v4671 = vpop.f32.mrb[0].mxu0
    %4672 = vdwg.mxu0
    %4673 = vmatprep.subr.bf16.mxu0 %v3041
    %4674 = vmatpush1.bf16.msra.mxu0 %v3040
    %4675 = vmatprep.subr.bf16.mxu0 %v3049
    %4676 = vmatpush1.bf16.msra.mxu0 %v3048
    %4677 = vmatprep.subr.bf16.mxu0 %v3057
    %4678 = vmatpush1.bf16.msra.mxu0 %v3056
    %4679 = vmatprep.subr.bf16.mxu0 %v3065
    %4680 = vmatpush1.bf16.msra.mxu0 %v3064
    %4681 = vmatprep.subr.bf16.mxu0 %v3073
    %4682 = vmatpush1.bf16.msra.mxu0 %v3072
    %4683 = vmatprep.subr.bf16.mxu0 %v3081
    %4684 = vmatpush1.bf16.msra.mxu0 %v3080
    %4685 = vmatprep.subr.bf16.mxu0 %v3089
    %4686 = vmatpush1.bf16.msra.mxu0 %v3088
    %4687 = vmatprep.subr.bf16.mxu0 %v3097
    %4688 = vmatpush1.bf16.msra.mxu0 %v3096
    %4689 = vmatprep.subr.bf16.mxu0 %v3105
    %4690 = vmatpush1.bf16.msra.mxu0 %v3104
    %4691 = vmatprep.subr.bf16.mxu0 %v3113
    %4692 = vmatpush1.bf16.msra.mxu0 %v3112
    %4693 = vmatprep.subr.bf16.mxu0 %v3121
    %4694 = vmatpush1.bf16.msra.mxu0 %v3120
    %4695 = vmatprep.subr.bf16.mxu0 %v3129
    %4696 = vmatpush1.bf16.msra.mxu0 %v3128
    %4697 = vmatprep.subr.bf16.mxu0 %v3137
    %4698 = vmatpush1.bf16.msra.mxu0 %v3136
    %4699 = vmatprep.subr.bf16.mxu0 %v3145
    %4700 = vmatpush1.bf16.msra.mxu0 %v3144
    %4701 = vmatprep.subr.bf16.mxu0 %v3153
    %4702 = vmatpush1.bf16.msra.mxu0 %v3152
    %4703 = vmatprep.subr.bf16.mxu0 %v3161
    %4704 = vmatpush1.bf16.msra.mxu0 %v3160
    %4705 = vmatprep.mubr.bf16.mxu0 %v93
    %4706 = vmatmul.mubr.bf16.gmra.mrb[0].mxu0 %v92
    %v4707 = vpop.f32.mrb[0].mxu0
    %v4708 = vadd.f32 %v4667, %v4707
    %v4709 = vpop.f32.mrb[0].mxu0
    %v4710 = vadd.f32 %v4669, %v4709
    %v4711 = vpop.f32.mrb[0].mxu0
    %v4712 = vpop.f32.mrb[0].mxu0
    %4713 = vdwg.mxu0
    %4714 = vmatprep.subr.bf16.mxu0 %v3169
    %4715 = vmatpush1.bf16.msra.mxu0 %v3168
    %4716 = vmatprep.subr.bf16.mxu0 %v3177
    %4717 = vmatpush1.bf16.msra.mxu0 %v3176
    %4718 = vmatprep.subr.bf16.mxu0 %v3185
    %4719 = vmatpush1.bf16.msra.mxu0 %v3184
    %4720 = vmatprep.subr.bf16.mxu0 %v3193
    %4721 = vmatpush1.bf16.msra.mxu0 %v3192
    %4722 = vmatprep.subr.bf16.mxu0 %v3201
    %4723 = vmatpush1.bf16.msra.mxu0 %v3200
    %4724 = vmatprep.subr.bf16.mxu0 %v3209
    %4725 = vmatpush1.bf16.msra.mxu0 %v3208
    %4726 = vmatprep.subr.bf16.mxu0 %v3217
    %4727 = vmatpush1.bf16.msra.mxu0 %v3216
    %4728 = vmatprep.subr.bf16.mxu0 %v3225
    %4729 = vmatpush1.bf16.msra.mxu0 %v3224
    %4730 = vmatprep.subr.bf16.mxu0 %v3233
    %4731 = vmatpush1.bf16.msra.mxu0 %v3232
    %4732 = vmatprep.subr.bf16.mxu0 %v3241
    %4733 = vmatpush1.bf16.msra.mxu0 %v3240
    %4734 = vmatprep.subr.bf16.mxu0 %v3249
    %4735 = vmatpush1.bf16.msra.mxu0 %v3248
    %4736 = vmatprep.subr.bf16.mxu0 %v3257
    %4737 = vmatpush1.bf16.msra.mxu0 %v3256
    %4738 = vmatprep.subr.bf16.mxu0 %v3265
    %4739 = vmatpush1.bf16.msra.mxu0 %v3264
    %4740 = vmatprep.subr.bf16.mxu0 %v3273
    %4741 = vmatpush1.bf16.msra.mxu0 %v3272
    %4742 = vmatprep.subr.bf16.mxu0 %v3933
    %4743 = vmatpush1.bf16.msra.mxu0 %v3930
    %4744 = vmatprep.subr.bf16.mxu0 0
    %4745 = vmatpush1.bf16.msra.mxu0 0
    %4746 = vmatprep.mubr.bf16.mxu0 %v3908
    %4747 = vmatmul.mubr.bf16.gmra.mrb[0].mxu0 %v94
    %v4748 = vpop.f32.mrb[0].mxu0
    %v4749 = vadd.f32 %v4708, %v4748
    %v4750 = vpop.f32.mrb[0].mxu0
    %v4751 = vadd.f32 %v4710, %v4750
    %v4752 = vpop.f32.mrb[0].mxu0
    %v4753 = vpop.f32.mrb[0].mxu0
    %4754 = vdwg.mxu0
    %v4755 = vmax.f32 %v4134, 0.0
    %v4756 = vmax.f32 %v4136, 0.0
    %v4757 = vmax.f32 %v4339, 0.0
    %v4758 = vmax.f32 %v4341, 0.0
    %v4759 = vmax.f32 %v4544, 0.0
    %v4760 = vmax.f32 %v4546, 0.0
    %v4761 = vmax.f32 %v4749, 0.0
    %v4762 = vmax.f32 %v4751, 0.0
    %v4763 = vpack.c.bf16 %v4755, %v4755
    %v4764 = vpack.c.bf16 %v4756, %v4756
    %v4765 = vpack.c.bf16 %v4757, %v4757
    %v4766 = vpack.c.bf16 %v4758, %v4758
    %v4767 = vpack.c.bf16 %v4759, %v4759
    %v4768 = vpack.c.bf16 %v4760, %v4760
    %v4769 = vpack.c.bf16 %v4761, %v4761
    %v4770 = vpack.c.bf16 %v4762, %v4762
    %v4771 = vld [vmem:[%s3] sm:$0xf]
    %v4772 = vld [vmem:[%s3 + $0x4] sm:$0xf]
    %v4773 = vld [vmem:[%s3 + $0x8] sm:$0xf]
    %v4774 = vld [vmem:[%s3 + $0xc] sm:$0xf]
    %v4775 = vld [vmem:[%s3 + $0x10] sm:$0xf]
    %v4776 = vld [vmem:[%s3 + $0x14] sm:$0xf]
    %v4777 = vld [vmem:[%s3 + $0x18] sm:$0xf]
    %v4778 = vld [vmem:[%s3 + $0x1c] sm:$0xf]
    %v4779 = vld [vmem:[%s3 + $0x20] sm:$0xf]
    %v4780 = vld [vmem:[%s3 + $0x24] sm:$0xf]
    %v4781 = vld [vmem:[%s3 + $0x28] sm:$0xf]
    %v4782 = vld [vmem:[%s3 + $0x2c] sm:$0xf]
    %v4783 = vld [vmem:[%s3 + $0x30] sm:$0xf]
    %v4784 = vld [vmem:[%s3 + $0x34] sm:$0xf]
    %v4785 = vld [vmem:[%s3 + $0x38] sm:$0xf]
    %v4786 = vld [vmem:[%s3 + $0x3c] sm:$0xf]
    %v4787 = vld [vmem:[%s3 + $0x40] sm:$0xf]
    %v4788 = vld [vmem:[%s3 + $0x44] sm:$0xf]
    %v4789 = vld [vmem:[%s3 + $0x48] sm:$0xf]
    %v4790 = vld [vmem:[%s3 + $0x4c] sm:$0xf]
    %v4791 = vld [vmem:[%s3 + $0x50] sm:$0xf]
    %v4792 = vld [vmem:[%s3 + $0x54] sm:$0xf]
    %v4793 = vld [vmem:[%s3 + $0x58] sm:$0xf]
    %v4794 = vld [vmem:[%s3 + $0x5c] sm:$0xf]
    %v4795 = vld [vmem:[%s3 + $0x60] sm:$0xf]
    %v4796 = vld [vmem:[%s3 + $0x64] sm:$0xf]
    %v4797 = vld [vmem:[%s3 + $0x68] sm:$0xf]
    %v4798 = vld [vmem:[%s3 + $0x6c] sm:$0xf]
    %v4799 = vld [vmem:[%s3 + $0x70] sm:$0xf]
    %v4800 = vld [vmem:[%s3 + $0x74] sm:$0xf]
    %v4801 = vld [vmem:[%s3 + $0x78] sm:$0xf]
    %v4802 = vld [vmem:[%s3 + $0x7c] sm:$0xf]
    %v4803 = vld [vmem:[%s3 + $0x80] sm:$0xf]
    %v4804 = vld [vmem:[%s3 + $0x84] sm:$0xf]
    %v4805 = vld [vmem:[%s3 + $0x88] sm:$0xf]
    %v4806 = vld [vmem:[%s3 + $0x8c] sm:$0xf]
    %v4807 = vld [vmem:[%s3 + $0x90] sm:$0xf]
    %v4808 = vld [vmem:[%s3 + $0x94] sm:$0xf]
    %v4809 = vld [vmem:[%s3 + $0x98] sm:$0xf]
    %v4810 = vld [vmem:[%s3 + $0x9c] sm:$0xf]
    %v4811 = vld [vmem:[%s3 + $0xa0] sm:$0xf]
    %v4812 = vld [vmem:[%s3 + $0xa4] sm:$0xf]
    %v4813 = vld [vmem:[%s3 + $0xa8] sm:$0xf]
    %v4814 = vld [vmem:[%s3 + $0xac] sm:$0xf]
    %v4815 = vld [vmem:[%s3 + $0xb0] sm:$0xf]
    %v4816 = vld [vmem:[%s3 + $0xb4] sm:$0xf]
    %v4817 = vld [vmem:[%s3 + $0xb8] sm:$0xf]
    %v4818 = vld [vmem:[%s3 + $0xbc] sm:$0xf]
    %v4819 = vld [vmem:[%s3 + $0xc0] sm:$0xf]
    %v4820 = vld [vmem:[%s3 + $0xc4] sm:$0xf]
    %v4821 = vld [vmem:[%s3 + $0xc8] sm:$0xf]
    %v4822 = vld [vmem:[%s3 + $0xcc] sm:$0xf]
    %v4823 = vld [vmem:[%s3 + $0xd0] sm:$0xf]
    %v4824 = vld [vmem:[%s3 + $0xd4] sm:$0xf]
    %v4825 = vld [vmem:[%s3 + $0xd8] sm:$0xf]
    %v4826 = vld [vmem:[%s3 + $0xdc] sm:$0xf]
    %v4827 = vld [vmem:[%s3 + $0xe0] sm:$0xf]
    %v4828 = vld [vmem:[%s3 + $0xe4] sm:$0xf]
    %v4829 = vld [vmem:[%s3 + $0xe8] sm:$0xf]
    %v4830 = vld [vmem:[%s3 + $0xec] sm:$0xf]
    %v4831 = vld [vmem:[%s3 + $0xf0] sm:$0xf]
    %v4832 = vld [vmem:[%s3 + $0xf4] sm:$0xf]
    %v4833 = vld [vmem:[%s3 + $0xf8] sm:$0xf]
    %v4834 = vld [vmem:[%s3 + $0xfc] sm:$0xf]
    %v4835 = vld [vmem:[%s3 + $0x100] sm:$0xf]
    %v4836 = vld [vmem:[%s3 + $0x104] sm:$0xf]
    %v4837 = vld [vmem:[%s3 + $0x108] sm:$0xf]
    %v4838 = vld [vmem:[%s3 + $0x10c] sm:$0xf]
    %v4839 = vld [vmem:[%s3 + $0x110] sm:$0xf]
    %v4840 = vld [vmem:[%s3 + $0x114] sm:$0xf]
    %v4841 = vld [vmem:[%s3 + $0x118] sm:$0xf]
    %v4842 = vld [vmem:[%s3 + $0x11c] sm:$0xf]
    %v4843 = vld [vmem:[%s3 + $0x120] sm:$0xf]
    %v4844 = vld [vmem:[%s3 + $0x124] sm:$0xf]
    %v4845 = vld [vmem:[%s3 + $0x128] sm:$0xf]
    %v4846 = vld [vmem:[%s3 + $0x12c] sm:$0xf]
    %v4847 = vld [vmem:[%s3 + $0x130] sm:$0xf]
    %v4848 = vld [vmem:[%s3 + $0x134] sm:$0xf]
    %v4849 = vld [vmem:[%s3 + $0x138] sm:$0xf]
    %v4850 = vld [vmem:[%s3 + $0x13c] sm:$0xf]
    %v4851 = vld [vmem:[%s3 + $0x140] sm:$0xf]
    %v4852 = vld [vmem:[%s3 + $0x144] sm:$0xf]
    %v4853 = vld [vmem:[%s3 + $0x148] sm:$0xf]
    %v4854 = vld [vmem:[%s3 + $0x14c] sm:$0xf]
    %v4855 = vld [vmem:[%s3 + $0x150] sm:$0xf]
    %v4856 = vld [vmem:[%s3 + $0x154] sm:$0xf]
    %v4857 = vld [vmem:[%s3 + $0x158] sm:$0xf]
    %v4858 = vld [vmem:[%s3 + $0x15c] sm:$0xf]
    %v4859 = vld [vmem:[%s3 + $0x160] sm:$0xf]
    %v4860 = vld [vmem:[%s3 + $0x164] sm:$0xf]
    %v4861 = vld [vmem:[%s3 + $0x168] sm:$0xf]
    %v4862 = vld [vmem:[%s3 + $0x16c] sm:$0xf]
    %v4863 = vld [vmem:[%s3 + $0x170] sm:$0xf]
    %v4864 = vld [vmem:[%s3 + $0x174] sm:$0xf]
    %v4865 = vld [vmem:[%s3 + $0x178] sm:$0xf]
    %v4866 = vld [vmem:[%s3 + $0x17c] sm:$0xf]
    %v4867 = vld [vmem:[%s3 + $0x180] sm:$0xf]
    %v4868 = vld [vmem:[%s3 + $0x184] sm:$0xf]
    %v4869 = vld [vmem:[%s3 + $0x188] sm:$0xf]
    %v4870 = vld [vmem:[%s3 + $0x18c] sm:$0xf]
    %v4871 = vld [vmem:[%s3 + $0x190] sm:$0xf]
    %v4872 = vld [vmem:[%s3 + $0x194] sm:$0xf]
    %v4873 = vld [vmem:[%s3 + $0x198] sm:$0xf]
    %v4874 = vld [vmem:[%s3 + $0x19c] sm:$0xf]
    %v4875 = vld [vmem:[%s3 + $0x1a0] sm:$0xf]
    %v4876 = vld [vmem:[%s3 + $0x1a4] sm:$0xf]
    %v4877 = vld [vmem:[%s3 + $0x1a8] sm:$0xf]
    %v4878 = vld [vmem:[%s3 + $0x1ac] sm:$0xf]
    %v4879 = vld [vmem:[%s3 + $0x1b0] sm:$0xf]
    %v4880 = vld [vmem:[%s3 + $0x1b4] sm:$0xf]
    %v4881 = vld [vmem:[%s3 + $0x1b8] sm:$0xf]
    %v4882 = vld [vmem:[%s3 + $0x1bc] sm:$0xf]
    %v4883 = vld [vmem:[%s3 + $0x1c0] sm:$0xf]
    %v4884 = vld [vmem:[%s3 + $0x1c4] sm:$0xf]
    %v4885 = vld [vmem:[%s3 + $0x1c8] sm:$0xf]
    %v4886 = vld [vmem:[%s3 + $0x1cc] sm:$0xf]
    %v4887 = vld [vmem:[%s3 + $0x1d0] sm:$0xf]
    %v4888 = vld [vmem:[%s3 + $0x1d4] sm:$0xf]
    %v4889 = vld [vmem:[%s3 + $0x1d8] sm:$0xf]
    %v4890 = vld [vmem:[%s3 + $0x1dc] sm:$0xf]
    %v4891 = vld [vmem:[%s3 + $0x1e0] sm:$0xf]
    %v4892 = vld [vmem:[%s3 + $0x1e4] sm:$0xf]
    %v4893 = vld [vmem:[%s3 + $0x1e8] sm:$0xf]
    %v4894 = vld [vmem:[%s3 + $0x1ec] sm:$0xf]
    %v4895 = vld [vmem:[%s3 + $0x1f0] sm:$0xf]
    %v4896 = vld [vmem:[%s3 + $0x1f4] sm:$0xf]
    %v4897 = vld [vmem:[%s3 + $0x1f8] sm:$0xf]
    %v4898 = vld [vmem:[%s3 + $0x1fc] sm:$0xf]
    %v4899 = vld [vmem:[%s4] sm:$0x1]
    %v4901 = vlaneseq
    %v4902 = vshrl.u32 %v4901, 7
    %v4903 = vsub.s32 0, %v4902
    %v4904 = vrot.slane %v4899, %v4903
    %v5034 = vunpack.c.l.b16 %v4771
    %v5035 = vunpack.c.l.b16 %v4772
    %v5036 = vunpack.c.l.b16 %v4773
    %v5037 = vunpack.c.l.b16 %v4774
    %v5038 = vunpack.c.l.b16 %v4775
    %v5039 = vunpack.c.l.b16 %v4776
    %v5040 = vunpack.c.l.b16 %v4777
    %v5041 = vunpack.c.l.b16 %v4778
    %v5042 = vunpack.c.l.b16 %v4779
    %v5043 = vunpack.c.l.b16 %v4780
    %v5044 = vunpack.c.l.b16 %v4781
    %v5045 = vunpack.c.l.b16 %v4782
    %v5046 = vunpack.c.l.b16 %v4783
    %v5047 = vunpack.c.l.b16 %v4784
    %v5048 = vunpack.c.l.b16 %v4785
    %v5049 = vunpack.c.l.b16 %v4786
    %v5050 = vunpack.c.l.b16 %v4787
    %v5051 = vunpack.c.l.b16 %v4788
    %v5052 = vunpack.c.l.b16 %v4789
    %v5053 = vunpack.c.l.b16 %v4790
    %v5054 = vunpack.c.l.b16 %v4791
    %v5055 = vunpack.c.l.b16 %v4792
    %v5056 = vunpack.c.l.b16 %v4793
    %v5057 = vunpack.c.l.b16 %v4794
    %v5058 = vunpack.c.l.b16 %v4795
    %v5059 = vunpack.c.l.b16 %v4796
    %v5060 = vunpack.c.l.b16 %v4797
    %v5061 = vunpack.c.l.b16 %v4798
    %v5062 = vunpack.c.l.b16 %v4799
    %v5063 = vunpack.c.l.b16 %v4800
    %v5064 = vunpack.c.l.b16 %v4801
    %v5065 = vunpack.c.l.b16 %v4802
    %v5066 = vunpack.c.l.b16 %v4803
    %v5067 = vunpack.c.l.b16 %v4804
    %v5068 = vunpack.c.l.b16 %v4805
    %v5069 = vunpack.c.l.b16 %v4806
    %v5070 = vunpack.c.l.b16 %v4807
    %v5071 = vunpack.c.l.b16 %v4808
    %v5072 = vunpack.c.l.b16 %v4809
    %v5073 = vunpack.c.l.b16 %v4810
    %v5074 = vunpack.c.l.b16 %v4811
    %v5075 = vunpack.c.l.b16 %v4812
    %v5076 = vunpack.c.l.b16 %v4813
    %v5077 = vunpack.c.l.b16 %v4814
    %v5078 = vunpack.c.l.b16 %v4815
    %v5079 = vunpack.c.l.b16 %v4816
    %v5080 = vunpack.c.l.b16 %v4817
    %v5081 = vunpack.c.l.b16 %v4818
    %v5082 = vunpack.c.l.b16 %v4819
    %v5083 = vunpack.c.l.b16 %v4820
    %v5084 = vunpack.c.l.b16 %v4821
    %v5085 = vunpack.c.l.b16 %v4822
    %v5086 = vunpack.c.l.b16 %v4823
    %v5087 = vunpack.c.l.b16 %v4824
    %v5088 = vunpack.c.l.b16 %v4825
    %v5089 = vunpack.c.l.b16 %v4826
    %v5090 = vunpack.c.l.b16 %v4827
    %v5091 = vunpack.c.l.b16 %v4828
    %v5092 = vunpack.c.l.b16 %v4829
    %v5093 = vunpack.c.l.b16 %v4830
    %v5094 = vunpack.c.l.b16 %v4831
    %v5095 = vunpack.c.l.b16 %v4832
    %v5096 = vunpack.c.l.b16 %v4833
    %v5097 = vunpack.c.l.b16 %v4834
    %v5098 = vunpack.c.l.b16 %v4835
    %v5099 = vunpack.c.l.b16 %v4836
    %v5100 = vunpack.c.l.b16 %v4837
    %v5101 = vunpack.c.l.b16 %v4838
    %v5102 = vunpack.c.l.b16 %v4839
    %v5103 = vunpack.c.l.b16 %v4840
    %v5104 = vunpack.c.l.b16 %v4841
    %v5105 = vunpack.c.l.b16 %v4842
    %v5106 = vunpack.c.l.b16 %v4843
    %v5107 = vunpack.c.l.b16 %v4844
    %v5108 = vunpack.c.l.b16 %v4845
    %v5109 = vunpack.c.l.b16 %v4846
    %v5110 = vunpack.c.l.b16 %v4847
    %v5111 = vunpack.c.l.b16 %v4848
    %v5112 = vunpack.c.l.b16 %v4849
    %v5113 = vunpack.c.l.b16 %v4850
    %v5114 = vunpack.c.l.b16 %v4851
    %v5115 = vunpack.c.l.b16 %v4852
    %v5116 = vunpack.c.l.b16 %v4853
    %v5117 = vunpack.c.l.b16 %v4854
    %v5118 = vunpack.c.l.b16 %v4855
    %v5119 = vunpack.c.l.b16 %v4856
    %v5120 = vunpack.c.l.b16 %v4857
    %v5121 = vunpack.c.l.b16 %v4858
    %v5122 = vunpack.c.l.b16 %v4859
    %v5123 = vunpack.c.l.b16 %v4860
    %v5124 = vunpack.c.l.b16 %v4861
    %v5125 = vunpack.c.l.b16 %v4862
    %v5126 = vunpack.c.l.b16 %v4863
    %v5127 = vunpack.c.l.b16 %v4864
    %v5128 = vunpack.c.l.b16 %v4865
    %v5129 = vunpack.c.l.b16 %v4866
    %v5130 = vunpack.c.l.b16 %v4867
    %v5131 = vunpack.c.l.b16 %v4868
    %v5132 = vunpack.c.l.b16 %v4869
    %v5133 = vunpack.c.l.b16 %v4870
    %v5134 = vunpack.c.l.b16 %v4871
    %v5135 = vunpack.c.l.b16 %v4872
    %v5136 = vunpack.c.l.b16 %v4873
    %v5137 = vunpack.c.l.b16 %v4874
    %v5138 = vunpack.c.l.b16 %v4875
    %v5139 = vunpack.c.l.b16 %v4876
    %v5140 = vunpack.c.l.b16 %v4877
    %v5141 = vunpack.c.l.b16 %v4878
    %v5142 = vunpack.c.l.b16 %v4879
    %v5143 = vunpack.c.l.b16 %v4880
    %v5144 = vunpack.c.l.b16 %v4881
    %v5145 = vunpack.c.l.b16 %v4882
    %v5146 = vunpack.c.l.b16 %v4883
    %v5147 = vunpack.c.l.b16 %v4884
    %v5148 = vunpack.c.l.b16 %v4885
    %v5149 = vunpack.c.l.b16 %v4886
    %v5150 = vunpack.c.l.b16 %v4887
    %v5151 = vunpack.c.l.b16 %v4888
    %v5152 = vunpack.c.l.b16 %v4889
    %v5153 = vunpack.c.l.b16 %v4890
    %v5154 = vunpack.c.l.b16 %v4891
    %v5155 = vunpack.c.l.b16 %v4892
    %v5156 = vunpack.c.l.b16 %v4893
    %v5157 = vunpack.c.l.b16 %v4894
    %v5158 = vunpack.c.l.b16 %v4895
    %v5159 = vunpack.c.l.b16 %v4896
    %v5160 = vunpack.c.l.b16 %v4897
    %v5161 = vunpack.c.l.b16 %v4898
    %v5162 = vpack.c.b16 %v5035, %v5034
    %v5163 = vpack.c.b16 %v5037, %v5036
    %v5164 = vpack.c.b16 %v5039, %v5038
    %v5165 = vpack.c.b16 %v5041, %v5040
    %v5166 = vpack.c.b16 %v5043, %v5042
    %v5167 = vpack.c.b16 %v5045, %v5044
    %v5168 = vpack.c.b16 %v5047, %v5046
    %v5169 = vpack.c.b16 %v5049, %v5048
    %v5170 = vpack.c.b16 %v5051, %v5050
    %v5171 = vpack.c.b16 %v5053, %v5052
    %v5172 = vpack.c.b16 %v5055, %v5054
    %v5173 = vpack.c.b16 %v5057, %v5056
    %v5174 = vpack.c.b16 %v5059, %v5058
    %v5175 = vpack.c.b16 %v5061, %v5060
    %v5176 = vpack.c.b16 %v5063, %v5062
    %v5177 = vpack.c.b16 %v5065, %v5064
    %v5178 = vpack.c.b16 %v5067, %v5066
    %v5179 = vpack.c.b16 %v5069, %v5068
    %v5180 = vpack.c.b16 %v5071, %v5070
    %v5181 = vpack.c.b16 %v5073, %v5072
    %v5182 = vpack.c.b16 %v5075, %v5074
    %v5183 = vpack.c.b16 %v5077, %v5076
    %v5184 = vpack.c.b16 %v5079, %v5078
    %v5185 = vpack.c.b16 %v5081, %v5080
    %v5186 = vpack.c.b16 %v5083, %v5082
    %v5187 = vpack.c.b16 %v5085, %v5084
    %v5188 = vpack.c.b16 %v5087, %v5086
    %v5189 = vpack.c.b16 %v5089, %v5088
    %v5190 = vpack.c.b16 %v5091, %v5090
    %v5191 = vpack.c.b16 %v5093, %v5092
    %v5192 = vpack.c.b16 %v5095, %v5094
    %v5193 = vpack.c.b16 %v5097, %v5096
    %v5194 = vpack.c.b16 %v5099, %v5098
    %v5195 = vpack.c.b16 %v5101, %v5100
    %v5196 = vpack.c.b16 %v5103, %v5102
    %v5197 = vpack.c.b16 %v5105, %v5104
    %v5198 = vpack.c.b16 %v5107, %v5106
    %v5199 = vpack.c.b16 %v5109, %v5108
    %v5200 = vpack.c.b16 %v5111, %v5110
    %v5201 = vpack.c.b16 %v5113, %v5112
    %v5202 = vpack.c.b16 %v5115, %v5114
    %v5203 = vpack.c.b16 %v5117, %v5116
    %v5204 = vpack.c.b16 %v5119, %v5118
    %v5205 = vpack.c.b16 %v5121, %v5120
    %v5206 = vpack.c.b16 %v5123, %v5122
    %v5207 = vpack.c.b16 %v5125, %v5124
    %v5208 = vpack.c.b16 %v5127, %v5126
    %v5209 = vpack.c.b16 %v5129, %v5128
    %v5210 = vpack.c.b16 %v5131, %v5130
    %v5211 = vpack.c.b16 %v5133, %v5132
    %v5212 = vpack.c.b16 %v5135, %v5134
    %v5213 = vpack.c.b16 %v5137, %v5136
    %v5214 = vpack.c.b16 %v5139, %v5138
    %v5215 = vpack.c.b16 %v5141, %v5140
    %v5216 = vpack.c.b16 %v5143, %v5142
    %v5217 = vpack.c.b16 %v5145, %v5144
    %v5218 = vpack.c.b16 %v5147, %v5146
    %v5219 = vpack.c.b16 %v5149, %v5148
    %v5220 = vpack.c.b16 %v5151, %v5150
    %v5221 = vpack.c.b16 %v5153, %v5152
    %v5222 = vpack.c.b16 %v5155, %v5154
    %v5223 = vpack.c.b16 %v5157, %v5156
    %v5224 = vpack.c.b16 %v5159, %v5158
    %v5225 = vpack.c.b16 %v5161, %v5160
    %5290 = vmatprep.subr.bf16.mxu0 0
    %5291 = vmatpush1.bf16.msra.mxu0 %v5162
    %5292 = vmatprep.subr.bf16.mxu0 0
    %5293 = vmatpush1.bf16.msra.mxu0 %v5163
    %5294 = vmatprep.subr.bf16.mxu0 0
    %5295 = vmatpush1.bf16.msra.mxu0 %v5164
    %5296 = vmatprep.subr.bf16.mxu0 0
    %5297 = vmatpush1.bf16.msra.mxu0 %v5165
    %5298 = vmatprep.subr.bf16.mxu0 0
    %5299 = vmatpush1.bf16.msra.mxu0 %v5166
    %5300 = vmatprep.subr.bf16.mxu0 0
    %5301 = vmatpush1.bf16.msra.mxu0 %v5167
    %5302 = vmatprep.subr.bf16.mxu0 0
    %5303 = vmatpush1.bf16.msra.mxu0 %v5168
    %5304 = vmatprep.subr.bf16.mxu0 0
    %5305 = vmatpush1.bf16.msra.mxu0 %v5169
    %5306 = vmatprep.subr.bf16.mxu0 0
    %5307 = vmatpush1.bf16.msra.mxu0 %v5170
    %5308 = vmatprep.subr.bf16.mxu0 0
    %5309 = vmatpush1.bf16.msra.mxu0 %v5171
    %5310 = vmatprep.subr.bf16.mxu0 0
    %5311 = vmatpush1.bf16.msra.mxu0 %v5172
    %5312 = vmatprep.subr.bf16.mxu0 0
    %5313 = vmatpush1.bf16.msra.mxu0 %v5173
    %5314 = vmatprep.subr.bf16.mxu0 0
    %5315 = vmatpush1.bf16.msra.mxu0 %v5174
    %5316 = vmatprep.subr.bf16.mxu0 0
    %5317 = vmatpush1.bf16.msra.mxu0 %v5175
    %5318 = vmatprep.subr.bf16.mxu0 0
    %5319 = vmatpush1.bf16.msra.mxu0 %v5176
    %5320 = vmatprep.subr.bf16.mxu0 0
    %5321 = vmatpush1.bf16.msra.mxu0 %v5177
    %5322 = vmatprep.mubr.bf16.mxu0 %v4764
    %5323 = vmatmul.mubr.bf16.gmra.mrb[0].mxu0 %v4763
    %v5324 = vpop.f32.mrb[0].mxu0
    %v5325 = vadd.f32 %v4904, %v5324
    %v5326 = vpop.f32.mrb[0].mxu0
    %v5327 = vpop.f32.mrb[0].mxu0
    %v5328 = vpop.f32.mrb[0].mxu0
    %5329 = vdwg.mxu0
    %5330 = vmatprep.subr.bf16.mxu0 0
    %5331 = vmatpush1.bf16.msra.mxu0 %v5178
    %5332 = vmatprep.subr.bf16.mxu0 0
    %5333 = vmatpush1.bf16.msra.mxu0 %v5179
    %5334 = vmatprep.subr.bf16.mxu0 0
    %5335 = vmatpush1.bf16.msra.mxu0 %v5180
    %5336 = vmatprep.subr.bf16.mxu0 0
    %5337 = vmatpush1.bf16.msra.mxu0 %v5181
    %5338 = vmatprep.subr.bf16.mxu0 0
    %5339 = vmatpush1.bf16.msra.mxu0 %v5182
    %5340 = vmatprep.subr.bf16.mxu0 0
    %5341 = vmatpush1.bf16.msra.mxu0 %v5183
    %5342 = vmatprep.subr.bf16.mxu0 0
    %5343 = vmatpush1.bf16.msra.mxu0 %v5184
    %5344 = vmatprep.subr.bf16.mxu0 0
    %5345 = vmatpush1.bf16.msra.mxu0 %v5185
    %5346 = vmatprep.subr.bf16.mxu0 0
    %5347 = vmatpush1.bf16.msra.mxu0 %v5186
    %5348 = vmatprep.subr.bf16.mxu0 0
    %5349 = vmatpush1.bf16.msra.mxu0 %v5187
    %5350 = vmatprep.subr.bf16.mxu0 0
    %5351 = vmatpush1.bf16.msra.mxu0 %v5188
    %5352 = vmatprep.subr.bf16.mxu0 0
    %5353 = vmatpush1.bf16.msra.mxu0 %v5189
    %5354 = vmatprep.subr.bf16.mxu0 0
    %5355 = vmatpush1.bf16.msra.mxu0 %v5190
    %5356 = vmatprep.subr.bf16.mxu0 0
    %5357 = vmatpush1.bf16.msra.mxu0 %v5191
    %5358 = vmatprep.subr.bf16.mxu0 0
    %5359 = vmatpush1.bf16.msra.mxu0 %v5192
    %5360 = vmatprep.subr.bf16.mxu0 0
    %5361 = vmatpush1.bf16.msra.mxu0 %v5193
    %5362 = vmatprep.mubr.bf16.mxu0 %v4766
    %5363 = vmatmul.mubr.bf16.gmra.mrb[0].mxu0 %v4765
    %v5364 = vpop.f32.mrb[0].mxu0
    %v5365 = vadd.f32 %v5325, %v5364
    %v5366 = vpop.f32.mrb[0].mxu0
    %v5367 = vpop.f32.mrb[0].mxu0
    %v5368 = vpop.f32.mrb[0].mxu0
    %5369 = vdwg.mxu0
    %5370 = vmatprep.subr.bf16.mxu0 0
    %5371 = vmatpush1.bf16.msra.mxu0 %v5194
    %5372 = vmatprep.subr.bf16.mxu0 0
    %5373 = vmatpush1.bf16.msra.mxu0 %v5195
    %5374 = vmatprep.subr.bf16.mxu0 0
    %5375 = vmatpush1.bf16.msra.mxu0 %v5196
    %5376 = vmatprep.subr.bf16.mxu0 0
    %5377 = vmatpush1.bf16.msra.mxu0 %v5197
    %5378 = vmatprep.subr.bf16.mxu0 0
    %5379 = vmatpush1.bf16.msra.mxu0 %v5198
    %5380 = vmatprep.subr.bf16.mxu0 0
    %5381 = vmatpush1.bf16.msra.mxu0 %v5199
    %5382 = vmatprep.subr.bf16.mxu0 0
    %5383 = vmatpush1.bf16.msra.mxu0 %v5200
    %5384 = vmatprep.subr.bf16.mxu0 0
    %5385 = vmatpush1.bf16.msra.mxu0 %v5201
    %5386 = vmatprep.subr.bf16.mxu0 0
    %5387 = vmatpush1.bf16.msra.mxu0 %v5202
    %5388 = vmatprep.subr.bf16.mxu0 0
    %5389 = vmatpush1.bf16.msra.mxu0 %v5203
    %5390 = vmatprep.subr.bf16.mxu0 0
    %5391 = vmatpush1.bf16.msra.mxu0 %v5204
    %5392 = vmatprep.subr.bf16.mxu0 0
    %5393 = vmatpush1.bf16.msra.mxu0 %v5205
    %5394 = vmatprep.subr.bf16.mxu0 0
    %5395 = vmatpush1.bf16.msra.mxu0 %v5206
    %5396 = vmatprep.subr.bf16.mxu0 0
    %5397 = vmatpush1.bf16.msra.mxu0 %v5207
    %5398 = vmatprep.subr.bf16.mxu0 0
    %5399 = vmatpush1.bf16.msra.mxu0 %v5208
    %5400 = vmatprep.subr.bf16.mxu0 0
    %5401 = vmatpush1.bf16.msra.mxu0 %v5209
    %5402 = vmatprep.mubr.bf16.mxu0 %v4768
    %5403 = vmatmul.mubr.bf16.gmra.mrb[0].mxu0 %v4767
    %v5404 = vpop.f32.mrb[0].mxu0
    %v5405 = vadd.f32 %v5365, %v5404
    %v5406 = vpop.f32.mrb[0].mxu0
    %v5407 = vpop.f32.mrb[0].mxu0
    %v5408 = vpop.f32.mrb[0].mxu0
    %5409 = vdwg.mxu0
    %5410 = vmatprep.subr.bf16.mxu0 0
    %5411 = vmatpush1.bf16.msra.mxu0 %v5210
    %5412 = vmatprep.subr.bf16.mxu0 0
    %5413 = vmatpush1.bf16.msra.mxu0 %v5211
    %5414 = vmatprep.subr.bf16.mxu0 0
    %5415 = vmatpush1.bf16.msra.mxu0 %v5212
    %5416 = vmatprep.subr.bf16.mxu0 0
    %5417 = vmatpush1.bf16.msra.mxu0 %v5213
    %5418 = vmatprep.subr.bf16.mxu0 0
    %5419 = vmatpush1.bf16.msra.mxu0 %v5214
    %5420 = vmatprep.subr.bf16.mxu0 0
    %5421 = vmatpush1.bf16.msra.mxu0 %v5215
    %5422 = vmatprep.subr.bf16.mxu0 0
    %5423 = vmatpush1.bf16.msra.mxu0 %v5216
    %5424 = vmatprep.subr.bf16.mxu0 0
    %5425 = vmatpush1.bf16.msra.mxu0 %v5217
    %5426 = vmatprep.subr.bf16.mxu0 0
    %5427 = vmatpush1.bf16.msra.mxu0 %v5218
    %5428 = vmatprep.subr.bf16.mxu0 0
    %5429 = vmatpush1.bf16.msra.mxu0 %v5219
    %5430 = vmatprep.subr.bf16.mxu0 0
    %5431 = vmatpush1.bf16.msra.mxu0 %v5220
    %5432 = vmatprep.subr.bf16.mxu0 0
    %5433 = vmatpush1.bf16.msra.mxu0 %v5221
    %5434 = vmatprep.subr.bf16.mxu0 0
    %5435 = vmatpush1.bf16.msra.mxu0 %v5222
    %5436 = vmatprep.subr.bf16.mxu0 0
    %5437 = vmatpush1.bf16.msra.mxu0 %v5223
    %5438 = vmatprep.subr.bf16.mxu0 0
    %5439 = vmatpush1.bf16.msra.mxu0 %v5224
    %5440 = vmatprep.subr.bf16.mxu0 0
    %5441 = vmatpush1.bf16.msra.mxu0 %v5225
    %5442 = vmatprep.mubr.bf16.mxu0 %v4770
    %5443 = vmatmul.mubr.bf16.gmra.mrb[0].mxu0 %v4769
    %v5444 = vpop.f32.mrb[0].mxu0
    %v5445 = vadd.f32 %v5405, %v5444
    %v5446 = vpop.f32.mrb[0].mxu0
    %v5447 = vpop.f32.mrb[0].mxu0
    %v5448 = vpop.f32.mrb[0].mxu0
    %5449 = vdwg.mxu0
    %v5450 = vmax.f32 %v5445, 0.0
    %v5451 = vpack.c.bf16 %v5450, %v5450
    %v5452 = vld [vmem:[%s5] sm:$0xf]
    %v5453 = vld [vmem:[%s5 + $0x4] sm:$0xf]
    %v5454 = vld [vmem:[%s5 + $0x8] sm:$0xf]
    %v5455 = vld [vmem:[%s5 + $0xc] sm:$0xf]
    %v5456 = vld [vmem:[%s5 + $0x10] sm:$0xf]
    %v5457 = vld [vmem:[%s5 + $0x14] sm:$0xf]
    %v5458 = vld [vmem:[%s5 + $0x18] sm:$0xf]
    %v5459 = vld [vmem:[%s5 + $0x1c] sm:$0xf]
    %v5460 = vld [vmem:[%s5 + $0x20] sm:$0xf]
    %v5461 = vld [vmem:[%s5 + $0x24] sm:$0xf]
    %v5462 = vld [vmem:[%s5 + $0x28] sm:$0xf]
    %v5463 = vld [vmem:[%s5 + $0x2c] sm:$0xf]
    %v5464 = vld [vmem:[%s5 + $0x30] sm:$0xf]
    %v5465 = vld [vmem:[%s5 + $0x34] sm:$0xf]
    %v5466 = vld [vmem:[%s5 + $0x38] sm:$0xf]
    %v5467 = vld [vmem:[%s5 + $0x3c] sm:$0xf]
    %v5468 = vld [vmem:[%s6] sm:$0x1]
    %v5470 = vlaneseq
    %v5471 = vshrl.u32 %v5470, 7
    %v5472 = vsub.s32 0, %v5471
    %v5473 = vrot.slane %v5468, %v5472
    %v5491 = vunpack.c.l.b16 %v5452
    %v5492 = vunpack.c.l.b16 %v5453
    %v5493 = vunpack.c.l.b16 %v5454
    %v5494 = vunpack.c.l.b16 %v5455
    %v5495 = vunpack.c.l.b16 %v5456
    %v5496 = vunpack.c.l.b16 %v5457
    %v5497 = vunpack.c.l.b16 %v5458
    %v5498 = vunpack.c.l.b16 %v5459
    %v5499 = vunpack.c.l.b16 %v5460
    %v5500 = vunpack.c.l.b16 %v5461
    %v5501 = vunpack.c.l.b16 %v5462
    %v5502 = vunpack.c.l.b16 %v5463
    %v5503 = vunpack.c.l.b16 %v5464
    %v5504 = vunpack.c.l.b16 %v5465
    %v5505 = vunpack.c.l.b16 %v5466
    %v5506 = vunpack.c.l.b16 %v5467
    %v5507 = vpack.c.b16 %v5492, %v5491
    %v5508 = vpack.c.b16 %v5494, %v5493
    %v5509 = vpack.c.b16 %v5496, %v5495
    %v5510 = vpack.c.b16 %v5498, %v5497
    %v5511 = vpack.c.b16 %v5500, %v5499
    %v5512 = vpack.c.b16 %v5502, %v5501
    %v5513 = vpack.c.b16 %v5504, %v5503
    %v5514 = vpack.c.b16 %v5506, %v5505
    %5523 = vmatprep.subr.bf16.mxu0 0
    %5524 = vmatpush1.bf16.msra.mxu0 %v5507
    %5525 = vmatprep.subr.bf16.mxu0 0
    %5526 = vmatpush1.bf16.msra.mxu0 %v5508
    %5527 = vmatprep.subr.bf16.mxu0 0
    %5528 = vmatpush1.bf16.msra.mxu0 %v5509
    %5529 = vmatprep.subr.bf16.mxu0 0
    %5530 = vmatpush1.bf16.msra.mxu0 %v5510
    %5531 = vmatprep.subr.bf16.mxu0 0
    %5532 = vmatpush1.bf16.msra.mxu0 %v5511
    %5533 = vmatprep.subr.bf16.mxu0 0
    %5534 = vmatpush1.bf16.msra.mxu0 %v5512
    %5535 = vmatprep.subr.bf16.mxu0 0
    %5536 = vmatpush1.bf16.msra.mxu0 %v5513
    %5537 = vmatprep.subr.bf16.mxu0 0
    %5538 = vmatpush1.bf16.msra.mxu0 %v5514
    %5539 = vmatprep.subr.bf16.mxu0 0
    %5540 = vmatpush1.bf16.msra.mxu0 0
    %5541 = vmatprep.subr.bf16.mxu0 0
    %5542 = vmatpush1.bf16.msra.mxu0 0
    %5543 = vmatprep.subr.bf16.mxu0 0
    %5544 = vmatpush1.bf16.msra.mxu0 0
    %5545 = vmatprep.subr.bf16.mxu0 0
    %5546 = vmatpush1.bf16.msra.mxu0 0
    %5547 = vmatprep.subr.bf16.mxu0 0
    %5548 = vmatpush1.bf16.msra.mxu0 0
    %5549 = vmatprep.subr.bf16.mxu0 0
    %5550 = vmatpush1.bf16.msra.mxu0 0
    %5551 = vmatprep.subr.bf16.mxu0 0
    %5552 = vmatpush1.bf16.msra.mxu0 0
    %5553 = vmatprep.subr.bf16.mxu0 0
    %5554 = vmatpush1.bf16.msra.mxu0 0
    %5555 = vmatprep.mubr.bf16.mxu0 0
    %5556 = vmatmul.mubr.bf16.gmra.mrb[0].mxu0 %v5451
    %v5557 = vpop.f32.mrb[0].mxu0
    %v5558 = vadd.f32 %v5473, %v5557
    %v5559 = vpop.f32.mrb[0].mxu0
    %v5560 = vpop.f32.mrb[0].mxu0
    %v5561 = vpop.f32.mrb[0].mxu0
    %5562 = vdwg.mxu0
    %5563 = vst [vmem:[#allocation2] sm:$0x3] %v5558
    // Predicated region
    $region30: #{cnn_forward.5} parent=1 // pred_check
      _
    $region31: #{cnn_forward.5} parent=1 // pred_check_branch
      %5565 = sbr.rel (0) target = $region33
    $region32: #{cnn_forward.5} parent=1 // pred_region
      %s5567 = ssub.s32 32, 32
      %5568 = vsyncadd [#allocation3], %s5567
      %s5570 = sshll.u32 [#allocation2], 4
      %s5571 = int_to_ptr.vmem [resolvable:$true] %s5570
      %5573 = dma.vmem_to_hbm [thread:$0]  %s5571, 32, %s7, [#allocation3]
    $region33: #{cnn_forward.5} parent=1 // pred_fallthru
      _
    // Predicated region
    $region34: #{cnn_forward.5} parent=1 // pred_check
      _
    $region35: #{cnn_forward.5} parent=1 // pred_check_branch
      %5575 = sbr.rel (0) target = $region37
    $region36: #{cnn_forward.5} parent=1 // pred_region
      %5576 = dma.done [#allocation3], 32
    $region37: #{cnn_forward.5} parent=1 // pred_fallthru
      _
    %5577 = vsyncpa [#allocation3], 1

</llo_original>
